<compile_context>
chip_gen: v7x
topology: tpu7x:2x2x1
jax: 0.10.0
libtpu: 0.0.40
codegen_flags: <defaults>
</compile_context>

<pallas_src>
import functools

import jax
import jax.numpy as jnp
from jax.experimental import pallas as pl
from jax.experimental.pallas import tpu as pltpu


COMPUTE_DTYPE = jnp.bfloat16  # MXU operand dtype; accumulation is always f32.


def _pick_row_tile(H):
    """Largest row tile from a fixed menu that divides H and gives >= 2 tiles."""
    for cand in (32, 16, 8, 4, 2):
        if H % cand == 0 and H // cand >= 2:
            return cand
    return H


def _backbone_row_tile_kernel(x_ref, w1_ref, b1_ref, w2_ref, b2_ref, o_ref,
                              ypad_ref, *, TH, W, Cin, Cout,
                              KH1, KW1, KH2, KW2):
    """One (batch, row-tile) step: intro conv -> identity middle -> ending conv.

    x_ref   : (1, 1, TH+2*ph1+2*ph2, W+2*pw1, Cin) bf16  compact padded input window
    w1_ref  : (KH1*KW1, Cin, Cout)  bf16   intro weights, one (Cin,Cout) matrix/tap
    b1_ref  : (1, Cout)             f32
    w2_ref  : (KH2*KW2, Cout, Cout) bf16   ending weights, one (Cout,Cout) matrix/tap
    b2_ref  : (1, Cout)             f32
    o_ref   : (1, 1, TH*W, Cout)    f32    compact output tile
    ypad_ref: (TH+2*ph2, W+2*pw2, Cout) bf16  VMEM intermediate with 3x3 zero halo
    """
    t = pl.program_id(1)
    n_t = pl.num_programs(1)
    ph2, pw2 = KH2 // 2, KW2 // 2
    TH2 = TH + 2 * ph2            # intermediate rows this step (incl. 3x3 halo rows)
    HW2 = TH2 * W
    HW = TH * W

    # ---- intro conv (5x5, Cin->Cout): accumulated per-tap matmuls, f32 acc ----
    acc1 = jnp.zeros((HW2, Cout), jnp.float32)
    for ky in range(KH1):
        for kx in range(KW1):
            tap = ky * KW1 + kx
            slab = x_ref[0, 0, ky:ky + TH2, kx:kx + W, :].reshape(HW2, Cin)
            acc1 = acc1 + jnp.dot(slab, w1_ref[tap],
                                  preferred_element_type=jnp.float32)
    y1 = acc1 + b1_ref[...]                                   # (HW2, Cout) f32

    # TODO(synk): CNPModule (middle block) is undefined in the reference source ->
    # treated as identity; real middle-block math would act on y1 here.

    # ---- place intermediate (incl. +/-1 halo rows) into the bf16 VMEM scratch ----
    ypad_ref[:, pw2:pw2 + W, :] = y1.reshape(TH2, W, Cout).astype(ypad_ref.dtype)

    # Column halo of the 3x3 conv is zero padding.  Re-zeroed every step (tiny)
    # so each grid step is self-contained (safe under megacore grid sharding).
    if pw2 > 0:
        zcol = jnp.zeros((TH2, pw2, Cout), ypad_ref.dtype)
        ypad_ref[:, 0:pw2, :] = zcol
        ypad_ref[:, pw2 + W:pw2 + W + pw2, :] = zcol

    # Rows -1 and H of the intermediate are the 3x3 conv's zero padding: only the
    # first / last row tile carries them, so zero just those thin strips there.
    if ph2 > 0:
        zrow = jnp.zeros((ph2, W + 2 * pw2, Cout), ypad_ref.dtype)

        @pl.when(t == 0)
        def _():
            ypad_ref[0:ph2, :, :] = zrow

        @pl.when(t == n_t - 1)
        def _():
            ypad_ref[ph2 + TH:ph2 + TH + ph2, :, :] = zrow

    # ---- ending conv (3x3, Cout->Cout): accumulated per-tap matmuls from ypad ----
    acc2 = jnp.zeros((HW, Cout), jnp.float32)
    for ky in range(KH2):
        for kx in range(KW2):
            tap = ky * KW2 + kx
            slab = ypad_ref[ky:ky + TH, kx:kx + W, :].reshape(HW, Cout)
            acc2 = acc2 + jnp.dot(slab, w2_ref[tap],
                                  preferred_element_type=jnp.float32)
    y2 = acc2 + b2_ref[...]                                   # (HW, Cout) f32

    # Compact store: no channel padding in HBM, wrapper reshape is a free view.
    o_ref[0, 0] = y2.astype(o_ref.dtype)


def backbone_pallas_nhwc(x_nhwc, params, *, row_tile=None,
                         compute_dtype=COMPUTE_DTYPE):
    """Fused Backbone forward on an NHWC input; returns NHWC f32."""
    B, H, W, Cin = x_nhwc.shape
    w1 = params["intro_w"]    # (KH1, KW1, Cin, Cout)  HWIO
    b1 = params["intro_b"]
    w2 = params["ending_w"]   # (KH2, KW2, Cout, Cout) HWIO
    b2 = params["ending_b"]
    KH1, KW1, _, Cout = w1.shape
    KH2, KW2, _, _ = w2.shape
    ph1, pw1 = KH1 // 2, KW1 // 2
    ph2, pw2 = KH2 // 2, KW2 // 2

    TH = row_tile if row_tile is not None else _pick_row_tile(H)
    assert H % TH == 0, "row tile must divide H"
    nT = H // TH
    halo = 2 * (ph1 + ph2)            # extra rows each input window carries

    # Compact padded input (no im2col expansion in HBM).  Rows are padded by
    # ph1+ph2 so every row tile can compute its TH + 2*ph2 intermediate rows
    # (incl. the 3x3 halo rows) from one uniform (TH + halo)-row window.
    xc = x_nhwc.astype(compute_dtype)
    x_pad = jnp.pad(xc, ((0, 0), (ph1 + ph2, ph1 + ph2), (pw1, pw1), (0, 0)))
    # Overlapping row windows (only `halo` rows duplicated per tile).
    x_win = jnp.stack([x_pad[:, t * TH:t * TH + TH + halo] for t in range(nT)],
                      axis=1)                    # (B, nT, TH+halo, W+2*pw1, Cin)

    w1_taps = w1.reshape(KH1 * KW1, Cin, Cout).astype(compute_dtype)
    w2_taps = w2.reshape(KH2 * KW2, Cout, Cout).astype(compute_dtype)
    b1_2d = b1.reshape(1, Cout).astype(jnp.float32)
    b2_2d = b2.reshape(1, Cout).astype(jnp.float32)

    kernel = functools.partial(_backbone_row_tile_kernel, TH=TH, W=W, Cin=Cin,
                               Cout=Cout, KH1=KH1, KW1=KW1, KH2=KH2, KW2=KW2)

    win_rows = TH + halo
    win_cols = W + 2 * pw1

    out = pl.pallas_call(
        kernel,
        out_shape=jax.ShapeDtypeStruct((B, nT, TH * W, Cout), jnp.float32),
        grid_spec=pltpu.PrefetchScalarGridSpec(
            num_scalar_prefetch=0,
            grid=(B, nT),                         # batch x row-tiles, both parallel
            in_specs=[
                pl.BlockSpec((1, 1, win_rows, win_cols, Cin),
                             lambda b, t: (b, t, 0, 0, 0)),
                pl.BlockSpec((KH1 * KW1, Cin, Cout), lambda b, t: (0, 0, 0)),
                pl.BlockSpec((1, Cout), lambda b, t: (0, 0)),
                pl.BlockSpec((KH2 * KW2, Cout, Cout), lambda b, t: (0, 0, 0)),
                pl.BlockSpec((1, Cout), lambda b, t: (0, 0)),
            ],
            out_specs=pl.BlockSpec((1, 1, TH * W, Cout),
                                   lambda b, t: (b, t, 0, 0)),
            scratch_shapes=[
                pltpu.VMEM((TH + 2 * ph2, W + 2 * pw2, Cout), compute_dtype),
            ],
        ),
        compiler_params=pltpu.CompilerParams(
            dimension_semantics=("parallel", "parallel"),
        ),
    )(x_win, w1_taps, b1_2d, w2_taps, b2_2d)

    # Row tiles are whole-row blocks in order -> plain contiguous reshape.
    return out.reshape(B, H, W, Cout)


def init_backbone_params(key, in_channel=4, width=32):
    """Deterministic synthetic parameters with the same shapes as the module."""
    k1, k2, k3, k4 = jax.random.split(key, 4)
    # PyTorch conv weight layout is (Cout, Cin, KH, KW); store HWIO for NHWC.
    intro_w_oihw = jax.random.normal(k1, (width, in_channel, 5, 5), jnp.float32) * 0.05
    intro_b = jax.random.normal(k2, (width,), jnp.float32) * 0.05
    ending_w_oihw = jax.random.normal(k3, (width, width, 3, 3), jnp.float32) * 0.05
    ending_b = jax.random.normal(k4, (width,), jnp.float32) * 0.05
    return {
        "intro_w": jnp.transpose(intro_w_oihw, (2, 3, 1, 0)),    # HWIO
        "intro_b": intro_b,
        "ending_w": jnp.transpose(ending_w_oihw, (2, 3, 1, 0)),  # HWIO
        "ending_b": ending_b,
    }


@jax.jit
def backbone_forward(x_nchw, params):
    # NCHW (PyTorch convention) -> NHWC for the TPU kernel, and back on exit.
    x = jnp.transpose(x_nchw, (0, 2, 3, 1))
    y = backbone_pallas_nhwc(x, params)
    return jnp.transpose(y, (0, 3, 1, 2))


if __name__ == "__main__":
    key = jax.random.PRNGKey(0)
    kx, kp = jax.random.split(key)

    B, C, H, W = 2, 4, 16, 16
    x = jax.random.normal(kx, (B, C, H, W), jnp.float32)
    params = init_backbone_params(kp, in_channel=C, width=32)

    out = backbone_forward(x, params)
    jax.block_until_ready(out)
    assert out.shape == (B, 32, H, W)

    # Reference with the same precision policy (bf16 MXU operands, f32 accumulation).
    def ref_conv(x_nchw, w_hwio, b):
        pad_h, pad_w = w_hwio.shape[0] // 2, w_hwio.shape[1] // 2
        y = jax.lax.conv_general_dilated(
            x_nchw.astype(COMPUTE_DTYPE), w_hwio.astype(COMPUTE_DTYPE),
            window_strides=(1, 1), padding=((pad_h, pad_h), (pad_w, pad_w)),
            dimension_numbers=("NCHW", "HWIO", "NCHW"),
            preferred_element_type=jnp.float32)
        return y + b.reshape(1, -1, 1, 1)

    ref = ref_conv(ref_conv(x, params["intro_w"], params["intro_b"]),
                   params["ending_w"], params["ending_b"])
    max_err = jnp.max(jnp.abs(out - ref))
    assert jnp.allclose(out, ref, atol=2e-2, rtol=2e-2), f"max abs err={max_err}"

    print("KERNEL_OK")
</pallas_src>

<mosaic_0001>
module attributes {stable_mosaic.version = 11 : i64} {
  func.func @_backbone_row_tile_kernel(%arg0: i32, %arg1: i32, %arg2: memref<1x1x14x20x4xbf16, #tpu.memory_space<vmem>>, %arg3: memref<25x4x32xbf16, #tpu.memory_space<vmem>>, %arg4: memref<1x32xf32, #tpu.memory_space<vmem>>, %arg5: memref<9x32x32xbf16, #tpu.memory_space<vmem>>, %arg6: memref<1x32xf32, #tpu.memory_space<vmem>>, %arg7: memref<1x1x128x32xf32, #tpu.memory_space<vmem>>, %arg8: memref<10x18x32xbf16, #tpu.memory_space<vmem>>) attributes {dimension_semantics = [#tpu.dimension_semantics<parallel>, #tpu.dimension_semantics<parallel>], iteration_bounds = array<i64: 2, 2>, scalar_prefetch = 0 : i64, scratch_operands = 1 : i64, tpu.core_type = #tpu.core_type<tc>, window_params = [{transform_indices = @transform_0, window_bounds = array<i64: 1, 1, 14, 20, 4>}, {pipeline_mode = #tpu.pipeline_mode<synchronous>, transform_indices = @transform_1, window_bounds = array<i64: 25, 4, 32>}, {pipeline_mode = #tpu.pipeline_mode<synchronous>, transform_indices = @transform_2, window_bounds = array<i64: 1, 32>}, {pipeline_mode = #tpu.pipeline_mode<synchronous>, transform_indices = @transform_3, window_bounds = array<i64: 9, 32, 32>}, {pipeline_mode = #tpu.pipeline_mode<synchronous>, transform_indices = @transform_4, window_bounds = array<i64: 1, 32>}, {transform_indices = @transform_5, window_bounds = array<i64: 1, 1, 128, 32>}]} {
    %cst = arith.constant 0.000000e+00 : f32
    %0 = vector.broadcast %cst : f32 to vector<160x32xf32>
    %c0 = arith.constant 0 : index
    %c0_0 = arith.constant 0 : index
    %c0_1 = arith.constant 0 : index
    %c0_2 = arith.constant 0 : index
    %c0_3 = arith.constant 0 : index
    %1 = vector.load %arg2[%c0, %c0_0, %c0_1, %c0_2, %c0_3] : memref<1x1x14x20x4xbf16, #tpu.memory_space<vmem>>, vector<1x1x10x16x4xbf16>
    %2 = vector.shape_cast %1 : vector<1x1x10x16x4xbf16> to vector<10x16x4xbf16>
    %3 = vector.shape_cast %2 : vector<10x16x4xbf16> to vector<160x4xbf16>
    %c0_4 = arith.constant 0 : index
    %c0_5 = arith.constant 0 : index
    %c0_6 = arith.constant 0 : index
    %4 = vector.load %arg3[%c0_4, %c0_5, %c0_6] : memref<25x4x32xbf16, #tpu.memory_space<vmem>>, vector<1x4x32xbf16>
    %5 = vector.shape_cast %4 : vector<1x4x32xbf16> to vector<4x32xbf16>
    %cst_7 = arith.constant dense<0.000000e+00> : vector<160x32xf32>
    %6 = tpu.matmul %3, %5, %cst_7 {dimension_numbers = #tpu.dot_dimension_numbers<[1], [0], [0], [1], [0, 0, 1, 1], [], []>} : vector<160x4xbf16>, vector<4x32xbf16>, vector<160x32xf32> -> vector<160x32xf32>
    %7 = arith.addf %0, %6 : vector<160x32xf32>
    %c0_8 = arith.constant 0 : index
    %c0_9 = arith.constant 0 : index
    %c0_10 = arith.constant 0 : index
    %c1 = arith.constant 1 : index
    %c0_11 = arith.constant 0 : index
    %8 = vector.load %arg2[%c0_8, %c0_9, %c0_10, %c1, %c0_11] : memref<1x1x14x20x4xbf16, #tpu.memory_space<vmem>>, vector<1x1x10x16x4xbf16>
    %9 = vector.shape_cast %8 : vector<1x1x10x16x4xbf16> to vector<10x16x4xbf16>
    %10 = vector.shape_cast %9 : vector<10x16x4xbf16> to vector<160x4xbf16>
    %c1_12 = arith.constant 1 : index
    %c0_13 = arith.constant 0 : index
    %c0_14 = arith.constant 0 : index
    %11 = vector.load %arg3[%c1_12, %c0_13, %c0_14] : memref<25x4x32xbf16, #tpu.memory_space<vmem>>, vector<1x4x32xbf16>
    %12 = vector.shape_cast %11 : vector<1x4x32xbf16> to vector<4x32xbf16>
    %cst_15 = arith.constant dense<0.000000e+00> : vector<160x32xf32>
    %13 = tpu.matmul %10, %12, %cst_15 {dimension_numbers = #tpu.dot_dimension_numbers<[1], [0], [0], [1], [0, 0, 1, 1], [], []>} : vector<160x4xbf16>, vector<4x32xbf16>, vector<160x32xf32> -> vector<160x32xf32>
    %14 = arith.addf %7, %13 : vector<160x32xf32>
    %c0_16 = arith.constant 0 : index
    %c0_17 = arith.constant 0 : index
    %c0_18 = arith.constant 0 : index
    %c2 = arith.constant 2 : index
    %c0_19 = arith.constant 0 : index
    %15 = vector.load %arg2[%c0_16, %c0_17, %c0_18, %c2, %c0_19] : memref<1x1x14x20x4xbf16, #tpu.memory_space<vmem>>, vector<1x1x10x16x4xbf16>
    %16 = vector.shape_cast %15 : vector<1x1x10x16x4xbf16> to vector<10x16x4xbf16>
    %17 = vector.shape_cast %16 : vector<10x16x4xbf16> to vector<160x4xbf16>
    %c2_20 = arith.constant 2 : index
    %c0_21 = arith.constant 0 : index
    %c0_22 = arith.constant 0 : index
    %18 = vector.load %arg3[%c2_20, %c0_21, %c0_22] : memref<25x4x32xbf16, #tpu.memory_space<vmem>>, vector<1x4x32xbf16>
    %19 = vector.shape_cast %18 : vector<1x4x32xbf16> to vector<4x32xbf16>
    %cst_23 = arith.constant dense<0.000000e+00> : vector<160x32xf32>
    %20 = tpu.matmul %17, %19, %cst_23 {dimension_numbers = #tpu.dot_dimension_numbers<[1], [0], [0], [1], [0, 0, 1, 1], [], []>} : vector<160x4xbf16>, vector<4x32xbf16>, vector<160x32xf32> -> vector<160x32xf32>
    %21 = arith.addf %14, %20 : vector<160x32xf32>
    %c0_24 = arith.constant 0 : index
    %c0_25 = arith.constant 0 : index
    %c0_26 = arith.constant 0 : index
    %c3 = arith.constant 3 : index
    %c0_27 = arith.constant 0 : index
    %22 = vector.load %arg2[%c0_24, %c0_25, %c0_26, %c3, %c0_27] : memref<1x1x14x20x4xbf16, #tpu.memory_space<vmem>>, vector<1x1x10x16x4xbf16>
    %23 = vector.shape_cast %22 : vector<1x1x10x16x4xbf16> to vector<10x16x4xbf16>
    %24 = vector.shape_cast %23 : vector<10x16x4xbf16> to vector<160x4xbf16>
    %c3_28 = arith.constant 3 : index
    %c0_29 = arith.constant 0 : index
    %c0_30 = arith.constant 0 : index
    %25 = vector.load %arg3[%c3_28, %c0_29, %c0_30] : memref<25x4x32xbf16, #tpu.memory_space<vmem>>, vector<1x4x32xbf16>
    %26 = vector.shape_cast %25 : vector<1x4x32xbf16> to vector<4x32xbf16>
    %cst_31 = arith.constant dense<0.000000e+00> : vector<160x32xf32>
    %27 = tpu.matmul %24, %26, %cst_31 {dimension_numbers = #tpu.dot_dimension_numbers<[1], [0], [0], [1], [0, 0, 1, 1], [], []>} : vector<160x4xbf16>, vector<4x32xbf16>, vector<160x32xf32> -> vector<160x32xf32>
    %28 = arith.addf %21, %27 : vector<160x32xf32>
    %c0_32 = arith.constant 0 : index
    %c0_33 = arith.constant 0 : index
    %c0_34 = arith.constant 0 : index
    %c4 = arith.constant 4 : index
    %c0_35 = arith.constant 0 : index
    %29 = vector.load %arg2[%c0_32, %c0_33, %c0_34, %c4, %c0_35] : memref<1x1x14x20x4xbf16, #tpu.memory_space<vmem>>, vector<1x1x10x16x4xbf16>
    %30 = vector.shape_cast %29 : vector<1x1x10x16x4xbf16> to vector<10x16x4xbf16>
    %31 = vector.shape_cast %30 : vector<10x16x4xbf16> to vector<160x4xbf16>
    %c4_36 = arith.constant 4 : index
    %c0_37 = arith.constant 0 : index
    %c0_38 = arith.constant 0 : index
    %32 = vector.load %arg3[%c4_36, %c0_37, %c0_38] : memref<25x4x32xbf16, #tpu.memory_space<vmem>>, vector<1x4x32xbf16>
    %33 = vector.shape_cast %32 : vector<1x4x32xbf16> to vector<4x32xbf16>
    %cst_39 = arith.constant dense<0.000000e+00> : vector<160x32xf32>
    %34 = tpu.matmul %31, %33, %cst_39 {dimension_numbers = #tpu.dot_dimension_numbers<[1], [0], [0], [1], [0, 0, 1, 1], [], []>} : vector<160x4xbf16>, vector<4x32xbf16>, vector<160x32xf32> -> vector<160x32xf32>
    %35 = arith.addf %28, %34 : vector<160x32xf32>
    %c0_40 = arith.constant 0 : index
    %c0_41 = arith.constant 0 : index
    %c1_42 = arith.constant 1 : index
    %c0_43 = arith.constant 0 : index
    %c0_44 = arith.constant 0 : index
    %36 = vector.load %arg2[%c0_40, %c0_41, %c1_42, %c0_43, %c0_44] : memref<1x1x14x20x4xbf16, #tpu.memory_space<vmem>>, vector<1x1x10x16x4xbf16>
    %37 = vector.shape_cast %36 : vector<1x1x10x16x4xbf16> to vector<10x16x4xbf16>
    %38 = vector.shape_cast %37 : vector<10x16x4xbf16> to vector<160x4xbf16>
    %c5 = arith.constant 5 : index
    %c0_45 = arith.constant 0 : index
    %c0_46 = arith.constant 0 : index
    %39 = vector.load %arg3[%c5, %c0_45, %c0_46] : memref<25x4x32xbf16, #tpu.memory_space<vmem>>, vector<1x4x32xbf16>
    %40 = vector.shape_cast %39 : vector<1x4x32xbf16> to vector<4x32xbf16>
    %cst_47 = arith.constant dense<0.000000e+00> : vector<160x32xf32>
    %41 = tpu.matmul %38, %40, %cst_47 {dimension_numbers = #tpu.dot_dimension_numbers<[1], [0], [0], [1], [0, 0, 1, 1], [], []>} : vector<160x4xbf16>, vector<4x32xbf16>, vector<160x32xf32> -> vector<160x32xf32>
    %42 = arith.addf %35, %41 : vector<160x32xf32>
    %c0_48 = arith.constant 0 : index
    %c0_49 = arith.constant 0 : index
    %c1_50 = arith.constant 1 : index
    %c1_51 = arith.constant 1 : index
    %c0_52 = arith.constant 0 : index
    %43 = vector.load %arg2[%c0_48, %c0_49, %c1_50, %c1_51, %c0_52] : memref<1x1x14x20x4xbf16, #tpu.memory_space<vmem>>, vector<1x1x10x16x4xbf16>
    %44 = vector.shape_cast %43 : vector<1x1x10x16x4xbf16> to vector<10x16x4xbf16>
    %45 = vector.shape_cast %44 : vector<10x16x4xbf16> to vector<160x4xbf16>
    %c6 = arith.constant 6 : index
    %c0_53 = arith.constant 0 : index
    %c0_54 = arith.constant 0 : index
    %46 = vector.load %arg3[%c6, %c0_53, %c0_54] : memref<25x4x32xbf16, #tpu.memory_space<vmem>>, vector<1x4x32xbf16>
    %47 = vector.shape_cast %46 : vector<1x4x32xbf16> to vector<4x32xbf16>
    %cst_55 = arith.constant dense<0.000000e+00> : vector<160x32xf32>
    %48 = tpu.matmul %45, %47, %cst_55 {dimension_numbers = #tpu.dot_dimension_numbers<[1], [0], [0], [1], [0, 0, 1, 1], [], []>} : vector<160x4xbf16>, vector<4x32xbf16>, vector<160x32xf32> -> vector<160x32xf32>
    %49 = arith.addf %42, %48 : vector<160x32xf32>
    %c0_56 = arith.constant 0 : index
    %c0_57 = arith.constant 0 : index
    %c1_58 = arith.constant 1 : index
    %c2_59 = arith.constant 2 : index
    %c0_60 = arith.constant 0 : index
    %50 = vector.load %arg2[%c0_56, %c0_57, %c1_58, %c2_59, %c0_60] : memref<1x1x14x20x4xbf16, #tpu.memory_space<vmem>>, vector<1x1x10x16x4xbf16>
    %51 = vector.shape_cast %50 : vector<1x1x10x16x4xbf16> to vector<10x16x4xbf16>
    %52 = vector.shape_cast %51 : vector<10x16x4xbf16> to vector<160x4xbf16>
    %c7 = arith.constant 7 : index
    %c0_61 = arith.constant 0 : index
    %c0_62 = arith.constant 0 : index
    %53 = vector.load %arg3[%c7, %c0_61, %c0_62] : memref<25x4x32xbf16, #tpu.memory_space<vmem>>, vector<1x4x32xbf16>
    %54 = vector.shape_cast %53 : vector<1x4x32xbf16> to vector<4x32xbf16>
    %cst_63 = arith.constant dense<0.000000e+00> : vector<160x32xf32>
    %55 = tpu.matmul %52, %54, %cst_63 {dimension_numbers = #tpu.dot_dimension_numbers<[1], [0], [0], [1], [0, 0, 1, 1], [], []>} : vector<160x4xbf16>, vector<4x32xbf16>, vector<160x32xf32> -> vector<160x32xf32>
    %56 = arith.addf %49, %55 : vector<160x32xf32>
    %c0_64 = arith.constant 0 : index
    %c0_65 = arith.constant 0 : index
    %c1_66 = arith.constant 1 : index
    %c3_67 = arith.constant 3 : index
    %c0_68 = arith.constant 0 : index
    %57 = vector.load %arg2[%c0_64, %c0_65, %c1_66, %c3_67, %c0_68] : memref<1x1x14x20x4xbf16, #tpu.memory_space<vmem>>, vector<1x1x10x16x4xbf16>
    %58 = vector.shape_cast %57 : vector<1x1x10x16x4xbf16> to vector<10x16x4xbf16>
    %59 = vector.shape_cast %58 : vector<10x16x4xbf16> to vector<160x4xbf16>
    %c8 = arith.constant 8 : index
    %c0_69 = arith.constant 0 : index
    %c0_70 = arith.constant 0 : index
    %60 = vector.load %arg3[%c8, %c0_69, %c0_70] : memref<25x4x32xbf16, #tpu.memory_space<vmem>>, vector<1x4x32xbf16>
    %61 = vector.shape_cast %60 : vector<1x4x32xbf16> to vector<4x32xbf16>
    %cst_71 = arith.constant dense<0.000000e+00> : vector<160x32xf32>
    %62 = tpu.matmul %59, %61, %cst_71 {dimension_numbers = #tpu.dot_dimension_numbers<[1], [0], [0], [1], [0, 0, 1, 1], [], []>} : vector<160x4xbf16>, vector<4x32xbf16>, vector<160x32xf32> -> vector<160x32xf32>
    %63 = arith.addf %56, %62 : vector<160x32xf32>
    %c0_72 = arith.constant 0 : index
    %c0_73 = arith.constant 0 : index
    %c1_74 = arith.constant 1 : index
    %c4_75 = arith.constant 4 : index
    %c0_76 = arith.constant 0 : index
    %64 = vector.load %arg2[%c0_72, %c0_73, %c1_74, %c4_75, %c0_76] : memref<1x1x14x20x4xbf16, #tpu.memory_space<vmem>>, vector<1x1x10x16x4xbf16>
    %65 = vector.shape_cast %64 : vector<1x1x10x16x4xbf16> to vector<10x16x4xbf16>
    %66 = vector.shape_cast %65 : vector<10x16x4xbf16> to vector<160x4xbf16>
    %c9 = arith.constant 9 : index
    %c0_77 = arith.constant 0 : index
    %c0_78 = arith.constant 0 : index
    %67 = vector.load %arg3[%c9, %c0_77, %c0_78] : memref<25x4x32xbf16, #tpu.memory_space<vmem>>, vector<1x4x32xbf16>
    %68 = vector.shape_cast %67 : vector<1x4x32xbf16> to vector<4x32xbf16>
    %cst_79 = arith.constant dense<0.000000e+00> : vector<160x32xf32>
    %69 = tpu.matmul %66, %68, %cst_79 {dimension_numbers = #tpu.dot_dimension_numbers<[1], [0], [0], [1], [0, 0, 1, 1], [], []>} : vector<160x4xbf16>, vector<4x32xbf16>, vector<160x32xf32> -> vector<160x32xf32>
    %70 = arith.addf %63, %69 : vector<160x32xf32>
    %c0_80 = arith.constant 0 : index
    %c0_81 = arith.constant 0 : index
    %c2_82 = arith.constant 2 : index
    %c0_83 = arith.constant 0 : index
    %c0_84 = arith.constant 0 : index
    %71 = vector.load %arg2[%c0_80, %c0_81, %c2_82, %c0_83, %c0_84] : memref<1x1x14x20x4xbf16, #tpu.memory_space<vmem>>, vector<1x1x10x16x4xbf16>
    %72 = vector.shape_cast %71 : vector<1x1x10x16x4xbf16> to vector<10x16x4xbf16>
    %73 = vector.shape_cast %72 : vector<10x16x4xbf16> to vector<160x4xbf16>
    %c10 = arith.constant 10 : index
    %c0_85 = arith.constant 0 : index
    %c0_86 = arith.constant 0 : index
    %74 = vector.load %arg3[%c10, %c0_85, %c0_86] : memref<25x4x32xbf16, #tpu.memory_space<vmem>>, vector<1x4x32xbf16>
    %75 = vector.shape_cast %74 : vector<1x4x32xbf16> to vector<4x32xbf16>
    %cst_87 = arith.constant dense<0.000000e+00> : vector<160x32xf32>
    %76 = tpu.matmul %73, %75, %cst_87 {dimension_numbers = #tpu.dot_dimension_numbers<[1], [0], [0], [1], [0, 0, 1, 1], [], []>} : vector<160x4xbf16>, vector<4x32xbf16>, vector<160x32xf32> -> vector<160x32xf32>
    %77 = arith.addf %70, %76 : vector<160x32xf32>
    %c0_88 = arith.constant 0 : index
    %c0_89 = arith.constant 0 : index
    %c2_90 = arith.constant 2 : index
    %c1_91 = arith.constant 1 : index
    %c0_92 = arith.constant 0 : index
    %78 = vector.load %arg2[%c0_88, %c0_89, %c2_90, %c1_91, %c0_92] : memref<1x1x14x20x4xbf16, #tpu.memory_space<vmem>>, vector<1x1x10x16x4xbf16>
    %79 = vector.shape_cast %78 : vector<1x1x10x16x4xbf16> to vector<10x16x4xbf16>
    %80 = vector.shape_cast %79 : vector<10x16x4xbf16> to vector<160x4xbf16>
    %c11 = arith.constant 11 : index
    %c0_93 = arith.constant 0 : index
    %c0_94 = arith.constant 0 : index
    %81 = vector.load %arg3[%c11, %c0_93, %c0_94] : memref<25x4x32xbf16, #tpu.memory_space<vmem>>, vector<1x4x32xbf16>
    %82 = vector.shape_cast %81 : vector<1x4x32xbf16> to vector<4x32xbf16>
    %cst_95 = arith.constant dense<0.000000e+00> : vector<160x32xf32>
    %83 = tpu.matmul %80, %82, %cst_95 {dimension_numbers = #tpu.dot_dimension_numbers<[1], [0], [0], [1], [0, 0, 1, 1], [], []>} : vector<160x4xbf16>, vector<4x32xbf16>, vector<160x32xf32> -> vector<160x32xf32>
    %84 = arith.addf %77, %83 : vector<160x32xf32>
    %c0_96 = arith.constant 0 : index
    %c0_97 = arith.constant 0 : index
    %c2_98 = arith.constant 2 : index
    %c2_99 = arith.constant 2 : index
    %c0_100 = arith.constant 0 : index
    %85 = vector.load %arg2[%c0_96, %c0_97, %c2_98, %c2_99, %c0_100] : memref<1x1x14x20x4xbf16, #tpu.memory_space<vmem>>, vector<1x1x10x16x4xbf16>
    %86 = vector.shape_cast %85 : vector<1x1x10x16x4xbf16> to vector<10x16x4xbf16>
    %87 = vector.shape_cast %86 : vector<10x16x4xbf16> to vector<160x4xbf16>
    %c12 = arith.constant 12 : index
    %c0_101 = arith.constant 0 : index
    %c0_102 = arith.constant 0 : index
    %88 = vector.load %arg3[%c12, %c0_101, %c0_102] : memref<25x4x32xbf16, #tpu.memory_space<vmem>>, vector<1x4x32xbf16>
    %89 = vector.shape_cast %88 : vector<1x4x32xbf16> to vector<4x32xbf16>
    %cst_103 = arith.constant dense<0.000000e+00> : vector<160x32xf32>
    %90 = tpu.matmul %87, %89, %cst_103 {dimension_numbers = #tpu.dot_dimension_numbers<[1], [0], [0], [1], [0, 0, 1, 1], [], []>} : vector<160x4xbf16>, vector<4x32xbf16>, vector<160x32xf32> -> vector<160x32xf32>
    %91 = arith.addf %84, %90 : vector<160x32xf32>
    %c0_104 = arith.constant 0 : index
    %c0_105 = arith.constant 0 : index
    %c2_106 = arith.constant 2 : index
    %c3_107 = arith.constant 3 : index
    %c0_108 = arith.constant 0 : index
    %92 = vector.load %arg2[%c0_104, %c0_105, %c2_106, %c3_107, %c0_108] : memref<1x1x14x20x4xbf16, #tpu.memory_space<vmem>>, vector<1x1x10x16x4xbf16>
    %93 = vector.shape_cast %92 : vector<1x1x10x16x4xbf16> to vector<10x16x4xbf16>
    %94 = vector.shape_cast %93 : vector<10x16x4xbf16> to vector<160x4xbf16>
    %c13 = arith.constant 13 : index
    %c0_109 = arith.constant 0 : index
    %c0_110 = arith.constant 0 : index
    %95 = vector.load %arg3[%c13, %c0_109, %c0_110] : memref<25x4x32xbf16, #tpu.memory_space<vmem>>, vector<1x4x32xbf16>
    %96 = vector.shape_cast %95 : vector<1x4x32xbf16> to vector<4x32xbf16>
    %cst_111 = arith.constant dense<0.000000e+00> : vector<160x32xf32>
    %97 = tpu.matmul %94, %96, %cst_111 {dimension_numbers = #tpu.dot_dimension_numbers<[1], [0], [0], [1], [0, 0, 1, 1], [], []>} : vector<160x4xbf16>, vector<4x32xbf16>, vector<160x32xf32> -> vector<160x32xf32>
    %98 = arith.addf %91, %97 : vector<160x32xf32>
    %c0_112 = arith.constant 0 : index
    %c0_113 = arith.constant 0 : index
    %c2_114 = arith.constant 2 : index
    %c4_115 = arith.constant 4 : index
    %c0_116 = arith.constant 0 : index
    %99 = vector.load %arg2[%c0_112, %c0_113, %c2_114, %c4_115, %c0_116] : memref<1x1x14x20x4xbf16, #tpu.memory_space<vmem>>, vector<1x1x10x16x4xbf16>
    %100 = vector.shape_cast %99 : vector<1x1x10x16x4xbf16> to vector<10x16x4xbf16>
    %101 = vector.shape_cast %100 : vector<10x16x4xbf16> to vector<160x4xbf16>
    %c14 = arith.constant 14 : index
    %c0_117 = arith.constant 0 : index
    %c0_118 = arith.constant 0 : index
    %102 = vector.load %arg3[%c14, %c0_117, %c0_118] : memref<25x4x32xbf16, #tpu.memory_space<vmem>>, vector<1x4x32xbf16>
    %103 = vector.shape_cast %102 : vector<1x4x32xbf16> to vector<4x32xbf16>
    %cst_119 = arith.constant dense<0.000000e+00> : vector<160x32xf32>
    %104 = tpu.matmul %101, %103, %cst_119 {dimension_numbers = #tpu.dot_dimension_numbers<[1], [0], [0], [1], [0, 0, 1, 1], [], []>} : vector<160x4xbf16>, vector<4x32xbf16>, vector<160x32xf32> -> vector<160x32xf32>
    %105 = arith.addf %98, %104 : vector<160x32xf32>
    %c0_120 = arith.constant 0 : index
    %c0_121 = arith.constant 0 : index
    %c3_122 = arith.constant 3 : index
    %c0_123 = arith.constant 0 : index
    %c0_124 = arith.constant 0 : index
    %106 = vector.load %arg2[%c0_120, %c0_121, %c3_122, %c0_123, %c0_124] : memref<1x1x14x20x4xbf16, #tpu.memory_space<vmem>>, vector<1x1x10x16x4xbf16>
    %107 = vector.shape_cast %106 : vector<1x1x10x16x4xbf16> to vector<10x16x4xbf16>
    %108 = vector.shape_cast %107 : vector<10x16x4xbf16> to vector<160x4xbf16>
    %c15 = arith.constant 15 : index
    %c0_125 = arith.constant 0 : index
    %c0_126 = arith.constant 0 : index
    %109 = vector.load %arg3[%c15, %c0_125, %c0_126] : memref<25x4x32xbf16, #tpu.memory_space<vmem>>, vector<1x4x32xbf16>
    %110 = vector.shape_cast %109 : vector<1x4x32xbf16> to vector<4x32xbf16>
    %cst_127 = arith.constant dense<0.000000e+00> : vector<160x32xf32>
    %111 = tpu.matmul %108, %110, %cst_127 {dimension_numbers = #tpu.dot_dimension_numbers<[1], [0], [0], [1], [0, 0, 1, 1], [], []>} : vector<160x4xbf16>, vector<4x32xbf16>, vector<160x32xf32> -> vector<160x32xf32>
    %112 = arith.addf %105, %111 : vector<160x32xf32>
    %c0_128 = arith.constant 0 : index
    %c0_129 = arith.constant 0 : index
    %c3_130 = arith.constant 3 : index
    %c1_131 = arith.constant 1 : index
    %c0_132 = arith.constant 0 : index
    %113 = vector.load %arg2[%c0_128, %c0_129, %c3_130, %c1_131, %c0_132] : memref<1x1x14x20x4xbf16, #tpu.memory_space<vmem>>, vector<1x1x10x16x4xbf16>
    %114 = vector.shape_cast %113 : vector<1x1x10x16x4xbf16> to vector<10x16x4xbf16>
    %115 = vector.shape_cast %114 : vector<10x16x4xbf16> to vector<160x4xbf16>
    %c16 = arith.constant 16 : index
    %c0_133 = arith.constant 0 : index
    %c0_134 = arith.constant 0 : index
    %116 = vector.load %arg3[%c16, %c0_133, %c0_134] : memref<25x4x32xbf16, #tpu.memory_space<vmem>>, vector<1x4x32xbf16>
    %117 = vector.shape_cast %116 : vector<1x4x32xbf16> to vector<4x32xbf16>
    %cst_135 = arith.constant dense<0.000000e+00> : vector<160x32xf32>
    %118 = tpu.matmul %115, %117, %cst_135 {dimension_numbers = #tpu.dot_dimension_numbers<[1], [0], [0], [1], [0, 0, 1, 1], [], []>} : vector<160x4xbf16>, vector<4x32xbf16>, vector<160x32xf32> -> vector<160x32xf32>
    %119 = arith.addf %112, %118 : vector<160x32xf32>
    %c0_136 = arith.constant 0 : index
    %c0_137 = arith.constant 0 : index
    %c3_138 = arith.constant 3 : index
    %c2_139 = arith.constant 2 : index
    %c0_140 = arith.constant 0 : index
    %120 = vector.load %arg2[%c0_136, %c0_137, %c3_138, %c2_139, %c0_140] : memref<1x1x14x20x4xbf16, #tpu.memory_space<vmem>>, vector<1x1x10x16x4xbf16>
    %121 = vector.shape_cast %120 : vector<1x1x10x16x4xbf16> to vector<10x16x4xbf16>
    %122 = vector.shape_cast %121 : vector<10x16x4xbf16> to vector<160x4xbf16>
    %c17 = arith.constant 17 : index
    %c0_141 = arith.constant 0 : index
    %c0_142 = arith.constant 0 : index
    %123 = vector.load %arg3[%c17, %c0_141, %c0_142] : memref<25x4x32xbf16, #tpu.memory_space<vmem>>, vector<1x4x32xbf16>
    %124 = vector.shape_cast %123 : vector<1x4x32xbf16> to vector<4x32xbf16>
    %cst_143 = arith.constant dense<0.000000e+00> : vector<160x32xf32>
    %125 = tpu.matmul %122, %124, %cst_143 {dimension_numbers = #tpu.dot_dimension_numbers<[1], [0], [0], [1], [0, 0, 1, 1], [], []>} : vector<160x4xbf16>, vector<4x32xbf16>, vector<160x32xf32> -> vector<160x32xf32>
    %126 = arith.addf %119, %125 : vector<160x32xf32>
    %c0_144 = arith.constant 0 : index
    %c0_145 = arith.constant 0 : index
    %c3_146 = arith.constant 3 : index
    %c3_147 = arith.constant 3 : index
    %c0_148 = arith.constant 0 : index
    %127 = vector.load %arg2[%c0_144, %c0_145, %c3_146, %c3_147, %c0_148] : memref<1x1x14x20x4xbf16, #tpu.memory_space<vmem>>, vector<1x1x10x16x4xbf16>
    %128 = vector.shape_cast %127 : vector<1x1x10x16x4xbf16> to vector<10x16x4xbf16>
    %129 = vector.shape_cast %128 : vector<10x16x4xbf16> to vector<160x4xbf16>
    %c18 = arith.constant 18 : index
    %c0_149 = arith.constant 0 : index
    %c0_150 = arith.constant 0 : index
    %130 = vector.load %arg3[%c18, %c0_149, %c0_150] : memref<25x4x32xbf16, #tpu.memory_space<vmem>>, vector<1x4x32xbf16>
    %131 = vector.shape_cast %130 : vector<1x4x32xbf16> to vector<4x32xbf16>
    %cst_151 = arith.constant dense<0.000000e+00> : vector<160x32xf32>
    %132 = tpu.matmul %129, %131, %cst_151 {dimension_numbers = #tpu.dot_dimension_numbers<[1], [0], [0], [1], [0, 0, 1, 1], [], []>} : vector<160x4xbf16>, vector<4x32xbf16>, vector<160x32xf32> -> vector<160x32xf32>
    %133 = arith.addf %126, %132 : vector<160x32xf32>
    %c0_152 = arith.constant 0 : index
    %c0_153 = arith.constant 0 : index
    %c3_154 = arith.constant 3 : index
    %c4_155 = arith.constant 4 : index
    %c0_156 = arith.constant 0 : index
    %134 = vector.load %arg2[%c0_152, %c0_153, %c3_154, %c4_155, %c0_156] : memref<1x1x14x20x4xbf16, #tpu.memory_space<vmem>>, vector<1x1x10x16x4xbf16>
    %135 = vector.shape_cast %134 : vector<1x1x10x16x4xbf16> to vector<10x16x4xbf16>
    %136 = vector.shape_cast %135 : vector<10x16x4xbf16> to vector<160x4xbf16>
    %c19 = arith.constant 19 : index
    %c0_157 = arith.constant 0 : index
    %c0_158 = arith.constant 0 : index
    %137 = vector.load %arg3[%c19, %c0_157, %c0_158] : memref<25x4x32xbf16, #tpu.memory_space<vmem>>, vector<1x4x32xbf16>
    %138 = vector.shape_cast %137 : vector<1x4x32xbf16> to vector<4x32xbf16>
    %cst_159 = arith.constant dense<0.000000e+00> : vector<160x32xf32>
    %139 = tpu.matmul %136, %138, %cst_159 {dimension_numbers = #tpu.dot_dimension_numbers<[1], [0], [0], [1], [0, 0, 1, 1], [], []>} : vector<160x4xbf16>, vector<4x32xbf16>, vector<160x32xf32> -> vector<160x32xf32>
    %140 = arith.addf %133, %139 : vector<160x32xf32>
    %c0_160 = arith.constant 0 : index
    %c0_161 = arith.constant 0 : index
    %c4_162 = arith.constant 4 : index
    %c0_163 = arith.constant 0 : index
    %c0_164 = arith.constant 0 : index
    %141 = vector.load %arg2[%c0_160, %c0_161, %c4_162, %c0_163, %c0_164] : memref<1x1x14x20x4xbf16, #tpu.memory_space<vmem>>, vector<1x1x10x16x4xbf16>
    %142 = vector.shape_cast %141 : vector<1x1x10x16x4xbf16> to vector<10x16x4xbf16>
    %143 = vector.shape_cast %142 : vector<10x16x4xbf16> to vector<160x4xbf16>
    %c20 = arith.constant 20 : index
    %c0_165 = arith.constant 0 : index
    %c0_166 = arith.constant 0 : index
    %144 = vector.load %arg3[%c20, %c0_165, %c0_166] : memref<25x4x32xbf16, #tpu.memory_space<vmem>>, vector<1x4x32xbf16>
    %145 = vector.shape_cast %144 : vector<1x4x32xbf16> to vector<4x32xbf16>
    %cst_167 = arith.constant dense<0.000000e+00> : vector<160x32xf32>
    %146 = tpu.matmul %143, %145, %cst_167 {dimension_numbers = #tpu.dot_dimension_numbers<[1], [0], [0], [1], [0, 0, 1, 1], [], []>} : vector<160x4xbf16>, vector<4x32xbf16>, vector<160x32xf32> -> vector<160x32xf32>
    %147 = arith.addf %140, %146 : vector<160x32xf32>
    %c0_168 = arith.constant 0 : index
    %c0_169 = arith.constant 0 : index
    %c4_170 = arith.constant 4 : index
    %c1_171 = arith.constant 1 : index
    %c0_172 = arith.constant 0 : index
    %148 = vector.load %arg2[%c0_168, %c0_169, %c4_170, %c1_171, %c0_172] : memref<1x1x14x20x4xbf16, #tpu.memory_space<vmem>>, vector<1x1x10x16x4xbf16>
    %149 = vector.shape_cast %148 : vector<1x1x10x16x4xbf16> to vector<10x16x4xbf16>
    %150 = vector.shape_cast %149 : vector<10x16x4xbf16> to vector<160x4xbf16>
    %c21 = arith.constant 21 : index
    %c0_173 = arith.constant 0 : index
    %c0_174 = arith.constant 0 : index
    %151 = vector.load %arg3[%c21, %c0_173, %c0_174] : memref<25x4x32xbf16, #tpu.memory_space<vmem>>, vector<1x4x32xbf16>
    %152 = vector.shape_cast %151 : vector<1x4x32xbf16> to vector<4x32xbf16>
    %cst_175 = arith.constant dense<0.000000e+00> : vector<160x32xf32>
    %153 = tpu.matmul %150, %152, %cst_175 {dimension_numbers = #tpu.dot_dimension_numbers<[1], [0], [0], [1], [0, 0, 1, 1], [], []>} : vector<160x4xbf16>, vector<4x32xbf16>, vector<160x32xf32> -> vector<160x32xf32>
    %154 = arith.addf %147, %153 : vector<160x32xf32>
    %c0_176 = arith.constant 0 : index
    %c0_177 = arith.constant 0 : index
    %c4_178 = arith.constant 4 : index
    %c2_179 = arith.constant 2 : index
    %c0_180 = arith.constant 0 : index
    %155 = vector.load %arg2[%c0_176, %c0_177, %c4_178, %c2_179, %c0_180] : memref<1x1x14x20x4xbf16, #tpu.memory_space<vmem>>, vector<1x1x10x16x4xbf16>
    %156 = vector.shape_cast %155 : vector<1x1x10x16x4xbf16> to vector<10x16x4xbf16>
    %157 = vector.shape_cast %156 : vector<10x16x4xbf16> to vector<160x4xbf16>
    %c22 = arith.constant 22 : index
    %c0_181 = arith.constant 0 : index
    %c0_182 = arith.constant 0 : index
    %158 = vector.load %arg3[%c22, %c0_181, %c0_182] : memref<25x4x32xbf16, #tpu.memory_space<vmem>>, vector<1x4x32xbf16>
    %159 = vector.shape_cast %158 : vector<1x4x32xbf16> to vector<4x32xbf16>
    %cst_183 = arith.constant dense<0.000000e+00> : vector<160x32xf32>
    %160 = tpu.matmul %157, %159, %cst_183 {dimension_numbers = #tpu.dot_dimension_numbers<[1], [0], [0], [1], [0, 0, 1, 1], [], []>} : vector<160x4xbf16>, vector<4x32xbf16>, vector<160x32xf32> -> vector<160x32xf32>
    %161 = arith.addf %154, %160 : vector<160x32xf32>
    %c0_184 = arith.constant 0 : index
    %c0_185 = arith.constant 0 : index
    %c4_186 = arith.constant 4 : index
    %c3_187 = arith.constant 3 : index
    %c0_188 = arith.constant 0 : index
    %162 = vector.load %arg2[%c0_184, %c0_185, %c4_186, %c3_187, %c0_188] : memref<1x1x14x20x4xbf16, #tpu.memory_space<vmem>>, vector<1x1x10x16x4xbf16>
    %163 = vector.shape_cast %162 : vector<1x1x10x16x4xbf16> to vector<10x16x4xbf16>
    %164 = vector.shape_cast %163 : vector<10x16x4xbf16> to vector<160x4xbf16>
    %c23 = arith.constant 23 : index
    %c0_189 = arith.constant 0 : index
    %c0_190 = arith.constant 0 : index
    %165 = vector.load %arg3[%c23, %c0_189, %c0_190] : memref<25x4x32xbf16, #tpu.memory_space<vmem>>, vector<1x4x32xbf16>
    %166 = vector.shape_cast %165 : vector<1x4x32xbf16> to vector<4x32xbf16>
    %cst_191 = arith.constant dense<0.000000e+00> : vector<160x32xf32>
    %167 = tpu.matmul %164, %166, %cst_191 {dimension_numbers = #tpu.dot_dimension_numbers<[1], [0], [0], [1], [0, 0, 1, 1], [], []>} : vector<160x4xbf16>, vector<4x32xbf16>, vector<160x32xf32> -> vector<160x32xf32>
    %168 = arith.addf %161, %167 : vector<160x32xf32>
    %c0_192 = arith.constant 0 : index
    %c0_193 = arith.constant 0 : index
    %c4_194 = arith.constant 4 : index
    %c4_195 = arith.constant 4 : index
    %c0_196 = arith.constant 0 : index
    %169 = vector.load %arg2[%c0_192, %c0_193, %c4_194, %c4_195, %c0_196] : memref<1x1x14x20x4xbf16, #tpu.memory_space<vmem>>, vector<1x1x10x16x4xbf16>
    %170 = vector.shape_cast %169 : vector<1x1x10x16x4xbf16> to vector<10x16x4xbf16>
    %171 = vector.shape_cast %170 : vector<10x16x4xbf16> to vector<160x4xbf16>
    %c24 = arith.constant 24 : index
    %c0_197 = arith.constant 0 : index
    %c0_198 = arith.constant 0 : index
    %172 = vector.load %arg3[%c24, %c0_197, %c0_198] : memref<25x4x32xbf16, #tpu.memory_space<vmem>>, vector<1x4x32xbf16>
    %173 = vector.shape_cast %172 : vector<1x4x32xbf16> to vector<4x32xbf16>
    %cst_199 = arith.constant dense<0.000000e+00> : vector<160x32xf32>
    %174 = tpu.matmul %171, %173, %cst_199 {dimension_numbers = #tpu.dot_dimension_numbers<[1], [0], [0], [1], [0, 0, 1, 1], [], []>} : vector<160x4xbf16>, vector<4x32xbf16>, vector<160x32xf32> -> vector<160x32xf32>
    %175 = arith.addf %168, %174 : vector<160x32xf32>
    %c0_200 = arith.constant 0 : index
    %c0_201 = arith.constant 0 : index
    %176 = vector.load %arg4[%c0_200, %c0_201] : memref<1x32xf32, #tpu.memory_space<vmem>>, vector<1x32xf32>
    %177 = vector.broadcast %176 : vector<1x32xf32> to vector<160x32xf32>
    %178 = arith.addf %175, %177 : vector<160x32xf32>
    %179 = vector.shape_cast %178 : vector<160x32xf32> to vector<10x16x32xf32>
    %180 = arith.truncf %179 : vector<10x16x32xf32> to vector<10x16x32xbf16>
    %c0_202 = arith.constant 0 : index
    %c1_203 = arith.constant 1 : index
    %c0_204 = arith.constant 0 : index
    %181 = vector.load %arg8[%c0_202, %c1_203, %c0_204] : memref<10x18x32xbf16, #tpu.memory_space<vmem>>, vector<10x16x32xbf16>
    tpu.vector_store %arg8[%c0_202, %c1_203, %c0_204], %180 {strides = array<i32>} : memref<10x18x32xbf16, #tpu.memory_space<vmem>>, vector<10x16x32xbf16>,
    %cst_205 = arith.constant 0.000000e+00 : bf16
    %182 = vector.broadcast %cst_205 : bf16 to vector<10x1x32xbf16>
    %c0_206 = arith.constant 0 : index
    %c0_207 = arith.constant 0 : index
    %c0_208 = arith.constant 0 : index
    %183 = vector.load %arg8[%c0_206, %c0_207, %c0_208] : memref<10x18x32xbf16, #tpu.memory_space<vmem>>, vector<10x1x32xbf16>
    tpu.vector_store %arg8[%c0_206, %c0_207, %c0_208], %182 {strides = array<i32>} : memref<10x18x32xbf16, #tpu.memory_space<vmem>>, vector<10x1x32xbf16>,
    %c0_209 = arith.constant 0 : index
    %c17_210 = arith.constant 17 : index
    %c0_211 = arith.constant 0 : index
    %184 = vector.load %arg8[%c0_209, %c17_210, %c0_211] : memref<10x18x32xbf16, #tpu.memory_space<vmem>>, vector<10x1x32xbf16>
    tpu.vector_store %arg8[%c0_209, %c17_210, %c0_211], %182 {strides = array<i32>} : memref<10x18x32xbf16, #tpu.memory_space<vmem>>, vector<10x1x32xbf16>,
    %cst_212 = arith.constant 0.000000e+00 : bf16
    %185 = vector.broadcast %cst_212 : bf16 to vector<1x18x32xbf16>
    %c0_i32 = arith.constant 0 : i32
    %186 = arith.cmpi eq, %arg1, %c0_i32 : i32
    %187 = arith.extui %186 : i1 to i32
    %c0_i32_213 = arith.constant 0 : i32
    %188 = arith.cmpi ne, %187, %c0_i32_213 : i32
    scf.if %188 {
      %c0_285 = arith.constant 0 : index
      %c0_286 = arith.constant 0 : index
      %c0_287 = arith.constant 0 : index
      %253 = vector.load %arg8[%c0_285, %c0_286, %c0_287] : memref<10x18x32xbf16, #tpu.memory_space<vmem>>, vector<1x18x32xbf16>
      tpu.vector_store %arg8[%c0_285, %c0_286, %c0_287], %185 {strides = array<i32>} : memref<10x18x32xbf16, #tpu.memory_space<vmem>>, vector<1x18x32xbf16>,
    } else {
    }
    %c1_i32 = arith.constant 1 : i32
    %189 = arith.cmpi eq, %arg1, %c1_i32 : i32
    %190 = arith.extui %189 : i1 to i32
    %c0_i32_214 = arith.constant 0 : i32
    %191 = arith.cmpi ne, %190, %c0_i32_214 : i32
    scf.if %191 {
      %c9_285 = arith.constant 9 : index
      %c0_286 = arith.constant 0 : index
      %c0_287 = arith.constant 0 : index
      %253 = vector.load %arg8[%c9_285, %c0_286, %c0_287] : memref<10x18x32xbf16, #tpu.memory_space<vmem>>, vector<1x18x32xbf16>
      tpu.vector_store %arg8[%c9_285, %c0_286, %c0_287], %185 {strides = array<i32>} : memref<10x18x32xbf16, #tpu.memory_space<vmem>>, vector<1x18x32xbf16>,
    } else {
    }
    %cst_215 = arith.constant 0.000000e+00 : f32
    %192 = vector.broadcast %cst_215 : f32 to vector<128x32xf32>
    %c0_216 = arith.constant 0 : index
    %c0_217 = arith.constant 0 : index
    %c0_218 = arith.constant 0 : index
    %193 = vector.load %arg8[%c0_216, %c0_217, %c0_218] : memref<10x18x32xbf16, #tpu.memory_space<vmem>>, vector<8x16x32xbf16>
    %194 = vector.shape_cast %193 : vector<8x16x32xbf16> to vector<128x32xbf16>
    %c0_219 = arith.constant 0 : index
    %c0_220 = arith.constant 0 : index
    %c0_221 = arith.constant 0 : index
    %195 = vector.load %arg5[%c0_219, %c0_220, %c0_221] : memref<9x32x32xbf16, #tpu.memory_space<vmem>>, vector<1x32x32xbf16>
    %196 = vector.shape_cast %195 : vector<1x32x32xbf16> to vector<32x32xbf16>
    %cst_222 = arith.constant dense<0.000000e+00> : vector<128x32xf32>
    %197 = tpu.matmul %194, %196, %cst_222 {dimension_numbers = #tpu.dot_dimension_numbers<[1], [0], [0], [1], [0, 0, 1, 1], [], []>} : vector<128x32xbf16>, vector<32x32xbf16>, vector<128x32xf32> -> vector<128x32xf32>
    %198 = arith.addf %192, %197 : vector<128x32xf32>
    %c0_223 = arith.constant 0 : index
    %c1_224 = arith.constant 1 : index
    %c0_225 = arith.constant 0 : index
    %199 = vector.load %arg8[%c0_223, %c1_224, %c0_225] : memref<10x18x32xbf16, #tpu.memory_space<vmem>>, vector<8x16x32xbf16>
    %200 = vector.shape_cast %199 : vector<8x16x32xbf16> to vector<128x32xbf16>
    %c1_226 = arith.constant 1 : index
    %c0_227 = arith.constant 0 : index
    %c0_228 = arith.constant 0 : index
    %201 = vector.load %arg5[%c1_226, %c0_227, %c0_228] : memref<9x32x32xbf16, #tpu.memory_space<vmem>>, vector<1x32x32xbf16>
    %202 = vector.shape_cast %201 : vector<1x32x32xbf16> to vector<32x32xbf16>
    %cst_229 = arith.constant dense<0.000000e+00> : vector<128x32xf32>
    %203 = tpu.matmul %200, %202, %cst_229 {dimension_numbers = #tpu.dot_dimension_numbers<[1], [0], [0], [1], [0, 0, 1, 1], [], []>} : vector<128x32xbf16>, vector<32x32xbf16>, vector<128x32xf32> -> vector<128x32xf32>
    %204 = arith.addf %198, %203 : vector<128x32xf32>
    %c0_230 = arith.constant 0 : index
    %c2_231 = arith.constant 2 : index
    %c0_232 = arith.constant 0 : index
    %205 = vector.load %arg8[%c0_230, %c2_231, %c0_232] : memref<10x18x32xbf16, #tpu.memory_space<vmem>>, vector<8x16x32xbf16>
    %206 = vector.shape_cast %205 : vector<8x16x32xbf16> to vector<128x32xbf16>
    %c2_233 = arith.constant 2 : index
    %c0_234 = arith.constant 0 : index
    %c0_235 = arith.constant 0 : index
    %207 = vector.load %arg5[%c2_233, %c0_234, %c0_235] : memref<9x32x32xbf16, #tpu.memory_space<vmem>>, vector<1x32x32xbf16>
    %208 = vector.shape_cast %207 : vector<1x32x32xbf16> to vector<32x32xbf16>
    %cst_236 = arith.constant dense<0.000000e+00> : vector<128x32xf32>
    %209 = tpu.matmul %206, %208, %cst_236 {dimension_numbers = #tpu.dot_dimension_numbers<[1], [0], [0], [1], [0, 0, 1, 1], [], []>} : vector<128x32xbf16>, vector<32x32xbf16>, vector<128x32xf32> -> vector<128x32xf32>
    %210 = arith.addf %204, %209 : vector<128x32xf32>
    %c1_237 = arith.constant 1 : index
    %c0_238 = arith.constant 0 : index
    %c0_239 = arith.constant 0 : index
    %211 = vector.load %arg8[%c1_237, %c0_238, %c0_239] : memref<10x18x32xbf16, #tpu.memory_space<vmem>>, vector<8x16x32xbf16>
    %212 = vector.shape_cast %211 : vector<8x16x32xbf16> to vector<128x32xbf16>
    %c3_240 = arith.constant 3 : index
    %c0_241 = arith.constant 0 : index
    %c0_242 = arith.constant 0 : index
    %213 = vector.load %arg5[%c3_240, %c0_241, %c0_242] : memref<9x32x32xbf16, #tpu.memory_space<vmem>>, vector<1x32x32xbf16>
    %214 = vector.shape_cast %213 : vector<1x32x32xbf16> to vector<32x32xbf16>
    %cst_243 = arith.constant dense<0.000000e+00> : vector<128x32xf32>
    %215 = tpu.matmul %212, %214, %cst_243 {dimension_numbers = #tpu.dot_dimension_numbers<[1], [0], [0], [1], [0, 0, 1, 1], [], []>} : vector<128x32xbf16>, vector<32x32xbf16>, vector<128x32xf32> -> vector<128x32xf32>
    %216 = arith.addf %210, %215 : vector<128x32xf32>
    %c1_244 = arith.constant 1 : index
    %c1_245 = arith.constant 1 : index
    %c0_246 = arith.constant 0 : index
    %217 = vector.load %arg8[%c1_244, %c1_245, %c0_246] : memref<10x18x32xbf16, #tpu.memory_space<vmem>>, vector<8x16x32xbf16>
    %218 = vector.shape_cast %217 : vector<8x16x32xbf16> to vector<128x32xbf16>
    %c4_247 = arith.constant 4 : index
    %c0_248 = arith.constant 0 : index
    %c0_249 = arith.constant 0 : index
    %219 = vector.load %arg5[%c4_247, %c0_248, %c0_249] : memref<9x32x32xbf16, #tpu.memory_space<vmem>>, vector<1x32x32xbf16>
    %220 = vector.shape_cast %219 : vector<1x32x32xbf16> to vector<32x32xbf16>
    %cst_250 = arith.constant dense<0.000000e+00> : vector<128x32xf32>
    %221 = tpu.matmul %218, %220, %cst_250 {dimension_numbers = #tpu.dot_dimension_numbers<[1], [0], [0], [1], [0, 0, 1, 1], [], []>} : vector<128x32xbf16>, vector<32x32xbf16>, vector<128x32xf32> -> vector<128x32xf32>
    %222 = arith.addf %216, %221 : vector<128x32xf32>
    %c1_251 = arith.constant 1 : index
    %c2_252 = arith.constant 2 : index
    %c0_253 = arith.constant 0 : index
    %223 = vector.load %arg8[%c1_251, %c2_252, %c0_253] : memref<10x18x32xbf16, #tpu.memory_space<vmem>>, vector<8x16x32xbf16>
    %224 = vector.shape_cast %223 : vector<8x16x32xbf16> to vector<128x32xbf16>
    %c5_254 = arith.constant 5 : index
    %c0_255 = arith.constant 0 : index
    %c0_256 = arith.constant 0 : index
    %225 = vector.load %arg5[%c5_254, %c0_255, %c0_256] : memref<9x32x32xbf16, #tpu.memory_space<vmem>>, vector<1x32x32xbf16>
    %226 = vector.shape_cast %225 : vector<1x32x32xbf16> to vector<32x32xbf16>
    %cst_257 = arith.constant dense<0.000000e+00> : vector<128x32xf32>
    %227 = tpu.matmul %224, %226, %cst_257 {dimension_numbers = #tpu.dot_dimension_numbers<[1], [0], [0], [1], [0, 0, 1, 1], [], []>} : vector<128x32xbf16>, vector<32x32xbf16>, vector<128x32xf32> -> vector<128x32xf32>
    %228 = arith.addf %222, %227 : vector<128x32xf32>
    %c2_258 = arith.constant 2 : index
    %c0_259 = arith.constant 0 : index
    %c0_260 = arith.constant 0 : index
    %229 = vector.load %arg8[%c2_258, %c0_259, %c0_260] : memref<10x18x32xbf16, #tpu.memory_space<vmem>>, vector<8x16x32xbf16>
    %230 = vector.shape_cast %229 : vector<8x16x32xbf16> to vector<128x32xbf16>
    %c6_261 = arith.constant 6 : index
    %c0_262 = arith.constant 0 : index
    %c0_263 = arith.constant 0 : index
    %231 = vector.load %arg5[%c6_261, %c0_262, %c0_263] : memref<9x32x32xbf16, #tpu.memory_space<vmem>>, vector<1x32x32xbf16>
    %232 = vector.shape_cast %231 : vector<1x32x32xbf16> to vector<32x32xbf16>
    %cst_264 = arith.constant dense<0.000000e+00> : vector<128x32xf32>
    %233 = tpu.matmul %230, %232, %cst_264 {dimension_numbers = #tpu.dot_dimension_numbers<[1], [0], [0], [1], [0, 0, 1, 1], [], []>} : vector<128x32xbf16>, vector<32x32xbf16>, vector<128x32xf32> -> vector<128x32xf32>
    %234 = arith.addf %228, %233 : vector<128x32xf32>
    %c2_265 = arith.constant 2 : index
    %c1_266 = arith.constant 1 : index
    %c0_267 = arith.constant 0 : index
    %235 = vector.load %arg8[%c2_265, %c1_266, %c0_267] : memref<10x18x32xbf16, #tpu.memory_space<vmem>>, vector<8x16x32xbf16>
    %236 = vector.shape_cast %235 : vector<8x16x32xbf16> to vector<128x32xbf16>
    %c7_268 = arith.constant 7 : index
    %c0_269 = arith.constant 0 : index
    %c0_270 = arith.constant 0 : index
    %237 = vector.load %arg5[%c7_268, %c0_269, %c0_270] : memref<9x32x32xbf16, #tpu.memory_space<vmem>>, vector<1x32x32xbf16>
    %238 = vector.shape_cast %237 : vector<1x32x32xbf16> to vector<32x32xbf16>
    %cst_271 = arith.constant dense<0.000000e+00> : vector<128x32xf32>
    %239 = tpu.matmul %236, %238, %cst_271 {dimension_numbers = #tpu.dot_dimension_numbers<[1], [0], [0], [1], [0, 0, 1, 1], [], []>} : vector<128x32xbf16>, vector<32x32xbf16>, vector<128x32xf32> -> vector<128x32xf32>
    %240 = arith.addf %234, %239 : vector<128x32xf32>
    %c2_272 = arith.constant 2 : index
    %c2_273 = arith.constant 2 : index
    %c0_274 = arith.constant 0 : index
    %241 = vector.load %arg8[%c2_272, %c2_273, %c0_274] : memref<10x18x32xbf16, #tpu.memory_space<vmem>>, vector<8x16x32xbf16>
    %242 = vector.shape_cast %241 : vector<8x16x32xbf16> to vector<128x32xbf16>
    %c8_275 = arith.constant 8 : index
    %c0_276 = arith.constant 0 : index
    %c0_277 = arith.constant 0 : index
    %243 = vector.load %arg5[%c8_275, %c0_276, %c0_277] : memref<9x32x32xbf16, #tpu.memory_space<vmem>>, vector<1x32x32xbf16>
    %244 = vector.shape_cast %243 : vector<1x32x32xbf16> to vector<32x32xbf16>
    %cst_278 = arith.constant dense<0.000000e+00> : vector<128x32xf32>
    %245 = tpu.matmul %242, %244, %cst_278 {dimension_numbers = #tpu.dot_dimension_numbers<[1], [0], [0], [1], [0, 0, 1, 1], [], []>} : vector<128x32xbf16>, vector<32x32xbf16>, vector<128x32xf32> -> vector<128x32xf32>
    %246 = arith.addf %240, %245 : vector<128x32xf32>
    %c0_279 = arith.constant 0 : index
    %c0_280 = arith.constant 0 : index
    %247 = vector.load %arg6[%c0_279, %c0_280] : memref<1x32xf32, #tpu.memory_space<vmem>>, vector<1x32xf32>
    %248 = vector.broadcast %247 : vector<1x32xf32> to vector<128x32xf32>
    %249 = arith.addf %246, %248 : vector<128x32xf32>
    %c0_281 = arith.constant 0 : index
    %c0_282 = arith.constant 0 : index
    %c0_283 = arith.constant 0 : index
    %c0_284 = arith.constant 0 : index
    %250 = vector.load %arg7[%c0_281, %c0_282, %c0_283, %c0_284] : memref<1x1x128x32xf32, #tpu.memory_space<vmem>>, vector<1x1x128x32xf32>
    %251 = vector.shape_cast %250 : vector<1x1x128x32xf32> to vector<128x32xf32>
    %252 = vector.shape_cast %249 : vector<128x32xf32> to vector<1x1x128x32xf32>
    tpu.vector_store %arg7[%c0_281, %c0_282, %c0_283, %c0_284], %252 {strides = array<i32>} : memref<1x1x128x32xf32, #tpu.memory_space<vmem>>, vector<1x1x128x32xf32>,
    return
  }
  func.func @transform_0(%arg0: i32, %arg1: i32) -> (i32, i32, i32, i32, i32) {
    %c0_i32 = arith.constant 0 : i32
    %c0_i32_0 = arith.constant 0 : i32
    %c0_i32_1 = arith.constant 0 : i32
    %c0_i32_2 = arith.constant 0 : i32
    return %arg0, %arg1, %c0_i32, %c0_i32_0, %c0_i32_1 : i32, i32, i32, i32, i32
  }
  func.func @transform_1(%arg0: i32, %arg1: i32) -> (i32, i32, i32) {
    %c0_i32 = arith.constant 0 : i32
    %c0_i32_0 = arith.constant 0 : i32
    %c0_i32_1 = arith.constant 0 : i32
    %c0_i32_2 = arith.constant 0 : i32
    return %c0_i32, %c0_i32_0, %c0_i32_1 : i32, i32, i32
  }
  func.func @transform_2(%arg0: i32, %arg1: i32) -> (i32, i32) {
    %c0_i32 = arith.constant 0 : i32
    %c0_i32_0 = arith.constant 0 : i32
    %c0_i32_1 = arith.constant 0 : i32
    return %c0_i32, %c0_i32_0 : i32, i32
  }
  func.func @transform_3(%arg0: i32, %arg1: i32) -> (i32, i32, i32) {
    %c0_i32 = arith.constant 0 : i32
    %c0_i32_0 = arith.constant 0 : i32
    %c0_i32_1 = arith.constant 0 : i32
    %c0_i32_2 = arith.constant 0 : i32
    return %c0_i32, %c0_i32_0, %c0_i32_1 : i32, i32, i32
  }
  func.func @transform_4(%arg0: i32, %arg1: i32) -> (i32, i32) {
    %c0_i32 = arith.constant 0 : i32
    %c0_i32_0 = arith.constant 0 : i32
    %c0_i32_1 = arith.constant 0 : i32
    return %c0_i32, %c0_i32_0 : i32, i32
  }
  func.func @transform_5(%arg0: i32, %arg1: i32) -> (i32, i32, i32, i32) {
    %c0_i32 = arith.constant 0 : i32
    %c0_i32_0 = arith.constant 0 : i32
    %c0_i32_1 = arith.constant 0 : i32
    return %arg0, %arg1, %c0_i32, %c0_i32_0 : i32, i32, i32, i32
  }
}

</mosaic_0001>

<llo_original>
// kernel: backbone_forward.1
$region0: #{backbone_forward.1}
  #allocation0 [shape = 'u32[]', space=smem, size = 0x4, offset = 0x4, fixed_abs, tag = 'smem constant byte address 0x4 - core index']
  #allocation1 [shape = 'u32[144,128]{1,0:T(1,128)}', space=vmem, size = 0x12000, scoped, tag = 'internal scratch']
  #allocation2 [shape = 'bf16[10,18,32]{2,1,0:T(8,128)(2,1)}', space=vmem, size = 0xf000, scoped, tag = 'scratch operand']
  %s0 = inlined_call_operand.vmem [shape: bf16[2,2,14,20,4], index: 0, kind: input, shape index: {}]
  %s1 = inlined_call_operand.vmem [shape: bf16[25,4,32], index: 1, kind: input, shape index: {}]
  %s2 = inlined_call_operand.vmem [shape: f32[1,32], index: 2, kind: input, shape index: {}]
  %s3 = inlined_call_operand.vmem [shape: bf16[9,32,32], index: 3, kind: input, shape index: {}]
  %s4 = inlined_call_operand.vmem [shape: f32[1,32], index: 4, kind: input, shape index: {}]
  %s5 = inlined_call_operand.hbm [shape: f32[2,2,128,32], index: 5, kind: output, shape index: {}]
  %s6 = sld [smem:[#allocation0]]
  $region61: #{backbone_forward.1} parent=0
    _
  %s8 = ssub.s32 1, %s6
  %s9 = scalar_select 0, %s8, %s6
  $region1: #{backbone_forward.1} parent=0
    #allocation3 [shape = 'u8[131072]{0}', space=vmem, size = 0x20000, scoped, tag = 'output window, operand 0']
    #allocation4 [shape = 's32[2]{0}', space=sflag, size = 0x8, scoped, tag = 'scoped memory for backbone_forward.1']
    %10 = vsyncpa [#allocation4], 0
    %s11 = scalar_lea.sflag [#allocation4], 1
    %12 = vsyncpa %s11, 0
    loop: start=0, step=1, limit=6
    $region2: #{backbone_forward.1} parent=1 // loop_pre_header
      _
    $region3: #{backbone_forward.1} parent=1 // loop_header
      %s14 = sphi 0, %s18
      %p15 = scmp.ge.s32.totalorder %s14, 6
      %s21 = sphi 0, %s33
      %s22 = sphi 0, %s29
      %s23 = sphi 0, %s21
      %s24 = sphi 0, %s22
      %s25 = sphi 0, %s23
      %s26 = sphi 0, %s24
      %s38 = sphi 0, %s40
      %s41 = sphi 0, %s38
      %s42 = sphi 0, %s41
      %s58 = sphi 0, %s42
      %s62 = sphi 0, %s62
      %s64 = sphi 0, %s62
      %s65 = sphi 0, %s64
      %s79 = sphi 0, %s65
      %s83 = sphi 0, %s83
      %s85 = sphi 0, %s83
      %s86 = sphi 0, %s85
      %s100 = sphi 0, %s86
      %s104 = sphi 0, %s104
      %s106 = sphi 0, %s104
      %s107 = sphi 0, %s106
      %s121 = sphi 0, %s107
      %s125 = sphi 0, %s125
      %s127 = sphi 0, %s125
      %s128 = sphi 0, %s127
      %s142 = sphi 0, %s128
      %s150 = sphi 0, %s152
      %s153 = sphi 0, %s150
      %s154 = sphi 0, %s153
      %s170 = sphi 0, %s154
    $region4: #{backbone_forward.1} parent=1 // loop_header_branch
      %17 = sbr.rel (%p15) target = $region8
    $region5: #{backbone_forward.1} parent=1 // loop_body
      %s19 = ssub.s32 %s14, 1
      %s20 = ssub.s32 %s14, 2
      %s27 = sadd.s32 1, %s22
      %p28 = scmp.ge.s32.totalorder %s27, 2
      %s29 = scalar_select %p28, 0, %s27
      %s30 = sadd.s32 1, %s21
      %s31 = scalar_select %p28, %s30, %s21
      %p32 = scmp.ge.s32.totalorder %s31, 2
      %s33 = scalar_select %p32, 0, %s31
      %s34 = ssub.s32 %s21, %s33
      %s35 = ssub.s32 %s22, %s29
      %s36 = sor.u32 %s34, %s35
      %p37 = scmp.eq.s32.totalorder %s36, 0
      %s39 = sadd.s32 %s38, 1
      %s40 = scalar_select %p37, %s38, %s39
      %p43 = pneg %p37
      %p44 = scmp.eq.s32.totalorder %s14, 3
      %p45 = por %p43, %p44
      %p46 = scmp.ne.s32.totalorder %s38, %s41
      %p47 = scmp.eq.s32.totalorder %s14, 0
      %p48 = por %p46, %p47
      %p49 = scmp.ne.s32.totalorder %s38, %s41
      %p50 = scmp.eq.s32.totalorder %s19, 3
      %p51 = por %p49, %p50
      %p52 = scmp.ne.s32.totalorder %s41, %s42
      %p53 = scmp.eq.s32.totalorder %s19, 0
      %p54 = por %p52, %p53
      %p55 = scmp.ne.s32.totalorder %s41, %s42
      %p56 = scmp.eq.s32.totalorder %s20, 3
      %p57 = por %p55, %p56
      %p59 = scmp.ne.s32.totalorder %s42, %s58
      %p60 = scmp.eq.s32.totalorder %s20, 0
      %p61 = por %p59, %p60
      %s63 = sadd.s32 %s62, 1
      %p66 = scmp.eq.s32.totalorder %s14, 3
      %p67 = scmp.ne.s32.totalorder %s62, %s64
      %p68 = scmp.eq.s32.totalorder %s14, 0
      %p69 = por %p67, %p68
      %p70 = scmp.ne.s32.totalorder %s62, %s64
      %p71 = scmp.eq.s32.totalorder %s19, 3
      %p72 = por %p70, %p71
      %p73 = scmp.ne.s32.totalorder %s64, %s65
      %p74 = scmp.eq.s32.totalorder %s19, 0
      %p75 = por %p73, %p74
      %p76 = scmp.ne.s32.totalorder %s64, %s65
      %p77 = scmp.eq.s32.totalorder %s20, 3
      %p78 = por %p76, %p77
      %p80 = scmp.ne.s32.totalorder %s65, %s79
      %p81 = scmp.eq.s32.totalorder %s20, 0
      %p82 = por %p80, %p81
      %s84 = sadd.s32 %s83, 1
      %p87 = scmp.eq.s32.totalorder %s14, 3
      %p88 = scmp.ne.s32.totalorder %s83, %s85
      %p89 = scmp.eq.s32.totalorder %s14, 0
      %p90 = por %p88, %p89
      %p91 = scmp.ne.s32.totalorder %s83, %s85
      %p92 = scmp.eq.s32.totalorder %s19, 3
      %p93 = por %p91, %p92
      %p94 = scmp.ne.s32.totalorder %s85, %s86
      %p95 = scmp.eq.s32.totalorder %s19, 0
      %p96 = por %p94, %p95
      %p97 = scmp.ne.s32.totalorder %s85, %s86
      %p98 = scmp.eq.s32.totalorder %s20, 3
      %p99 = por %p97, %p98
      %p101 = scmp.ne.s32.totalorder %s86, %s100
      %p102 = scmp.eq.s32.totalorder %s20, 0
      %p103 = por %p101, %p102
      %s105 = sadd.s32 %s104, 1
      %p108 = scmp.eq.s32.totalorder %s14, 3
      %p109 = scmp.ne.s32.totalorder %s104, %s106
      %p110 = scmp.eq.s32.totalorder %s14, 0
      %p111 = por %p109, %p110
      %p112 = scmp.ne.s32.totalorder %s104, %s106
      %p113 = scmp.eq.s32.totalorder %s19, 3
      %p114 = por %p112, %p113
      %p115 = scmp.ne.s32.totalorder %s106, %s107
      %p116 = scmp.eq.s32.totalorder %s19, 0
      %p117 = por %p115, %p116
      %p118 = scmp.ne.s32.totalorder %s106, %s107
      %p119 = scmp.eq.s32.totalorder %s20, 3
      %p120 = por %p118, %p119
      %p122 = scmp.ne.s32.totalorder %s107, %s121
      %p123 = scmp.eq.s32.totalorder %s20, 0
      %p124 = por %p122, %p123
      %s126 = sadd.s32 %s125, 1
      %p129 = scmp.eq.s32.totalorder %s14, 3
      %p130 = scmp.ne.s32.totalorder %s125, %s127
      %p131 = scmp.eq.s32.totalorder %s14, 0
      %p132 = por %p130, %p131
      %p133 = scmp.ne.s32.totalorder %s125, %s127
      %p134 = scmp.eq.s32.totalorder %s19, 3
      %p135 = por %p133, %p134
      %p136 = scmp.ne.s32.totalorder %s127, %s128
      %p137 = scmp.eq.s32.totalorder %s19, 0
      %p138 = por %p136, %p137
      %p139 = scmp.ne.s32.totalorder %s127, %s128
      %p140 = scmp.eq.s32.totalorder %s20, 3
      %p141 = por %p139, %p140
      %p143 = scmp.ne.s32.totalorder %s128, %s142
      %p144 = scmp.eq.s32.totalorder %s20, 0
      %p145 = por %p143, %p144
      %s146 = ssub.s32 %s21, %s33
      %s147 = ssub.s32 %s22, %s29
      %s148 = sor.u32 %s146, %s147
      %p149 = scmp.eq.s32.totalorder %s148, 0
      %s151 = sadd.s32 %s150, 1
      %s152 = scalar_select %p149, %s150, %s151
      %p155 = pneg %p149
      %p156 = scmp.eq.s32.totalorder %s14, 3
      %p157 = por %p155, %p156
      %p158 = scmp.ne.s32.totalorder %s150, %s153
      %p159 = scmp.eq.s32.totalorder %s14, 0
      %p160 = por %p158, %p159
      %p161 = scmp.ne.s32.totalorder %s150, %s153
      %p162 = scmp.eq.s32.totalorder %s19, 3
      %p163 = por %p161, %p162
      %p164 = scmp.ne.s32.totalorder %s153, %s154
      %p165 = scmp.eq.s32.totalorder %s19, 0
      %p166 = por %p164, %p165
      %p167 = scmp.ne.s32.totalorder %s153, %s154
      %p168 = scmp.eq.s32.totalorder %s20, 3
      %p169 = por %p167, %p168
      %p171 = scmp.ne.s32.totalorder %s154, %s170
      %p172 = scmp.eq.s32.totalorder %s20, 0
      %p173 = por %p171, %p172
      %p174 = scmp.le.s32.totalorder 1, %s14
      %p175 = scmp.lt.s32.totalorder %s14, 5
      %p176 = pnand %p174, %p175
      %p177 = pneg %p176
      // Predicated region
      $region9: #{backbone_forward.1} parent=5 // pred_check
        _
      $region10: #{backbone_forward.1} parent=5 // pred_check_branch
        %179 = sbr.rel (%p176) target = $region12
      $region11: #{backbone_forward.1} parent=5 // pred_region
        %s180 = ssub.s32 %s14, 1
        // Predicated region
        $region13: #{backbone_forward.1} parent=11 // pred_check
          %p181 = pneg %p75
        $region14: #{backbone_forward.1} parent=11 // pred_check_branch
          %183 = sbr.rel (%p181) target = $region16
        $region15: #{backbone_forward.1} parent=11 // pred_region
          _
        $region16: #{backbone_forward.1} parent=11 // pred_fallthru
          _
        // Predicated region
        $region17: #{backbone_forward.1} parent=11 // pred_check
          %p184 = pneg %p96
        $region18: #{backbone_forward.1} parent=11 // pred_check_branch
          %186 = sbr.rel (%p184) target = $region20
        $region19: #{backbone_forward.1} parent=11 // pred_region
          _
        $region20: #{backbone_forward.1} parent=11 // pred_fallthru
          _
        // Predicated region
        $region21: #{backbone_forward.1} parent=11 // pred_check
          %p187 = pneg %p117
        $region22: #{backbone_forward.1} parent=11 // pred_check_branch
          %189 = sbr.rel (%p187) target = $region24
        $region23: #{backbone_forward.1} parent=11 // pred_region
          _
        $region24: #{backbone_forward.1} parent=11 // pred_fallthru
          _
        // Predicated region
        $region25: #{backbone_forward.1} parent=11 // pred_check
          %p190 = pneg %p138
        $region26: #{backbone_forward.1} parent=11 // pred_check_branch
          %192 = sbr.rel (%p190) target = $region28
        $region27: #{backbone_forward.1} parent=11 // pred_region
          _
        $region28: #{backbone_forward.1} parent=11 // pred_fallthru
          _
      $region12: #{backbone_forward.1} parent=5 // pred_fallthru
        _
      %p193 = scmp.lt.s32.totalorder %s14, 4
      // Predicated region
      $region29: #{backbone_forward.1} parent=5 // pred_check
        %p194 = pneg %p193
      $region30: #{backbone_forward.1} parent=5 // pred_check_branch
        %196 = sbr.rel (%p194) target = $region32
      $region31: #{backbone_forward.1} parent=5 // pred_region
        // Predicated region
        $region33: #{backbone_forward.1} parent=31 // pred_check
          %p197 = pneg %p48
        $region34: #{backbone_forward.1} parent=31 // pred_check_branch
          %199 = sbr.rel (%p197) target = $region36
        $region35: #{backbone_forward.1} parent=31 // pred_region
          %p200 = scmp.lt.s32.totalorder %s21, 1
          %s201 = scalar_select %p200, %s21, 1
          %p202 = scmp.lt.s32.totalorder %s22, 1
          %s203 = scalar_select %p202, %s22, 1
          %s204 = smul.addr %s203, 42
          %s205 = smul.addr %s201, 84
          %s206 = sadd.s32 %s204, %s205
          %s207 = smul.addr %s206, 4
          %s208 = scalar_lea.vmem %s0, %s207
        $region36: #{backbone_forward.1} parent=31 // pred_fallthru
          _
      $region32: #{backbone_forward.1} parent=5 // pred_fallthru
        _
      %p209 = scmp.le.s32.totalorder 1, %s14
      %p210 = scmp.lt.s32.totalorder %s14, 5
      %p211 = pnand %p209, %p210
      %p212 = pneg %p211
      // Predicated region
      $region37: #{backbone_forward.1} parent=5 // pred_check
        _
      $region38: #{backbone_forward.1} parent=5 // pred_check_branch
        %214 = sbr.rel (%p211) target = $region40
      $region39: #{backbone_forward.1} parent=5 // pred_region
        %s215 = ssub.s32 %s14, 1
        %p216 = scmp.lt.s32.totalorder %s23, 1
        %s217 = scalar_select %p216, %s23, 1
        %p218 = scmp.lt.s32.totalorder %s24, 1
        %s219 = scalar_select %p218, %s24, 1
        %s220 = smul.addr %s219, 42
        %s221 = smul.addr %s217, 84
        %s222 = sadd.s32 %s220, %s221
        %s223 = smul.addr %s222, 4
        %s224 = scalar_lea.vmem %s0, %s223
        %p225 = pneg %p54
        %p226 = pneg %p51
        %p227 = pneg %p75
        %p228 = pneg %p72
        %p229 = pneg %p96
        %p230 = pneg %p93
        %p231 = pneg %p117
        %p232 = pneg %p114
        %p233 = pneg %p138
        %p234 = pneg %p135
        %p235 = pneg %p166
        %p236 = pneg %p163
        %s237 = sand.u32 %s153, 1
        %s238 = scalar_lea.sflag [#allocation4], %s237
        %s239 = sand.u32 %s153, 1
        %s240 = smul.addr %s239, 128
        %s241 = scalar_lea.vmem [#allocation3], %s240
        %p242 = scmp.lt.s32.totalorder %s23, 1
        %s243 = scalar_select %p242, %s23, 1
        %p244 = scmp.lt.s32.totalorder %s24, 1
        %s245 = scalar_select %p244, %s24, 1
        %s246 = smul.addr %s245, 42
        %s247 = smul.addr %s243, 84
        %s248 = sadd.s32 %s246, %s247
        %s249 = smul.addr %s248, 4
        %s250 = scalar_lea.vmem %s0, %s249
        %v252 = vld [vmem:[%s250] sm:$0xf]
        %v253 = vld [vmem:[%s250 + $0x4] sm:$0xf]
        %v254 = vld [vmem:[%s250 + $0xc] sm:$0xf]
        %v255 = vld [vmem:[%s250 + $0x10] sm:$0xf]
        %v256 = vld [vmem:[%s250 + $0x18] sm:$0xf]
        %v257 = vld [vmem:[%s250 + $0x1c] sm:$0xf]
        %v258 = vld [vmem:[%s250 + $0x24] sm:$0xf]
        %v259 = vld [vmem:[%s250 + $0x28] sm:$0xf]
        %v260 = vld [vmem:[%s250 + $0x30] sm:$0xf]
        %v261 = vld [vmem:[%s250 + $0x34] sm:$0xf]
        %v262 = vld [vmem:[%s250 + $0x3c] sm:$0xf]
        %v263 = vld [vmem:[%s250 + $0x40] sm:$0xf]
        %v264 = vld [vmem:[%s250 + $0x48] sm:$0xf]
        %v265 = vld [vmem:[%s250 + $0x4c] sm:$0xf]
        %v266 = vld [vmem:[%s250 + $0x54] sm:$0xf]
        %v267 = vld [vmem:[%s250 + $0x58] sm:$0xf]
        %v268 = vld [vmem:[%s250 + $0x60] sm:$0xf]
        %v269 = vld [vmem:[%s250 + $0x64] sm:$0xf]
        %v270 = vld [vmem:[%s250 + $0x6c] sm:$0xf]
        %v271 = vld [vmem:[%s250 + $0x70] sm:$0xf]
        %v272 = vld [vmem:[%s1] sm:$0x3]
        %v273 = vld [vmem:[%s250 + $0x8] sm:$0x1]
        %v274 = vld [vmem:[%s250 + $0x14] sm:$0x1]
        %v275 = vld [vmem:[%s250 + $0x20] sm:$0x1]
        %v276 = vld [vmem:[%s250 + $0x2c] sm:$0x1]
        %v277 = vld [vmem:[%s250 + $0x38] sm:$0x1]
        %v278 = vld [vmem:[%s250 + $0x44] sm:$0x1]
        %v279 = vld [vmem:[%s250 + $0x50] sm:$0x1]
        %v280 = vld [vmem:[%s250 + $0x5c] sm:$0x1]
        %v281 = vld [vmem:[%s250 + $0x68] sm:$0x1]
        %v282 = vld [vmem:[%s250 + $0x74] sm:$0x1]
        %vm283 = vsmask.f32 3328
        %vm284 = vsmask.f32 7440
        %vm285 = vmor %vm283, %vm284
        %v287 = vshrl.u32 %v252, 16
        %v289 = vrot.slane %v287, 4
        %v290 = vshll.u32 %v252, 16
        %v292 = vrot.slane %v290, 5
        %v293 = vor.u32 %v289, %v292
        %v294 = vrot.slane %v293, 4
        %v296 = vshll.u32 %v253, 16
        %v298 = vrot.slane %v296, 5
        %v299 = vsel %vm285, %v294, %v298
        %v300 = vshrl.u32 %v253, 16
        %v302 = vrot.slane %v300, 4
        %v303 = vor.u32 %v302, %v298
        %v304 = vrot.slane %v303, 4
        %v306 = vshll.u32 %v273, 16
        %v308 = vrot.slane %v306, 5
        %v309 = vsel %vm285, %v304, %v308
        %v311 = vshrl.u32 %v254, 16
        %v313 = vrot.slane %v311, 4
        %v314 = vshll.u32 %v254, 16
        %v316 = vrot.slane %v314, 5
        %v317 = vor.u32 %v313, %v316
        %v318 = vrot.slane %v317, 4
        %v320 = vshll.u32 %v255, 16
        %v322 = vrot.slane %v320, 5
        %v323 = vsel %vm285, %v318, %v322
        %v324 = vshrl.u32 %v255, 16
        %v326 = vrot.slane %v324, 4
        %v327 = vor.u32 %v326, %v322
        %v328 = vrot.slane %v327, 4
        %v330 = vshll.u32 %v274, 16
        %v332 = vrot.slane %v330, 5
        %v333 = vsel %vm285, %v328, %v332
        %v335 = vshrl.u32 %v256, 16
        %v337 = vrot.slane %v335, 4
        %v338 = vshll.u32 %v256, 16
        %v340 = vrot.slane %v338, 5
        %v341 = vor.u32 %v337, %v340
        %v342 = vrot.slane %v341, 4
        %v344 = vshll.u32 %v257, 16
        %v346 = vrot.slane %v344, 5
        %v347 = vsel %vm285, %v342, %v346
        %v348 = vshrl.u32 %v257, 16
        %v350 = vrot.slane %v348, 4
        %v351 = vor.u32 %v350, %v346
        %v352 = vrot.slane %v351, 4
        %v354 = vshll.u32 %v275, 16
        %v356 = vrot.slane %v354, 5
        %v357 = vsel %vm285, %v352, %v356
        %v359 = vshrl.u32 %v258, 16
        %v361 = vrot.slane %v359, 4
        %v362 = vshll.u32 %v258, 16
        %v364 = vrot.slane %v362, 5
        %v365 = vor.u32 %v361, %v364
        %v366 = vrot.slane %v365, 4
        %v368 = vshll.u32 %v259, 16
        %v370 = vrot.slane %v368, 5
        %v371 = vsel %vm285, %v366, %v370
        %v372 = vshrl.u32 %v259, 16
        %v374 = vrot.slane %v372, 4
        %v375 = vor.u32 %v374, %v370
        %v376 = vrot.slane %v375, 4
        %v378 = vshll.u32 %v276, 16
        %v380 = vrot.slane %v378, 5
        %v381 = vsel %vm285, %v376, %v380
        %v383 = vshrl.u32 %v260, 16
        %v385 = vrot.slane %v383, 4
        %v386 = vshll.u32 %v260, 16
        %v388 = vrot.slane %v386, 5
        %v389 = vor.u32 %v385, %v388
        %v390 = vrot.slane %v389, 4
        %v392 = vshll.u32 %v261, 16
        %v394 = vrot.slane %v392, 5
        %v395 = vsel %vm285, %v390, %v394
        %v396 = vshrl.u32 %v261, 16
        %v398 = vrot.slane %v396, 4
        %v399 = vor.u32 %v398, %v394
        %v400 = vrot.slane %v399, 4
        %v402 = vshll.u32 %v277, 16
        %v404 = vrot.slane %v402, 5
        %v405 = vsel %vm285, %v400, %v404
        %v407 = vshrl.u32 %v262, 16
        %v409 = vrot.slane %v407, 4
        %v410 = vshll.u32 %v262, 16
        %v412 = vrot.slane %v410, 5
        %v413 = vor.u32 %v409, %v412
        %v414 = vrot.slane %v413, 4
        %v416 = vshll.u32 %v263, 16
        %v418 = vrot.slane %v416, 5
        %v419 = vsel %vm285, %v414, %v418
        %v420 = vshrl.u32 %v263, 16
        %v422 = vrot.slane %v420, 4
        %v423 = vor.u32 %v422, %v418
        %v424 = vrot.slane %v423, 4
        %v426 = vshll.u32 %v278, 16
        %v428 = vrot.slane %v426, 5
        %v429 = vsel %vm285, %v424, %v428
        %v431 = vshrl.u32 %v264, 16
        %v433 = vrot.slane %v431, 4
        %v434 = vshll.u32 %v264, 16
        %v436 = vrot.slane %v434, 5
        %v437 = vor.u32 %v433, %v436
        %v438 = vrot.slane %v437, 4
        %v440 = vshll.u32 %v265, 16
        %v442 = vrot.slane %v440, 5
        %v443 = vsel %vm285, %v438, %v442
        %v444 = vshrl.u32 %v265, 16
        %v446 = vrot.slane %v444, 4
        %v447 = vor.u32 %v446, %v442
        %v448 = vrot.slane %v447, 4
        %v450 = vshll.u32 %v279, 16
        %v452 = vrot.slane %v450, 5
        %v453 = vsel %vm285, %v448, %v452
        %v455 = vshrl.u32 %v266, 16
        %v457 = vrot.slane %v455, 4
        %v458 = vshll.u32 %v266, 16
        %v460 = vrot.slane %v458, 5
        %v461 = vor.u32 %v457, %v460
        %v462 = vrot.slane %v461, 4
        %v464 = vshll.u32 %v267, 16
        %v466 = vrot.slane %v464, 5
        %v467 = vsel %vm285, %v462, %v466
        %v468 = vshrl.u32 %v267, 16
        %v470 = vrot.slane %v468, 4
        %v471 = vor.u32 %v470, %v466
        %v472 = vrot.slane %v471, 4
        %v474 = vshll.u32 %v280, 16
        %v476 = vrot.slane %v474, 5
        %v477 = vsel %vm285, %v472, %v476
        %v479 = vshrl.u32 %v268, 16
        %v481 = vrot.slane %v479, 4
        %v482 = vshll.u32 %v268, 16
        %v484 = vrot.slane %v482, 5
        %v485 = vor.u32 %v481, %v484
        %v486 = vrot.slane %v485, 4
        %v488 = vshll.u32 %v269, 16
        %v490 = vrot.slane %v488, 5
        %v491 = vsel %vm285, %v486, %v490
        %v492 = vshrl.u32 %v269, 16
        %v494 = vrot.slane %v492, 4
        %v495 = vor.u32 %v494, %v490
        %v496 = vrot.slane %v495, 4
        %v498 = vshll.u32 %v281, 16
        %v500 = vrot.slane %v498, 5
        %v501 = vsel %vm285, %v496, %v500
        %v503 = vshrl.u32 %v270, 16
        %v505 = vrot.slane %v503, 4
        %v506 = vshll.u32 %v270, 16
        %v508 = vrot.slane %v506, 5
        %v509 = vor.u32 %v505, %v508
        %v510 = vrot.slane %v509, 4
        %v512 = vshll.u32 %v271, 16
        %v514 = vrot.slane %v512, 5
        %v515 = vsel %vm285, %v510, %v514
        %v516 = vshrl.u32 %v271, 16
        %v518 = vrot.slane %v516, 4
        %v519 = vor.u32 %v518, %v514
        %v520 = vrot.slane %v519, 4
        %v522 = vshll.u32 %v282, 16
        %v524 = vrot.slane %v522, 5
        %v525 = vsel %vm285, %v520, %v524
        %s526 = scalar_lea.vmem %s1, 2
        %v527 = vld [vmem:[%s526] sm:$0x3]
        %v528 = vunpack.c.l.b16 %v299
        %v529 = vunpack.c.l.b16 %v309
        %v530 = vunpack.c.l.b16 %v323
        %v531 = vunpack.c.l.b16 %v333
        %v532 = vunpack.c.l.b16 %v347
        %v533 = vunpack.c.l.b16 %v357
        %v534 = vunpack.c.l.b16 %v371
        %v535 = vunpack.c.l.b16 %v381
        %v536 = vunpack.c.l.b16 %v395
        %v537 = vunpack.c.l.b16 %v405
        %v538 = vunpack.c.l.b16 %v419
        %v539 = vunpack.c.l.b16 %v429
        %v540 = vunpack.c.l.b16 %v443
        %v541 = vunpack.c.l.b16 %v453
        %v542 = vunpack.c.l.b16 %v467
        %v543 = vunpack.c.l.b16 %v477
        %v544 = vunpack.c.l.b16 %v491
        %v545 = vunpack.c.l.b16 %v501
        %v546 = vunpack.c.l.b16 %v515
        %v547 = vunpack.c.l.b16 %v525
        %v548 = vpack.c.b16 %v529, %v528
        %v549 = vpack.c.b16 %v531, %v530
        %v550 = vpack.c.b16 %v533, %v532
        %v551 = vpack.c.b16 %v535, %v534
        %v552 = vpack.c.b16 %v537, %v536
        %v553 = vpack.c.b16 %v539, %v538
        %v554 = vpack.c.b16 %v541, %v540
        %v555 = vpack.c.b16 %v543, %v542
        %v556 = vpack.c.b16 %v545, %v544
        %v557 = vpack.c.b16 %v547, %v546
        %vm558 = vcmask 31744
        %v560 = vsel %vm558, %v548, 0
        %v563 = vsel %vm558, %v549, 0
        %v566 = vsel %vm558, %v550, 0
        %v569 = vsel %vm558, %v551, 0
        %v572 = vsel %vm558, %v552, 0
        %v575 = vsel %vm558, %v553, 0
        %v578 = vsel %vm558, %v554, 0
        %v581 = vsel %vm558, %v555, 0
        %v584 = vsel %vm558, %v556, 0
        %v587 = vsel %vm558, %v557, 0
        %vm589 = vcmask 1041408
        %v591 = vsel %vm589, %v527, 0
        %593 = vmatprep.subr.bf16.mxu0 0
        %594 = vmatpush1.bf16.msra.mxu0 %v591
        %595 = vmatprep.subr.bf16.mxu0 0
        %596 = vmatpush1.bf16.msra.mxu0 0
        %597 = vmatprep.subr.bf16.mxu0 0
        %598 = vmatpush1.bf16.msra.mxu0 0
        %599 = vmatprep.subr.bf16.mxu0 0
        %600 = vmatpush1.bf16.msra.mxu0 0
        %601 = vmatprep.subr.bf16.mxu0 0
        %602 = vmatpush1.bf16.msra.mxu0 0
        %603 = vmatprep.subr.bf16.mxu0 0
        %604 = vmatpush1.bf16.msra.mxu0 0
        %605 = vmatprep.subr.bf16.mxu0 0
        %606 = vmatpush1.bf16.msra.mxu0 0
        %607 = vmatprep.subr.bf16.mxu0 0
        %608 = vmatpush1.bf16.msra.mxu0 0
        %609 = vmatprep.subr.bf16.mxu0 0
        %610 = vmatpush1.bf16.msra.mxu0 0
        %611 = vmatprep.subr.bf16.mxu0 0
        %612 = vmatpush1.bf16.msra.mxu0 0
        %613 = vmatprep.subr.bf16.mxu0 0
        %614 = vmatpush1.bf16.msra.mxu0 0
        %615 = vmatprep.subr.bf16.mxu0 0
        %616 = vmatpush1.bf16.msra.mxu0 0
        %617 = vmatprep.subr.bf16.mxu0 0
        %618 = vmatpush1.bf16.msra.mxu0 0
        %619 = vmatprep.subr.bf16.mxu0 0
        %620 = vmatpush1.bf16.msra.mxu0 0
        %621 = vmatprep.subr.bf16.mxu0 0
        %622 = vmatpush1.bf16.msra.mxu0 0
        %623 = vmatprep.subr.bf16.mxu0 0
        %624 = vmatpush1.bf16.msra.mxu0 0
        %625 = vmatprep.mubr.bf16.mxu0 0
        %626 = vmatmul.mubr.bf16.gmra.mrb[0].mxu0 %v560
        %v627 = vpop.f32.mrb[0].mxu0
        %v628 = vadd.f32 0.0, %v627
        %v629 = vpop.f32.mrb[0].mxu0
        %v630 = vpop.f32.mrb[0].mxu0
        %v631 = vadd.f32 0.0, %v630
        %v632 = vpop.f32.mrb[0].mxu0
        %633 = vmatprep.mubr.bf16.mxu0 0
        %634 = vmatmul.mubr.bf16.gmra.mrb[0].mxu0 %v563
        %v635 = vpop.f32.mrb[0].mxu0
        %v636 = vadd.f32 0.0, %v635
        %v637 = vpop.f32.mrb[0].mxu0
        %v638 = vpop.f32.mrb[0].mxu0
        %v639 = vadd.f32 0.0, %v638
        %v640 = vpop.f32.mrb[0].mxu0
        %641 = vmatprep.mubr.bf16.mxu0 0
        %642 = vmatmul.mubr.bf16.gmra.mrb[0].mxu0 %v566
        %v643 = vpop.f32.mrb[0].mxu0
        %v644 = vadd.f32 0.0, %v643
        %v645 = vpop.f32.mrb[0].mxu0
        %v646 = vpop.f32.mrb[0].mxu0
        %v647 = vadd.f32 0.0, %v646
        %v648 = vpop.f32.mrb[0].mxu0
        %649 = vmatprep.mubr.bf16.mxu0 0
        %650 = vmatmul.mubr.bf16.gmra.mrb[0].mxu0 %v569
        %v651 = vpop.f32.mrb[0].mxu0
        %v652 = vadd.f32 0.0, %v651
        %v653 = vpop.f32.mrb[0].mxu0
        %v654 = vpop.f32.mrb[0].mxu0
        %v655 = vadd.f32 0.0, %v654
        %v656 = vpop.f32.mrb[0].mxu0
        %657 = vmatprep.mubr.bf16.mxu0 0
        %658 = vmatmul.mubr.bf16.gmra.mrb[0].mxu0 %v572
        %v659 = vpop.f32.mrb[0].mxu0
        %v660 = vadd.f32 0.0, %v659
        %v661 = vpop.f32.mrb[0].mxu0
        %v662 = vpop.f32.mrb[0].mxu0
        %v663 = vadd.f32 0.0, %v662
        %v664 = vpop.f32.mrb[0].mxu0
        %665 = vmatprep.mubr.bf16.mxu0 0
        %666 = vmatmul.mubr.bf16.gmra.mrb[0].mxu0 %v575
        %v667 = vpop.f32.mrb[0].mxu0
        %v668 = vadd.f32 0.0, %v667
        %v669 = vpop.f32.mrb[0].mxu0
        %v670 = vpop.f32.mrb[0].mxu0
        %v671 = vadd.f32 0.0, %v670
        %v672 = vpop.f32.mrb[0].mxu0
        %673 = vmatprep.mubr.bf16.mxu0 0
        %674 = vmatmul.mubr.bf16.gmra.mrb[0].mxu0 %v578
        %v675 = vpop.f32.mrb[0].mxu0
        %v676 = vadd.f32 0.0, %v675
        %v677 = vpop.f32.mrb[0].mxu0
        %v678 = vpop.f32.mrb[0].mxu0
        %v679 = vadd.f32 0.0, %v678
        %v680 = vpop.f32.mrb[0].mxu0
        %681 = vmatprep.mubr.bf16.mxu0 0
        %682 = vmatmul.mubr.bf16.gmra.mrb[0].mxu0 %v581
        %v683 = vpop.f32.mrb[0].mxu0
        %v684 = vadd.f32 0.0, %v683
        %v685 = vpop.f32.mrb[0].mxu0
        %v686 = vpop.f32.mrb[0].mxu0
        %v687 = vadd.f32 0.0, %v686
        %v688 = vpop.f32.mrb[0].mxu0
        %689 = vmatprep.mubr.bf16.mxu0 0
        %690 = vmatmul.mubr.bf16.gmra.mrb[0].mxu0 %v584
        %v691 = vpop.f32.mrb[0].mxu0
        %v692 = vadd.f32 0.0, %v691
        %v693 = vpop.f32.mrb[0].mxu0
        %v694 = vpop.f32.mrb[0].mxu0
        %v695 = vadd.f32 0.0, %v694
        %v696 = vpop.f32.mrb[0].mxu0
        %697 = vmatprep.mubr.bf16.mxu0 0
        %698 = vmatmul.mubr.bf16.gmra.mrb[0].mxu0 %v587
        %v699 = vpop.f32.mrb[0].mxu0
        %v700 = vadd.f32 0.0, %v699
        %v701 = vpop.f32.mrb[0].mxu0
        %v702 = vpop.f32.mrb[0].mxu0
        %v703 = vadd.f32 0.0, %v702
        %v704 = vpop.f32.mrb[0].mxu0
        %705 = vdwg.mxu0
        %v726 = vunpack.c.l.b16 %v252
        %v727 = vunpack.c.l.b16 %v253
        %v728 = vunpack.c.l.b16 %v254
        %v729 = vunpack.c.l.b16 %v255
        %v730 = vunpack.c.l.b16 %v256
        %v731 = vunpack.c.l.b16 %v257
        %v732 = vunpack.c.l.b16 %v258
        %v733 = vunpack.c.l.b16 %v259
        %v734 = vunpack.c.l.b16 %v260
        %v735 = vunpack.c.l.b16 %v261
        %v736 = vunpack.c.l.b16 %v262
        %v737 = vunpack.c.l.b16 %v263
        %v738 = vunpack.c.l.b16 %v264
        %v739 = vunpack.c.l.b16 %v265
        %v740 = vunpack.c.l.b16 %v266
        %v741 = vunpack.c.l.b16 %v267
        %v742 = vunpack.c.l.b16 %v268
        %v743 = vunpack.c.l.b16 %v269
        %v744 = vunpack.c.l.b16 %v270
        %v745 = vunpack.c.l.b16 %v271
        %v746 = vpack.c.b16 %v727, %v726
        %v747 = vpack.c.b16 %v729, %v728
        %v748 = vpack.c.b16 %v731, %v730
        %v749 = vpack.c.b16 %v733, %v732
        %v750 = vpack.c.b16 %v735, %v734
        %v751 = vpack.c.b16 %v737, %v736
        %v752 = vpack.c.b16 %v739, %v738
        %v753 = vpack.c.b16 %v741, %v740
        %v754 = vpack.c.b16 %v743, %v742
        %v755 = vpack.c.b16 %v745, %v744
        %v757 = vsel %vm558, %v746, 0
        %v760 = vsel %vm558, %v747, 0
        %v763 = vsel %vm558, %v748, 0
        %v766 = vsel %vm558, %v749, 0
        %v769 = vsel %vm558, %v750, 0
        %v772 = vsel %vm558, %v751, 0
        %v775 = vsel %vm558, %v752, 0
        %v778 = vsel %vm558, %v753, 0
        %v781 = vsel %vm558, %v754, 0
        %v784 = vsel %vm558, %v755, 0
        %v787 = vsel %vm589, %v272, 0
        %789 = vmatprep.subr.bf16.mxu0 0
        %790 = vmatpush1.bf16.msra.mxu0 %v787
        %791 = vmatprep.subr.bf16.mxu0 0
        %792 = vmatpush1.bf16.msra.mxu0 0
        %793 = vmatprep.subr.bf16.mxu0 0
        %794 = vmatpush1.bf16.msra.mxu0 0
        %795 = vmatprep.subr.bf16.mxu0 0
        %796 = vmatpush1.bf16.msra.mxu0 0
        %797 = vmatprep.subr.bf16.mxu0 0
        %798 = vmatpush1.bf16.msra.mxu0 0
        %799 = vmatprep.subr.bf16.mxu0 0
        %800 = vmatpush1.bf16.msra.mxu0 0
        %801 = vmatprep.subr.bf16.mxu0 0
        %802 = vmatpush1.bf16.msra.mxu0 0
        %803 = vmatprep.subr.bf16.mxu0 0
        %804 = vmatpush1.bf16.msra.mxu0 0
        %805 = vmatprep.subr.bf16.mxu0 0
        %806 = vmatpush1.bf16.msra.mxu0 0
        %807 = vmatprep.subr.bf16.mxu0 0
        %808 = vmatpush1.bf16.msra.mxu0 0
        %809 = vmatprep.subr.bf16.mxu0 0
        %810 = vmatpush1.bf16.msra.mxu0 0
        %811 = vmatprep.subr.bf16.mxu0 0
        %812 = vmatpush1.bf16.msra.mxu0 0
        %813 = vmatprep.subr.bf16.mxu0 0
        %814 = vmatpush1.bf16.msra.mxu0 0
        %815 = vmatprep.subr.bf16.mxu0 0
        %816 = vmatpush1.bf16.msra.mxu0 0
        %817 = vmatprep.subr.bf16.mxu0 0
        %818 = vmatpush1.bf16.msra.mxu0 0
        %819 = vmatprep.subr.bf16.mxu0 0
        %820 = vmatpush1.bf16.msra.mxu0 0
        %821 = vmatprep.mubr.bf16.mxu0 0
        %822 = vmatmul.mubr.bf16.gmra.mrb[0].mxu0 %v757
        %v823 = vpop.f32.mrb[0].mxu0
        %v824 = vadd.f32 %v628, %v823
        %v825 = vpop.f32.mrb[0].mxu0
        %v826 = vpop.f32.mrb[0].mxu0
        %v827 = vadd.f32 %v631, %v826
        %v828 = vpop.f32.mrb[0].mxu0
        %829 = vmatprep.mubr.bf16.mxu0 0
        %830 = vmatmul.mubr.bf16.gmra.mrb[0].mxu0 %v760
        %v831 = vpop.f32.mrb[0].mxu0
        %v832 = vadd.f32 %v636, %v831
        %v833 = vpop.f32.mrb[0].mxu0
        %v834 = vpop.f32.mrb[0].mxu0
        %v835 = vadd.f32 %v639, %v834
        %v836 = vpop.f32.mrb[0].mxu0
        %837 = vmatprep.mubr.bf16.mxu0 0
        %838 = vmatmul.mubr.bf16.gmra.mrb[0].mxu0 %v763
        %v839 = vpop.f32.mrb[0].mxu0
        %v840 = vadd.f32 %v644, %v839
        %v841 = vpop.f32.mrb[0].mxu0
        %v842 = vpop.f32.mrb[0].mxu0
        %v843 = vadd.f32 %v647, %v842
        %v844 = vpop.f32.mrb[0].mxu0
        %845 = vmatprep.mubr.bf16.mxu0 0
        %846 = vmatmul.mubr.bf16.gmra.mrb[0].mxu0 %v766
        %v847 = vpop.f32.mrb[0].mxu0
        %v848 = vadd.f32 %v652, %v847
        %v849 = vpop.f32.mrb[0].mxu0
        %v850 = vpop.f32.mrb[0].mxu0
        %v851 = vadd.f32 %v655, %v850
        %v852 = vpop.f32.mrb[0].mxu0
        %853 = vmatprep.mubr.bf16.mxu0 0
        %854 = vmatmul.mubr.bf16.gmra.mrb[0].mxu0 %v769
        %v855 = vpop.f32.mrb[0].mxu0
        %v856 = vadd.f32 %v660, %v855
        %v857 = vpop.f32.mrb[0].mxu0
        %v858 = vpop.f32.mrb[0].mxu0
        %v859 = vadd.f32 %v663, %v858
        %v860 = vpop.f32.mrb[0].mxu0
        %861 = vmatprep.mubr.bf16.mxu0 0
        %862 = vmatmul.mubr.bf16.gmra.mrb[0].mxu0 %v772
        %v863 = vpop.f32.mrb[0].mxu0
        %v864 = vadd.f32 %v668, %v863
        %v865 = vpop.f32.mrb[0].mxu0
        %v866 = vpop.f32.mrb[0].mxu0
        %v867 = vadd.f32 %v671, %v866
        %v868 = vpop.f32.mrb[0].mxu0
        %869 = vmatprep.mubr.bf16.mxu0 0
        %870 = vmatmul.mubr.bf16.gmra.mrb[0].mxu0 %v775
        %v871 = vpop.f32.mrb[0].mxu0
        %v872 = vadd.f32 %v676, %v871
        %v873 = vpop.f32.mrb[0].mxu0
        %v874 = vpop.f32.mrb[0].mxu0
        %v875 = vadd.f32 %v679, %v874
        %v876 = vpop.f32.mrb[0].mxu0
        %877 = vmatprep.mubr.bf16.mxu0 0
        %878 = vmatmul.mubr.bf16.gmra.mrb[0].mxu0 %v778
        %v879 = vpop.f32.mrb[0].mxu0
        %v880 = vadd.f32 %v684, %v879
        %v881 = vpop.f32.mrb[0].mxu0
        %v882 = vpop.f32.mrb[0].mxu0
        %v883 = vadd.f32 %v687, %v882
        %v884 = vpop.f32.mrb[0].mxu0
        %885 = vmatprep.mubr.bf16.mxu0 0
        %886 = vmatmul.mubr.bf16.gmra.mrb[0].mxu0 %v781
        %v887 = vpop.f32.mrb[0].mxu0
        %v888 = vadd.f32 %v692, %v887
        %v889 = vpop.f32.mrb[0].mxu0
        %v890 = vpop.f32.mrb[0].mxu0
        %v891 = vadd.f32 %v695, %v890
        %v892 = vpop.f32.mrb[0].mxu0
        %893 = vmatprep.mubr.bf16.mxu0 0
        %894 = vmatmul.mubr.bf16.gmra.mrb[0].mxu0 %v784
        %v895 = vpop.f32.mrb[0].mxu0
        %v896 = vadd.f32 %v700, %v895
        %v897 = vpop.f32.mrb[0].mxu0
        %v898 = vpop.f32.mrb[0].mxu0
        %v899 = vadd.f32 %v703, %v898
        %v900 = vpop.f32.mrb[0].mxu0
        %901 = vdwg.mxu0
        %v902 = vld [vmem:[%s250] sm:$0xe]
        %v903 = vld [vmem:[%s250 + $0xc] sm:$0xe]
        %v904 = vld [vmem:[%s250 + $0x18] sm:$0xe]
        %v905 = vld [vmem:[%s250 + $0x24] sm:$0xe]
        %v906 = vld [vmem:[%s250 + $0x30] sm:$0xe]
        %v907 = vld [vmem:[%s250 + $0x3c] sm:$0xe]
        %v908 = vld [vmem:[%s250 + $0x48] sm:$0xe]
        %v909 = vld [vmem:[%s250 + $0x54] sm:$0xe]
        %v910 = vld [vmem:[%s250 + $0x60] sm:$0xe]
        %v911 = vld [vmem:[%s250 + $0x6c] sm:$0xe]
        %vm932 = vcmask 1042432
        %vm933 = vcmask 1046532
        %vm934 = vmor %vm932, %vm933
        %v935 = vrot.slane %v902, 5
        %v936 = vrot.slane %v935, 4
        %v937 = vrot.slane %v253, 5
        %v938 = vsel %vm934, %v936, %v937
        %v939 = vrot.slane %v937, 4
        %v940 = vrot.slane %v273, 5
        %v941 = vsel %vm934, %v939, %v940
        %v942 = vrot.slane %v903, 5
        %v943 = vrot.slane %v942, 4
        %v944 = vrot.slane %v255, 5
        %v945 = vsel %vm934, %v943, %v944
        %v946 = vrot.slane %v944, 4
        %v947 = vrot.slane %v274, 5
        %v948 = vsel %vm934, %v946, %v947
        %v949 = vrot.slane %v904, 5
        %v950 = vrot.slane %v949, 4
        %v951 = vrot.slane %v257, 5
        %v952 = vsel %vm934, %v950, %v951
        %v953 = vrot.slane %v951, 4
        %v954 = vrot.slane %v275, 5
        %v955 = vsel %vm934, %v953, %v954
        %v956 = vrot.slane %v905, 5
        %v957 = vrot.slane %v956, 4
        %v958 = vrot.slane %v259, 5
        %v959 = vsel %vm934, %v957, %v958
        %v960 = vrot.slane %v958, 4
        %v961 = vrot.slane %v276, 5
        %v962 = vsel %vm934, %v960, %v961
        %v963 = vrot.slane %v906, 5
        %v964 = vrot.slane %v963, 4
        %v965 = vrot.slane %v261, 5
        %v966 = vsel %vm934, %v964, %v965
        %v967 = vrot.slane %v965, 4
        %v968 = vrot.slane %v277, 5
        %v969 = vsel %vm934, %v967, %v968
        %v970 = vrot.slane %v907, 5
        %v971 = vrot.slane %v970, 4
        %v972 = vrot.slane %v263, 5
        %v973 = vsel %vm934, %v971, %v972
        %v974 = vrot.slane %v972, 4
        %v975 = vrot.slane %v278, 5
        %v976 = vsel %vm934, %v974, %v975
        %v977 = vrot.slane %v908, 5
        %v978 = vrot.slane %v977, 4
        %v979 = vrot.slane %v265, 5
        %v980 = vsel %vm934, %v978, %v979
        %v981 = vrot.slane %v979, 4
        %v982 = vrot.slane %v279, 5
        %v983 = vsel %vm934, %v981, %v982
        %v984 = vrot.slane %v909, 5
        %v985 = vrot.slane %v984, 4
        %v986 = vrot.slane %v267, 5
        %v987 = vsel %vm934, %v985, %v986
        %v988 = vrot.slane %v986, 4
        %v989 = vrot.slane %v280, 5
        %v990 = vsel %vm934, %v988, %v989
        %v991 = vrot.slane %v910, 5
        %v992 = vrot.slane %v991, 4
        %v993 = vrot.slane %v269, 5
        %v994 = vsel %vm934, %v992, %v993
        %v995 = vrot.slane %v993, 4
        %v996 = vrot.slane %v281, 5
        %v997 = vsel %vm934, %v995, %v996
        %v998 = vrot.slane %v911, 5
        %v999 = vrot.slane %v998, 4
        %v1000 = vrot.slane %v271, 5
        %v1001 = vsel %vm934, %v999, %v1000
        %v1002 = vrot.slane %v1000, 4
        %v1003 = vrot.slane %v282, 5
        %v1004 = vsel %vm934, %v1002, %v1003
        %s1005 = scalar_lea.vmem %s1, 4
        %v1006 = vld [vmem:[%s1005] sm:$0x3]
        %v1007 = vunpack.c.l.b16 %v938
        %v1008 = vunpack.c.l.b16 %v941
        %v1009 = vunpack.c.l.b16 %v945
        %v1010 = vunpack.c.l.b16 %v948
        %v1011 = vunpack.c.l.b16 %v952
        %v1012 = vunpack.c.l.b16 %v955
        %v1013 = vunpack.c.l.b16 %v959
        %v1014 = vunpack.c.l.b16 %v962
        %v1015 = vunpack.c.l.b16 %v966
        %v1016 = vunpack.c.l.b16 %v969
        %v1017 = vunpack.c.l.b16 %v973
        %v1018 = vunpack.c.l.b16 %v976
        %v1019 = vunpack.c.l.b16 %v980
        %v1020 = vunpack.c.l.b16 %v983
        %v1021 = vunpack.c.l.b16 %v987
        %v1022 = vunpack.c.l.b16 %v990
        %v1023 = vunpack.c.l.b16 %v994
        %v1024 = vunpack.c.l.b16 %v997
        %v1025 = vunpack.c.l.b16 %v1001
        %v1026 = vunpack.c.l.b16 %v1004
        %v1027 = vpack.c.b16 %v1008, %v1007
        %v1028 = vpack.c.b16 %v1010, %v1009
        %v1029 = vpack.c.b16 %v1012, %v1011
        %v1030 = vpack.c.b16 %v1014, %v1013
        %v1031 = vpack.c.b16 %v1016, %v1015
        %v1032 = vpack.c.b16 %v1018, %v1017
        %v1033 = vpack.c.b16 %v1020, %v1019
        %v1034 = vpack.c.b16 %v1022, %v1021
        %v1035 = vpack.c.b16 %v1024, %v1023
        %v1036 = vpack.c.b16 %v1026, %v1025
        %v1038 = vsel %vm558, %v1027, 0
        %v1041 = vsel %vm558, %v1028, 0
        %v1044 = vsel %vm558, %v1029, 0
        %v1047 = vsel %vm558, %v1030, 0
        %v1050 = vsel %vm558, %v1031, 0
        %v1053 = vsel %vm558, %v1032, 0
        %v1056 = vsel %vm558, %v1033, 0
        %v1059 = vsel %vm558, %v1034, 0
        %v1062 = vsel %vm558, %v1035, 0
        %v1065 = vsel %vm558, %v1036, 0
        %v1068 = vsel %vm589, %v1006, 0
        %1070 = vmatprep.subr.bf16.mxu0 0
        %1071 = vmatpush1.bf16.msra.mxu0 %v1068
        %1072 = vmatprep.subr.bf16.mxu0 0
        %1073 = vmatpush1.bf16.msra.mxu0 0
        %1074 = vmatprep.subr.bf16.mxu0 0
        %1075 = vmatpush1.bf16.msra.mxu0 0
        %1076 = vmatprep.subr.bf16.mxu0 0
        %1077 = vmatpush1.bf16.msra.mxu0 0
        %1078 = vmatprep.subr.bf16.mxu0 0
        %1079 = vmatpush1.bf16.msra.mxu0 0
        %1080 = vmatprep.subr.bf16.mxu0 0
        %1081 = vmatpush1.bf16.msra.mxu0 0
        %1082 = vmatprep.subr.bf16.mxu0 0
        %1083 = vmatpush1.bf16.msra.mxu0 0
        %1084 = vmatprep.subr.bf16.mxu0 0
        %1085 = vmatpush1.bf16.msra.mxu0 0
        %1086 = vmatprep.subr.bf16.mxu0 0
        %1087 = vmatpush1.bf16.msra.mxu0 0
        %1088 = vmatprep.subr.bf16.mxu0 0
        %1089 = vmatpush1.bf16.msra.mxu0 0
        %1090 = vmatprep.subr.bf16.mxu0 0
        %1091 = vmatpush1.bf16.msra.mxu0 0
        %1092 = vmatprep.subr.bf16.mxu0 0
        %1093 = vmatpush1.bf16.msra.mxu0 0
        %1094 = vmatprep.subr.bf16.mxu0 0
        %1095 = vmatpush1.bf16.msra.mxu0 0
        %1096 = vmatprep.subr.bf16.mxu0 0
        %1097 = vmatpush1.bf16.msra.mxu0 0
        %1098 = vmatprep.subr.bf16.mxu0 0
        %1099 = vmatpush1.bf16.msra.mxu0 0
        %1100 = vmatprep.subr.bf16.mxu0 0
        %1101 = vmatpush1.bf16.msra.mxu0 0
        %1102 = vmatprep.mubr.bf16.mxu0 0
        %1103 = vmatmul.mubr.bf16.gmra.mrb[0].mxu0 %v1038
        %v1104 = vpop.f32.mrb[0].mxu0
        %v1105 = vadd.f32 0.0, %v1104
        %v1106 = vpop.f32.mrb[0].mxu0
        %v1107 = vpop.f32.mrb[0].mxu0
        %v1108 = vadd.f32 0.0, %v1107
        %v1109 = vpop.f32.mrb[0].mxu0
        %1110 = vmatprep.mubr.bf16.mxu0 0
        %1111 = vmatmul.mubr.bf16.gmra.mrb[0].mxu0 %v1041
        %v1112 = vpop.f32.mrb[0].mxu0
        %v1113 = vadd.f32 0.0, %v1112
        %v1114 = vpop.f32.mrb[0].mxu0
        %v1115 = vpop.f32.mrb[0].mxu0
        %v1116 = vadd.f32 0.0, %v1115
        %v1117 = vpop.f32.mrb[0].mxu0
        %1118 = vmatprep.mubr.bf16.mxu0 0
        %1119 = vmatmul.mubr.bf16.gmra.mrb[0].mxu0 %v1044
        %v1120 = vpop.f32.mrb[0].mxu0
        %v1121 = vadd.f32 0.0, %v1120
        %v1122 = vpop.f32.mrb[0].mxu0
        %v1123 = vpop.f32.mrb[0].mxu0
        %v1124 = vadd.f32 0.0, %v1123
        %v1125 = vpop.f32.mrb[0].mxu0
        %1126 = vmatprep.mubr.bf16.mxu0 0
        %1127 = vmatmul.mubr.bf16.gmra.mrb[0].mxu0 %v1047
        %v1128 = vpop.f32.mrb[0].mxu0
        %v1129 = vadd.f32 0.0, %v1128
        %v1130 = vpop.f32.mrb[0].mxu0
        %v1131 = vpop.f32.mrb[0].mxu0
        %v1132 = vadd.f32 0.0, %v1131
        %v1133 = vpop.f32.mrb[0].mxu0
        %1134 = vmatprep.mubr.bf16.mxu0 0
        %1135 = vmatmul.mubr.bf16.gmra.mrb[0].mxu0 %v1050
        %v1136 = vpop.f32.mrb[0].mxu0
        %v1137 = vadd.f32 0.0, %v1136
        %v1138 = vpop.f32.mrb[0].mxu0
        %v1139 = vpop.f32.mrb[0].mxu0
        %v1140 = vadd.f32 0.0, %v1139
        %v1141 = vpop.f32.mrb[0].mxu0
        %1142 = vmatprep.mubr.bf16.mxu0 0
        %1143 = vmatmul.mubr.bf16.gmra.mrb[0].mxu0 %v1053
        %v1144 = vpop.f32.mrb[0].mxu0
        %v1145 = vadd.f32 0.0, %v1144
        %v1146 = vpop.f32.mrb[0].mxu0
        %v1147 = vpop.f32.mrb[0].mxu0
        %v1148 = vadd.f32 0.0, %v1147
        %v1149 = vpop.f32.mrb[0].mxu0
        %1150 = vmatprep.mubr.bf16.mxu0 0
        %1151 = vmatmul.mubr.bf16.gmra.mrb[0].mxu0 %v1056
        %v1152 = vpop.f32.mrb[0].mxu0
        %v1153 = vadd.f32 0.0, %v1152
        %v1154 = vpop.f32.mrb[0].mxu0
        %v1155 = vpop.f32.mrb[0].mxu0
        %v1156 = vadd.f32 0.0, %v1155
        %v1157 = vpop.f32.mrb[0].mxu0
        %1158 = vmatprep.mubr.bf16.mxu0 0
        %1159 = vmatmul.mubr.bf16.gmra.mrb[0].mxu0 %v1059
        %v1160 = vpop.f32.mrb[0].mxu0
        %v1161 = vadd.f32 0.0, %v1160
        %v1162 = vpop.f32.mrb[0].mxu0
        %v1163 = vpop.f32.mrb[0].mxu0
        %v1164 = vadd.f32 0.0, %v1163
        %v1165 = vpop.f32.mrb[0].mxu0
        %1166 = vmatprep.mubr.bf16.mxu0 0
        %1167 = vmatmul.mubr.bf16.gmra.mrb[0].mxu0 %v1062
        %v1168 = vpop.f32.mrb[0].mxu0
        %v1169 = vadd.f32 0.0, %v1168
        %v1170 = vpop.f32.mrb[0].mxu0
        %v1171 = vpop.f32.mrb[0].mxu0
        %v1172 = vadd.f32 0.0, %v1171
        %v1173 = vpop.f32.mrb[0].mxu0
        %1174 = vmatprep.mubr.bf16.mxu0 0
        %1175 = vmatmul.mubr.bf16.gmra.mrb[0].mxu0 %v1065
        %v1176 = vpop.f32.mrb[0].mxu0
        %v1177 = vadd.f32 0.0, %v1176
        %v1178 = vpop.f32.mrb[0].mxu0
        %v1179 = vpop.f32.mrb[0].mxu0
        %v1180 = vadd.f32 0.0, %v1179
        %v1181 = vpop.f32.mrb[0].mxu0
        %1182 = vdwg.mxu0
        %v1183 = vadd.f32 %v824, %v1105
        %v1184 = vadd.f32 %v827, %v1108
        %v1185 = vadd.f32 %v832, %v1113
        %v1186 = vadd.f32 %v835, %v1116
        %v1187 = vadd.f32 %v840, %v1121
        %v1188 = vadd.f32 %v843, %v1124
        %v1189 = vadd.f32 %v848, %v1129
        %v1190 = vadd.f32 %v851, %v1132
        %v1191 = vadd.f32 %v856, %v1137
        %v1192 = vadd.f32 %v859, %v1140
        %v1193 = vadd.f32 %v864, %v1145
        %v1194 = vadd.f32 %v867, %v1148
        %v1195 = vadd.f32 %v872, %v1153
        %v1196 = vadd.f32 %v875, %v1156
        %v1197 = vadd.f32 %v880, %v1161
        %v1198 = vadd.f32 %v883, %v1164
        %v1199 = vadd.f32 %v888, %v1169
        %v1200 = vadd.f32 %v891, %v1172
        %v1201 = vadd.f32 %v896, %v1177
        %v1202 = vadd.f32 %v899, %v1180
        %v1203 = vld [vmem:[%s250 + $0x8] sm:$0x3]
        %v1204 = vld [vmem:[%s250 + $0x14] sm:$0x3]
        %v1205 = vld [vmem:[%s250 + $0x20] sm:$0x3]
        %v1206 = vld [vmem:[%s250 + $0x2c] sm:$0x3]
        %v1207 = vld [vmem:[%s250 + $0x38] sm:$0x3]
        %v1208 = vld [vmem:[%s250 + $0x44] sm:$0x3]
        %v1209 = vld [vmem:[%s250 + $0x50] sm:$0x3]
        %v1210 = vld [vmem:[%s250 + $0x5c] sm:$0x3]
        %v1211 = vld [vmem:[%s250 + $0x68] sm:$0x3]
        %v1212 = vld [vmem:[%s250 + $0x74] sm:$0x3]
        %vm1213 = vsmask.f32 2304
        %vm1214 = vsmask.f32 6416
        %vm1215 = vmor %vm1213, %vm1214
        %v1217 = vshrl.u32 %v902, 16
        %v1219 = vrot.slane %v1217, 5
        %v1220 = vshll.u32 %v902, 16
        %v1222 = vrot.slane %v1220, 6
        %v1223 = vor.u32 %v1219, %v1222
        %v1224 = vrot.slane %v1223, 4
        %v1225 = vrot.slane %v300, 5
        %v1226 = vrot.slane %v296, 6
        %v1227 = vor.u32 %v1225, %v1226
        %v1228 = vsel %vm1215, %v1224, %v1227
        %v1229 = vrot.slane %v1227, 4
        %v1231 = vshrl.u32 %v1203, 16
        %v1233 = vrot.slane %v1231, 5
        %v1234 = vshll.u32 %v1203, 16
        %v1236 = vrot.slane %v1234, 6
        %v1237 = vor.u32 %v1233, %v1236
        %v1238 = vsel %vm1215, %v1229, %v1237
        %v1240 = vshrl.u32 %v903, 16
        %v1242 = vrot.slane %v1240, 5
        %v1243 = vshll.u32 %v903, 16
        %v1245 = vrot.slane %v1243, 6
        %v1246 = vor.u32 %v1242, %v1245
        %v1247 = vrot.slane %v1246, 4
        %v1248 = vrot.slane %v324, 5
        %v1249 = vrot.slane %v320, 6
        %v1250 = vor.u32 %v1248, %v1249
        %v1251 = vsel %vm1215, %v1247, %v1250
        %v1252 = vrot.slane %v1250, 4
        %v1254 = vshrl.u32 %v1204, 16
        %v1256 = vrot.slane %v1254, 5
        %v1257 = vshll.u32 %v1204, 16
        %v1259 = vrot.slane %v1257, 6
        %v1260 = vor.u32 %v1256, %v1259
        %v1261 = vsel %vm1215, %v1252, %v1260
        %v1263 = vshrl.u32 %v904, 16
        %v1265 = vrot.slane %v1263, 5
        %v1266 = vshll.u32 %v904, 16
        %v1268 = vrot.slane %v1266, 6
        %v1269 = vor.u32 %v1265, %v1268
        %v1270 = vrot.slane %v1269, 4
        %v1271 = vrot.slane %v348, 5
        %v1272 = vrot.slane %v344, 6
        %v1273 = vor.u32 %v1271, %v1272
        %v1274 = vsel %vm1215, %v1270, %v1273
        %v1275 = vrot.slane %v1273, 4
        %v1277 = vshrl.u32 %v1205, 16
        %v1279 = vrot.slane %v1277, 5
        %v1280 = vshll.u32 %v1205, 16
        %v1282 = vrot.slane %v1280, 6
        %v1283 = vor.u32 %v1279, %v1282
        %v1284 = vsel %vm1215, %v1275, %v1283
        %v1286 = vshrl.u32 %v905, 16
        %v1288 = vrot.slane %v1286, 5
        %v1289 = vshll.u32 %v905, 16
        %v1291 = vrot.slane %v1289, 6
        %v1292 = vor.u32 %v1288, %v1291
        %v1293 = vrot.slane %v1292, 4
        %v1294 = vrot.slane %v372, 5
        %v1295 = vrot.slane %v368, 6
        %v1296 = vor.u32 %v1294, %v1295
        %v1297 = vsel %vm1215, %v1293, %v1296
        %v1298 = vrot.slane %v1296, 4
        %v1300 = vshrl.u32 %v1206, 16
        %v1302 = vrot.slane %v1300, 5
        %v1303 = vshll.u32 %v1206, 16
        %v1305 = vrot.slane %v1303, 6
        %v1306 = vor.u32 %v1302, %v1305
        %v1307 = vsel %vm1215, %v1298, %v1306
        %v1309 = vshrl.u32 %v906, 16
        %v1311 = vrot.slane %v1309, 5
        %v1312 = vshll.u32 %v906, 16
        %v1314 = vrot.slane %v1312, 6
        %v1315 = vor.u32 %v1311, %v1314
        %v1316 = vrot.slane %v1315, 4
        %v1317 = vrot.slane %v396, 5
        %v1318 = vrot.slane %v392, 6
        %v1319 = vor.u32 %v1317, %v1318
        %v1320 = vsel %vm1215, %v1316, %v1319
        %v1321 = vrot.slane %v1319, 4
        %v1323 = vshrl.u32 %v1207, 16
        %v1325 = vrot.slane %v1323, 5
        %v1326 = vshll.u32 %v1207, 16
        %v1328 = vrot.slane %v1326, 6
        %v1329 = vor.u32 %v1325, %v1328
        %v1330 = vsel %vm1215, %v1321, %v1329
        %v1332 = vshrl.u32 %v907, 16
        %v1334 = vrot.slane %v1332, 5
        %v1335 = vshll.u32 %v907, 16
        %v1337 = vrot.slane %v1335, 6
        %v1338 = vor.u32 %v1334, %v1337
        %v1339 = vrot.slane %v1338, 4
        %v1340 = vrot.slane %v420, 5
        %v1341 = vrot.slane %v416, 6
        %v1342 = vor.u32 %v1340, %v1341
        %v1343 = vsel %vm1215, %v1339, %v1342
        %v1344 = vrot.slane %v1342, 4
        %v1346 = vshrl.u32 %v1208, 16
        %v1348 = vrot.slane %v1346, 5
        %v1349 = vshll.u32 %v1208, 16
        %v1351 = vrot.slane %v1349, 6
        %v1352 = vor.u32 %v1348, %v1351
        %v1353 = vsel %vm1215, %v1344, %v1352
        %v1355 = vshrl.u32 %v908, 16
        %v1357 = vrot.slane %v1355, 5
        %v1358 = vshll.u32 %v908, 16
        %v1360 = vrot.slane %v1358, 6
        %v1361 = vor.u32 %v1357, %v1360
        %v1362 = vrot.slane %v1361, 4
        %v1363 = vrot.slane %v444, 5
        %v1364 = vrot.slane %v440, 6
        %v1365 = vor.u32 %v1363, %v1364
        %v1366 = vsel %vm1215, %v1362, %v1365
        %v1367 = vrot.slane %v1365, 4
        %v1369 = vshrl.u32 %v1209, 16
        %v1371 = vrot.slane %v1369, 5
        %v1372 = vshll.u32 %v1209, 16
        %v1374 = vrot.slane %v1372, 6
        %v1375 = vor.u32 %v1371, %v1374
        %v1376 = vsel %vm1215, %v1367, %v1375
        %v1378 = vshrl.u32 %v909, 16
        %v1380 = vrot.slane %v1378, 5
        %v1381 = vshll.u32 %v909, 16
        %v1383 = vrot.slane %v1381, 6
        %v1384 = vor.u32 %v1380, %v1383
        %v1385 = vrot.slane %v1384, 4
        %v1386 = vrot.slane %v468, 5
        %v1387 = vrot.slane %v464, 6
        %v1388 = vor.u32 %v1386, %v1387
        %v1389 = vsel %vm1215, %v1385, %v1388
        %v1390 = vrot.slane %v1388, 4
        %v1392 = vshrl.u32 %v1210, 16
        %v1394 = vrot.slane %v1392, 5
        %v1395 = vshll.u32 %v1210, 16
        %v1397 = vrot.slane %v1395, 6
        %v1398 = vor.u32 %v1394, %v1397
        %v1399 = vsel %vm1215, %v1390, %v1398
        %v1401 = vshrl.u32 %v910, 16
        %v1403 = vrot.slane %v1401, 5
        %v1404 = vshll.u32 %v910, 16
        %v1406 = vrot.slane %v1404, 6
        %v1407 = vor.u32 %v1403, %v1406
        %v1408 = vrot.slane %v1407, 4
        %v1409 = vrot.slane %v492, 5
        %v1410 = vrot.slane %v488, 6
        %v1411 = vor.u32 %v1409, %v1410
        %v1412 = vsel %vm1215, %v1408, %v1411
        %v1413 = vrot.slane %v1411, 4
        %v1415 = vshrl.u32 %v1211, 16
        %v1417 = vrot.slane %v1415, 5
        %v1418 = vshll.u32 %v1211, 16
        %v1420 = vrot.slane %v1418, 6
        %v1421 = vor.u32 %v1417, %v1420
        %v1422 = vsel %vm1215, %v1413, %v1421
        %v1424 = vshrl.u32 %v911, 16
        %v1426 = vrot.slane %v1424, 5
        %v1427 = vshll.u32 %v911, 16
        %v1429 = vrot.slane %v1427, 6
        %v1430 = vor.u32 %v1426, %v1429
        %v1431 = vrot.slane %v1430, 4
        %v1432 = vrot.slane %v516, 5
        %v1433 = vrot.slane %v512, 6
        %v1434 = vor.u32 %v1432, %v1433
        %v1435 = vsel %vm1215, %v1431, %v1434
        %v1436 = vrot.slane %v1434, 4
        %v1438 = vshrl.u32 %v1212, 16
        %v1440 = vrot.slane %v1438, 5
        %v1441 = vshll.u32 %v1212, 16
        %v1443 = vrot.slane %v1441, 6
        %v1444 = vor.u32 %v1440, %v1443
        %v1445 = vsel %vm1215, %v1436, %v1444
        %s1446 = scalar_lea.vmem %s1, 6
        %v1447 = vld [vmem:[%s1446] sm:$0x3]
        %v1448 = vunpack.c.l.b16 %v1228
        %v1449 = vunpack.c.l.b16 %v1238
        %v1450 = vunpack.c.l.b16 %v1251
        %v1451 = vunpack.c.l.b16 %v1261
        %v1452 = vunpack.c.l.b16 %v1274
        %v1453 = vunpack.c.l.b16 %v1284
        %v1454 = vunpack.c.l.b16 %v1297
        %v1455 = vunpack.c.l.b16 %v1307
        %v1456 = vunpack.c.l.b16 %v1320
        %v1457 = vunpack.c.l.b16 %v1330
        %v1458 = vunpack.c.l.b16 %v1343
        %v1459 = vunpack.c.l.b16 %v1353
        %v1460 = vunpack.c.l.b16 %v1366
        %v1461 = vunpack.c.l.b16 %v1376
        %v1462 = vunpack.c.l.b16 %v1389
        %v1463 = vunpack.c.l.b16 %v1399
        %v1464 = vunpack.c.l.b16 %v1412
        %v1465 = vunpack.c.l.b16 %v1422
        %v1466 = vunpack.c.l.b16 %v1435
        %v1467 = vunpack.c.l.b16 %v1445
        %v1468 = vpack.c.b16 %v1449, %v1448
        %v1469 = vpack.c.b16 %v1451, %v1450
        %v1470 = vpack.c.b16 %v1453, %v1452
        %v1471 = vpack.c.b16 %v1455, %v1454
        %v1472 = vpack.c.b16 %v1457, %v1456
        %v1473 = vpack.c.b16 %v1459, %v1458
        %v1474 = vpack.c.b16 %v1461, %v1460
        %v1475 = vpack.c.b16 %v1463, %v1462
        %v1476 = vpack.c.b16 %v1465, %v1464
        %v1477 = vpack.c.b16 %v1467, %v1466
        %v1479 = vsel %vm558, %v1468, 0
        %v1482 = vsel %vm558, %v1469, 0
        %v1485 = vsel %vm558, %v1470, 0
        %v1488 = vsel %vm558, %v1471, 0
        %v1491 = vsel %vm558, %v1472, 0
        %v1494 = vsel %vm558, %v1473, 0
        %v1497 = vsel %vm558, %v1474, 0
        %v1500 = vsel %vm558, %v1475, 0
        %v1503 = vsel %vm558, %v1476, 0
        %v1506 = vsel %vm558, %v1477, 0
        %v1509 = vsel %vm589, %v1447, 0
        %1511 = vmatprep.subr.bf16.mxu0 0
        %1512 = vmatpush1.bf16.msra.mxu0 %v1509
        %1513 = vmatprep.subr.bf16.mxu0 0
        %1514 = vmatpush1.bf16.msra.mxu0 0
        %1515 = vmatprep.subr.bf16.mxu0 0
        %1516 = vmatpush1.bf16.msra.mxu0 0
        %1517 = vmatprep.subr.bf16.mxu0 0
        %1518 = vmatpush1.bf16.msra.mxu0 0
        %1519 = vmatprep.subr.bf16.mxu0 0
        %1520 = vmatpush1.bf16.msra.mxu0 0
        %1521 = vmatprep.subr.bf16.mxu0 0
        %1522 = vmatpush1.bf16.msra.mxu0 0
        %1523 = vmatprep.subr.bf16.mxu0 0
        %1524 = vmatpush1.bf16.msra.mxu0 0
        %1525 = vmatprep.subr.bf16.mxu0 0
        %1526 = vmatpush1.bf16.msra.mxu0 0
        %1527 = vmatprep.subr.bf16.mxu0 0
        %1528 = vmatpush1.bf16.msra.mxu0 0
        %1529 = vmatprep.subr.bf16.mxu0 0
        %1530 = vmatpush1.bf16.msra.mxu0 0
        %1531 = vmatprep.subr.bf16.mxu0 0
        %1532 = vmatpush1.bf16.msra.mxu0 0
        %1533 = vmatprep.subr.bf16.mxu0 0
        %1534 = vmatpush1.bf16.msra.mxu0 0
        %1535 = vmatprep.subr.bf16.mxu0 0
        %1536 = vmatpush1.bf16.msra.mxu0 0
        %1537 = vmatprep.subr.bf16.mxu0 0
        %1538 = vmatpush1.bf16.msra.mxu0 0
        %1539 = vmatprep.subr.bf16.mxu0 0
        %1540 = vmatpush1.bf16.msra.mxu0 0
        %1541 = vmatprep.subr.bf16.mxu0 0
        %1542 = vmatpush1.bf16.msra.mxu0 0
        %1543 = vmatprep.mubr.bf16.mxu0 0
        %1544 = vmatmul.mubr.bf16.gmra.mrb[0].mxu0 %v1479
        %v1545 = vpop.f32.mrb[0].mxu0
        %v1546 = vadd.f32 0.0, %v1545
        %v1547 = vpop.f32.mrb[0].mxu0
        %v1548 = vpop.f32.mrb[0].mxu0
        %v1549 = vadd.f32 0.0, %v1548
        %v1550 = vpop.f32.mrb[0].mxu0
        %1551 = vmatprep.mubr.bf16.mxu0 0
        %1552 = vmatmul.mubr.bf16.gmra.mrb[0].mxu0 %v1482
        %v1553 = vpop.f32.mrb[0].mxu0
        %v1554 = vadd.f32 0.0, %v1553
        %v1555 = vpop.f32.mrb[0].mxu0
        %v1556 = vpop.f32.mrb[0].mxu0
        %v1557 = vadd.f32 0.0, %v1556
        %v1558 = vpop.f32.mrb[0].mxu0
        %1559 = vmatprep.mubr.bf16.mxu0 0
        %1560 = vmatmul.mubr.bf16.gmra.mrb[0].mxu0 %v1485
        %v1561 = vpop.f32.mrb[0].mxu0
        %v1562 = vadd.f32 0.0, %v1561
        %v1563 = vpop.f32.mrb[0].mxu0
        %v1564 = vpop.f32.mrb[0].mxu0
        %v1565 = vadd.f32 0.0, %v1564
        %v1566 = vpop.f32.mrb[0].mxu0
        %1567 = vmatprep.mubr.bf16.mxu0 0
        %1568 = vmatmul.mubr.bf16.gmra.mrb[0].mxu0 %v1488
        %v1569 = vpop.f32.mrb[0].mxu0
        %v1570 = vadd.f32 0.0, %v1569
        %v1571 = vpop.f32.mrb[0].mxu0
        %v1572 = vpop.f32.mrb[0].mxu0
        %v1573 = vadd.f32 0.0, %v1572
        %v1574 = vpop.f32.mrb[0].mxu0
        %1575 = vmatprep.mubr.bf16.mxu0 0
        %1576 = vmatmul.mubr.bf16.gmra.mrb[0].mxu0 %v1491
        %v1577 = vpop.f32.mrb[0].mxu0
        %v1578 = vadd.f32 0.0, %v1577
        %v1579 = vpop.f32.mrb[0].mxu0
        %v1580 = vpop.f32.mrb[0].mxu0
        %v1581 = vadd.f32 0.0, %v1580
        %v1582 = vpop.f32.mrb[0].mxu0
        %1583 = vmatprep.mubr.bf16.mxu0 0
        %1584 = vmatmul.mubr.bf16.gmra.mrb[0].mxu0 %v1494
        %v1585 = vpop.f32.mrb[0].mxu0
        %v1586 = vadd.f32 0.0, %v1585
        %v1587 = vpop.f32.mrb[0].mxu0
        %v1588 = vpop.f32.mrb[0].mxu0
        %v1589 = vadd.f32 0.0, %v1588
        %v1590 = vpop.f32.mrb[0].mxu0
        %1591 = vmatprep.mubr.bf16.mxu0 0
        %1592 = vmatmul.mubr.bf16.gmra.mrb[0].mxu0 %v1497
        %v1593 = vpop.f32.mrb[0].mxu0
        %v1594 = vadd.f32 0.0, %v1593
        %v1595 = vpop.f32.mrb[0].mxu0
        %v1596 = vpop.f32.mrb[0].mxu0
        %v1597 = vadd.f32 0.0, %v1596
        %v1598 = vpop.f32.mrb[0].mxu0
        %1599 = vmatprep.mubr.bf16.mxu0 0
        %1600 = vmatmul.mubr.bf16.gmra.mrb[0].mxu0 %v1500
        %v1601 = vpop.f32.mrb[0].mxu0
        %v1602 = vadd.f32 0.0, %v1601
        %v1603 = vpop.f32.mrb[0].mxu0
        %v1604 = vpop.f32.mrb[0].mxu0
        %v1605 = vadd.f32 0.0, %v1604
        %v1606 = vpop.f32.mrb[0].mxu0
        %1607 = vmatprep.mubr.bf16.mxu0 0
        %1608 = vmatmul.mubr.bf16.gmra.mrb[0].mxu0 %v1503
        %v1609 = vpop.f32.mrb[0].mxu0
        %v1610 = vadd.f32 0.0, %v1609
        %v1611 = vpop.f32.mrb[0].mxu0
        %v1612 = vpop.f32.mrb[0].mxu0
        %v1613 = vadd.f32 0.0, %v1612
        %v1614 = vpop.f32.mrb[0].mxu0
        %1615 = vmatprep.mubr.bf16.mxu0 0
        %1616 = vmatmul.mubr.bf16.gmra.mrb[0].mxu0 %v1506
        %v1617 = vpop.f32.mrb[0].mxu0
        %v1618 = vadd.f32 0.0, %v1617
        %v1619 = vpop.f32.mrb[0].mxu0
        %v1620 = vpop.f32.mrb[0].mxu0
        %v1621 = vadd.f32 0.0, %v1620
        %v1622 = vpop.f32.mrb[0].mxu0
        %1623 = vdwg.mxu0
        %v1624 = vadd.f32 %v1183, %v1546
        %v1625 = vadd.f32 %v1184, %v1549
        %v1626 = vadd.f32 %v1185, %v1554
        %v1627 = vadd.f32 %v1186, %v1557
        %v1628 = vadd.f32 %v1187, %v1562
        %v1629 = vadd.f32 %v1188, %v1565
        %v1630 = vadd.f32 %v1189, %v1570
        %v1631 = vadd.f32 %v1190, %v1573
        %v1632 = vadd.f32 %v1191, %v1578
        %v1633 = vadd.f32 %v1192, %v1581
        %v1634 = vadd.f32 %v1193, %v1586
        %v1635 = vadd.f32 %v1194, %v1589
        %v1636 = vadd.f32 %v1195, %v1594
        %v1637 = vadd.f32 %v1196, %v1597
        %v1638 = vadd.f32 %v1197, %v1602
        %v1639 = vadd.f32 %v1198, %v1605
        %v1640 = vadd.f32 %v1199, %v1610
        %v1641 = vadd.f32 %v1200, %v1613
        %v1642 = vadd.f32 %v1201, %v1618
        %v1643 = vadd.f32 %v1202, %v1621
        %v1644 = vld [vmem:[%s250] sm:$0xc]
        %v1645 = vld [vmem:[%s250 + $0xc] sm:$0xc]
        %v1646 = vld [vmem:[%s250 + $0x18] sm:$0xc]
        %v1647 = vld [vmem:[%s250 + $0x24] sm:$0xc]
        %v1648 = vld [vmem:[%s250 + $0x30] sm:$0xc]
        %v1649 = vld [vmem:[%s250 + $0x3c] sm:$0xc]
        %v1650 = vld [vmem:[%s250 + $0x48] sm:$0xc]
        %v1651 = vld [vmem:[%s250 + $0x54] sm:$0xc]
        %v1652 = vld [vmem:[%s250 + $0x60] sm:$0xc]
        %v1653 = vld [vmem:[%s250 + $0x6c] sm:$0xc]
        %vm1674 = vcmask 1041408
        %vm1675 = vcmask 1045508
        %vm1676 = vmor %vm1674, %vm1675
        %v1677 = vrot.slane %v1644, 6
        %v1678 = vrot.slane %v1677, 4
        %v1679 = vrot.slane %v253, 6
        %v1680 = vsel %vm1676, %v1678, %v1679
        %v1681 = vrot.slane %v1679, 4
        %v1682 = vrot.slane %v1203, 6
        %v1683 = vsel %vm1676, %v1681, %v1682
        %v1684 = vrot.slane %v1645, 6
        %v1685 = vrot.slane %v1684, 4
        %v1686 = vrot.slane %v255, 6
        %v1687 = vsel %vm1676, %v1685, %v1686
        %v1688 = vrot.slane %v1686, 4
        %v1689 = vrot.slane %v1204, 6
        %v1690 = vsel %vm1676, %v1688, %v1689
        %v1691 = vrot.slane %v1646, 6
        %v1692 = vrot.slane %v1691, 4
        %v1693 = vrot.slane %v257, 6
        %v1694 = vsel %vm1676, %v1692, %v1693
        %v1695 = vrot.slane %v1693, 4
        %v1696 = vrot.slane %v1205, 6
        %v1697 = vsel %vm1676, %v1695, %v1696
        %v1698 = vrot.slane %v1647, 6
        %v1699 = vrot.slane %v1698, 4
        %v1700 = vrot.slane %v259, 6
        %v1701 = vsel %vm1676, %v1699, %v1700
        %v1702 = vrot.slane %v1700, 4
        %v1703 = vrot.slane %v1206, 6
        %v1704 = vsel %vm1676, %v1702, %v1703
        %v1705 = vrot.slane %v1648, 6
        %v1706 = vrot.slane %v1705, 4
        %v1707 = vrot.slane %v261, 6
        %v1708 = vsel %vm1676, %v1706, %v1707
        %v1709 = vrot.slane %v1707, 4
        %v1710 = vrot.slane %v1207, 6
        %v1711 = vsel %vm1676, %v1709, %v1710
        %v1712 = vrot.slane %v1649, 6
        %v1713 = vrot.slane %v1712, 4
        %v1714 = vrot.slane %v263, 6
        %v1715 = vsel %vm1676, %v1713, %v1714
        %v1716 = vrot.slane %v1714, 4
        %v1717 = vrot.slane %v1208, 6
        %v1718 = vsel %vm1676, %v1716, %v1717
        %v1719 = vrot.slane %v1650, 6
        %v1720 = vrot.slane %v1719, 4
        %v1721 = vrot.slane %v265, 6
        %v1722 = vsel %vm1676, %v1720, %v1721
        %v1723 = vrot.slane %v1721, 4
        %v1724 = vrot.slane %v1209, 6
        %v1725 = vsel %vm1676, %v1723, %v1724
        %v1726 = vrot.slane %v1651, 6
        %v1727 = vrot.slane %v1726, 4
        %v1728 = vrot.slane %v267, 6
        %v1729 = vsel %vm1676, %v1727, %v1728
        %v1730 = vrot.slane %v1728, 4
        %v1731 = vrot.slane %v1210, 6
        %v1732 = vsel %vm1676, %v1730, %v1731
        %v1733 = vrot.slane %v1652, 6
        %v1734 = vrot.slane %v1733, 4
        %v1735 = vrot.slane %v269, 6
        %v1736 = vsel %vm1676, %v1734, %v1735
        %v1737 = vrot.slane %v1735, 4
        %v1738 = vrot.slane %v1211, 6
        %v1739 = vsel %vm1676, %v1737, %v1738
        %v1740 = vrot.slane %v1653, 6
        %v1741 = vrot.slane %v1740, 4
        %v1742 = vrot.slane %v271, 6
        %v1743 = vsel %vm1676, %v1741, %v1742
        %v1744 = vrot.slane %v1742, 4
        %v1745 = vrot.slane %v1212, 6
        %v1746 = vsel %vm1676, %v1744, %v1745
        %s1747 = scalar_lea.vmem %s1, 8
        %v1748 = vld [vmem:[%s1747] sm:$0x3]
        %v1749 = vunpack.c.l.b16 %v1680
        %v1750 = vunpack.c.l.b16 %v1683
        %v1751 = vunpack.c.l.b16 %v1687
        %v1752 = vunpack.c.l.b16 %v1690
        %v1753 = vunpack.c.l.b16 %v1694
        %v1754 = vunpack.c.l.b16 %v1697
        %v1755 = vunpack.c.l.b16 %v1701
        %v1756 = vunpack.c.l.b16 %v1704
        %v1757 = vunpack.c.l.b16 %v1708
        %v1758 = vunpack.c.l.b16 %v1711
        %v1759 = vunpack.c.l.b16 %v1715
        %v1760 = vunpack.c.l.b16 %v1718
        %v1761 = vunpack.c.l.b16 %v1722
        %v1762 = vunpack.c.l.b16 %v1725
        %v1763 = vunpack.c.l.b16 %v1729
        %v1764 = vunpack.c.l.b16 %v1732
        %v1765 = vunpack.c.l.b16 %v1736
        %v1766 = vunpack.c.l.b16 %v1739
        %v1767 = vunpack.c.l.b16 %v1743
        %v1768 = vunpack.c.l.b16 %v1746
        %v1769 = vpack.c.b16 %v1750, %v1749
        %v1770 = vpack.c.b16 %v1752, %v1751
        %v1771 = vpack.c.b16 %v1754, %v1753
        %v1772 = vpack.c.b16 %v1756, %v1755
        %v1773 = vpack.c.b16 %v1758, %v1757
        %v1774 = vpack.c.b16 %v1760, %v1759
        %v1775 = vpack.c.b16 %v1762, %v1761
        %v1776 = vpack.c.b16 %v1764, %v1763
        %v1777 = vpack.c.b16 %v1766, %v1765
        %v1778 = vpack.c.b16 %v1768, %v1767
        %v1780 = vsel %vm558, %v1769, 0
        %v1783 = vsel %vm558, %v1770, 0
        %v1786 = vsel %vm558, %v1771, 0
        %v1789 = vsel %vm558, %v1772, 0
        %v1792 = vsel %vm558, %v1773, 0
        %v1795 = vsel %vm558, %v1774, 0
        %v1798 = vsel %vm558, %v1775, 0
        %v1801 = vsel %vm558, %v1776, 0
        %v1804 = vsel %vm558, %v1777, 0
        %v1807 = vsel %vm558, %v1778, 0
        %v1810 = vsel %vm589, %v1748, 0
        %1812 = vmatprep.subr.bf16.mxu0 0
        %1813 = vmatpush1.bf16.msra.mxu0 %v1810
        %1814 = vmatprep.subr.bf16.mxu0 0
        %1815 = vmatpush1.bf16.msra.mxu0 0
        %1816 = vmatprep.subr.bf16.mxu0 0
        %1817 = vmatpush1.bf16.msra.mxu0 0
        %1818 = vmatprep.subr.bf16.mxu0 0
        %1819 = vmatpush1.bf16.msra.mxu0 0
        %1820 = vmatprep.subr.bf16.mxu0 0
        %1821 = vmatpush1.bf16.msra.mxu0 0
        %1822 = vmatprep.subr.bf16.mxu0 0
        %1823 = vmatpush1.bf16.msra.mxu0 0
        %1824 = vmatprep.subr.bf16.mxu0 0
        %1825 = vmatpush1.bf16.msra.mxu0 0
        %1826 = vmatprep.subr.bf16.mxu0 0
        %1827 = vmatpush1.bf16.msra.mxu0 0
        %1828 = vmatprep.subr.bf16.mxu0 0
        %1829 = vmatpush1.bf16.msra.mxu0 0
        %1830 = vmatprep.subr.bf16.mxu0 0
        %1831 = vmatpush1.bf16.msra.mxu0 0
        %1832 = vmatprep.subr.bf16.mxu0 0
        %1833 = vmatpush1.bf16.msra.mxu0 0
        %1834 = vmatprep.subr.bf16.mxu0 0
        %1835 = vmatpush1.bf16.msra.mxu0 0
        %1836 = vmatprep.subr.bf16.mxu0 0
        %1837 = vmatpush1.bf16.msra.mxu0 0
        %1838 = vmatprep.subr.bf16.mxu0 0
        %1839 = vmatpush1.bf16.msra.mxu0 0
        %1840 = vmatprep.subr.bf16.mxu0 0
        %1841 = vmatpush1.bf16.msra.mxu0 0
        %1842 = vmatprep.subr.bf16.mxu0 0
        %1843 = vmatpush1.bf16.msra.mxu0 0
        %1844 = vmatprep.mubr.bf16.mxu0 0
        %1845 = vmatmul.mubr.bf16.gmra.mrb[0].mxu0 %v1780
        %v1846 = vpop.f32.mrb[0].mxu0
        %v1847 = vadd.f32 0.0, %v1846
        %v1848 = vpop.f32.mrb[0].mxu0
        %v1849 = vpop.f32.mrb[0].mxu0
        %v1850 = vadd.f32 0.0, %v1849
        %v1851 = vpop.f32.mrb[0].mxu0
        %1852 = vmatprep.mubr.bf16.mxu0 0
        %1853 = vmatmul.mubr.bf16.gmra.mrb[0].mxu0 %v1783
        %v1854 = vpop.f32.mrb[0].mxu0
        %v1855 = vadd.f32 0.0, %v1854
        %v1856 = vpop.f32.mrb[0].mxu0
        %v1857 = vpop.f32.mrb[0].mxu0
        %v1858 = vadd.f32 0.0, %v1857
        %v1859 = vpop.f32.mrb[0].mxu0
        %1860 = vmatprep.mubr.bf16.mxu0 0
        %1861 = vmatmul.mubr.bf16.gmra.mrb[0].mxu0 %v1786
        %v1862 = vpop.f32.mrb[0].mxu0
        %v1863 = vadd.f32 0.0, %v1862
        %v1864 = vpop.f32.mrb[0].mxu0
        %v1865 = vpop.f32.mrb[0].mxu0
        %v1866 = vadd.f32 0.0, %v1865
        %v1867 = vpop.f32.mrb[0].mxu0
        %1868 = vmatprep.mubr.bf16.mxu0 0
        %1869 = vmatmul.mubr.bf16.gmra.mrb[0].mxu0 %v1789
        %v1870 = vpop.f32.mrb[0].mxu0
        %v1871 = vadd.f32 0.0, %v1870
        %v1872 = vpop.f32.mrb[0].mxu0
        %v1873 = vpop.f32.mrb[0].mxu0
        %v1874 = vadd.f32 0.0, %v1873
        %v1875 = vpop.f32.mrb[0].mxu0
        %1876 = vmatprep.mubr.bf16.mxu0 0
        %1877 = vmatmul.mubr.bf16.gmra.mrb[0].mxu0 %v1792
        %v1878 = vpop.f32.mrb[0].mxu0
        %v1879 = vadd.f32 0.0, %v1878
        %v1880 = vpop.f32.mrb[0].mxu0
        %v1881 = vpop.f32.mrb[0].mxu0
        %v1882 = vadd.f32 0.0, %v1881
        %v1883 = vpop.f32.mrb[0].mxu0
        %1884 = vmatprep.mubr.bf16.mxu0 0
        %1885 = vmatmul.mubr.bf16.gmra.mrb[0].mxu0 %v1795
        %v1886 = vpop.f32.mrb[0].mxu0
        %v1887 = vadd.f32 0.0, %v1886
        %v1888 = vpop.f32.mrb[0].mxu0
        %v1889 = vpop.f32.mrb[0].mxu0
        %v1890 = vadd.f32 0.0, %v1889
        %v1891 = vpop.f32.mrb[0].mxu0
        %1892 = vmatprep.mubr.bf16.mxu0 0
        %1893 = vmatmul.mubr.bf16.gmra.mrb[0].mxu0 %v1798
        %v1894 = vpop.f32.mrb[0].mxu0
        %v1895 = vadd.f32 0.0, %v1894
        %v1896 = vpop.f32.mrb[0].mxu0
        %v1897 = vpop.f32.mrb[0].mxu0
        %v1898 = vadd.f32 0.0, %v1897
        %v1899 = vpop.f32.mrb[0].mxu0
        %1900 = vmatprep.mubr.bf16.mxu0 0
        %1901 = vmatmul.mubr.bf16.gmra.mrb[0].mxu0 %v1801
        %v1902 = vpop.f32.mrb[0].mxu0
        %v1903 = vadd.f32 0.0, %v1902
        %v1904 = vpop.f32.mrb[0].mxu0
        %v1905 = vpop.f32.mrb[0].mxu0
        %v1906 = vadd.f32 0.0, %v1905
        %v1907 = vpop.f32.mrb[0].mxu0
        %1908 = vmatprep.mubr.bf16.mxu0 0
        %1909 = vmatmul.mubr.bf16.gmra.mrb[0].mxu0 %v1804
        %v1910 = vpop.f32.mrb[0].mxu0
        %v1911 = vadd.f32 0.0, %v1910
        %v1912 = vpop.f32.mrb[0].mxu0
        %v1913 = vpop.f32.mrb[0].mxu0
        %v1914 = vadd.f32 0.0, %v1913
        %v1915 = vpop.f32.mrb[0].mxu0
        %1916 = vmatprep.mubr.bf16.mxu0 0
        %1917 = vmatmul.mubr.bf16.gmra.mrb[0].mxu0 %v1807
        %v1918 = vpop.f32.mrb[0].mxu0
        %v1919 = vadd.f32 0.0, %v1918
        %v1920 = vpop.f32.mrb[0].mxu0
        %v1921 = vpop.f32.mrb[0].mxu0
        %v1922 = vadd.f32 0.0, %v1921
        %v1923 = vpop.f32.mrb[0].mxu0
        %1924 = vdwg.mxu0
        %v1925 = vadd.f32 %v1624, %v1847
        %v1926 = vadd.f32 %v1625, %v1850
        %v1927 = vadd.f32 %v1626, %v1855
        %v1928 = vadd.f32 %v1627, %v1858
        %v1929 = vadd.f32 %v1628, %v1863
        %v1930 = vadd.f32 %v1629, %v1866
        %v1931 = vadd.f32 %v1630, %v1871
        %v1932 = vadd.f32 %v1631, %v1874
        %v1933 = vadd.f32 %v1632, %v1879
        %v1934 = vadd.f32 %v1633, %v1882
        %v1935 = vadd.f32 %v1634, %v1887
        %v1936 = vadd.f32 %v1635, %v1890
        %v1937 = vadd.f32 %v1636, %v1895
        %v1938 = vadd.f32 %v1637, %v1898
        %v1939 = vadd.f32 %v1638, %v1903
        %v1940 = vadd.f32 %v1639, %v1906
        %v1941 = vadd.f32 %v1640, %v1911
        %v1942 = vadd.f32 %v1641, %v1914
        %v1943 = vadd.f32 %v1642, %v1919
        %v1944 = vadd.f32 %v1643, %v1922
        %s1945 = scalar_lea.vmem %s250, 12
        %v1946 = vld [vmem:[%s1945] sm:$0xf]
        %v1947 = vld [vmem:[%s1945 + $0x4] sm:$0xf]
        %v1948 = vld [vmem:[%s1945 + $0xc] sm:$0xf]
        %v1949 = vld [vmem:[%s1945 + $0x10] sm:$0xf]
        %v1950 = vld [vmem:[%s1945 + $0x18] sm:$0xf]
        %v1951 = vld [vmem:[%s1945 + $0x1c] sm:$0xf]
        %v1952 = vld [vmem:[%s1945 + $0x24] sm:$0xf]
        %v1953 = vld [vmem:[%s1945 + $0x28] sm:$0xf]
        %v1954 = vld [vmem:[%s1945 + $0x30] sm:$0xf]
        %v1955 = vld [vmem:[%s1945 + $0x34] sm:$0xf]
        %v1956 = vld [vmem:[%s1945 + $0x3c] sm:$0xf]
        %v1957 = vld [vmem:[%s1945 + $0x40] sm:$0xf]
        %v1958 = vld [vmem:[%s1945 + $0x48] sm:$0xf]
        %v1959 = vld [vmem:[%s1945 + $0x4c] sm:$0xf]
        %v1960 = vld [vmem:[%s1945 + $0x54] sm:$0xf]
        %v1961 = vld [vmem:[%s1945 + $0x58] sm:$0xf]
        %v1962 = vld [vmem:[%s1945 + $0x60] sm:$0xf]
        %v1963 = vld [vmem:[%s1945 + $0x64] sm:$0xf]
        %v1964 = vld [vmem:[%s1945 + $0x6c] sm:$0xf]
        %v1965 = vld [vmem:[%s1945 + $0x70] sm:$0xf]
        %s1966 = scalar_lea.vmem %s1, 10
        %v1967 = vld [vmem:[%s1966] sm:$0x3]
        %v1988 = vunpack.c.l.b16 %v1946
        %v1989 = vunpack.c.l.b16 %v1947
        %v1990 = vunpack.c.l.b16 %v1948
        %v1991 = vunpack.c.l.b16 %v1949
        %v1992 = vunpack.c.l.b16 %v1950
        %v1993 = vunpack.c.l.b16 %v1951
        %v1994 = vunpack.c.l.b16 %v1952
        %v1995 = vunpack.c.l.b16 %v1953
        %v1996 = vunpack.c.l.b16 %v1954
        %v1997 = vunpack.c.l.b16 %v1955
        %v1998 = vunpack.c.l.b16 %v1956
        %v1999 = vunpack.c.l.b16 %v1957
        %v2000 = vunpack.c.l.b16 %v1958
        %v2001 = vunpack.c.l.b16 %v1959
        %v2002 = vunpack.c.l.b16 %v1960
        %v2003 = vunpack.c.l.b16 %v1961
        %v2004 = vunpack.c.l.b16 %v1962
        %v2005 = vunpack.c.l.b16 %v1963
        %v2006 = vunpack.c.l.b16 %v1964
        %v2007 = vunpack.c.l.b16 %v1965
        %v2008 = vpack.c.b16 %v1989, %v1988
        %v2009 = vpack.c.b16 %v1991, %v1990
        %v2010 = vpack.c.b16 %v1993, %v1992
        %v2011 = vpack.c.b16 %v1995, %v1994
        %v2012 = vpack.c.b16 %v1997, %v1996
        %v2013 = vpack.c.b16 %v1999, %v1998
        %v2014 = vpack.c.b16 %v2001, %v2000
        %v2015 = vpack.c.b16 %v2003, %v2002
        %v2016 = vpack.c.b16 %v2005, %v2004
        %v2017 = vpack.c.b16 %v2007, %v2006
        %v2019 = vsel %vm558, %v2008, 0
        %v2022 = vsel %vm558, %v2009, 0
        %v2025 = vsel %vm558, %v2010, 0
        %v2028 = vsel %vm558, %v2011, 0
        %v2031 = vsel %vm558, %v2012, 0
        %v2034 = vsel %vm558, %v2013, 0
        %v2037 = vsel %vm558, %v2014, 0
        %v2040 = vsel %vm558, %v2015, 0
        %v2043 = vsel %vm558, %v2016, 0
        %v2046 = vsel %vm558, %v2017, 0
        %v2049 = vsel %vm589, %v1967, 0
        %2051 = vmatprep.subr.bf16.mxu0 0
        %2052 = vmatpush1.bf16.msra.mxu0 %v2049
        %2053 = vmatprep.subr.bf16.mxu0 0
        %2054 = vmatpush1.bf16.msra.mxu0 0
        %2055 = vmatprep.subr.bf16.mxu0 0
        %2056 = vmatpush1.bf16.msra.mxu0 0
        %2057 = vmatprep.subr.bf16.mxu0 0
        %2058 = vmatpush1.bf16.msra.mxu0 0
        %2059 = vmatprep.subr.bf16.mxu0 0
        %2060 = vmatpush1.bf16.msra.mxu0 0
        %2061 = vmatprep.subr.bf16.mxu0 0
        %2062 = vmatpush1.bf16.msra.mxu0 0
        %2063 = vmatprep.subr.bf16.mxu0 0
        %2064 = vmatpush1.bf16.msra.mxu0 0
        %2065 = vmatprep.subr.bf16.mxu0 0
        %2066 = vmatpush1.bf16.msra.mxu0 0
        %2067 = vmatprep.subr.bf16.mxu0 0
        %2068 = vmatpush1.bf16.msra.mxu0 0
        %2069 = vmatprep.subr.bf16.mxu0 0
        %2070 = vmatpush1.bf16.msra.mxu0 0
        %2071 = vmatprep.subr.bf16.mxu0 0
        %2072 = vmatpush1.bf16.msra.mxu0 0
        %2073 = vmatprep.subr.bf16.mxu0 0
        %2074 = vmatpush1.bf16.msra.mxu0 0
        %2075 = vmatprep.subr.bf16.mxu0 0
        %2076 = vmatpush1.bf16.msra.mxu0 0
        %2077 = vmatprep.subr.bf16.mxu0 0
        %2078 = vmatpush1.bf16.msra.mxu0 0
        %2079 = vmatprep.subr.bf16.mxu0 0
        %2080 = vmatpush1.bf16.msra.mxu0 0
        %2081 = vmatprep.subr.bf16.mxu0 0
        %2082 = vmatpush1.bf16.msra.mxu0 0
        %2083 = vmatprep.mubr.bf16.mxu0 0
        %2084 = vmatmul.mubr.bf16.gmra.mrb[0].mxu0 %v2019
        %v2085 = vpop.f32.mrb[0].mxu0
        %v2086 = vadd.f32 0.0, %v2085
        %v2087 = vpop.f32.mrb[0].mxu0
        %v2088 = vpop.f32.mrb[0].mxu0
        %v2089 = vadd.f32 0.0, %v2088
        %v2090 = vpop.f32.mrb[0].mxu0
        %2091 = vmatprep.mubr.bf16.mxu0 0
        %2092 = vmatmul.mubr.bf16.gmra.mrb[0].mxu0 %v2022
        %v2093 = vpop.f32.mrb[0].mxu0
        %v2094 = vadd.f32 0.0, %v2093
        %v2095 = vpop.f32.mrb[0].mxu0
        %v2096 = vpop.f32.mrb[0].mxu0
        %v2097 = vadd.f32 0.0, %v2096
        %v2098 = vpop.f32.mrb[0].mxu0
        %2099 = vmatprep.mubr.bf16.mxu0 0
        %2100 = vmatmul.mubr.bf16.gmra.mrb[0].mxu0 %v2025
        %v2101 = vpop.f32.mrb[0].mxu0
        %v2102 = vadd.f32 0.0, %v2101
        %v2103 = vpop.f32.mrb[0].mxu0
        %v2104 = vpop.f32.mrb[0].mxu0
        %v2105 = vadd.f32 0.0, %v2104
        %v2106 = vpop.f32.mrb[0].mxu0
        %2107 = vmatprep.mubr.bf16.mxu0 0
        %2108 = vmatmul.mubr.bf16.gmra.mrb[0].mxu0 %v2028
        %v2109 = vpop.f32.mrb[0].mxu0
        %v2110 = vadd.f32 0.0, %v2109
        %v2111 = vpop.f32.mrb[0].mxu0
        %v2112 = vpop.f32.mrb[0].mxu0
        %v2113 = vadd.f32 0.0, %v2112
        %v2114 = vpop.f32.mrb[0].mxu0
        %2115 = vmatprep.mubr.bf16.mxu0 0
        %2116 = vmatmul.mubr.bf16.gmra.mrb[0].mxu0 %v2031
        %v2117 = vpop.f32.mrb[0].mxu0
        %v2118 = vadd.f32 0.0, %v2117
        %v2119 = vpop.f32.mrb[0].mxu0
        %v2120 = vpop.f32.mrb[0].mxu0
        %v2121 = vadd.f32 0.0, %v2120
        %v2122 = vpop.f32.mrb[0].mxu0
        %2123 = vmatprep.mubr.bf16.mxu0 0
        %2124 = vmatmul.mubr.bf16.gmra.mrb[0].mxu0 %v2034
        %v2125 = vpop.f32.mrb[0].mxu0
        %v2126 = vadd.f32 0.0, %v2125
        %v2127 = vpop.f32.mrb[0].mxu0
        %v2128 = vpop.f32.mrb[0].mxu0
        %v2129 = vadd.f32 0.0, %v2128
        %v2130 = vpop.f32.mrb[0].mxu0
        %2131 = vmatprep.mubr.bf16.mxu0 0
        %2132 = vmatmul.mubr.bf16.gmra.mrb[0].mxu0 %v2037
        %v2133 = vpop.f32.mrb[0].mxu0
        %v2134 = vadd.f32 0.0, %v2133
        %v2135 = vpop.f32.mrb[0].mxu0
        %v2136 = vpop.f32.mrb[0].mxu0
        %v2137 = vadd.f32 0.0, %v2136
        %v2138 = vpop.f32.mrb[0].mxu0
        %2139 = vmatprep.mubr.bf16.mxu0 0
        %2140 = vmatmul.mubr.bf16.gmra.mrb[0].mxu0 %v2040
        %v2141 = vpop.f32.mrb[0].mxu0
        %v2142 = vadd.f32 0.0, %v2141
        %v2143 = vpop.f32.mrb[0].mxu0
        %v2144 = vpop.f32.mrb[0].mxu0
        %v2145 = vadd.f32 0.0, %v2144
        %v2146 = vpop.f32.mrb[0].mxu0
        %2147 = vmatprep.mubr.bf16.mxu0 0
        %2148 = vmatmul.mubr.bf16.gmra.mrb[0].mxu0 %v2043
        %v2149 = vpop.f32.mrb[0].mxu0
        %v2150 = vadd.f32 0.0, %v2149
        %v2151 = vpop.f32.mrb[0].mxu0
        %v2152 = vpop.f32.mrb[0].mxu0
        %v2153 = vadd.f32 0.0, %v2152
        %v2154 = vpop.f32.mrb[0].mxu0
        %2155 = vmatprep.mubr.bf16.mxu0 0
        %2156 = vmatmul.mubr.bf16.gmra.mrb[0].mxu0 %v2046
        %v2157 = vpop.f32.mrb[0].mxu0
        %v2158 = vadd.f32 0.0, %v2157
        %v2159 = vpop.f32.mrb[0].mxu0
        %v2160 = vpop.f32.mrb[0].mxu0
        %v2161 = vadd.f32 0.0, %v2160
        %v2162 = vpop.f32.mrb[0].mxu0
        %2163 = vdwg.mxu0
        %v2164 = vadd.f32 %v1925, %v2086
        %v2165 = vadd.f32 %v1926, %v2089
        %v2166 = vadd.f32 %v1927, %v2094
        %v2167 = vadd.f32 %v1928, %v2097
        %v2168 = vadd.f32 %v1929, %v2102
        %v2169 = vadd.f32 %v1930, %v2105
        %v2170 = vadd.f32 %v1931, %v2110
        %v2171 = vadd.f32 %v1932, %v2113
        %v2172 = vadd.f32 %v1933, %v2118
        %v2173 = vadd.f32 %v1934, %v2121
        %v2174 = vadd.f32 %v1935, %v2126
        %v2175 = vadd.f32 %v1936, %v2129
        %v2176 = vadd.f32 %v1937, %v2134
        %v2177 = vadd.f32 %v1938, %v2137
        %v2178 = vadd.f32 %v1939, %v2142
        %v2179 = vadd.f32 %v1940, %v2145
        %v2180 = vadd.f32 %v1941, %v2150
        %v2181 = vadd.f32 %v1942, %v2153
        %v2182 = vadd.f32 %v1943, %v2158
        %v2183 = vadd.f32 %v1944, %v2161
        %v2184 = vld [vmem:[%s1945] sm:$0xf]
        %v2185 = vld [vmem:[%s1945 + $0x4] sm:$0xf]
        %v2186 = vld [vmem:[%s1945 + $0x8] sm:$0x1]
        %v2187 = vld [vmem:[%s1945 + $0xc] sm:$0xf]
        %v2188 = vld [vmem:[%s1945 + $0x10] sm:$0xf]
        %v2189 = vld [vmem:[%s1945 + $0x14] sm:$0x1]
        %v2190 = vld [vmem:[%s1945 + $0x18] sm:$0xf]
        %v2191 = vld [vmem:[%s1945 + $0x1c] sm:$0xf]
        %v2192 = vld [vmem:[%s1945 + $0x20] sm:$0x1]
        %v2193 = vld [vmem:[%s1945 + $0x24] sm:$0xf]
        %v2194 = vld [vmem:[%s1945 + $0x28] sm:$0xf]
        %v2195 = vld [vmem:[%s1945 + $0x2c] sm:$0x1]
        %v2196 = vld [vmem:[%s1945 + $0x30] sm:$0xf]
        %v2197 = vld [vmem:[%s1945 + $0x34] sm:$0xf]
        %v2198 = vld [vmem:[%s1945 + $0x38] sm:$0x1]
        %v2199 = vld [vmem:[%s1945 + $0x3c] sm:$0xf]
        %v2200 = vld [vmem:[%s1945 + $0x40] sm:$0xf]
        %v2201 = vld [vmem:[%s1945 + $0x44] sm:$0x1]
        %v2202 = vld [vmem:[%s1945 + $0x48] sm:$0xf]
        %v2203 = vld [vmem:[%s1945 + $0x4c] sm:$0xf]
        %v2204 = vld [vmem:[%s1945 + $0x50] sm:$0x1]
        %v2205 = vld [vmem:[%s1945 + $0x54] sm:$0xf]
        %v2206 = vld [vmem:[%s1945 + $0x58] sm:$0xf]
        %v2207 = vld [vmem:[%s1945 + $0x5c] sm:$0x1]
        %v2208 = vld [vmem:[%s1945 + $0x60] sm:$0xf]
        %v2209 = vld [vmem:[%s1945 + $0x64] sm:$0xf]
        %v2210 = vld [vmem:[%s1945 + $0x68] sm:$0x1]
        %v2211 = vld [vmem:[%s1945 + $0x6c] sm:$0xf]
        %v2212 = vld [vmem:[%s1945 + $0x70] sm:$0xf]
        %v2213 = vld [vmem:[%s1945 + $0x74] sm:$0x1]
        %v2215 = vshrl.u32 %v2184, 16
        %v2217 = vrot.slane %v2215, 4
        %v2218 = vshll.u32 %v2184, 16
        %v2220 = vrot.slane %v2218, 5
        %v2221 = vor.u32 %v2217, %v2220
        %v2222 = vrot.slane %v2221, 4
        %v2224 = vshll.u32 %v2185, 16
        %v2226 = vrot.slane %v2224, 5
        %v2227 = vsel %vm285, %v2222, %v2226
        %v2228 = vshrl.u32 %v2185, 16
        %v2230 = vrot.slane %v2228, 4
        %v2231 = vor.u32 %v2230, %v2226
        %v2232 = vrot.slane %v2231, 4
        %v2234 = vshll.u32 %v2186, 16
        %v2236 = vrot.slane %v2234, 5
        %v2237 = vsel %vm285, %v2232, %v2236
        %v2239 = vshrl.u32 %v2187, 16
        %v2241 = vrot.slane %v2239, 4
        %v2242 = vshll.u32 %v2187, 16
        %v2244 = vrot.slane %v2242, 5
        %v2245 = vor.u32 %v2241, %v2244
        %v2246 = vrot.slane %v2245, 4
        %v2248 = vshll.u32 %v2188, 16
        %v2250 = vrot.slane %v2248, 5
        %v2251 = vsel %vm285, %v2246, %v2250
        %v2252 = vshrl.u32 %v2188, 16
        %v2254 = vrot.slane %v2252, 4
        %v2255 = vor.u32 %v2254, %v2250
        %v2256 = vrot.slane %v2255, 4
        %v2258 = vshll.u32 %v2189, 16
        %v2260 = vrot.slane %v2258, 5
        %v2261 = vsel %vm285, %v2256, %v2260
        %v2263 = vshrl.u32 %v2190, 16
        %v2265 = vrot.slane %v2263, 4
        %v2266 = vshll.u32 %v2190, 16
        %v2268 = vrot.slane %v2266, 5
        %v2269 = vor.u32 %v2265, %v2268
        %v2270 = vrot.slane %v2269, 4
        %v2272 = vshll.u32 %v2191, 16
        %v2274 = vrot.slane %v2272, 5
        %v2275 = vsel %vm285, %v2270, %v2274
        %v2276 = vshrl.u32 %v2191, 16
        %v2278 = vrot.slane %v2276, 4
        %v2279 = vor.u32 %v2278, %v2274
        %v2280 = vrot.slane %v2279, 4
        %v2282 = vshll.u32 %v2192, 16
        %v2284 = vrot.slane %v2282, 5
        %v2285 = vsel %vm285, %v2280, %v2284
        %v2287 = vshrl.u32 %v2193, 16
        %v2289 = vrot.slane %v2287, 4
        %v2290 = vshll.u32 %v2193, 16
        %v2292 = vrot.slane %v2290, 5
        %v2293 = vor.u32 %v2289, %v2292
        %v2294 = vrot.slane %v2293, 4
        %v2296 = vshll.u32 %v2194, 16
        %v2298 = vrot.slane %v2296, 5
        %v2299 = vsel %vm285, %v2294, %v2298
        %v2300 = vshrl.u32 %v2194, 16
        %v2302 = vrot.slane %v2300, 4
        %v2303 = vor.u32 %v2302, %v2298
        %v2304 = vrot.slane %v2303, 4
        %v2306 = vshll.u32 %v2195, 16
        %v2308 = vrot.slane %v2306, 5
        %v2309 = vsel %vm285, %v2304, %v2308
        %v2311 = vshrl.u32 %v2196, 16
        %v2313 = vrot.slane %v2311, 4
        %v2314 = vshll.u32 %v2196, 16
        %v2316 = vrot.slane %v2314, 5
        %v2317 = vor.u32 %v2313, %v2316
        %v2318 = vrot.slane %v2317, 4
        %v2320 = vshll.u32 %v2197, 16
        %v2322 = vrot.slane %v2320, 5
        %v2323 = vsel %vm285, %v2318, %v2322
        %v2324 = vshrl.u32 %v2197, 16
        %v2326 = vrot.slane %v2324, 4
        %v2327 = vor.u32 %v2326, %v2322
        %v2328 = vrot.slane %v2327, 4
        %v2330 = vshll.u32 %v2198, 16
        %v2332 = vrot.slane %v2330, 5
        %v2333 = vsel %vm285, %v2328, %v2332
        %v2335 = vshrl.u32 %v2199, 16
        %v2337 = vrot.slane %v2335, 4
        %v2338 = vshll.u32 %v2199, 16
        %v2340 = vrot.slane %v2338, 5
        %v2341 = vor.u32 %v2337, %v2340
        %v2342 = vrot.slane %v2341, 4
        %v2344 = vshll.u32 %v2200, 16
        %v2346 = vrot.slane %v2344, 5
        %v2347 = vsel %vm285, %v2342, %v2346
        %v2348 = vshrl.u32 %v2200, 16
        %v2350 = vrot.slane %v2348, 4
        %v2351 = vor.u32 %v2350, %v2346
        %v2352 = vrot.slane %v2351, 4
        %v2354 = vshll.u32 %v2201, 16
        %v2356 = vrot.slane %v2354, 5
        %v2357 = vsel %vm285, %v2352, %v2356
        %v2359 = vshrl.u32 %v2202, 16
        %v2361 = vrot.slane %v2359, 4
        %v2362 = vshll.u32 %v2202, 16
        %v2364 = vrot.slane %v2362, 5
        %v2365 = vor.u32 %v2361, %v2364
        %v2366 = vrot.slane %v2365, 4
        %v2368 = vshll.u32 %v2203, 16
        %v2370 = vrot.slane %v2368, 5
        %v2371 = vsel %vm285, %v2366, %v2370
        %v2372 = vshrl.u32 %v2203, 16
        %v2374 = vrot.slane %v2372, 4
        %v2375 = vor.u32 %v2374, %v2370
        %v2376 = vrot.slane %v2375, 4
        %v2378 = vshll.u32 %v2204, 16
        %v2380 = vrot.slane %v2378, 5
        %v2381 = vsel %vm285, %v2376, %v2380
        %v2383 = vshrl.u32 %v2205, 16
        %v2385 = vrot.slane %v2383, 4
        %v2386 = vshll.u32 %v2205, 16
        %v2388 = vrot.slane %v2386, 5
        %v2389 = vor.u32 %v2385, %v2388
        %v2390 = vrot.slane %v2389, 4
        %v2392 = vshll.u32 %v2206, 16
        %v2394 = vrot.slane %v2392, 5
        %v2395 = vsel %vm285, %v2390, %v2394
        %v2396 = vshrl.u32 %v2206, 16
        %v2398 = vrot.slane %v2396, 4
        %v2399 = vor.u32 %v2398, %v2394
        %v2400 = vrot.slane %v2399, 4
        %v2402 = vshll.u32 %v2207, 16
        %v2404 = vrot.slane %v2402, 5
        %v2405 = vsel %vm285, %v2400, %v2404
        %v2407 = vshrl.u32 %v2208, 16
        %v2409 = vrot.slane %v2407, 4
        %v2410 = vshll.u32 %v2208, 16
        %v2412 = vrot.slane %v2410, 5
        %v2413 = vor.u32 %v2409, %v2412
        %v2414 = vrot.slane %v2413, 4
        %v2416 = vshll.u32 %v2209, 16
        %v2418 = vrot.slane %v2416, 5
        %v2419 = vsel %vm285, %v2414, %v2418
        %v2420 = vshrl.u32 %v2209, 16
        %v2422 = vrot.slane %v2420, 4
        %v2423 = vor.u32 %v2422, %v2418
        %v2424 = vrot.slane %v2423, 4
        %v2426 = vshll.u32 %v2210, 16
        %v2428 = vrot.slane %v2426, 5
        %v2429 = vsel %vm285, %v2424, %v2428
        %v2431 = vshrl.u32 %v2211, 16
        %v2433 = vrot.slane %v2431, 4
        %v2434 = vshll.u32 %v2211, 16
        %v2436 = vrot.slane %v2434, 5
        %v2437 = vor.u32 %v2433, %v2436
        %v2438 = vrot.slane %v2437, 4
        %v2440 = vshll.u32 %v2212, 16
        %v2442 = vrot.slane %v2440, 5
        %v2443 = vsel %vm285, %v2438, %v2442
        %v2444 = vshrl.u32 %v2212, 16
        %v2446 = vrot.slane %v2444, 4
        %v2447 = vor.u32 %v2446, %v2442
        %v2448 = vrot.slane %v2447, 4
        %v2450 = vshll.u32 %v2213, 16
        %v2452 = vrot.slane %v2450, 5
        %v2453 = vsel %vm285, %v2448, %v2452
        %s2454 = scalar_lea.vmem %s1, 12
        %v2455 = vld [vmem:[%s2454] sm:$0x3]
        %v2456 = vunpack.c.l.b16 %v2227
        %v2457 = vunpack.c.l.b16 %v2237
        %v2458 = vunpack.c.l.b16 %v2251
        %v2459 = vunpack.c.l.b16 %v2261
        %v2460 = vunpack.c.l.b16 %v2275
        %v2461 = vunpack.c.l.b16 %v2285
        %v2462 = vunpack.c.l.b16 %v2299
        %v2463 = vunpack.c.l.b16 %v2309
        %v2464 = vunpack.c.l.b16 %v2323
        %v2465 = vunpack.c.l.b16 %v2333
        %v2466 = vunpack.c.l.b16 %v2347
        %v2467 = vunpack.c.l.b16 %v2357
        %v2468 = vunpack.c.l.b16 %v2371
        %v2469 = vunpack.c.l.b16 %v2381
        %v2470 = vunpack.c.l.b16 %v2395
        %v2471 = vunpack.c.l.b16 %v2405
        %v2472 = vunpack.c.l.b16 %v2419
        %v2473 = vunpack.c.l.b16 %v2429
        %v2474 = vunpack.c.l.b16 %v2443
        %v2475 = vunpack.c.l.b16 %v2453
        %v2476 = vpack.c.b16 %v2457, %v2456
        %v2477 = vpack.c.b16 %v2459, %v2458
        %v2478 = vpack.c.b16 %v2461, %v2460
        %v2479 = vpack.c.b16 %v2463, %v2462
        %v2480 = vpack.c.b16 %v2465, %v2464
        %v2481 = vpack.c.b16 %v2467, %v2466
        %v2482 = vpack.c.b16 %v2469, %v2468
        %v2483 = vpack.c.b16 %v2471, %v2470
        %v2484 = vpack.c.b16 %v2473, %v2472
        %v2485 = vpack.c.b16 %v2475, %v2474
        %v2487 = vsel %vm558, %v2476, 0
        %v2490 = vsel %vm558, %v2477, 0
        %v2493 = vsel %vm558, %v2478, 0
        %v2496 = vsel %vm558, %v2479, 0
        %v2499 = vsel %vm558, %v2480, 0
        %v2502 = vsel %vm558, %v2481, 0
        %v2505 = vsel %vm558, %v2482, 0
        %v2508 = vsel %vm558, %v2483, 0
        %v2511 = vsel %vm558, %v2484, 0
        %v2514 = vsel %vm558, %v2485, 0
        %v2517 = vsel %vm589, %v2455, 0
        %2519 = vmatprep.subr.bf16.mxu0 0
        %2520 = vmatpush1.bf16.msra.mxu0 %v2517
        %2521 = vmatprep.subr.bf16.mxu0 0
        %2522 = vmatpush1.bf16.msra.mxu0 0
        %2523 = vmatprep.subr.bf16.mxu0 0
        %2524 = vmatpush1.bf16.msra.mxu0 0
        %2525 = vmatprep.subr.bf16.mxu0 0
        %2526 = vmatpush1.bf16.msra.mxu0 0
        %2527 = vmatprep.subr.bf16.mxu0 0
        %2528 = vmatpush1.bf16.msra.mxu0 0
        %2529 = vmatprep.subr.bf16.mxu0 0
        %2530 = vmatpush1.bf16.msra.mxu0 0
        %2531 = vmatprep.subr.bf16.mxu0 0
        %2532 = vmatpush1.bf16.msra.mxu0 0
        %2533 = vmatprep.subr.bf16.mxu0 0
        %2534 = vmatpush1.bf16.msra.mxu0 0
        %2535 = vmatprep.subr.bf16.mxu0 0
        %2536 = vmatpush1.bf16.msra.mxu0 0
        %2537 = vmatprep.subr.bf16.mxu0 0
        %2538 = vmatpush1.bf16.msra.mxu0 0
        %2539 = vmatprep.subr.bf16.mxu0 0
        %2540 = vmatpush1.bf16.msra.mxu0 0
        %2541 = vmatprep.subr.bf16.mxu0 0
        %2542 = vmatpush1.bf16.msra.mxu0 0
        %2543 = vmatprep.subr.bf16.mxu0 0
        %2544 = vmatpush1.bf16.msra.mxu0 0
        %2545 = vmatprep.subr.bf16.mxu0 0
        %2546 = vmatpush1.bf16.msra.mxu0 0
        %2547 = vmatprep.subr.bf16.mxu0 0
        %2548 = vmatpush1.bf16.msra.mxu0 0
        %2549 = vmatprep.subr.bf16.mxu0 0
        %2550 = vmatpush1.bf16.msra.mxu0 0
        %2551 = vmatprep.mubr.bf16.mxu0 0
        %2552 = vmatmul.mubr.bf16.gmra.mrb[0].mxu0 %v2487
        %v2553 = vpop.f32.mrb[0].mxu0
        %v2554 = vadd.f32 0.0, %v2553
        %v2555 = vpop.f32.mrb[0].mxu0
        %v2556 = vpop.f32.mrb[0].mxu0
        %v2557 = vadd.f32 0.0, %v2556
        %v2558 = vpop.f32.mrb[0].mxu0
        %2559 = vmatprep.mubr.bf16.mxu0 0
        %2560 = vmatmul.mubr.bf16.gmra.mrb[0].mxu0 %v2490
        %v2561 = vpop.f32.mrb[0].mxu0
        %v2562 = vadd.f32 0.0, %v2561
        %v2563 = vpop.f32.mrb[0].mxu0
        %v2564 = vpop.f32.mrb[0].mxu0
        %v2565 = vadd.f32 0.0, %v2564
        %v2566 = vpop.f32.mrb[0].mxu0
        %2567 = vmatprep.mubr.bf16.mxu0 0
        %2568 = vmatmul.mubr.bf16.gmra.mrb[0].mxu0 %v2493
        %v2569 = vpop.f32.mrb[0].mxu0
        %v2570 = vadd.f32 0.0, %v2569
        %v2571 = vpop.f32.mrb[0].mxu0
        %v2572 = vpop.f32.mrb[0].mxu0
        %v2573 = vadd.f32 0.0, %v2572
        %v2574 = vpop.f32.mrb[0].mxu0
        %2575 = vmatprep.mubr.bf16.mxu0 0
        %2576 = vmatmul.mubr.bf16.gmra.mrb[0].mxu0 %v2496
        %v2577 = vpop.f32.mrb[0].mxu0
        %v2578 = vadd.f32 0.0, %v2577
        %v2579 = vpop.f32.mrb[0].mxu0
        %v2580 = vpop.f32.mrb[0].mxu0
        %v2581 = vadd.f32 0.0, %v2580
        %v2582 = vpop.f32.mrb[0].mxu0
        %2583 = vmatprep.mubr.bf16.mxu0 0
        %2584 = vmatmul.mubr.bf16.gmra.mrb[0].mxu0 %v2499
        %v2585 = vpop.f32.mrb[0].mxu0
        %v2586 = vadd.f32 0.0, %v2585
        %v2587 = vpop.f32.mrb[0].mxu0
        %v2588 = vpop.f32.mrb[0].mxu0
        %v2589 = vadd.f32 0.0, %v2588
        %v2590 = vpop.f32.mrb[0].mxu0
        %2591 = vmatprep.mubr.bf16.mxu0 0
        %2592 = vmatmul.mubr.bf16.gmra.mrb[0].mxu0 %v2502
        %v2593 = vpop.f32.mrb[0].mxu0
        %v2594 = vadd.f32 0.0, %v2593
        %v2595 = vpop.f32.mrb[0].mxu0
        %v2596 = vpop.f32.mrb[0].mxu0
        %v2597 = vadd.f32 0.0, %v2596
        %v2598 = vpop.f32.mrb[0].mxu0
        %2599 = vmatprep.mubr.bf16.mxu0 0
        %2600 = vmatmul.mubr.bf16.gmra.mrb[0].mxu0 %v2505
        %v2601 = vpop.f32.mrb[0].mxu0
        %v2602 = vadd.f32 0.0, %v2601
        %v2603 = vpop.f32.mrb[0].mxu0
        %v2604 = vpop.f32.mrb[0].mxu0
        %v2605 = vadd.f32 0.0, %v2604
        %v2606 = vpop.f32.mrb[0].mxu0
        %2607 = vmatprep.mubr.bf16.mxu0 0
        %2608 = vmatmul.mubr.bf16.gmra.mrb[0].mxu0 %v2508
        %v2609 = vpop.f32.mrb[0].mxu0
        %v2610 = vadd.f32 0.0, %v2609
        %v2611 = vpop.f32.mrb[0].mxu0
        %v2612 = vpop.f32.mrb[0].mxu0
        %v2613 = vadd.f32 0.0, %v2612
        %v2614 = vpop.f32.mrb[0].mxu0
        %2615 = vmatprep.mubr.bf16.mxu0 0
        %2616 = vmatmul.mubr.bf16.gmra.mrb[0].mxu0 %v2511
        %v2617 = vpop.f32.mrb[0].mxu0
        %v2618 = vadd.f32 0.0, %v2617
        %v2619 = vpop.f32.mrb[0].mxu0
        %v2620 = vpop.f32.mrb[0].mxu0
        %v2621 = vadd.f32 0.0, %v2620
        %v2622 = vpop.f32.mrb[0].mxu0
        %2623 = vmatprep.mubr.bf16.mxu0 0
        %2624 = vmatmul.mubr.bf16.gmra.mrb[0].mxu0 %v2514
        %v2625 = vpop.f32.mrb[0].mxu0
        %v2626 = vadd.f32 0.0, %v2625
        %v2627 = vpop.f32.mrb[0].mxu0
        %v2628 = vpop.f32.mrb[0].mxu0
        %v2629 = vadd.f32 0.0, %v2628
        %v2630 = vpop.f32.mrb[0].mxu0
        %2631 = vdwg.mxu0
        %v2632 = vadd.f32 %v2164, %v2554
        %v2633 = vadd.f32 %v2165, %v2557
        %v2634 = vadd.f32 %v2166, %v2562
        %v2635 = vadd.f32 %v2167, %v2565
        %v2636 = vadd.f32 %v2168, %v2570
        %v2637 = vadd.f32 %v2169, %v2573
        %v2638 = vadd.f32 %v2170, %v2578
        %v2639 = vadd.f32 %v2171, %v2581
        %v2640 = vadd.f32 %v2172, %v2586
        %v2641 = vadd.f32 %v2173, %v2589
        %v2642 = vadd.f32 %v2174, %v2594
        %v2643 = vadd.f32 %v2175, %v2597
        %v2644 = vadd.f32 %v2176, %v2602
        %v2645 = vadd.f32 %v2177, %v2605
        %v2646 = vadd.f32 %v2178, %v2610
        %v2647 = vadd.f32 %v2179, %v2613
        %v2648 = vadd.f32 %v2180, %v2618
        %v2649 = vadd.f32 %v2181, %v2621
        %v2650 = vadd.f32 %v2182, %v2626
        %v2651 = vadd.f32 %v2183, %v2629
        %v2652 = vld [vmem:[%s1945] sm:$0xe]
        %v2653 = vld [vmem:[%s1945 + $0xc] sm:$0xe]
        %v2654 = vld [vmem:[%s1945 + $0x18] sm:$0xe]
        %v2655 = vld [vmem:[%s1945 + $0x24] sm:$0xe]
        %v2656 = vld [vmem:[%s1945 + $0x30] sm:$0xe]
        %v2657 = vld [vmem:[%s1945 + $0x3c] sm:$0xe]
        %v2658 = vld [vmem:[%s1945 + $0x48] sm:$0xe]
        %v2659 = vld [vmem:[%s1945 + $0x54] sm:$0xe]
        %v2660 = vld [vmem:[%s1945 + $0x60] sm:$0xe]
        %v2661 = vld [vmem:[%s1945 + $0x6c] sm:$0xe]
        %v2692 = vrot.slane %v2652, 5
        %v2693 = vrot.slane %v2692, 4
        %v2694 = vrot.slane %v2185, 5
        %v2695 = vsel %vm934, %v2693, %v2694
        %v2696 = vrot.slane %v2694, 4
        %v2697 = vrot.slane %v2186, 5
        %v2698 = vsel %vm934, %v2696, %v2697
        %v2699 = vrot.slane %v2653, 5
        %v2700 = vrot.slane %v2699, 4
        %v2701 = vrot.slane %v2188, 5
        %v2702 = vsel %vm934, %v2700, %v2701
        %v2703 = vrot.slane %v2701, 4
        %v2704 = vrot.slane %v2189, 5
        %v2705 = vsel %vm934, %v2703, %v2704
        %v2706 = vrot.slane %v2654, 5
        %v2707 = vrot.slane %v2706, 4
        %v2708 = vrot.slane %v2191, 5
        %v2709 = vsel %vm934, %v2707, %v2708
        %v2710 = vrot.slane %v2708, 4
        %v2711 = vrot.slane %v2192, 5
        %v2712 = vsel %vm934, %v2710, %v2711
        %v2713 = vrot.slane %v2655, 5
        %v2714 = vrot.slane %v2713, 4
        %v2715 = vrot.slane %v2194, 5
        %v2716 = vsel %vm934, %v2714, %v2715
        %v2717 = vrot.slane %v2715, 4
        %v2718 = vrot.slane %v2195, 5
        %v2719 = vsel %vm934, %v2717, %v2718
        %v2720 = vrot.slane %v2656, 5
        %v2721 = vrot.slane %v2720, 4
        %v2722 = vrot.slane %v2197, 5
        %v2723 = vsel %vm934, %v2721, %v2722
        %v2724 = vrot.slane %v2722, 4
        %v2725 = vrot.slane %v2198, 5
        %v2726 = vsel %vm934, %v2724, %v2725
        %v2727 = vrot.slane %v2657, 5
        %v2728 = vrot.slane %v2727, 4
        %v2729 = vrot.slane %v2200, 5
        %v2730 = vsel %vm934, %v2728, %v2729
        %v2731 = vrot.slane %v2729, 4
        %v2732 = vrot.slane %v2201, 5
        %v2733 = vsel %vm934, %v2731, %v2732
        %v2734 = vrot.slane %v2658, 5
        %v2735 = vrot.slane %v2734, 4
        %v2736 = vrot.slane %v2203, 5
        %v2737 = vsel %vm934, %v2735, %v2736
        %v2738 = vrot.slane %v2736, 4
        %v2739 = vrot.slane %v2204, 5
        %v2740 = vsel %vm934, %v2738, %v2739
        %v2741 = vrot.slane %v2659, 5
        %v2742 = vrot.slane %v2741, 4
        %v2743 = vrot.slane %v2206, 5
        %v2744 = vsel %vm934, %v2742, %v2743
        %v2745 = vrot.slane %v2743, 4
        %v2746 = vrot.slane %v2207, 5
        %v2747 = vsel %vm934, %v2745, %v2746
        %v2748 = vrot.slane %v2660, 5
        %v2749 = vrot.slane %v2748, 4
        %v2750 = vrot.slane %v2209, 5
        %v2751 = vsel %vm934, %v2749, %v2750
        %v2752 = vrot.slane %v2750, 4
        %v2753 = vrot.slane %v2210, 5
        %v2754 = vsel %vm934, %v2752, %v2753
        %v2755 = vrot.slane %v2661, 5
        %v2756 = vrot.slane %v2755, 4
        %v2757 = vrot.slane %v2212, 5
        %v2758 = vsel %vm934, %v2756, %v2757
        %v2759 = vrot.slane %v2757, 4
        %v2760 = vrot.slane %v2213, 5
        %v2761 = vsel %vm934, %v2759, %v2760
        %s2762 = scalar_lea.vmem %s1, 14
        %v2763 = vld [vmem:[%s2762] sm:$0x3]
        %v2764 = vunpack.c.l.b16 %v2695
        %v2765 = vunpack.c.l.b16 %v2698
        %v2766 = vunpack.c.l.b16 %v2702
        %v2767 = vunpack.c.l.b16 %v2705
        %v2768 = vunpack.c.l.b16 %v2709
        %v2769 = vunpack.c.l.b16 %v2712
        %v2770 = vunpack.c.l.b16 %v2716
        %v2771 = vunpack.c.l.b16 %v2719
        %v2772 = vunpack.c.l.b16 %v2723
        %v2773 = vunpack.c.l.b16 %v2726
        %v2774 = vunpack.c.l.b16 %v2730
        %v2775 = vunpack.c.l.b16 %v2733
        %v2776 = vunpack.c.l.b16 %v2737
        %v2777 = vunpack.c.l.b16 %v2740
        %v2778 = vunpack.c.l.b16 %v2744
        %v2779 = vunpack.c.l.b16 %v2747
        %v2780 = vunpack.c.l.b16 %v2751
        %v2781 = vunpack.c.l.b16 %v2754
        %v2782 = vunpack.c.l.b16 %v2758
        %v2783 = vunpack.c.l.b16 %v2761
        %v2784 = vpack.c.b16 %v2765, %v2764
        %v2785 = vpack.c.b16 %v2767, %v2766
        %v2786 = vpack.c.b16 %v2769, %v2768
        %v2787 = vpack.c.b16 %v2771, %v2770
        %v2788 = vpack.c.b16 %v2773, %v2772
        %v2789 = vpack.c.b16 %v2775, %v2774
        %v2790 = vpack.c.b16 %v2777, %v2776
        %v2791 = vpack.c.b16 %v2779, %v2778
        %v2792 = vpack.c.b16 %v2781, %v2780
        %v2793 = vpack.c.b16 %v2783, %v2782
        %v2795 = vsel %vm558, %v2784, 0
        %v2798 = vsel %vm558, %v2785, 0
        %v2801 = vsel %vm558, %v2786, 0
        %v2804 = vsel %vm558, %v2787, 0
        %v2807 = vsel %vm558, %v2788, 0
        %v2810 = vsel %vm558, %v2789, 0
        %v2813 = vsel %vm558, %v2790, 0
        %v2816 = vsel %vm558, %v2791, 0
        %v2819 = vsel %vm558, %v2792, 0
        %v2822 = vsel %vm558, %v2793, 0
        %v2825 = vsel %vm589, %v2763, 0
        %2827 = vmatprep.subr.bf16.mxu0 0
        %2828 = vmatpush1.bf16.msra.mxu0 %v2825
        %2829 = vmatprep.subr.bf16.mxu0 0
        %2830 = vmatpush1.bf16.msra.mxu0 0
        %2831 = vmatprep.subr.bf16.mxu0 0
        %2832 = vmatpush1.bf16.msra.mxu0 0
        %2833 = vmatprep.subr.bf16.mxu0 0
        %2834 = vmatpush1.bf16.msra.mxu0 0
        %2835 = vmatprep.subr.bf16.mxu0 0
        %2836 = vmatpush1.bf16.msra.mxu0 0
        %2837 = vmatprep.subr.bf16.mxu0 0
        %2838 = vmatpush1.bf16.msra.mxu0 0
        %2839 = vmatprep.subr.bf16.mxu0 0
        %2840 = vmatpush1.bf16.msra.mxu0 0
        %2841 = vmatprep.subr.bf16.mxu0 0
        %2842 = vmatpush1.bf16.msra.mxu0 0
        %2843 = vmatprep.subr.bf16.mxu0 0
        %2844 = vmatpush1.bf16.msra.mxu0 0
        %2845 = vmatprep.subr.bf16.mxu0 0
        %2846 = vmatpush1.bf16.msra.mxu0 0
        %2847 = vmatprep.subr.bf16.mxu0 0
        %2848 = vmatpush1.bf16.msra.mxu0 0
        %2849 = vmatprep.subr.bf16.mxu0 0
        %2850 = vmatpush1.bf16.msra.mxu0 0
        %2851 = vmatprep.subr.bf16.mxu0 0
        %2852 = vmatpush1.bf16.msra.mxu0 0
        %2853 = vmatprep.subr.bf16.mxu0 0
        %2854 = vmatpush1.bf16.msra.mxu0 0
        %2855 = vmatprep.subr.bf16.mxu0 0
        %2856 = vmatpush1.bf16.msra.mxu0 0
        %2857 = vmatprep.subr.bf16.mxu0 0
        %2858 = vmatpush1.bf16.msra.mxu0 0
        %2859 = vmatprep.mubr.bf16.mxu0 0
        %2860 = vmatmul.mubr.bf16.gmra.mrb[0].mxu0 %v2795
        %v2861 = vpop.f32.mrb[0].mxu0
        %v2862 = vadd.f32 0.0, %v2861
        %v2863 = vpop.f32.mrb[0].mxu0
        %v2864 = vpop.f32.mrb[0].mxu0
        %v2865 = vadd.f32 0.0, %v2864
        %v2866 = vpop.f32.mrb[0].mxu0
        %2867 = vmatprep.mubr.bf16.mxu0 0
        %2868 = vmatmul.mubr.bf16.gmra.mrb[0].mxu0 %v2798
        %v2869 = vpop.f32.mrb[0].mxu0
        %v2870 = vadd.f32 0.0, %v2869
        %v2871 = vpop.f32.mrb[0].mxu0
        %v2872 = vpop.f32.mrb[0].mxu0
        %v2873 = vadd.f32 0.0, %v2872
        %v2874 = vpop.f32.mrb[0].mxu0
        %2875 = vmatprep.mubr.bf16.mxu0 0
        %2876 = vmatmul.mubr.bf16.gmra.mrb[0].mxu0 %v2801
        %v2877 = vpop.f32.mrb[0].mxu0
        %v2878 = vadd.f32 0.0, %v2877
        %v2879 = vpop.f32.mrb[0].mxu0
        %v2880 = vpop.f32.mrb[0].mxu0
        %v2881 = vadd.f32 0.0, %v2880
        %v2882 = vpop.f32.mrb[0].mxu0
        %2883 = vmatprep.mubr.bf16.mxu0 0
        %2884 = vmatmul.mubr.bf16.gmra.mrb[0].mxu0 %v2804
        %v2885 = vpop.f32.mrb[0].mxu0
        %v2886 = vadd.f32 0.0, %v2885
        %v2887 = vpop.f32.mrb[0].mxu0
        %v2888 = vpop.f32.mrb[0].mxu0
        %v2889 = vadd.f32 0.0, %v2888
        %v2890 = vpop.f32.mrb[0].mxu0
        %2891 = vmatprep.mubr.bf16.mxu0 0
        %2892 = vmatmul.mubr.bf16.gmra.mrb[0].mxu0 %v2807
        %v2893 = vpop.f32.mrb[0].mxu0
        %v2894 = vadd.f32 0.0, %v2893
        %v2895 = vpop.f32.mrb[0].mxu0
        %v2896 = vpop.f32.mrb[0].mxu0
        %v2897 = vadd.f32 0.0, %v2896
        %v2898 = vpop.f32.mrb[0].mxu0
        %2899 = vmatprep.mubr.bf16.mxu0 0
        %2900 = vmatmul.mubr.bf16.gmra.mrb[0].mxu0 %v2810
        %v2901 = vpop.f32.mrb[0].mxu0
        %v2902 = vadd.f32 0.0, %v2901
        %v2903 = vpop.f32.mrb[0].mxu0
        %v2904 = vpop.f32.mrb[0].mxu0
        %v2905 = vadd.f32 0.0, %v2904
        %v2906 = vpop.f32.mrb[0].mxu0
        %2907 = vmatprep.mubr.bf16.mxu0 0
        %2908 = vmatmul.mubr.bf16.gmra.mrb[0].mxu0 %v2813
        %v2909 = vpop.f32.mrb[0].mxu0
        %v2910 = vadd.f32 0.0, %v2909
        %v2911 = vpop.f32.mrb[0].mxu0
        %v2912 = vpop.f32.mrb[0].mxu0
        %v2913 = vadd.f32 0.0, %v2912
        %v2914 = vpop.f32.mrb[0].mxu0
        %2915 = vmatprep.mubr.bf16.mxu0 0
        %2916 = vmatmul.mubr.bf16.gmra.mrb[0].mxu0 %v2816
        %v2917 = vpop.f32.mrb[0].mxu0
        %v2918 = vadd.f32 0.0, %v2917
        %v2919 = vpop.f32.mrb[0].mxu0
        %v2920 = vpop.f32.mrb[0].mxu0
        %v2921 = vadd.f32 0.0, %v2920
        %v2922 = vpop.f32.mrb[0].mxu0
        %2923 = vmatprep.mubr.bf16.mxu0 0
        %2924 = vmatmul.mubr.bf16.gmra.mrb[0].mxu0 %v2819
        %v2925 = vpop.f32.mrb[0].mxu0
        %v2926 = vadd.f32 0.0, %v2925
        %v2927 = vpop.f32.mrb[0].mxu0
        %v2928 = vpop.f32.mrb[0].mxu0
        %v2929 = vadd.f32 0.0, %v2928
        %v2930 = vpop.f32.mrb[0].mxu0
        %2931 = vmatprep.mubr.bf16.mxu0 0
        %2932 = vmatmul.mubr.bf16.gmra.mrb[0].mxu0 %v2822
        %v2933 = vpop.f32.mrb[0].mxu0
        %v2934 = vadd.f32 0.0, %v2933
        %v2935 = vpop.f32.mrb[0].mxu0
        %v2936 = vpop.f32.mrb[0].mxu0
        %v2937 = vadd.f32 0.0, %v2936
        %v2938 = vpop.f32.mrb[0].mxu0
        %2939 = vdwg.mxu0
        %v2940 = vadd.f32 %v2632, %v2862
        %v2941 = vadd.f32 %v2633, %v2865
        %v2942 = vadd.f32 %v2634, %v2870
        %v2943 = vadd.f32 %v2635, %v2873
        %v2944 = vadd.f32 %v2636, %v2878
        %v2945 = vadd.f32 %v2637, %v2881
        %v2946 = vadd.f32 %v2638, %v2886
        %v2947 = vadd.f32 %v2639, %v2889
        %v2948 = vadd.f32 %v2640, %v2894
        %v2949 = vadd.f32 %v2641, %v2897
        %v2950 = vadd.f32 %v2642, %v2902
        %v2951 = vadd.f32 %v2643, %v2905
        %v2952 = vadd.f32 %v2644, %v2910
        %v2953 = vadd.f32 %v2645, %v2913
        %v2954 = vadd.f32 %v2646, %v2918
        %v2955 = vadd.f32 %v2647, %v2921
        %v2956 = vadd.f32 %v2648, %v2926
        %v2957 = vadd.f32 %v2649, %v2929
        %v2958 = vadd.f32 %v2650, %v2934
        %v2959 = vadd.f32 %v2651, %v2937
        %v2960 = vld [vmem:[%s1945 + $0x8] sm:$0x3]
        %v2961 = vld [vmem:[%s1945 + $0x14] sm:$0x3]
        %v2962 = vld [vmem:[%s1945 + $0x20] sm:$0x3]
        %v2963 = vld [vmem:[%s1945 + $0x2c] sm:$0x3]
        %v2964 = vld [vmem:[%s1945 + $0x38] sm:$0x3]
        %v2965 = vld [vmem:[%s1945 + $0x44] sm:$0x3]
        %v2966 = vld [vmem:[%s1945 + $0x50] sm:$0x3]
        %v2967 = vld [vmem:[%s1945 + $0x5c] sm:$0x3]
        %v2968 = vld [vmem:[%s1945 + $0x68] sm:$0x3]
        %v2969 = vld [vmem:[%s1945 + $0x74] sm:$0x3]
        %v2971 = vshrl.u32 %v2652, 16
        %v2973 = vrot.slane %v2971, 5
        %v2974 = vshll.u32 %v2652, 16
        %v2976 = vrot.slane %v2974, 6
        %v2977 = vor.u32 %v2973, %v2976
        %v2978 = vrot.slane %v2977, 4
        %v2979 = vrot.slane %v2228, 5
        %v2980 = vrot.slane %v2224, 6
        %v2981 = vor.u32 %v2979, %v2980
        %v2982 = vsel %vm1215, %v2978, %v2981
        %v2983 = vrot.slane %v2981, 4
        %v2985 = vshrl.u32 %v2960, 16
        %v2987 = vrot.slane %v2985, 5
        %v2988 = vshll.u32 %v2960, 16
        %v2990 = vrot.slane %v2988, 6
        %v2991 = vor.u32 %v2987, %v2990
        %v2992 = vsel %vm1215, %v2983, %v2991
        %v2994 = vshrl.u32 %v2653, 16
        %v2996 = vrot.slane %v2994, 5
        %v2997 = vshll.u32 %v2653, 16
        %v2999 = vrot.slane %v2997, 6
        %v3000 = vor.u32 %v2996, %v2999
        %v3001 = vrot.slane %v3000, 4
        %v3002 = vrot.slane %v2252, 5
        %v3003 = vrot.slane %v2248, 6
        %v3004 = vor.u32 %v3002, %v3003
        %v3005 = vsel %vm1215, %v3001, %v3004
        %v3006 = vrot.slane %v3004, 4
        %v3008 = vshrl.u32 %v2961, 16
        %v3010 = vrot.slane %v3008, 5
        %v3011 = vshll.u32 %v2961, 16
        %v3013 = vrot.slane %v3011, 6
        %v3014 = vor.u32 %v3010, %v3013
        %v3015 = vsel %vm1215, %v3006, %v3014
        %v3017 = vshrl.u32 %v2654, 16
        %v3019 = vrot.slane %v3017, 5
        %v3020 = vshll.u32 %v2654, 16
        %v3022 = vrot.slane %v3020, 6
        %v3023 = vor.u32 %v3019, %v3022
        %v3024 = vrot.slane %v3023, 4
        %v3025 = vrot.slane %v2276, 5
        %v3026 = vrot.slane %v2272, 6
        %v3027 = vor.u32 %v3025, %v3026
        %v3028 = vsel %vm1215, %v3024, %v3027
        %v3029 = vrot.slane %v3027, 4
        %v3031 = vshrl.u32 %v2962, 16
        %v3033 = vrot.slane %v3031, 5
        %v3034 = vshll.u32 %v2962, 16
        %v3036 = vrot.slane %v3034, 6
        %v3037 = vor.u32 %v3033, %v3036
        %v3038 = vsel %vm1215, %v3029, %v3037
        %v3040 = vshrl.u32 %v2655, 16
        %v3042 = vrot.slane %v3040, 5
        %v3043 = vshll.u32 %v2655, 16
        %v3045 = vrot.slane %v3043, 6
        %v3046 = vor.u32 %v3042, %v3045
        %v3047 = vrot.slane %v3046, 4
        %v3048 = vrot.slane %v2300, 5
        %v3049 = vrot.slane %v2296, 6
        %v3050 = vor.u32 %v3048, %v3049
        %v3051 = vsel %vm1215, %v3047, %v3050
        %v3052 = vrot.slane %v3050, 4
        %v3054 = vshrl.u32 %v2963, 16
        %v3056 = vrot.slane %v3054, 5
        %v3057 = vshll.u32 %v2963, 16
        %v3059 = vrot.slane %v3057, 6
        %v3060 = vor.u32 %v3056, %v3059
        %v3061 = vsel %vm1215, %v3052, %v3060
        %v3063 = vshrl.u32 %v2656, 16
        %v3065 = vrot.slane %v3063, 5
        %v3066 = vshll.u32 %v2656, 16
        %v3068 = vrot.slane %v3066, 6
        %v3069 = vor.u32 %v3065, %v3068
        %v3070 = vrot.slane %v3069, 4
        %v3071 = vrot.slane %v2324, 5
        %v3072 = vrot.slane %v2320, 6
        %v3073 = vor.u32 %v3071, %v3072
        %v3074 = vsel %vm1215, %v3070, %v3073
        %v3075 = vrot.slane %v3073, 4
        %v3077 = vshrl.u32 %v2964, 16
        %v3079 = vrot.slane %v3077, 5
        %v3080 = vshll.u32 %v2964, 16
        %v3082 = vrot.slane %v3080, 6
        %v3083 = vor.u32 %v3079, %v3082
        %v3084 = vsel %vm1215, %v3075, %v3083
        %v3086 = vshrl.u32 %v2657, 16
        %v3088 = vrot.slane %v3086, 5
        %v3089 = vshll.u32 %v2657, 16
        %v3091 = vrot.slane %v3089, 6
        %v3092 = vor.u32 %v3088, %v3091
        %v3093 = vrot.slane %v3092, 4
        %v3094 = vrot.slane %v2348, 5
        %v3095 = vrot.slane %v2344, 6
        %v3096 = vor.u32 %v3094, %v3095
        %v3097 = vsel %vm1215, %v3093, %v3096
        %v3098 = vrot.slane %v3096, 4
        %v3100 = vshrl.u32 %v2965, 16
        %v3102 = vrot.slane %v3100, 5
        %v3103 = vshll.u32 %v2965, 16
        %v3105 = vrot.slane %v3103, 6
        %v3106 = vor.u32 %v3102, %v3105
        %v3107 = vsel %vm1215, %v3098, %v3106
        %v3109 = vshrl.u32 %v2658, 16
        %v3111 = vrot.slane %v3109, 5
        %v3112 = vshll.u32 %v2658, 16
        %v3114 = vrot.slane %v3112, 6
        %v3115 = vor.u32 %v3111, %v3114
        %v3116 = vrot.slane %v3115, 4
        %v3117 = vrot.slane %v2372, 5
        %v3118 = vrot.slane %v2368, 6
        %v3119 = vor.u32 %v3117, %v3118
        %v3120 = vsel %vm1215, %v3116, %v3119
        %v3121 = vrot.slane %v3119, 4
        %v3123 = vshrl.u32 %v2966, 16
        %v3125 = vrot.slane %v3123, 5
        %v3126 = vshll.u32 %v2966, 16
        %v3128 = vrot.slane %v3126, 6
        %v3129 = vor.u32 %v3125, %v3128
        %v3130 = vsel %vm1215, %v3121, %v3129
        %v3132 = vshrl.u32 %v2659, 16
        %v3134 = vrot.slane %v3132, 5
        %v3135 = vshll.u32 %v2659, 16
        %v3137 = vrot.slane %v3135, 6
        %v3138 = vor.u32 %v3134, %v3137
        %v3139 = vrot.slane %v3138, 4
        %v3140 = vrot.slane %v2396, 5
        %v3141 = vrot.slane %v2392, 6
        %v3142 = vor.u32 %v3140, %v3141
        %v3143 = vsel %vm1215, %v3139, %v3142
        %v3144 = vrot.slane %v3142, 4
        %v3146 = vshrl.u32 %v2967, 16
        %v3148 = vrot.slane %v3146, 5
        %v3149 = vshll.u32 %v2967, 16
        %v3151 = vrot.slane %v3149, 6
        %v3152 = vor.u32 %v3148, %v3151
        %v3153 = vsel %vm1215, %v3144, %v3152
        %v3155 = vshrl.u32 %v2660, 16
        %v3157 = vrot.slane %v3155, 5
        %v3158 = vshll.u32 %v2660, 16
        %v3160 = vrot.slane %v3158, 6
        %v3161 = vor.u32 %v3157, %v3160
        %v3162 = vrot.slane %v3161, 4
        %v3163 = vrot.slane %v2420, 5
        %v3164 = vrot.slane %v2416, 6
        %v3165 = vor.u32 %v3163, %v3164
        %v3166 = vsel %vm1215, %v3162, %v3165
        %v3167 = vrot.slane %v3165, 4
        %v3169 = vshrl.u32 %v2968, 16
        %v3171 = vrot.slane %v3169, 5
        %v3172 = vshll.u32 %v2968, 16
        %v3174 = vrot.slane %v3172, 6
        %v3175 = vor.u32 %v3171, %v3174
        %v3176 = vsel %vm1215, %v3167, %v3175
        %v3178 = vshrl.u32 %v2661, 16
        %v3180 = vrot.slane %v3178, 5
        %v3181 = vshll.u32 %v2661, 16
        %v3183 = vrot.slane %v3181, 6
        %v3184 = vor.u32 %v3180, %v3183
        %v3185 = vrot.slane %v3184, 4
        %v3186 = vrot.slane %v2444, 5
        %v3187 = vrot.slane %v2440, 6
        %v3188 = vor.u32 %v3186, %v3187
        %v3189 = vsel %vm1215, %v3185, %v3188
        %v3190 = vrot.slane %v3188, 4
        %v3192 = vshrl.u32 %v2969, 16
        %v3194 = vrot.slane %v3192, 5
        %v3195 = vshll.u32 %v2969, 16
        %v3197 = vrot.slane %v3195, 6
        %v3198 = vor.u32 %v3194, %v3197
        %v3199 = vsel %vm1215, %v3190, %v3198
        %s3200 = scalar_lea.vmem %s1, 16
        %v3201 = vld [vmem:[%s3200] sm:$0x3]
        %v3202 = vunpack.c.l.b16 %v2982
        %v3203 = vunpack.c.l.b16 %v2992
        %v3204 = vunpack.c.l.b16 %v3005
        %v3205 = vunpack.c.l.b16 %v3015
        %v3206 = vunpack.c.l.b16 %v3028
        %v3207 = vunpack.c.l.b16 %v3038
        %v3208 = vunpack.c.l.b16 %v3051
        %v3209 = vunpack.c.l.b16 %v3061
        %v3210 = vunpack.c.l.b16 %v3074
        %v3211 = vunpack.c.l.b16 %v3084
        %v3212 = vunpack.c.l.b16 %v3097
        %v3213 = vunpack.c.l.b16 %v3107
        %v3214 = vunpack.c.l.b16 %v3120
        %v3215 = vunpack.c.l.b16 %v3130
        %v3216 = vunpack.c.l.b16 %v3143
        %v3217 = vunpack.c.l.b16 %v3153
        %v3218 = vunpack.c.l.b16 %v3166
        %v3219 = vunpack.c.l.b16 %v3176
        %v3220 = vunpack.c.l.b16 %v3189
        %v3221 = vunpack.c.l.b16 %v3199
        %v3222 = vpack.c.b16 %v3203, %v3202
        %v3223 = vpack.c.b16 %v3205, %v3204
        %v3224 = vpack.c.b16 %v3207, %v3206
        %v3225 = vpack.c.b16 %v3209, %v3208
        %v3226 = vpack.c.b16 %v3211, %v3210
        %v3227 = vpack.c.b16 %v3213, %v3212
        %v3228 = vpack.c.b16 %v3215, %v3214
        %v3229 = vpack.c.b16 %v3217, %v3216
        %v3230 = vpack.c.b16 %v3219, %v3218
        %v3231 = vpack.c.b16 %v3221, %v3220
        %v3233 = vsel %vm558, %v3222, 0
        %v3236 = vsel %vm558, %v3223, 0
        %v3239 = vsel %vm558, %v3224, 0
        %v3242 = vsel %vm558, %v3225, 0
        %v3245 = vsel %vm558, %v3226, 0
        %v3248 = vsel %vm558, %v3227, 0
        %v3251 = vsel %vm558, %v3228, 0
        %v3254 = vsel %vm558, %v3229, 0
        %v3257 = vsel %vm558, %v3230, 0
        %v3260 = vsel %vm558, %v3231, 0
        %v3263 = vsel %vm589, %v3201, 0
        %3265 = vmatprep.subr.bf16.mxu0 0
        %3266 = vmatpush1.bf16.msra.mxu0 %v3263
        %3267 = vmatprep.subr.bf16.mxu0 0
        %3268 = vmatpush1.bf16.msra.mxu0 0
        %3269 = vmatprep.subr.bf16.mxu0 0
        %3270 = vmatpush1.bf16.msra.mxu0 0
        %3271 = vmatprep.subr.bf16.mxu0 0
        %3272 = vmatpush1.bf16.msra.mxu0 0
        %3273 = vmatprep.subr.bf16.mxu0 0
        %3274 = vmatpush1.bf16.msra.mxu0 0
        %3275 = vmatprep.subr.bf16.mxu0 0
        %3276 = vmatpush1.bf16.msra.mxu0 0
        %3277 = vmatprep.subr.bf16.mxu0 0
        %3278 = vmatpush1.bf16.msra.mxu0 0
        %3279 = vmatprep.subr.bf16.mxu0 0
        %3280 = vmatpush1.bf16.msra.mxu0 0
        %3281 = vmatprep.subr.bf16.mxu0 0
        %3282 = vmatpush1.bf16.msra.mxu0 0
        %3283 = vmatprep.subr.bf16.mxu0 0
        %3284 = vmatpush1.bf16.msra.mxu0 0
        %3285 = vmatprep.subr.bf16.mxu0 0
        %3286 = vmatpush1.bf16.msra.mxu0 0
        %3287 = vmatprep.subr.bf16.mxu0 0
        %3288 = vmatpush1.bf16.msra.mxu0 0
        %3289 = vmatprep.subr.bf16.mxu0 0
        %3290 = vmatpush1.bf16.msra.mxu0 0
        %3291 = vmatprep.subr.bf16.mxu0 0
        %3292 = vmatpush1.bf16.msra.mxu0 0
        %3293 = vmatprep.subr.bf16.mxu0 0
        %3294 = vmatpush1.bf16.msra.mxu0 0
        %3295 = vmatprep.subr.bf16.mxu0 0
        %3296 = vmatpush1.bf16.msra.mxu0 0
        %3297 = vmatprep.mubr.bf16.mxu0 0
        %3298 = vmatmul.mubr.bf16.gmra.mrb[0].mxu0 %v3233
        %v3299 = vpop.f32.mrb[0].mxu0
        %v3300 = vadd.f32 0.0, %v3299
        %v3301 = vpop.f32.mrb[0].mxu0
        %v3302 = vpop.f32.mrb[0].mxu0
        %v3303 = vadd.f32 0.0, %v3302
        %v3304 = vpop.f32.mrb[0].mxu0
        %3305 = vmatprep.mubr.bf16.mxu0 0
        %3306 = vmatmul.mubr.bf16.gmra.mrb[0].mxu0 %v3236
        %v3307 = vpop.f32.mrb[0].mxu0
        %v3308 = vadd.f32 0.0, %v3307
        %v3309 = vpop.f32.mrb[0].mxu0
        %v3310 = vpop.f32.mrb[0].mxu0
        %v3311 = vadd.f32 0.0, %v3310
        %v3312 = vpop.f32.mrb[0].mxu0
        %3313 = vmatprep.mubr.bf16.mxu0 0
        %3314 = vmatmul.mubr.bf16.gmra.mrb[0].mxu0 %v3239
        %v3315 = vpop.f32.mrb[0].mxu0
        %v3316 = vadd.f32 0.0, %v3315
        %v3317 = vpop.f32.mrb[0].mxu0
        %v3318 = vpop.f32.mrb[0].mxu0
        %v3319 = vadd.f32 0.0, %v3318
        %v3320 = vpop.f32.mrb[0].mxu0
        %3321 = vmatprep.mubr.bf16.mxu0 0
        %3322 = vmatmul.mubr.bf16.gmra.mrb[0].mxu0 %v3242
        %v3323 = vpop.f32.mrb[0].mxu0
        %v3324 = vadd.f32 0.0, %v3323
        %v3325 = vpop.f32.mrb[0].mxu0
        %v3326 = vpop.f32.mrb[0].mxu0
        %v3327 = vadd.f32 0.0, %v3326
        %v3328 = vpop.f32.mrb[0].mxu0
        %3329 = vmatprep.mubr.bf16.mxu0 0
        %3330 = vmatmul.mubr.bf16.gmra.mrb[0].mxu0 %v3245
        %v3331 = vpop.f32.mrb[0].mxu0
        %v3332 = vadd.f32 0.0, %v3331
        %v3333 = vpop.f32.mrb[0].mxu0
        %v3334 = vpop.f32.mrb[0].mxu0
        %v3335 = vadd.f32 0.0, %v3334
        %v3336 = vpop.f32.mrb[0].mxu0
        %3337 = vmatprep.mubr.bf16.mxu0 0
        %3338 = vmatmul.mubr.bf16.gmra.mrb[0].mxu0 %v3248
        %v3339 = vpop.f32.mrb[0].mxu0
        %v3340 = vadd.f32 0.0, %v3339
        %v3341 = vpop.f32.mrb[0].mxu0
        %v3342 = vpop.f32.mrb[0].mxu0
        %v3343 = vadd.f32 0.0, %v3342
        %v3344 = vpop.f32.mrb[0].mxu0
        %3345 = vmatprep.mubr.bf16.mxu0 0
        %3346 = vmatmul.mubr.bf16.gmra.mrb[0].mxu0 %v3251
        %v3347 = vpop.f32.mrb[0].mxu0
        %v3348 = vadd.f32 0.0, %v3347
        %v3349 = vpop.f32.mrb[0].mxu0
        %v3350 = vpop.f32.mrb[0].mxu0
        %v3351 = vadd.f32 0.0, %v3350
        %v3352 = vpop.f32.mrb[0].mxu0
        %3353 = vmatprep.mubr.bf16.mxu0 0
        %3354 = vmatmul.mubr.bf16.gmra.mrb[0].mxu0 %v3254
        %v3355 = vpop.f32.mrb[0].mxu0
        %v3356 = vadd.f32 0.0, %v3355
        %v3357 = vpop.f32.mrb[0].mxu0
        %v3358 = vpop.f32.mrb[0].mxu0
        %v3359 = vadd.f32 0.0, %v3358
        %v3360 = vpop.f32.mrb[0].mxu0
        %3361 = vmatprep.mubr.bf16.mxu0 0
        %3362 = vmatmul.mubr.bf16.gmra.mrb[0].mxu0 %v3257
        %v3363 = vpop.f32.mrb[0].mxu0
        %v3364 = vadd.f32 0.0, %v3363
        %v3365 = vpop.f32.mrb[0].mxu0
        %v3366 = vpop.f32.mrb[0].mxu0
        %v3367 = vadd.f32 0.0, %v3366
        %v3368 = vpop.f32.mrb[0].mxu0
        %3369 = vmatprep.mubr.bf16.mxu0 0
        %3370 = vmatmul.mubr.bf16.gmra.mrb[0].mxu0 %v3260
        %v3371 = vpop.f32.mrb[0].mxu0
        %v3372 = vadd.f32 0.0, %v3371
        %v3373 = vpop.f32.mrb[0].mxu0
        %v3374 = vpop.f32.mrb[0].mxu0
        %v3375 = vadd.f32 0.0, %v3374
        %v3376 = vpop.f32.mrb[0].mxu0
        %3377 = vdwg.mxu0
        %v3378 = vadd.f32 %v2940, %v3300
        %v3379 = vadd.f32 %v2941, %v3303
        %v3380 = vadd.f32 %v2942, %v3308
        %v3381 = vadd.f32 %v2943, %v3311
        %v3382 = vadd.f32 %v2944, %v3316
        %v3383 = vadd.f32 %v2945, %v3319
        %v3384 = vadd.f32 %v2946, %v3324
        %v3385 = vadd.f32 %v2947, %v3327
        %v3386 = vadd.f32 %v2948, %v3332
        %v3387 = vadd.f32 %v2949, %v3335
        %v3388 = vadd.f32 %v2950, %v3340
        %v3389 = vadd.f32 %v2951, %v3343
        %v3390 = vadd.f32 %v2952, %v3348
        %v3391 = vadd.f32 %v2953, %v3351
        %v3392 = vadd.f32 %v2954, %v3356
        %v3393 = vadd.f32 %v2955, %v3359
        %v3394 = vadd.f32 %v2956, %v3364
        %v3395 = vadd.f32 %v2957, %v3367
        %v3396 = vadd.f32 %v2958, %v3372
        %v3397 = vadd.f32 %v2959, %v3375
        %v3398 = vld [vmem:[%s1945] sm:$0xc]
        %v3399 = vld [vmem:[%s1945 + $0xc] sm:$0xc]
        %v3400 = vld [vmem:[%s1945 + $0x18] sm:$0xc]
        %v3401 = vld [vmem:[%s1945 + $0x24] sm:$0xc]
        %v3402 = vld [vmem:[%s1945 + $0x30] sm:$0xc]
        %v3403 = vld [vmem:[%s1945 + $0x3c] sm:$0xc]
        %v3404 = vld [vmem:[%s1945 + $0x48] sm:$0xc]
        %v3405 = vld [vmem:[%s1945 + $0x54] sm:$0xc]
        %v3406 = vld [vmem:[%s1945 + $0x60] sm:$0xc]
        %v3407 = vld [vmem:[%s1945 + $0x6c] sm:$0xc]
        %v3428 = vrot.slane %v3398, 6
        %v3429 = vrot.slane %v3428, 4
        %v3430 = vrot.slane %v2185, 6
        %v3431 = vsel %vm1676, %v3429, %v3430
        %v3432 = vrot.slane %v3430, 4
        %v3433 = vrot.slane %v2960, 6
        %v3434 = vsel %vm1676, %v3432, %v3433
        %v3435 = vrot.slane %v3399, 6
        %v3436 = vrot.slane %v3435, 4
        %v3437 = vrot.slane %v2188, 6
        %v3438 = vsel %vm1676, %v3436, %v3437
        %v3439 = vrot.slane %v3437, 4
        %v3440 = vrot.slane %v2961, 6
        %v3441 = vsel %vm1676, %v3439, %v3440
        %v3442 = vrot.slane %v3400, 6
        %v3443 = vrot.slane %v3442, 4
        %v3444 = vrot.slane %v2191, 6
        %v3445 = vsel %vm1676, %v3443, %v3444
        %v3446 = vrot.slane %v3444, 4
        %v3447 = vrot.slane %v2962, 6
        %v3448 = vsel %vm1676, %v3446, %v3447
        %v3449 = vrot.slane %v3401, 6
        %v3450 = vrot.slane %v3449, 4
        %v3451 = vrot.slane %v2194, 6
        %v3452 = vsel %vm1676, %v3450, %v3451
        %v3453 = vrot.slane %v3451, 4
        %v3454 = vrot.slane %v2963, 6
        %v3455 = vsel %vm1676, %v3453, %v3454
        %v3456 = vrot.slane %v3402, 6
        %v3457 = vrot.slane %v3456, 4
        %v3458 = vrot.slane %v2197, 6
        %v3459 = vsel %vm1676, %v3457, %v3458
        %v3460 = vrot.slane %v3458, 4
        %v3461 = vrot.slane %v2964, 6
        %v3462 = vsel %vm1676, %v3460, %v3461
        %v3463 = vrot.slane %v3403, 6
        %v3464 = vrot.slane %v3463, 4
        %v3465 = vrot.slane %v2200, 6
        %v3466 = vsel %vm1676, %v3464, %v3465
        %v3467 = vrot.slane %v3465, 4
        %v3468 = vrot.slane %v2965, 6
        %v3469 = vsel %vm1676, %v3467, %v3468
        %v3470 = vrot.slane %v3404, 6
        %v3471 = vrot.slane %v3470, 4
        %v3472 = vrot.slane %v2203, 6
        %v3473 = vsel %vm1676, %v3471, %v3472
        %v3474 = vrot.slane %v3472, 4
        %v3475 = vrot.slane %v2966, 6
        %v3476 = vsel %vm1676, %v3474, %v3475
        %v3477 = vrot.slane %v3405, 6
        %v3478 = vrot.slane %v3477, 4
        %v3479 = vrot.slane %v2206, 6
        %v3480 = vsel %vm1676, %v3478, %v3479
        %v3481 = vrot.slane %v3479, 4
        %v3482 = vrot.slane %v2967, 6
        %v3483 = vsel %vm1676, %v3481, %v3482
        %v3484 = vrot.slane %v3406, 6
        %v3485 = vrot.slane %v3484, 4
        %v3486 = vrot.slane %v2209, 6
        %v3487 = vsel %vm1676, %v3485, %v3486
        %v3488 = vrot.slane %v3486, 4
        %v3489 = vrot.slane %v2968, 6
        %v3490 = vsel %vm1676, %v3488, %v3489
        %v3491 = vrot.slane %v3407, 6
        %v3492 = vrot.slane %v3491, 4
        %v3493 = vrot.slane %v2212, 6
        %v3494 = vsel %vm1676, %v3492, %v3493
        %v3495 = vrot.slane %v3493, 4
        %v3496 = vrot.slane %v2969, 6
        %v3497 = vsel %vm1676, %v3495, %v3496
        %s3498 = scalar_lea.vmem %s1, 18
        %v3499 = vld [vmem:[%s3498] sm:$0x3]
        %v3500 = vunpack.c.l.b16 %v3431
        %v3501 = vunpack.c.l.b16 %v3434
        %v3502 = vunpack.c.l.b16 %v3438
        %v3503 = vunpack.c.l.b16 %v3441
        %v3504 = vunpack.c.l.b16 %v3445
        %v3505 = vunpack.c.l.b16 %v3448
        %v3506 = vunpack.c.l.b16 %v3452
        %v3507 = vunpack.c.l.b16 %v3455
        %v3508 = vunpack.c.l.b16 %v3459
        %v3509 = vunpack.c.l.b16 %v3462
        %v3510 = vunpack.c.l.b16 %v3466
        %v3511 = vunpack.c.l.b16 %v3469
        %v3512 = vunpack.c.l.b16 %v3473
        %v3513 = vunpack.c.l.b16 %v3476
        %v3514 = vunpack.c.l.b16 %v3480
        %v3515 = vunpack.c.l.b16 %v3483
        %v3516 = vunpack.c.l.b16 %v3487
        %v3517 = vunpack.c.l.b16 %v3490
        %v3518 = vunpack.c.l.b16 %v3494
        %v3519 = vunpack.c.l.b16 %v3497
        %v3520 = vpack.c.b16 %v3501, %v3500
        %v3521 = vpack.c.b16 %v3503, %v3502
        %v3522 = vpack.c.b16 %v3505, %v3504
        %v3523 = vpack.c.b16 %v3507, %v3506
        %v3524 = vpack.c.b16 %v3509, %v3508
        %v3525 = vpack.c.b16 %v3511, %v3510
        %v3526 = vpack.c.b16 %v3513, %v3512
        %v3527 = vpack.c.b16 %v3515, %v3514
        %v3528 = vpack.c.b16 %v3517, %v3516
        %v3529 = vpack.c.b16 %v3519, %v3518
        %v3531 = vsel %vm558, %v3520, 0
        %v3534 = vsel %vm558, %v3521, 0
        %v3537 = vsel %vm558, %v3522, 0
        %v3540 = vsel %vm558, %v3523, 0
        %v3543 = vsel %vm558, %v3524, 0
        %v3546 = vsel %vm558, %v3525, 0
        %v3549 = vsel %vm558, %v3526, 0
        %v3552 = vsel %vm558, %v3527, 0
        %v3555 = vsel %vm558, %v3528, 0
        %v3558 = vsel %vm558, %v3529, 0
        %v3561 = vsel %vm589, %v3499, 0
        %3563 = vmatprep.subr.bf16.mxu0 0
        %3564 = vmatpush1.bf16.msra.mxu0 %v3561
        %3565 = vmatprep.subr.bf16.mxu0 0
        %3566 = vmatpush1.bf16.msra.mxu0 0
        %3567 = vmatprep.subr.bf16.mxu0 0
        %3568 = vmatpush1.bf16.msra.mxu0 0
        %3569 = vmatprep.subr.bf16.mxu0 0
        %3570 = vmatpush1.bf16.msra.mxu0 0
        %3571 = vmatprep.subr.bf16.mxu0 0
        %3572 = vmatpush1.bf16.msra.mxu0 0
        %3573 = vmatprep.subr.bf16.mxu0 0
        %3574 = vmatpush1.bf16.msra.mxu0 0
        %3575 = vmatprep.subr.bf16.mxu0 0
        %3576 = vmatpush1.bf16.msra.mxu0 0
        %3577 = vmatprep.subr.bf16.mxu0 0
        %3578 = vmatpush1.bf16.msra.mxu0 0
        %3579 = vmatprep.subr.bf16.mxu0 0
        %3580 = vmatpush1.bf16.msra.mxu0 0
        %3581 = vmatprep.subr.bf16.mxu0 0
        %3582 = vmatpush1.bf16.msra.mxu0 0
        %3583 = vmatprep.subr.bf16.mxu0 0
        %3584 = vmatpush1.bf16.msra.mxu0 0
        %3585 = vmatprep.subr.bf16.mxu0 0
        %3586 = vmatpush1.bf16.msra.mxu0 0
        %3587 = vmatprep.subr.bf16.mxu0 0
        %3588 = vmatpush1.bf16.msra.mxu0 0
        %3589 = vmatprep.subr.bf16.mxu0 0
        %3590 = vmatpush1.bf16.msra.mxu0 0
        %3591 = vmatprep.subr.bf16.mxu0 0
        %3592 = vmatpush1.bf16.msra.mxu0 0
        %3593 = vmatprep.subr.bf16.mxu0 0
        %3594 = vmatpush1.bf16.msra.mxu0 0
        %3595 = vmatprep.mubr.bf16.mxu0 0
        %3596 = vmatmul.mubr.bf16.gmra.mrb[0].mxu0 %v3531
        %v3597 = vpop.f32.mrb[0].mxu0
        %v3598 = vadd.f32 0.0, %v3597
        %v3599 = vpop.f32.mrb[0].mxu0
        %v3600 = vpop.f32.mrb[0].mxu0
        %v3601 = vadd.f32 0.0, %v3600
        %v3602 = vpop.f32.mrb[0].mxu0
        %3603 = vmatprep.mubr.bf16.mxu0 0
        %3604 = vmatmul.mubr.bf16.gmra.mrb[0].mxu0 %v3534
        %v3605 = vpop.f32.mrb[0].mxu0
        %v3606 = vadd.f32 0.0, %v3605
        %v3607 = vpop.f32.mrb[0].mxu0
        %v3608 = vpop.f32.mrb[0].mxu0
        %v3609 = vadd.f32 0.0, %v3608
        %v3610 = vpop.f32.mrb[0].mxu0
        %3611 = vmatprep.mubr.bf16.mxu0 0
        %3612 = vmatmul.mubr.bf16.gmra.mrb[0].mxu0 %v3537
        %v3613 = vpop.f32.mrb[0].mxu0
        %v3614 = vadd.f32 0.0, %v3613
        %v3615 = vpop.f32.mrb[0].mxu0
        %v3616 = vpop.f32.mrb[0].mxu0
        %v3617 = vadd.f32 0.0, %v3616
        %v3618 = vpop.f32.mrb[0].mxu0
        %3619 = vmatprep.mubr.bf16.mxu0 0
        %3620 = vmatmul.mubr.bf16.gmra.mrb[0].mxu0 %v3540
        %v3621 = vpop.f32.mrb[0].mxu0
        %v3622 = vadd.f32 0.0, %v3621
        %v3623 = vpop.f32.mrb[0].mxu0
        %v3624 = vpop.f32.mrb[0].mxu0
        %v3625 = vadd.f32 0.0, %v3624
        %v3626 = vpop.f32.mrb[0].mxu0
        %3627 = vmatprep.mubr.bf16.mxu0 0
        %3628 = vmatmul.mubr.bf16.gmra.mrb[0].mxu0 %v3543
        %v3629 = vpop.f32.mrb[0].mxu0
        %v3630 = vadd.f32 0.0, %v3629
        %v3631 = vpop.f32.mrb[0].mxu0
        %v3632 = vpop.f32.mrb[0].mxu0
        %v3633 = vadd.f32 0.0, %v3632
        %v3634 = vpop.f32.mrb[0].mxu0
        %3635 = vmatprep.mubr.bf16.mxu0 0
        %3636 = vmatmul.mubr.bf16.gmra.mrb[0].mxu0 %v3546
        %v3637 = vpop.f32.mrb[0].mxu0
        %v3638 = vadd.f32 0.0, %v3637
        %v3639 = vpop.f32.mrb[0].mxu0
        %v3640 = vpop.f32.mrb[0].mxu0
        %v3641 = vadd.f32 0.0, %v3640
        %v3642 = vpop.f32.mrb[0].mxu0
        %3643 = vmatprep.mubr.bf16.mxu0 0
        %3644 = vmatmul.mubr.bf16.gmra.mrb[0].mxu0 %v3549
        %v3645 = vpop.f32.mrb[0].mxu0
        %v3646 = vadd.f32 0.0, %v3645
        %v3647 = vpop.f32.mrb[0].mxu0
        %v3648 = vpop.f32.mrb[0].mxu0
        %v3649 = vadd.f32 0.0, %v3648
        %v3650 = vpop.f32.mrb[0].mxu0
        %3651 = vmatprep.mubr.bf16.mxu0 0
        %3652 = vmatmul.mubr.bf16.gmra.mrb[0].mxu0 %v3552
        %v3653 = vpop.f32.mrb[0].mxu0
        %v3654 = vadd.f32 0.0, %v3653
        %v3655 = vpop.f32.mrb[0].mxu0
        %v3656 = vpop.f32.mrb[0].mxu0
        %v3657 = vadd.f32 0.0, %v3656
        %v3658 = vpop.f32.mrb[0].mxu0
        %3659 = vmatprep.mubr.bf16.mxu0 0
        %3660 = vmatmul.mubr.bf16.gmra.mrb[0].mxu0 %v3555
        %v3661 = vpop.f32.mrb[0].mxu0
        %v3662 = vadd.f32 0.0, %v3661
        %v3663 = vpop.f32.mrb[0].mxu0
        %v3664 = vpop.f32.mrb[0].mxu0
        %v3665 = vadd.f32 0.0, %v3664
        %v3666 = vpop.f32.mrb[0].mxu0
        %3667 = vmatprep.mubr.bf16.mxu0 0
        %3668 = vmatmul.mubr.bf16.gmra.mrb[0].mxu0 %v3558
        %v3669 = vpop.f32.mrb[0].mxu0
        %v3670 = vadd.f32 0.0, %v3669
        %v3671 = vpop.f32.mrb[0].mxu0
        %v3672 = vpop.f32.mrb[0].mxu0
        %v3673 = vadd.f32 0.0, %v3672
        %v3674 = vpop.f32.mrb[0].mxu0
        %3675 = vdwg.mxu0
        %v3676 = vadd.f32 %v3378, %v3598
        %v3677 = vadd.f32 %v3379, %v3601
        %v3678 = vadd.f32 %v3380, %v3606
        %v3679 = vadd.f32 %v3381, %v3609
        %v3680 = vadd.f32 %v3382, %v3614
        %v3681 = vadd.f32 %v3383, %v3617
        %v3682 = vadd.f32 %v3384, %v3622
        %v3683 = vadd.f32 %v3385, %v3625
        %v3684 = vadd.f32 %v3386, %v3630
        %v3685 = vadd.f32 %v3387, %v3633
        %v3686 = vadd.f32 %v3388, %v3638
        %v3687 = vadd.f32 %v3389, %v3641
        %v3688 = vadd.f32 %v3390, %v3646
        %v3689 = vadd.f32 %v3391, %v3649
        %v3690 = vadd.f32 %v3392, %v3654
        %v3691 = vadd.f32 %v3393, %v3657
        %v3692 = vadd.f32 %v3394, %v3662
        %v3693 = vadd.f32 %v3395, %v3665
        %v3694 = vadd.f32 %v3396, %v3670
        %v3695 = vadd.f32 %v3397, %v3673
        %s3696 = scalar_lea.vmem %s250, 24
        %v3697 = vld [vmem:[%s3696] sm:$0xf]
        %v3698 = vld [vmem:[%s3696 + $0x4] sm:$0xf]
        %v3699 = vld [vmem:[%s3696 + $0xc] sm:$0xf]
        %v3700 = vld [vmem:[%s3696 + $0x10] sm:$0xf]
        %v3701 = vld [vmem:[%s3696 + $0x18] sm:$0xf]
        %v3702 = vld [vmem:[%s3696 + $0x1c] sm:$0xf]
        %v3703 = vld [vmem:[%s3696 + $0x24] sm:$0xf]
        %v3704 = vld [vmem:[%s3696 + $0x28] sm:$0xf]
        %v3705 = vld [vmem:[%s3696 + $0x30] sm:$0xf]
        %v3706 = vld [vmem:[%s3696 + $0x34] sm:$0xf]
        %v3707 = vld [vmem:[%s3696 + $0x3c] sm:$0xf]
        %v3708 = vld [vmem:[%s3696 + $0x40] sm:$0xf]
        %v3709 = vld [vmem:[%s3696 + $0x48] sm:$0xf]
        %v3710 = vld [vmem:[%s3696 + $0x4c] sm:$0xf]
        %v3711 = vld [vmem:[%s3696 + $0x54] sm:$0xf]
        %v3712 = vld [vmem:[%s3696 + $0x58] sm:$0xf]
        %v3713 = vld [vmem:[%s3696 + $0x60] sm:$0xf]
        %v3714 = vld [vmem:[%s3696 + $0x64] sm:$0xf]
        %v3715 = vld [vmem:[%s3696 + $0x6c] sm:$0xf]
        %v3716 = vld [vmem:[%s3696 + $0x70] sm:$0xf]
        %s3717 = scalar_lea.vmem %s1, 20
        %v3718 = vld [vmem:[%s3717] sm:$0x3]
        %v3739 = vunpack.c.l.b16 %v3697
        %v3740 = vunpack.c.l.b16 %v3698
        %v3741 = vunpack.c.l.b16 %v3699
        %v3742 = vunpack.c.l.b16 %v3700
        %v3743 = vunpack.c.l.b16 %v3701
        %v3744 = vunpack.c.l.b16 %v3702
        %v3745 = vunpack.c.l.b16 %v3703
        %v3746 = vunpack.c.l.b16 %v3704
        %v3747 = vunpack.c.l.b16 %v3705
        %v3748 = vunpack.c.l.b16 %v3706
        %v3749 = vunpack.c.l.b16 %v3707
        %v3750 = vunpack.c.l.b16 %v3708
        %v3751 = vunpack.c.l.b16 %v3709
        %v3752 = vunpack.c.l.b16 %v3710
        %v3753 = vunpack.c.l.b16 %v3711
        %v3754 = vunpack.c.l.b16 %v3712
        %v3755 = vunpack.c.l.b16 %v3713
        %v3756 = vunpack.c.l.b16 %v3714
        %v3757 = vunpack.c.l.b16 %v3715
        %v3758 = vunpack.c.l.b16 %v3716
        %v3759 = vpack.c.b16 %v3740, %v3739
        %v3760 = vpack.c.b16 %v3742, %v3741
        %v3761 = vpack.c.b16 %v3744, %v3743
        %v3762 = vpack.c.b16 %v3746, %v3745
        %v3763 = vpack.c.b16 %v3748, %v3747
        %v3764 = vpack.c.b16 %v3750, %v3749
        %v3765 = vpack.c.b16 %v3752, %v3751
        %v3766 = vpack.c.b16 %v3754, %v3753
        %v3767 = vpack.c.b16 %v3756, %v3755
        %v3768 = vpack.c.b16 %v3758, %v3757
        %v3770 = vsel %vm558, %v3759, 0
        %v3773 = vsel %vm558, %v3760, 0
        %v3776 = vsel %vm558, %v3761, 0
        %v3779 = vsel %vm558, %v3762, 0
        %v3782 = vsel %vm558, %v3763, 0
        %v3785 = vsel %vm558, %v3764, 0
        %v3788 = vsel %vm558, %v3765, 0
        %v3791 = vsel %vm558, %v3766, 0
        %v3794 = vsel %vm558, %v3767, 0
        %v3797 = vsel %vm558, %v3768, 0
        %v3800 = vsel %vm589, %v3718, 0
        %3802 = vmatprep.subr.bf16.mxu0 0
        %3803 = vmatpush1.bf16.msra.mxu0 %v3800
        %3804 = vmatprep.subr.bf16.mxu0 0
        %3805 = vmatpush1.bf16.msra.mxu0 0
        %3806 = vmatprep.subr.bf16.mxu0 0
        %3807 = vmatpush1.bf16.msra.mxu0 0
        %3808 = vmatprep.subr.bf16.mxu0 0
        %3809 = vmatpush1.bf16.msra.mxu0 0
        %3810 = vmatprep.subr.bf16.mxu0 0
        %3811 = vmatpush1.bf16.msra.mxu0 0
        %3812 = vmatprep.subr.bf16.mxu0 0
        %3813 = vmatpush1.bf16.msra.mxu0 0
        %3814 = vmatprep.subr.bf16.mxu0 0
        %3815 = vmatpush1.bf16.msra.mxu0 0
        %3816 = vmatprep.subr.bf16.mxu0 0
        %3817 = vmatpush1.bf16.msra.mxu0 0
        %3818 = vmatprep.subr.bf16.mxu0 0
        %3819 = vmatpush1.bf16.msra.mxu0 0
        %3820 = vmatprep.subr.bf16.mxu0 0
        %3821 = vmatpush1.bf16.msra.mxu0 0
        %3822 = vmatprep.subr.bf16.mxu0 0
        %3823 = vmatpush1.bf16.msra.mxu0 0
        %3824 = vmatprep.subr.bf16.mxu0 0
        %3825 = vmatpush1.bf16.msra.mxu0 0
        %3826 = vmatprep.subr.bf16.mxu0 0
        %3827 = vmatpush1.bf16.msra.mxu0 0
        %3828 = vmatprep.subr.bf16.mxu0 0
        %3829 = vmatpush1.bf16.msra.mxu0 0
        %3830 = vmatprep.subr.bf16.mxu0 0
        %3831 = vmatpush1.bf16.msra.mxu0 0
        %3832 = vmatprep.subr.bf16.mxu0 0
        %3833 = vmatpush1.bf16.msra.mxu0 0
        %3834 = vmatprep.mubr.bf16.mxu0 0
        %3835 = vmatmul.mubr.bf16.gmra.mrb[0].mxu0 %v3770
        %v3836 = vpop.f32.mrb[0].mxu0
        %v3837 = vadd.f32 0.0, %v3836
        %v3838 = vpop.f32.mrb[0].mxu0
        %v3839 = vpop.f32.mrb[0].mxu0
        %v3840 = vadd.f32 0.0, %v3839
        %v3841 = vpop.f32.mrb[0].mxu0
        %3842 = vmatprep.mubr.bf16.mxu0 0
        %3843 = vmatmul.mubr.bf16.gmra.mrb[0].mxu0 %v3773
        %v3844 = vpop.f32.mrb[0].mxu0
        %v3845 = vadd.f32 0.0, %v3844
        %v3846 = vpop.f32.mrb[0].mxu0
        %v3847 = vpop.f32.mrb[0].mxu0
        %v3848 = vadd.f32 0.0, %v3847
        %v3849 = vpop.f32.mrb[0].mxu0
        %3850 = vmatprep.mubr.bf16.mxu0 0
        %3851 = vmatmul.mubr.bf16.gmra.mrb[0].mxu0 %v3776
        %v3852 = vpop.f32.mrb[0].mxu0
        %v3853 = vadd.f32 0.0, %v3852
        %v3854 = vpop.f32.mrb[0].mxu0
        %v3855 = vpop.f32.mrb[0].mxu0
        %v3856 = vadd.f32 0.0, %v3855
        %v3857 = vpop.f32.mrb[0].mxu0
        %3858 = vmatprep.mubr.bf16.mxu0 0
        %3859 = vmatmul.mubr.bf16.gmra.mrb[0].mxu0 %v3779
        %v3860 = vpop.f32.mrb[0].mxu0
        %v3861 = vadd.f32 0.0, %v3860
        %v3862 = vpop.f32.mrb[0].mxu0
        %v3863 = vpop.f32.mrb[0].mxu0
        %v3864 = vadd.f32 0.0, %v3863
        %v3865 = vpop.f32.mrb[0].mxu0
        %3866 = vmatprep.mubr.bf16.mxu0 0
        %3867 = vmatmul.mubr.bf16.gmra.mrb[0].mxu0 %v3782
        %v3868 = vpop.f32.mrb[0].mxu0
        %v3869 = vadd.f32 0.0, %v3868
        %v3870 = vpop.f32.mrb[0].mxu0
        %v3871 = vpop.f32.mrb[0].mxu0
        %v3872 = vadd.f32 0.0, %v3871
        %v3873 = vpop.f32.mrb[0].mxu0
        %3874 = vmatprep.mubr.bf16.mxu0 0
        %3875 = vmatmul.mubr.bf16.gmra.mrb[0].mxu0 %v3785
        %v3876 = vpop.f32.mrb[0].mxu0
        %v3877 = vadd.f32 0.0, %v3876
        %v3878 = vpop.f32.mrb[0].mxu0
        %v3879 = vpop.f32.mrb[0].mxu0
        %v3880 = vadd.f32 0.0, %v3879
        %v3881 = vpop.f32.mrb[0].mxu0
        %3882 = vmatprep.mubr.bf16.mxu0 0
        %3883 = vmatmul.mubr.bf16.gmra.mrb[0].mxu0 %v3788
        %v3884 = vpop.f32.mrb[0].mxu0
        %v3885 = vadd.f32 0.0, %v3884
        %v3886 = vpop.f32.mrb[0].mxu0
        %v3887 = vpop.f32.mrb[0].mxu0
        %v3888 = vadd.f32 0.0, %v3887
        %v3889 = vpop.f32.mrb[0].mxu0
        %3890 = vmatprep.mubr.bf16.mxu0 0
        %3891 = vmatmul.mubr.bf16.gmra.mrb[0].mxu0 %v3791
        %v3892 = vpop.f32.mrb[0].mxu0
        %v3893 = vadd.f32 0.0, %v3892
        %v3894 = vpop.f32.mrb[0].mxu0
        %v3895 = vpop.f32.mrb[0].mxu0
        %v3896 = vadd.f32 0.0, %v3895
        %v3897 = vpop.f32.mrb[0].mxu0
        %3898 = vmatprep.mubr.bf16.mxu0 0
        %3899 = vmatmul.mubr.bf16.gmra.mrb[0].mxu0 %v3794
        %v3900 = vpop.f32.mrb[0].mxu0
        %v3901 = vadd.f32 0.0, %v3900
        %v3902 = vpop.f32.mrb[0].mxu0
        %v3903 = vpop.f32.mrb[0].mxu0
        %v3904 = vadd.f32 0.0, %v3903
        %v3905 = vpop.f32.mrb[0].mxu0
        %3906 = vmatprep.mubr.bf16.mxu0 0
        %3907 = vmatmul.mubr.bf16.gmra.mrb[0].mxu0 %v3797
        %v3908 = vpop.f32.mrb[0].mxu0
        %v3909 = vadd.f32 0.0, %v3908
        %v3910 = vpop.f32.mrb[0].mxu0
        %v3911 = vpop.f32.mrb[0].mxu0
        %v3912 = vadd.f32 0.0, %v3911
        %v3913 = vpop.f32.mrb[0].mxu0
        %3914 = vdwg.mxu0
        %v3915 = vadd.f32 %v3676, %v3837
        %v3916 = vadd.f32 %v3677, %v3840
        %v3917 = vadd.f32 %v3678, %v3845
        %v3918 = vadd.f32 %v3679, %v3848
        %v3919 = vadd.f32 %v3680, %v3853
        %v3920 = vadd.f32 %v3681, %v3856
        %v3921 = vadd.f32 %v3682, %v3861
        %v3922 = vadd.f32 %v3683, %v3864
        %v3923 = vadd.f32 %v3684, %v3869
        %v3924 = vadd.f32 %v3685, %v3872
        %v3925 = vadd.f32 %v3686, %v3877
        %v3926 = vadd.f32 %v3687, %v3880
        %v3927 = vadd.f32 %v3688, %v3885
        %v3928 = vadd.f32 %v3689, %v3888
        %v3929 = vadd.f32 %v3690, %v3893
        %v3930 = vadd.f32 %v3691, %v3896
        %v3931 = vadd.f32 %v3692, %v3901
        %v3932 = vadd.f32 %v3693, %v3904
        %v3933 = vadd.f32 %v3694, %v3909
        %v3934 = vadd.f32 %v3695, %v3912
        %v3935 = vld [vmem:[%s3696] sm:$0xf]
        %v3936 = vld [vmem:[%s3696 + $0x4] sm:$0xf]
        %v3937 = vld [vmem:[%s3696 + $0x8] sm:$0x1]
        %v3938 = vld [vmem:[%s3696 + $0xc] sm:$0xf]
        %v3939 = vld [vmem:[%s3696 + $0x10] sm:$0xf]
        %v3940 = vld [vmem:[%s3696 + $0x14] sm:$0x1]
        %v3941 = vld [vmem:[%s3696 + $0x18] sm:$0xf]
        %v3942 = vld [vmem:[%s3696 + $0x1c] sm:$0xf]
        %v3943 = vld [vmem:[%s3696 + $0x20] sm:$0x1]
        %v3944 = vld [vmem:[%s3696 + $0x24] sm:$0xf]
        %v3945 = vld [vmem:[%s3696 + $0x28] sm:$0xf]
        %v3946 = vld [vmem:[%s3696 + $0x2c] sm:$0x1]
        %v3947 = vld [vmem:[%s3696 + $0x30] sm:$0xf]
        %v3948 = vld [vmem:[%s3696 + $0x34] sm:$0xf]
        %v3949 = vld [vmem:[%s3696 + $0x38] sm:$0x1]
        %v3950 = vld [vmem:[%s3696 + $0x3c] sm:$0xf]
        %v3951 = vld [vmem:[%s3696 + $0x40] sm:$0xf]
        %v3952 = vld [vmem:[%s3696 + $0x44] sm:$0x1]
        %v3953 = vld [vmem:[%s3696 + $0x48] sm:$0xf]
        %v3954 = vld [vmem:[%s3696 + $0x4c] sm:$0xf]
        %v3955 = vld [vmem:[%s3696 + $0x50] sm:$0x1]
        %v3956 = vld [vmem:[%s3696 + $0x54] sm:$0xf]
        %v3957 = vld [vmem:[%s3696 + $0x58] sm:$0xf]
        %v3958 = vld [vmem:[%s3696 + $0x5c] sm:$0x1]
        %v3959 = vld [vmem:[%s3696 + $0x60] sm:$0xf]
        %v3960 = vld [vmem:[%s3696 + $0x64] sm:$0xf]
        %v3961 = vld [vmem:[%s3696 + $0x68] sm:$0x1]
        %v3962 = vld [vmem:[%s3696 + $0x6c] sm:$0xf]
        %v3963 = vld [vmem:[%s3696 + $0x70] sm:$0xf]
        %v3964 = vld [vmem:[%s3696 + $0x74] sm:$0x1]
        %v3966 = vshrl.u32 %v3935, 16
        %v3968 = vrot.slane %v3966, 4
        %v3969 = vshll.u32 %v3935, 16
        %v3971 = vrot.slane %v3969, 5
        %v3972 = vor.u32 %v3968, %v3971
        %v3973 = vrot.slane %v3972, 4
        %v3975 = vshll.u32 %v3936, 16
        %v3977 = vrot.slane %v3975, 5
        %v3978 = vsel %vm285, %v3973, %v3977
        %v3979 = vshrl.u32 %v3936, 16
        %v3981 = vrot.slane %v3979, 4
        %v3982 = vor.u32 %v3981, %v3977
        %v3983 = vrot.slane %v3982, 4
        %v3985 = vshll.u32 %v3937, 16
        %v3987 = vrot.slane %v3985, 5
        %v3988 = vsel %vm285, %v3983, %v3987
        %v3990 = vshrl.u32 %v3938, 16
        %v3992 = vrot.slane %v3990, 4
        %v3993 = vshll.u32 %v3938, 16
        %v3995 = vrot.slane %v3993, 5
        %v3996 = vor.u32 %v3992, %v3995
        %v3997 = vrot.slane %v3996, 4
        %v3999 = vshll.u32 %v3939, 16
        %v4001 = vrot.slane %v3999, 5
        %v4002 = vsel %vm285, %v3997, %v4001
        %v4003 = vshrl.u32 %v3939, 16
        %v4005 = vrot.slane %v4003, 4
        %v4006 = vor.u32 %v4005, %v4001
        %v4007 = vrot.slane %v4006, 4
        %v4009 = vshll.u32 %v3940, 16
        %v4011 = vrot.slane %v4009, 5
        %v4012 = vsel %vm285, %v4007, %v4011
        %v4014 = vshrl.u32 %v3941, 16
        %v4016 = vrot.slane %v4014, 4
        %v4017 = vshll.u32 %v3941, 16
        %v4019 = vrot.slane %v4017, 5
        %v4020 = vor.u32 %v4016, %v4019
        %v4021 = vrot.slane %v4020, 4
        %v4023 = vshll.u32 %v3942, 16
        %v4025 = vrot.slane %v4023, 5
        %v4026 = vsel %vm285, %v4021, %v4025
        %v4027 = vshrl.u32 %v3942, 16
        %v4029 = vrot.slane %v4027, 4
        %v4030 = vor.u32 %v4029, %v4025
        %v4031 = vrot.slane %v4030, 4
        %v4033 = vshll.u32 %v3943, 16
        %v4035 = vrot.slane %v4033, 5
        %v4036 = vsel %vm285, %v4031, %v4035
        %v4038 = vshrl.u32 %v3944, 16
        %v4040 = vrot.slane %v4038, 4
        %v4041 = vshll.u32 %v3944, 16
        %v4043 = vrot.slane %v4041, 5
        %v4044 = vor.u32 %v4040, %v4043
        %v4045 = vrot.slane %v4044, 4
        %v4047 = vshll.u32 %v3945, 16
        %v4049 = vrot.slane %v4047, 5
        %v4050 = vsel %vm285, %v4045, %v4049
        %v4051 = vshrl.u32 %v3945, 16
        %v4053 = vrot.slane %v4051, 4
        %v4054 = vor.u32 %v4053, %v4049
        %v4055 = vrot.slane %v4054, 4
        %v4057 = vshll.u32 %v3946, 16
        %v4059 = vrot.slane %v4057, 5
        %v4060 = vsel %vm285, %v4055, %v4059
        %v4062 = vshrl.u32 %v3947, 16
        %v4064 = vrot.slane %v4062, 4
        %v4065 = vshll.u32 %v3947, 16
        %v4067 = vrot.slane %v4065, 5
        %v4068 = vor.u32 %v4064, %v4067
        %v4069 = vrot.slane %v4068, 4
        %v4071 = vshll.u32 %v3948, 16
        %v4073 = vrot.slane %v4071, 5
        %v4074 = vsel %vm285, %v4069, %v4073
        %v4075 = vshrl.u32 %v3948, 16
        %v4077 = vrot.slane %v4075, 4
        %v4078 = vor.u32 %v4077, %v4073
        %v4079 = vrot.slane %v4078, 4
        %v4081 = vshll.u32 %v3949, 16
        %v4083 = vrot.slane %v4081, 5
        %v4084 = vsel %vm285, %v4079, %v4083
        %v4086 = vshrl.u32 %v3950, 16
        %v4088 = vrot.slane %v4086, 4
        %v4089 = vshll.u32 %v3950, 16
        %v4091 = vrot.slane %v4089, 5
        %v4092 = vor.u32 %v4088, %v4091
        %v4093 = vrot.slane %v4092, 4
        %v4095 = vshll.u32 %v3951, 16
        %v4097 = vrot.slane %v4095, 5
        %v4098 = vsel %vm285, %v4093, %v4097
        %v4099 = vshrl.u32 %v3951, 16
        %v4101 = vrot.slane %v4099, 4
        %v4102 = vor.u32 %v4101, %v4097
        %v4103 = vrot.slane %v4102, 4
        %v4105 = vshll.u32 %v3952, 16
        %v4107 = vrot.slane %v4105, 5
        %v4108 = vsel %vm285, %v4103, %v4107
        %v4110 = vshrl.u32 %v3953, 16
        %v4112 = vrot.slane %v4110, 4
        %v4113 = vshll.u32 %v3953, 16
        %v4115 = vrot.slane %v4113, 5
        %v4116 = vor.u32 %v4112, %v4115
        %v4117 = vrot.slane %v4116, 4
        %v4119 = vshll.u32 %v3954, 16
        %v4121 = vrot.slane %v4119, 5
        %v4122 = vsel %vm285, %v4117, %v4121
        %v4123 = vshrl.u32 %v3954, 16
        %v4125 = vrot.slane %v4123, 4
        %v4126 = vor.u32 %v4125, %v4121
        %v4127 = vrot.slane %v4126, 4
        %v4129 = vshll.u32 %v3955, 16
        %v4131 = vrot.slane %v4129, 5
        %v4132 = vsel %vm285, %v4127, %v4131
        %v4134 = vshrl.u32 %v3956, 16
        %v4136 = vrot.slane %v4134, 4
        %v4137 = vshll.u32 %v3956, 16
        %v4139 = vrot.slane %v4137, 5
        %v4140 = vor.u32 %v4136, %v4139
        %v4141 = vrot.slane %v4140, 4
        %v4143 = vshll.u32 %v3957, 16
        %v4145 = vrot.slane %v4143, 5
        %v4146 = vsel %vm285, %v4141, %v4145
        %v4147 = vshrl.u32 %v3957, 16
        %v4149 = vrot.slane %v4147, 4
        %v4150 = vor.u32 %v4149, %v4145
        %v4151 = vrot.slane %v4150, 4
        %v4153 = vshll.u32 %v3958, 16
        %v4155 = vrot.slane %v4153, 5
        %v4156 = vsel %vm285, %v4151, %v4155
        %v4158 = vshrl.u32 %v3959, 16
        %v4160 = vrot.slane %v4158, 4
        %v4161 = vshll.u32 %v3959, 16
        %v4163 = vrot.slane %v4161, 5
        %v4164 = vor.u32 %v4160, %v4163
        %v4165 = vrot.slane %v4164, 4
        %v4167 = vshll.u32 %v3960, 16
        %v4169 = vrot.slane %v4167, 5
        %v4170 = vsel %vm285, %v4165, %v4169
        %v4171 = vshrl.u32 %v3960, 16
        %v4173 = vrot.slane %v4171, 4
        %v4174 = vor.u32 %v4173, %v4169
        %v4175 = vrot.slane %v4174, 4
        %v4177 = vshll.u32 %v3961, 16
        %v4179 = vrot.slane %v4177, 5
        %v4180 = vsel %vm285, %v4175, %v4179
        %v4182 = vshrl.u32 %v3962, 16
        %v4184 = vrot.slane %v4182, 4
        %v4185 = vshll.u32 %v3962, 16
        %v4187 = vrot.slane %v4185, 5
        %v4188 = vor.u32 %v4184, %v4187
        %v4189 = vrot.slane %v4188, 4
        %v4191 = vshll.u32 %v3963, 16
        %v4193 = vrot.slane %v4191, 5
        %v4194 = vsel %vm285, %v4189, %v4193
        %v4195 = vshrl.u32 %v3963, 16
        %v4197 = vrot.slane %v4195, 4
        %v4198 = vor.u32 %v4197, %v4193
        %v4199 = vrot.slane %v4198, 4
        %v4201 = vshll.u32 %v3964, 16
        %v4203 = vrot.slane %v4201, 5
        %v4204 = vsel %vm285, %v4199, %v4203
        %s4205 = scalar_lea.vmem %s1, 22
        %v4206 = vld [vmem:[%s4205] sm:$0x3]
        %v4207 = vunpack.c.l.b16 %v3978
        %v4208 = vunpack.c.l.b16 %v3988
        %v4209 = vunpack.c.l.b16 %v4002
        %v4210 = vunpack.c.l.b16 %v4012
        %v4211 = vunpack.c.l.b16 %v4026
        %v4212 = vunpack.c.l.b16 %v4036
        %v4213 = vunpack.c.l.b16 %v4050
        %v4214 = vunpack.c.l.b16 %v4060
        %v4215 = vunpack.c.l.b16 %v4074
        %v4216 = vunpack.c.l.b16 %v4084
        %v4217 = vunpack.c.l.b16 %v4098
        %v4218 = vunpack.c.l.b16 %v4108
        %v4219 = vunpack.c.l.b16 %v4122
        %v4220 = vunpack.c.l.b16 %v4132
        %v4221 = vunpack.c.l.b16 %v4146
        %v4222 = vunpack.c.l.b16 %v4156
        %v4223 = vunpack.c.l.b16 %v4170
        %v4224 = vunpack.c.l.b16 %v4180
        %v4225 = vunpack.c.l.b16 %v4194
        %v4226 = vunpack.c.l.b16 %v4204
        %v4227 = vpack.c.b16 %v4208, %v4207
        %v4228 = vpack.c.b16 %v4210, %v4209
        %v4229 = vpack.c.b16 %v4212, %v4211
        %v4230 = vpack.c.b16 %v4214, %v4213
        %v4231 = vpack.c.b16 %v4216, %v4215
        %v4232 = vpack.c.b16 %v4218, %v4217
        %v4233 = vpack.c.b16 %v4220, %v4219
        %v4234 = vpack.c.b16 %v4222, %v4221
        %v4235 = vpack.c.b16 %v4224, %v4223
        %v4236 = vpack.c.b16 %v4226, %v4225
        %v4238 = vsel %vm558, %v4227, 0
        %v4241 = vsel %vm558, %v4228, 0
        %v4244 = vsel %vm558, %v4229, 0
        %v4247 = vsel %vm558, %v4230, 0
        %v4250 = vsel %vm558, %v4231, 0
        %v4253 = vsel %vm558, %v4232, 0
        %v4256 = vsel %vm558, %v4233, 0
        %v4259 = vsel %vm558, %v4234, 0
        %v4262 = vsel %vm558, %v4235, 0
        %v4265 = vsel %vm558, %v4236, 0
        %v4268 = vsel %vm589, %v4206, 0
        %4270 = vmatprep.subr.bf16.mxu0 0
        %4271 = vmatpush1.bf16.msra.mxu0 %v4268
        %4272 = vmatprep.subr.bf16.mxu0 0
        %4273 = vmatpush1.bf16.msra.mxu0 0
        %4274 = vmatprep.subr.bf16.mxu0 0
        %4275 = vmatpush1.bf16.msra.mxu0 0
        %4276 = vmatprep.subr.bf16.mxu0 0
        %4277 = vmatpush1.bf16.msra.mxu0 0
        %4278 = vmatprep.subr.bf16.mxu0 0
        %4279 = vmatpush1.bf16.msra.mxu0 0
        %4280 = vmatprep.subr.bf16.mxu0 0
        %4281 = vmatpush1.bf16.msra.mxu0 0
        %4282 = vmatprep.subr.bf16.mxu0 0
        %4283 = vmatpush1.bf16.msra.mxu0 0
        %4284 = vmatprep.subr.bf16.mxu0 0
        %4285 = vmatpush1.bf16.msra.mxu0 0
        %4286 = vmatprep.subr.bf16.mxu0 0
        %4287 = vmatpush1.bf16.msra.mxu0 0
        %4288 = vmatprep.subr.bf16.mxu0 0
        %4289 = vmatpush1.bf16.msra.mxu0 0
        %4290 = vmatprep.subr.bf16.mxu0 0
        %4291 = vmatpush1.bf16.msra.mxu0 0
        %4292 = vmatprep.subr.bf16.mxu0 0
        %4293 = vmatpush1.bf16.msra.mxu0 0
        %4294 = vmatprep.subr.bf16.mxu0 0
        %4295 = vmatpush1.bf16.msra.mxu0 0
        %4296 = vmatprep.subr.bf16.mxu0 0
        %4297 = vmatpush1.bf16.msra.mxu0 0
        %4298 = vmatprep.subr.bf16.mxu0 0
        %4299 = vmatpush1.bf16.msra.mxu0 0
        %4300 = vmatprep.subr.bf16.mxu0 0
        %4301 = vmatpush1.bf16.msra.mxu0 0
        %4302 = vmatprep.mubr.bf16.mxu0 0
        %4303 = vmatmul.mubr.bf16.gmra.mrb[0].mxu0 %v4238
        %v4304 = vpop.f32.mrb[0].mxu0
        %v4305 = vadd.f32 0.0, %v4304
        %v4306 = vpop.f32.mrb[0].mxu0
        %v4307 = vpop.f32.mrb[0].mxu0
        %v4308 = vadd.f32 0.0, %v4307
        %v4309 = vpop.f32.mrb[0].mxu0
        %4310 = vmatprep.mubr.bf16.mxu0 0
        %4311 = vmatmul.mubr.bf16.gmra.mrb[0].mxu0 %v4241
        %v4312 = vpop.f32.mrb[0].mxu0
        %v4313 = vadd.f32 0.0, %v4312
        %v4314 = vpop.f32.mrb[0].mxu0
        %v4315 = vpop.f32.mrb[0].mxu0
        %v4316 = vadd.f32 0.0, %v4315
        %v4317 = vpop.f32.mrb[0].mxu0
        %4318 = vmatprep.mubr.bf16.mxu0 0
        %4319 = vmatmul.mubr.bf16.gmra.mrb[0].mxu0 %v4244
        %v4320 = vpop.f32.mrb[0].mxu0
        %v4321 = vadd.f32 0.0, %v4320
        %v4322 = vpop.f32.mrb[0].mxu0
        %v4323 = vpop.f32.mrb[0].mxu0
        %v4324 = vadd.f32 0.0, %v4323
        %v4325 = vpop.f32.mrb[0].mxu0
        %4326 = vmatprep.mubr.bf16.mxu0 0
        %4327 = vmatmul.mubr.bf16.gmra.mrb[0].mxu0 %v4247
        %v4328 = vpop.f32.mrb[0].mxu0
        %v4329 = vadd.f32 0.0, %v4328
        %v4330 = vpop.f32.mrb[0].mxu0
        %v4331 = vpop.f32.mrb[0].mxu0
        %v4332 = vadd.f32 0.0, %v4331
        %v4333 = vpop.f32.mrb[0].mxu0
        %4334 = vmatprep.mubr.bf16.mxu0 0
        %4335 = vmatmul.mubr.bf16.gmra.mrb[0].mxu0 %v4250
        %v4336 = vpop.f32.mrb[0].mxu0
        %v4337 = vadd.f32 0.0, %v4336
        %v4338 = vpop.f32.mrb[0].mxu0
        %v4339 = vpop.f32.mrb[0].mxu0
        %v4340 = vadd.f32 0.0, %v4339
        %v4341 = vpop.f32.mrb[0].mxu0
        %4342 = vmatprep.mubr.bf16.mxu0 0
        %4343 = vmatmul.mubr.bf16.gmra.mrb[0].mxu0 %v4253
        %v4344 = vpop.f32.mrb[0].mxu0
        %v4345 = vadd.f32 0.0, %v4344
        %v4346 = vpop.f32.mrb[0].mxu0
        %v4347 = vpop.f32.mrb[0].mxu0
        %v4348 = vadd.f32 0.0, %v4347
        %v4349 = vpop.f32.mrb[0].mxu0
        %4350 = vmatprep.mubr.bf16.mxu0 0
        %4351 = vmatmul.mubr.bf16.gmra.mrb[0].mxu0 %v4256
        %v4352 = vpop.f32.mrb[0].mxu0
        %v4353 = vadd.f32 0.0, %v4352
        %v4354 = vpop.f32.mrb[0].mxu0
        %v4355 = vpop.f32.mrb[0].mxu0
        %v4356 = vadd.f32 0.0, %v4355
        %v4357 = vpop.f32.mrb[0].mxu0
        %4358 = vmatprep.mubr.bf16.mxu0 0
        %4359 = vmatmul.mubr.bf16.gmra.mrb[0].mxu0 %v4259
        %v4360 = vpop.f32.mrb[0].mxu0
        %v4361 = vadd.f32 0.0, %v4360
        %v4362 = vpop.f32.mrb[0].mxu0
        %v4363 = vpop.f32.mrb[0].mxu0
        %v4364 = vadd.f32 0.0, %v4363
        %v4365 = vpop.f32.mrb[0].mxu0
        %4366 = vmatprep.mubr.bf16.mxu0 0
        %4367 = vmatmul.mubr.bf16.gmra.mrb[0].mxu0 %v4262
        %v4368 = vpop.f32.mrb[0].mxu0
        %v4369 = vadd.f32 0.0, %v4368
        %v4370 = vpop.f32.mrb[0].mxu0
        %v4371 = vpop.f32.mrb[0].mxu0
        %v4372 = vadd.f32 0.0, %v4371
        %v4373 = vpop.f32.mrb[0].mxu0
        %4374 = vmatprep.mubr.bf16.mxu0 0
        %4375 = vmatmul.mubr.bf16.gmra.mrb[0].mxu0 %v4265
        %v4376 = vpop.f32.mrb[0].mxu0
        %v4377 = vadd.f32 0.0, %v4376
        %v4378 = vpop.f32.mrb[0].mxu0
        %v4379 = vpop.f32.mrb[0].mxu0
        %v4380 = vadd.f32 0.0, %v4379
        %v4381 = vpop.f32.mrb[0].mxu0
        %4382 = vdwg.mxu0
        %v4383 = vadd.f32 %v3915, %v4305
        %v4384 = vadd.f32 %v3916, %v4308
        %v4385 = vadd.f32 %v3917, %v4313
        %v4386 = vadd.f32 %v3918, %v4316
        %v4387 = vadd.f32 %v3919, %v4321
        %v4388 = vadd.f32 %v3920, %v4324
        %v4389 = vadd.f32 %v3921, %v4329
        %v4390 = vadd.f32 %v3922, %v4332
        %v4391 = vadd.f32 %v3923, %v4337
        %v4392 = vadd.f32 %v3924, %v4340
        %v4393 = vadd.f32 %v3925, %v4345
        %v4394 = vadd.f32 %v3926, %v4348
        %v4395 = vadd.f32 %v3927, %v4353
        %v4396 = vadd.f32 %v3928, %v4356
        %v4397 = vadd.f32 %v3929, %v4361
        %v4398 = vadd.f32 %v3930, %v4364
        %v4399 = vadd.f32 %v3931, %v4369
        %v4400 = vadd.f32 %v3932, %v4372
        %v4401 = vadd.f32 %v3933, %v4377
        %v4402 = vadd.f32 %v3934, %v4380
        %v4403 = vld [vmem:[%s3696] sm:$0xe]
        %v4404 = vld [vmem:[%s3696 + $0xc] sm:$0xe]
        %v4405 = vld [vmem:[%s3696 + $0x18] sm:$0xe]
        %v4406 = vld [vmem:[%s3696 + $0x24] sm:$0xe]
        %v4407 = vld [vmem:[%s3696 + $0x30] sm:$0xe]
        %v4408 = vld [vmem:[%s3696 + $0x3c] sm:$0xe]
        %v4409 = vld [vmem:[%s3696 + $0x48] sm:$0xe]
        %v4410 = vld [vmem:[%s3696 + $0x54] sm:$0xe]
        %v4411 = vld [vmem:[%s3696 + $0x60] sm:$0xe]
        %v4412 = vld [vmem:[%s3696 + $0x6c] sm:$0xe]
        %v4443 = vrot.slane %v4403, 5
        %v4444 = vrot.slane %v4443, 4
        %v4445 = vrot.slane %v3936, 5
        %v4446 = vsel %vm934, %v4444, %v4445
        %v4447 = vrot.slane %v4445, 4
        %v4448 = vrot.slane %v3937, 5
        %v4449 = vsel %vm934, %v4447, %v4448
        %v4450 = vrot.slane %v4404, 5
        %v4451 = vrot.slane %v4450, 4
        %v4452 = vrot.slane %v3939, 5
        %v4453 = vsel %vm934, %v4451, %v4452
        %v4454 = vrot.slane %v4452, 4
        %v4455 = vrot.slane %v3940, 5
        %v4456 = vsel %vm934, %v4454, %v4455
        %v4457 = vrot.slane %v4405, 5
        %v4458 = vrot.slane %v4457, 4
        %v4459 = vrot.slane %v3942, 5
        %v4460 = vsel %vm934, %v4458, %v4459
        %v4461 = vrot.slane %v4459, 4
        %v4462 = vrot.slane %v3943, 5
        %v4463 = vsel %vm934, %v4461, %v4462
        %v4464 = vrot.slane %v4406, 5
        %v4465 = vrot.slane %v4464, 4
        %v4466 = vrot.slane %v3945, 5
        %v4467 = vsel %vm934, %v4465, %v4466
        %v4468 = vrot.slane %v4466, 4
        %v4469 = vrot.slane %v3946, 5
        %v4470 = vsel %vm934, %v4468, %v4469
        %v4471 = vrot.slane %v4407, 5
        %v4472 = vrot.slane %v4471, 4
        %v4473 = vrot.slane %v3948, 5
        %v4474 = vsel %vm934, %v4472, %v4473
        %v4475 = vrot.slane %v4473, 4
        %v4476 = vrot.slane %v3949, 5
        %v4477 = vsel %vm934, %v4475, %v4476
        %v4478 = vrot.slane %v4408, 5
        %v4479 = vrot.slane %v4478, 4
        %v4480 = vrot.slane %v3951, 5
        %v4481 = vsel %vm934, %v4479, %v4480
        %v4482 = vrot.slane %v4480, 4
        %v4483 = vrot.slane %v3952, 5
        %v4484 = vsel %vm934, %v4482, %v4483
        %v4485 = vrot.slane %v4409, 5
        %v4486 = vrot.slane %v4485, 4
        %v4487 = vrot.slane %v3954, 5
        %v4488 = vsel %vm934, %v4486, %v4487
        %v4489 = vrot.slane %v4487, 4
        %v4490 = vrot.slane %v3955, 5
        %v4491 = vsel %vm934, %v4489, %v4490
        %v4492 = vrot.slane %v4410, 5
        %v4493 = vrot.slane %v4492, 4
        %v4494 = vrot.slane %v3957, 5
        %v4495 = vsel %vm934, %v4493, %v4494
        %v4496 = vrot.slane %v4494, 4
        %v4497 = vrot.slane %v3958, 5
        %v4498 = vsel %vm934, %v4496, %v4497
        %v4499 = vrot.slane %v4411, 5
        %v4500 = vrot.slane %v4499, 4
        %v4501 = vrot.slane %v3960, 5
        %v4502 = vsel %vm934, %v4500, %v4501
        %v4503 = vrot.slane %v4501, 4
        %v4504 = vrot.slane %v3961, 5
        %v4505 = vsel %vm934, %v4503, %v4504
        %v4506 = vrot.slane %v4412, 5
        %v4507 = vrot.slane %v4506, 4
        %v4508 = vrot.slane %v3963, 5
        %v4509 = vsel %vm934, %v4507, %v4508
        %v4510 = vrot.slane %v4508, 4
        %v4511 = vrot.slane %v3964, 5
        %v4512 = vsel %vm934, %v4510, %v4511
        %s4513 = scalar_lea.vmem %s1, 24
        %v4514 = vld [vmem:[%s4513] sm:$0x3]
        %v4515 = vunpack.c.l.b16 %v4446
        %v4516 = vunpack.c.l.b16 %v4449
        %v4517 = vunpack.c.l.b16 %v4453
        %v4518 = vunpack.c.l.b16 %v4456
        %v4519 = vunpack.c.l.b16 %v4460
        %v4520 = vunpack.c.l.b16 %v4463
        %v4521 = vunpack.c.l.b16 %v4467
        %v4522 = vunpack.c.l.b16 %v4470
        %v4523 = vunpack.c.l.b16 %v4474
        %v4524 = vunpack.c.l.b16 %v4477
        %v4525 = vunpack.c.l.b16 %v4481
        %v4526 = vunpack.c.l.b16 %v4484
        %v4527 = vunpack.c.l.b16 %v4488
        %v4528 = vunpack.c.l.b16 %v4491
        %v4529 = vunpack.c.l.b16 %v4495
        %v4530 = vunpack.c.l.b16 %v4498
        %v4531 = vunpack.c.l.b16 %v4502
        %v4532 = vunpack.c.l.b16 %v4505
        %v4533 = vunpack.c.l.b16 %v4509
        %v4534 = vunpack.c.l.b16 %v4512
        %v4535 = vpack.c.b16 %v4516, %v4515
        %v4536 = vpack.c.b16 %v4518, %v4517
        %v4537 = vpack.c.b16 %v4520, %v4519
        %v4538 = vpack.c.b16 %v4522, %v4521
        %v4539 = vpack.c.b16 %v4524, %v4523
        %v4540 = vpack.c.b16 %v4526, %v4525
        %v4541 = vpack.c.b16 %v4528, %v4527
        %v4542 = vpack.c.b16 %v4530, %v4529
        %v4543 = vpack.c.b16 %v4532, %v4531
        %v4544 = vpack.c.b16 %v4534, %v4533
        %v4546 = vsel %vm558, %v4535, 0
        %v4549 = vsel %vm558, %v4536, 0
        %v4552 = vsel %vm558, %v4537, 0
        %v4555 = vsel %vm558, %v4538, 0
        %v4558 = vsel %vm558, %v4539, 0
        %v4561 = vsel %vm558, %v4540, 0
        %v4564 = vsel %vm558, %v4541, 0
        %v4567 = vsel %vm558, %v4542, 0
        %v4570 = vsel %vm558, %v4543, 0
        %v4573 = vsel %vm558, %v4544, 0
        %v4576 = vsel %vm589, %v4514, 0
        %4578 = vmatprep.subr.bf16.mxu0 0
        %4579 = vmatpush1.bf16.msra.mxu0 %v4576
        %4580 = vmatprep.subr.bf16.mxu0 0
        %4581 = vmatpush1.bf16.msra.mxu0 0
        %4582 = vmatprep.subr.bf16.mxu0 0
        %4583 = vmatpush1.bf16.msra.mxu0 0
        %4584 = vmatprep.subr.bf16.mxu0 0
        %4585 = vmatpush1.bf16.msra.mxu0 0
        %4586 = vmatprep.subr.bf16.mxu0 0
        %4587 = vmatpush1.bf16.msra.mxu0 0
        %4588 = vmatprep.subr.bf16.mxu0 0
        %4589 = vmatpush1.bf16.msra.mxu0 0
        %4590 = vmatprep.subr.bf16.mxu0 0
        %4591 = vmatpush1.bf16.msra.mxu0 0
        %4592 = vmatprep.subr.bf16.mxu0 0
        %4593 = vmatpush1.bf16.msra.mxu0 0
        %4594 = vmatprep.subr.bf16.mxu0 0
        %4595 = vmatpush1.bf16.msra.mxu0 0
        %4596 = vmatprep.subr.bf16.mxu0 0
        %4597 = vmatpush1.bf16.msra.mxu0 0
        %4598 = vmatprep.subr.bf16.mxu0 0
        %4599 = vmatpush1.bf16.msra.mxu0 0
        %4600 = vmatprep.subr.bf16.mxu0 0
        %4601 = vmatpush1.bf16.msra.mxu0 0
        %4602 = vmatprep.subr.bf16.mxu0 0
        %4603 = vmatpush1.bf16.msra.mxu0 0
        %4604 = vmatprep.subr.bf16.mxu0 0
        %4605 = vmatpush1.bf16.msra.mxu0 0
        %4606 = vmatprep.subr.bf16.mxu0 0
        %4607 = vmatpush1.bf16.msra.mxu0 0
        %4608 = vmatprep.subr.bf16.mxu0 0
        %4609 = vmatpush1.bf16.msra.mxu0 0
        %4610 = vmatprep.mubr.bf16.mxu0 0
        %4611 = vmatmul.mubr.bf16.gmra.mrb[0].mxu0 %v4546
        %v4612 = vpop.f32.mrb[0].mxu0
        %v4613 = vadd.f32 0.0, %v4612
        %v4614 = vpop.f32.mrb[0].mxu0
        %v4615 = vpop.f32.mrb[0].mxu0
        %v4616 = vadd.f32 0.0, %v4615
        %v4617 = vpop.f32.mrb[0].mxu0
        %4618 = vmatprep.mubr.bf16.mxu0 0
        %4619 = vmatmul.mubr.bf16.gmra.mrb[0].mxu0 %v4549
        %v4620 = vpop.f32.mrb[0].mxu0
        %v4621 = vadd.f32 0.0, %v4620
        %v4622 = vpop.f32.mrb[0].mxu0
        %v4623 = vpop.f32.mrb[0].mxu0
        %v4624 = vadd.f32 0.0, %v4623
        %v4625 = vpop.f32.mrb[0].mxu0
        %4626 = vmatprep.mubr.bf16.mxu0 0
        %4627 = vmatmul.mubr.bf16.gmra.mrb[0].mxu0 %v4552
        %v4628 = vpop.f32.mrb[0].mxu0
        %v4629 = vadd.f32 0.0, %v4628
        %v4630 = vpop.f32.mrb[0].mxu0
        %v4631 = vpop.f32.mrb[0].mxu0
        %v4632 = vadd.f32 0.0, %v4631
        %v4633 = vpop.f32.mrb[0].mxu0
        %4634 = vmatprep.mubr.bf16.mxu0 0
        %4635 = vmatmul.mubr.bf16.gmra.mrb[0].mxu0 %v4555
        %v4636 = vpop.f32.mrb[0].mxu0
        %v4637 = vadd.f32 0.0, %v4636
        %v4638 = vpop.f32.mrb[0].mxu0
        %v4639 = vpop.f32.mrb[0].mxu0
        %v4640 = vadd.f32 0.0, %v4639
        %v4641 = vpop.f32.mrb[0].mxu0
        %4642 = vmatprep.mubr.bf16.mxu0 0
        %4643 = vmatmul.mubr.bf16.gmra.mrb[0].mxu0 %v4558
        %v4644 = vpop.f32.mrb[0].mxu0
        %v4645 = vadd.f32 0.0, %v4644
        %v4646 = vpop.f32.mrb[0].mxu0
        %v4647 = vpop.f32.mrb[0].mxu0
        %v4648 = vadd.f32 0.0, %v4647
        %v4649 = vpop.f32.mrb[0].mxu0
        %4650 = vmatprep.mubr.bf16.mxu0 0
        %4651 = vmatmul.mubr.bf16.gmra.mrb[0].mxu0 %v4561
        %v4652 = vpop.f32.mrb[0].mxu0
        %v4653 = vadd.f32 0.0, %v4652
        %v4654 = vpop.f32.mrb[0].mxu0
        %v4655 = vpop.f32.mrb[0].mxu0
        %v4656 = vadd.f32 0.0, %v4655
        %v4657 = vpop.f32.mrb[0].mxu0
        %4658 = vmatprep.mubr.bf16.mxu0 0
        %4659 = vmatmul.mubr.bf16.gmra.mrb[0].mxu0 %v4564
        %v4660 = vpop.f32.mrb[0].mxu0
        %v4661 = vadd.f32 0.0, %v4660
        %v4662 = vpop.f32.mrb[0].mxu0
        %v4663 = vpop.f32.mrb[0].mxu0
        %v4664 = vadd.f32 0.0, %v4663
        %v4665 = vpop.f32.mrb[0].mxu0
        %4666 = vmatprep.mubr.bf16.mxu0 0
        %4667 = vmatmul.mubr.bf16.gmra.mrb[0].mxu0 %v4567
        %v4668 = vpop.f32.mrb[0].mxu0
        %v4669 = vadd.f32 0.0, %v4668
        %v4670 = vpop.f32.mrb[0].mxu0
        %v4671 = vpop.f32.mrb[0].mxu0
        %v4672 = vadd.f32 0.0, %v4671
        %v4673 = vpop.f32.mrb[0].mxu0
        %4674 = vmatprep.mubr.bf16.mxu0 0
        %4675 = vmatmul.mubr.bf16.gmra.mrb[0].mxu0 %v4570
        %v4676 = vpop.f32.mrb[0].mxu0
        %v4677 = vadd.f32 0.0, %v4676
        %v4678 = vpop.f32.mrb[0].mxu0
        %v4679 = vpop.f32.mrb[0].mxu0
        %v4680 = vadd.f32 0.0, %v4679
        %v4681 = vpop.f32.mrb[0].mxu0
        %4682 = vmatprep.mubr.bf16.mxu0 0
        %4683 = vmatmul.mubr.bf16.gmra.mrb[0].mxu0 %v4573
        %v4684 = vpop.f32.mrb[0].mxu0
        %v4685 = vadd.f32 0.0, %v4684
        %v4686 = vpop.f32.mrb[0].mxu0
        %v4687 = vpop.f32.mrb[0].mxu0
        %v4688 = vadd.f32 0.0, %v4687
        %v4689 = vpop.f32.mrb[0].mxu0
        %4690 = vdwg.mxu0
        %v4691 = vadd.f32 %v4383, %v4613
        %v4692 = vadd.f32 %v4384, %v4616
        %v4693 = vadd.f32 %v4385, %v4621
        %v4694 = vadd.f32 %v4386, %v4624
        %v4695 = vadd.f32 %v4387, %v4629
        %v4696 = vadd.f32 %v4388, %v4632
        %v4697 = vadd.f32 %v4389, %v4637
        %v4698 = vadd.f32 %v4390, %v4640
        %v4699 = vadd.f32 %v4391, %v4645
        %v4700 = vadd.f32 %v4392, %v4648
        %v4701 = vadd.f32 %v4393, %v4653
        %v4702 = vadd.f32 %v4394, %v4656
        %v4703 = vadd.f32 %v4395, %v4661
        %v4704 = vadd.f32 %v4396, %v4664
        %v4705 = vadd.f32 %v4397, %v4669
        %v4706 = vadd.f32 %v4398, %v4672
        %v4707 = vadd.f32 %v4399, %v4677
        %v4708 = vadd.f32 %v4400, %v4680
        %v4709 = vadd.f32 %v4401, %v4685
        %v4710 = vadd.f32 %v4402, %v4688
        %v4711 = vld [vmem:[%s3696 + $0x8] sm:$0x3]
        %v4712 = vld [vmem:[%s3696 + $0x14] sm:$0x3]
        %v4713 = vld [vmem:[%s3696 + $0x20] sm:$0x3]
        %v4714 = vld [vmem:[%s3696 + $0x2c] sm:$0x3]
        %v4715 = vld [vmem:[%s3696 + $0x38] sm:$0x3]
        %v4716 = vld [vmem:[%s3696 + $0x44] sm:$0x3]
        %v4717 = vld [vmem:[%s3696 + $0x50] sm:$0x3]
        %v4718 = vld [vmem:[%s3696 + $0x5c] sm:$0x3]
        %v4719 = vld [vmem:[%s3696 + $0x68] sm:$0x3]
        %v4720 = vld [vmem:[%s3696 + $0x74] sm:$0x3]
        %v4722 = vshrl.u32 %v4403, 16
        %v4724 = vrot.slane %v4722, 5
        %v4725 = vshll.u32 %v4403, 16
        %v4727 = vrot.slane %v4725, 6
        %v4728 = vor.u32 %v4724, %v4727
        %v4729 = vrot.slane %v4728, 4
        %v4730 = vrot.slane %v3979, 5
        %v4731 = vrot.slane %v3975, 6
        %v4732 = vor.u32 %v4730, %v4731
        %v4733 = vsel %vm1215, %v4729, %v4732
        %v4734 = vrot.slane %v4732, 4
        %v4736 = vshrl.u32 %v4711, 16
        %v4738 = vrot.slane %v4736, 5
        %v4739 = vshll.u32 %v4711, 16
        %v4741 = vrot.slane %v4739, 6
        %v4742 = vor.u32 %v4738, %v4741
        %v4743 = vsel %vm1215, %v4734, %v4742
        %v4745 = vshrl.u32 %v4404, 16
        %v4747 = vrot.slane %v4745, 5
        %v4748 = vshll.u32 %v4404, 16
        %v4750 = vrot.slane %v4748, 6
        %v4751 = vor.u32 %v4747, %v4750
        %v4752 = vrot.slane %v4751, 4
        %v4753 = vrot.slane %v4003, 5
        %v4754 = vrot.slane %v3999, 6
        %v4755 = vor.u32 %v4753, %v4754
        %v4756 = vsel %vm1215, %v4752, %v4755
        %v4757 = vrot.slane %v4755, 4
        %v4759 = vshrl.u32 %v4712, 16
        %v4761 = vrot.slane %v4759, 5
        %v4762 = vshll.u32 %v4712, 16
        %v4764 = vrot.slane %v4762, 6
        %v4765 = vor.u32 %v4761, %v4764
        %v4766 = vsel %vm1215, %v4757, %v4765
        %v4768 = vshrl.u32 %v4405, 16
        %v4770 = vrot.slane %v4768, 5
        %v4771 = vshll.u32 %v4405, 16
        %v4773 = vrot.slane %v4771, 6
        %v4774 = vor.u32 %v4770, %v4773
        %v4775 = vrot.slane %v4774, 4
        %v4776 = vrot.slane %v4027, 5
        %v4777 = vrot.slane %v4023, 6
        %v4778 = vor.u32 %v4776, %v4777
        %v4779 = vsel %vm1215, %v4775, %v4778
        %v4780 = vrot.slane %v4778, 4
        %v4782 = vshrl.u32 %v4713, 16
        %v4784 = vrot.slane %v4782, 5
        %v4785 = vshll.u32 %v4713, 16
        %v4787 = vrot.slane %v4785, 6
        %v4788 = vor.u32 %v4784, %v4787
        %v4789 = vsel %vm1215, %v4780, %v4788
        %v4791 = vshrl.u32 %v4406, 16
        %v4793 = vrot.slane %v4791, 5
        %v4794 = vshll.u32 %v4406, 16
        %v4796 = vrot.slane %v4794, 6
        %v4797 = vor.u32 %v4793, %v4796
        %v4798 = vrot.slane %v4797, 4
        %v4799 = vrot.slane %v4051, 5
        %v4800 = vrot.slane %v4047, 6
        %v4801 = vor.u32 %v4799, %v4800
        %v4802 = vsel %vm1215, %v4798, %v4801
        %v4803 = vrot.slane %v4801, 4
        %v4805 = vshrl.u32 %v4714, 16
        %v4807 = vrot.slane %v4805, 5
        %v4808 = vshll.u32 %v4714, 16
        %v4810 = vrot.slane %v4808, 6
        %v4811 = vor.u32 %v4807, %v4810
        %v4812 = vsel %vm1215, %v4803, %v4811
        %v4814 = vshrl.u32 %v4407, 16
        %v4816 = vrot.slane %v4814, 5
        %v4817 = vshll.u32 %v4407, 16
        %v4819 = vrot.slane %v4817, 6
        %v4820 = vor.u32 %v4816, %v4819
        %v4821 = vrot.slane %v4820, 4
        %v4822 = vrot.slane %v4075, 5
        %v4823 = vrot.slane %v4071, 6
        %v4824 = vor.u32 %v4822, %v4823
        %v4825 = vsel %vm1215, %v4821, %v4824
        %v4826 = vrot.slane %v4824, 4
        %v4828 = vshrl.u32 %v4715, 16
        %v4830 = vrot.slane %v4828, 5
        %v4831 = vshll.u32 %v4715, 16
        %v4833 = vrot.slane %v4831, 6
        %v4834 = vor.u32 %v4830, %v4833
        %v4835 = vsel %vm1215, %v4826, %v4834
        %v4837 = vshrl.u32 %v4408, 16
        %v4839 = vrot.slane %v4837, 5
        %v4840 = vshll.u32 %v4408, 16
        %v4842 = vrot.slane %v4840, 6
        %v4843 = vor.u32 %v4839, %v4842
        %v4844 = vrot.slane %v4843, 4
        %v4845 = vrot.slane %v4099, 5
        %v4846 = vrot.slane %v4095, 6
        %v4847 = vor.u32 %v4845, %v4846
        %v4848 = vsel %vm1215, %v4844, %v4847
        %v4849 = vrot.slane %v4847, 4
        %v4851 = vshrl.u32 %v4716, 16
        %v4853 = vrot.slane %v4851, 5
        %v4854 = vshll.u32 %v4716, 16
        %v4856 = vrot.slane %v4854, 6
        %v4857 = vor.u32 %v4853, %v4856
        %v4858 = vsel %vm1215, %v4849, %v4857
        %v4860 = vshrl.u32 %v4409, 16
        %v4862 = vrot.slane %v4860, 5
        %v4863 = vshll.u32 %v4409, 16
        %v4865 = vrot.slane %v4863, 6
        %v4866 = vor.u32 %v4862, %v4865
        %v4867 = vrot.slane %v4866, 4
        %v4868 = vrot.slane %v4123, 5
        %v4869 = vrot.slane %v4119, 6
        %v4870 = vor.u32 %v4868, %v4869
        %v4871 = vsel %vm1215, %v4867, %v4870
        %v4872 = vrot.slane %v4870, 4
        %v4874 = vshrl.u32 %v4717, 16
        %v4876 = vrot.slane %v4874, 5
        %v4877 = vshll.u32 %v4717, 16
        %v4879 = vrot.slane %v4877, 6
        %v4880 = vor.u32 %v4876, %v4879
        %v4881 = vsel %vm1215, %v4872, %v4880
        %v4883 = vshrl.u32 %v4410, 16
        %v4885 = vrot.slane %v4883, 5
        %v4886 = vshll.u32 %v4410, 16
        %v4888 = vrot.slane %v4886, 6
        %v4889 = vor.u32 %v4885, %v4888
        %v4890 = vrot.slane %v4889, 4
        %v4891 = vrot.slane %v4147, 5
        %v4892 = vrot.slane %v4143, 6
        %v4893 = vor.u32 %v4891, %v4892
        %v4894 = vsel %vm1215, %v4890, %v4893
        %v4895 = vrot.slane %v4893, 4
        %v4897 = vshrl.u32 %v4718, 16
        %v4899 = vrot.slane %v4897, 5
        %v4900 = vshll.u32 %v4718, 16
        %v4902 = vrot.slane %v4900, 6
        %v4903 = vor.u32 %v4899, %v4902
        %v4904 = vsel %vm1215, %v4895, %v4903
        %v4906 = vshrl.u32 %v4411, 16
        %v4908 = vrot.slane %v4906, 5
        %v4909 = vshll.u32 %v4411, 16
        %v4911 = vrot.slane %v4909, 6
        %v4912 = vor.u32 %v4908, %v4911
        %v4913 = vrot.slane %v4912, 4
        %v4914 = vrot.slane %v4171, 5
        %v4915 = vrot.slane %v4167, 6
        %v4916 = vor.u32 %v4914, %v4915
        %v4917 = vsel %vm1215, %v4913, %v4916
        %v4918 = vrot.slane %v4916, 4
        %v4920 = vshrl.u32 %v4719, 16
        %v4922 = vrot.slane %v4920, 5
        %v4923 = vshll.u32 %v4719, 16
        %v4925 = vrot.slane %v4923, 6
        %v4926 = vor.u32 %v4922, %v4925
        %v4927 = vsel %vm1215, %v4918, %v4926
        %v4929 = vshrl.u32 %v4412, 16
        %v4931 = vrot.slane %v4929, 5
        %v4932 = vshll.u32 %v4412, 16
        %v4934 = vrot.slane %v4932, 6
        %v4935 = vor.u32 %v4931, %v4934
        %v4936 = vrot.slane %v4935, 4
        %v4937 = vrot.slane %v4195, 5
        %v4938 = vrot.slane %v4191, 6
        %v4939 = vor.u32 %v4937, %v4938
        %v4940 = vsel %vm1215, %v4936, %v4939
        %v4941 = vrot.slane %v4939, 4
        %v4943 = vshrl.u32 %v4720, 16
        %v4945 = vrot.slane %v4943, 5
        %v4946 = vshll.u32 %v4720, 16
        %v4948 = vrot.slane %v4946, 6
        %v4949 = vor.u32 %v4945, %v4948
        %v4950 = vsel %vm1215, %v4941, %v4949
        %s4951 = scalar_lea.vmem %s1, 26
        %v4952 = vld [vmem:[%s4951] sm:$0x3]
        %v4953 = vunpack.c.l.b16 %v4733
        %v4954 = vunpack.c.l.b16 %v4743
        %v4955 = vunpack.c.l.b16 %v4756
        %v4956 = vunpack.c.l.b16 %v4766
        %v4957 = vunpack.c.l.b16 %v4779
        %v4958 = vunpack.c.l.b16 %v4789
        %v4959 = vunpack.c.l.b16 %v4802
        %v4960 = vunpack.c.l.b16 %v4812
        %v4961 = vunpack.c.l.b16 %v4825
        %v4962 = vunpack.c.l.b16 %v4835
        %v4963 = vunpack.c.l.b16 %v4848
        %v4964 = vunpack.c.l.b16 %v4858
        %v4965 = vunpack.c.l.b16 %v4871
        %v4966 = vunpack.c.l.b16 %v4881
        %v4967 = vunpack.c.l.b16 %v4894
        %v4968 = vunpack.c.l.b16 %v4904
        %v4969 = vunpack.c.l.b16 %v4917
        %v4970 = vunpack.c.l.b16 %v4927
        %v4971 = vunpack.c.l.b16 %v4940
        %v4972 = vunpack.c.l.b16 %v4950
        %v4973 = vpack.c.b16 %v4954, %v4953
        %v4974 = vpack.c.b16 %v4956, %v4955
        %v4975 = vpack.c.b16 %v4958, %v4957
        %v4976 = vpack.c.b16 %v4960, %v4959
        %v4977 = vpack.c.b16 %v4962, %v4961
        %v4978 = vpack.c.b16 %v4964, %v4963
        %v4979 = vpack.c.b16 %v4966, %v4965
        %v4980 = vpack.c.b16 %v4968, %v4967
        %v4981 = vpack.c.b16 %v4970, %v4969
        %v4982 = vpack.c.b16 %v4972, %v4971
        %v4984 = vsel %vm558, %v4973, 0
        %v4987 = vsel %vm558, %v4974, 0
        %v4990 = vsel %vm558, %v4975, 0
        %v4993 = vsel %vm558, %v4976, 0
        %v4996 = vsel %vm558, %v4977, 0
        %v4999 = vsel %vm558, %v4978, 0
        %v5002 = vsel %vm558, %v4979, 0
        %v5005 = vsel %vm558, %v4980, 0
        %v5008 = vsel %vm558, %v4981, 0
        %v5011 = vsel %vm558, %v4982, 0
        %v5014 = vsel %vm589, %v4952, 0
        %5016 = vmatprep.subr.bf16.mxu0 0
        %5017 = vmatpush1.bf16.msra.mxu0 %v5014
        %5018 = vmatprep.subr.bf16.mxu0 0
        %5019 = vmatpush1.bf16.msra.mxu0 0
        %5020 = vmatprep.subr.bf16.mxu0 0
        %5021 = vmatpush1.bf16.msra.mxu0 0
        %5022 = vmatprep.subr.bf16.mxu0 0
        %5023 = vmatpush1.bf16.msra.mxu0 0
        %5024 = vmatprep.subr.bf16.mxu0 0
        %5025 = vmatpush1.bf16.msra.mxu0 0
        %5026 = vmatprep.subr.bf16.mxu0 0
        %5027 = vmatpush1.bf16.msra.mxu0 0
        %5028 = vmatprep.subr.bf16.mxu0 0
        %5029 = vmatpush1.bf16.msra.mxu0 0
        %5030 = vmatprep.subr.bf16.mxu0 0
        %5031 = vmatpush1.bf16.msra.mxu0 0
        %5032 = vmatprep.subr.bf16.mxu0 0
        %5033 = vmatpush1.bf16.msra.mxu0 0
        %5034 = vmatprep.subr.bf16.mxu0 0
        %5035 = vmatpush1.bf16.msra.mxu0 0
        %5036 = vmatprep.subr.bf16.mxu0 0
        %5037 = vmatpush1.bf16.msra.mxu0 0
        %5038 = vmatprep.subr.bf16.mxu0 0
        %5039 = vmatpush1.bf16.msra.mxu0 0
        %5040 = vmatprep.subr.bf16.mxu0 0
        %5041 = vmatpush1.bf16.msra.mxu0 0
        %5042 = vmatprep.subr.bf16.mxu0 0
        %5043 = vmatpush1.bf16.msra.mxu0 0
        %5044 = vmatprep.subr.bf16.mxu0 0
        %5045 = vmatpush1.bf16.msra.mxu0 0
        %5046 = vmatprep.subr.bf16.mxu0 0
        %5047 = vmatpush1.bf16.msra.mxu0 0
        %5048 = vmatprep.mubr.bf16.mxu0 0
        %5049 = vmatmul.mubr.bf16.gmra.mrb[0].mxu0 %v4984
        %v5050 = vpop.f32.mrb[0].mxu0
        %v5051 = vadd.f32 0.0, %v5050
        %v5052 = vpop.f32.mrb[0].mxu0
        %v5053 = vpop.f32.mrb[0].mxu0
        %v5054 = vadd.f32 0.0, %v5053
        %v5055 = vpop.f32.mrb[0].mxu0
        %5056 = vmatprep.mubr.bf16.mxu0 0
        %5057 = vmatmul.mubr.bf16.gmra.mrb[0].mxu0 %v4987
        %v5058 = vpop.f32.mrb[0].mxu0
        %v5059 = vadd.f32 0.0, %v5058
        %v5060 = vpop.f32.mrb[0].mxu0
        %v5061 = vpop.f32.mrb[0].mxu0
        %v5062 = vadd.f32 0.0, %v5061
        %v5063 = vpop.f32.mrb[0].mxu0
        %5064 = vmatprep.mubr.bf16.mxu0 0
        %5065 = vmatmul.mubr.bf16.gmra.mrb[0].mxu0 %v4990
        %v5066 = vpop.f32.mrb[0].mxu0
        %v5067 = vadd.f32 0.0, %v5066
        %v5068 = vpop.f32.mrb[0].mxu0
        %v5069 = vpop.f32.mrb[0].mxu0
        %v5070 = vadd.f32 0.0, %v5069
        %v5071 = vpop.f32.mrb[0].mxu0
        %5072 = vmatprep.mubr.bf16.mxu0 0
        %5073 = vmatmul.mubr.bf16.gmra.mrb[0].mxu0 %v4993
        %v5074 = vpop.f32.mrb[0].mxu0
        %v5075 = vadd.f32 0.0, %v5074
        %v5076 = vpop.f32.mrb[0].mxu0
        %v5077 = vpop.f32.mrb[0].mxu0
        %v5078 = vadd.f32 0.0, %v5077
        %v5079 = vpop.f32.mrb[0].mxu0
        %5080 = vmatprep.mubr.bf16.mxu0 0
        %5081 = vmatmul.mubr.bf16.gmra.mrb[0].mxu0 %v4996
        %v5082 = vpop.f32.mrb[0].mxu0
        %v5083 = vadd.f32 0.0, %v5082
        %v5084 = vpop.f32.mrb[0].mxu0
        %v5085 = vpop.f32.mrb[0].mxu0
        %v5086 = vadd.f32 0.0, %v5085
        %v5087 = vpop.f32.mrb[0].mxu0
        %5088 = vmatprep.mubr.bf16.mxu0 0
        %5089 = vmatmul.mubr.bf16.gmra.mrb[0].mxu0 %v4999
        %v5090 = vpop.f32.mrb[0].mxu0
        %v5091 = vadd.f32 0.0, %v5090
        %v5092 = vpop.f32.mrb[0].mxu0
        %v5093 = vpop.f32.mrb[0].mxu0
        %v5094 = vadd.f32 0.0, %v5093
        %v5095 = vpop.f32.mrb[0].mxu0
        %5096 = vmatprep.mubr.bf16.mxu0 0
        %5097 = vmatmul.mubr.bf16.gmra.mrb[0].mxu0 %v5002
        %v5098 = vpop.f32.mrb[0].mxu0
        %v5099 = vadd.f32 0.0, %v5098
        %v5100 = vpop.f32.mrb[0].mxu0
        %v5101 = vpop.f32.mrb[0].mxu0
        %v5102 = vadd.f32 0.0, %v5101
        %v5103 = vpop.f32.mrb[0].mxu0
        %5104 = vmatprep.mubr.bf16.mxu0 0
        %5105 = vmatmul.mubr.bf16.gmra.mrb[0].mxu0 %v5005
        %v5106 = vpop.f32.mrb[0].mxu0
        %v5107 = vadd.f32 0.0, %v5106
        %v5108 = vpop.f32.mrb[0].mxu0
        %v5109 = vpop.f32.mrb[0].mxu0
        %v5110 = vadd.f32 0.0, %v5109
        %v5111 = vpop.f32.mrb[0].mxu0
        %5112 = vmatprep.mubr.bf16.mxu0 0
        %5113 = vmatmul.mubr.bf16.gmra.mrb[0].mxu0 %v5008
        %v5114 = vpop.f32.mrb[0].mxu0
        %v5115 = vadd.f32 0.0, %v5114
        %v5116 = vpop.f32.mrb[0].mxu0
        %v5117 = vpop.f32.mrb[0].mxu0
        %v5118 = vadd.f32 0.0, %v5117
        %v5119 = vpop.f32.mrb[0].mxu0
        %5120 = vmatprep.mubr.bf16.mxu0 0
        %5121 = vmatmul.mubr.bf16.gmra.mrb[0].mxu0 %v5011
        %v5122 = vpop.f32.mrb[0].mxu0
        %v5123 = vadd.f32 0.0, %v5122
        %v5124 = vpop.f32.mrb[0].mxu0
        %v5125 = vpop.f32.mrb[0].mxu0
        %v5126 = vadd.f32 0.0, %v5125
        %v5127 = vpop.f32.mrb[0].mxu0
        %5128 = vdwg.mxu0
        %v5129 = vadd.f32 %v4691, %v5051
        %v5130 = vadd.f32 %v4692, %v5054
        %v5131 = vadd.f32 %v4693, %v5059
        %v5132 = vadd.f32 %v4694, %v5062
        %v5133 = vadd.f32 %v4695, %v5067
        %v5134 = vadd.f32 %v4696, %v5070
        %v5135 = vadd.f32 %v4697, %v5075
        %v5136 = vadd.f32 %v4698, %v5078
        %v5137 = vadd.f32 %v4699, %v5083
        %v5138 = vadd.f32 %v4700, %v5086
        %v5139 = vadd.f32 %v4701, %v5091
        %v5140 = vadd.f32 %v4702, %v5094
        %v5141 = vadd.f32 %v4703, %v5099
        %v5142 = vadd.f32 %v4704, %v5102
        %v5143 = vadd.f32 %v4705, %v5107
        %v5144 = vadd.f32 %v4706, %v5110
        %v5145 = vadd.f32 %v4707, %v5115
        %v5146 = vadd.f32 %v4708, %v5118
        %v5147 = vadd.f32 %v4709, %v5123
        %v5148 = vadd.f32 %v4710, %v5126
        %v5149 = vld [vmem:[%s3696] sm:$0xc]
        %v5150 = vld [vmem:[%s3696 + $0xc] sm:$0xc]
        %v5151 = vld [vmem:[%s3696 + $0x18] sm:$0xc]
        %v5152 = vld [vmem:[%s3696 + $0x24] sm:$0xc]
        %v5153 = vld [vmem:[%s3696 + $0x30] sm:$0xc]
        %v5154 = vld [vmem:[%s3696 + $0x3c] sm:$0xc]
        %v5155 = vld [vmem:[%s3696 + $0x48] sm:$0xc]
        %v5156 = vld [vmem:[%s3696 + $0x54] sm:$0xc]
        %v5157 = vld [vmem:[%s3696 + $0x60] sm:$0xc]
        %v5158 = vld [vmem:[%s3696 + $0x6c] sm:$0xc]
        %v5179 = vrot.slane %v5149, 6
        %v5180 = vrot.slane %v5179, 4
        %v5181 = vrot.slane %v3936, 6
        %v5182 = vsel %vm1676, %v5180, %v5181
        %v5183 = vrot.slane %v5181, 4
        %v5184 = vrot.slane %v4711, 6
        %v5185 = vsel %vm1676, %v5183, %v5184
        %v5186 = vrot.slane %v5150, 6
        %v5187 = vrot.slane %v5186, 4
        %v5188 = vrot.slane %v3939, 6
        %v5189 = vsel %vm1676, %v5187, %v5188
        %v5190 = vrot.slane %v5188, 4
        %v5191 = vrot.slane %v4712, 6
        %v5192 = vsel %vm1676, %v5190, %v5191
        %v5193 = vrot.slane %v5151, 6
        %v5194 = vrot.slane %v5193, 4
        %v5195 = vrot.slane %v3942, 6
        %v5196 = vsel %vm1676, %v5194, %v5195
        %v5197 = vrot.slane %v5195, 4
        %v5198 = vrot.slane %v4713, 6
        %v5199 = vsel %vm1676, %v5197, %v5198
        %v5200 = vrot.slane %v5152, 6
        %v5201 = vrot.slane %v5200, 4
        %v5202 = vrot.slane %v3945, 6
        %v5203 = vsel %vm1676, %v5201, %v5202
        %v5204 = vrot.slane %v5202, 4
        %v5205 = vrot.slane %v4714, 6
        %v5206 = vsel %vm1676, %v5204, %v5205
        %v5207 = vrot.slane %v5153, 6
        %v5208 = vrot.slane %v5207, 4
        %v5209 = vrot.slane %v3948, 6
        %v5210 = vsel %vm1676, %v5208, %v5209
        %v5211 = vrot.slane %v5209, 4
        %v5212 = vrot.slane %v4715, 6
        %v5213 = vsel %vm1676, %v5211, %v5212
        %v5214 = vrot.slane %v5154, 6
        %v5215 = vrot.slane %v5214, 4
        %v5216 = vrot.slane %v3951, 6
        %v5217 = vsel %vm1676, %v5215, %v5216
        %v5218 = vrot.slane %v5216, 4
        %v5219 = vrot.slane %v4716, 6
        %v5220 = vsel %vm1676, %v5218, %v5219
        %v5221 = vrot.slane %v5155, 6
        %v5222 = vrot.slane %v5221, 4
        %v5223 = vrot.slane %v3954, 6
        %v5224 = vsel %vm1676, %v5222, %v5223
        %v5225 = vrot.slane %v5223, 4
        %v5226 = vrot.slane %v4717, 6
        %v5227 = vsel %vm1676, %v5225, %v5226
        %v5228 = vrot.slane %v5156, 6
        %v5229 = vrot.slane %v5228, 4
        %v5230 = vrot.slane %v3957, 6
        %v5231 = vsel %vm1676, %v5229, %v5230
        %v5232 = vrot.slane %v5230, 4
        %v5233 = vrot.slane %v4718, 6
        %v5234 = vsel %vm1676, %v5232, %v5233
        %v5235 = vrot.slane %v5157, 6
        %v5236 = vrot.slane %v5235, 4
        %v5237 = vrot.slane %v3960, 6
        %v5238 = vsel %vm1676, %v5236, %v5237
        %v5239 = vrot.slane %v5237, 4
        %v5240 = vrot.slane %v4719, 6
        %v5241 = vsel %vm1676, %v5239, %v5240
        %v5242 = vrot.slane %v5158, 6
        %v5243 = vrot.slane %v5242, 4
        %v5244 = vrot.slane %v3963, 6
        %v5245 = vsel %vm1676, %v5243, %v5244
        %v5246 = vrot.slane %v5244, 4
        %v5247 = vrot.slane %v4720, 6
        %v5248 = vsel %vm1676, %v5246, %v5247
        %s5249 = scalar_lea.vmem %s1, 28
        %v5250 = vld [vmem:[%s5249] sm:$0x3]
        %v5251 = vunpack.c.l.b16 %v5182
        %v5252 = vunpack.c.l.b16 %v5185
        %v5253 = vunpack.c.l.b16 %v5189
        %v5254 = vunpack.c.l.b16 %v5192
        %v5255 = vunpack.c.l.b16 %v5196
        %v5256 = vunpack.c.l.b16 %v5199
        %v5257 = vunpack.c.l.b16 %v5203
        %v5258 = vunpack.c.l.b16 %v5206
        %v5259 = vunpack.c.l.b16 %v5210
        %v5260 = vunpack.c.l.b16 %v5213
        %v5261 = vunpack.c.l.b16 %v5217
        %v5262 = vunpack.c.l.b16 %v5220
        %v5263 = vunpack.c.l.b16 %v5224
        %v5264 = vunpack.c.l.b16 %v5227
        %v5265 = vunpack.c.l.b16 %v5231
        %v5266 = vunpack.c.l.b16 %v5234
        %v5267 = vunpack.c.l.b16 %v5238
        %v5268 = vunpack.c.l.b16 %v5241
        %v5269 = vunpack.c.l.b16 %v5245
        %v5270 = vunpack.c.l.b16 %v5248
        %v5271 = vpack.c.b16 %v5252, %v5251
        %v5272 = vpack.c.b16 %v5254, %v5253
        %v5273 = vpack.c.b16 %v5256, %v5255
        %v5274 = vpack.c.b16 %v5258, %v5257
        %v5275 = vpack.c.b16 %v5260, %v5259
        %v5276 = vpack.c.b16 %v5262, %v5261
        %v5277 = vpack.c.b16 %v5264, %v5263
        %v5278 = vpack.c.b16 %v5266, %v5265
        %v5279 = vpack.c.b16 %v5268, %v5267
        %v5280 = vpack.c.b16 %v5270, %v5269
        %v5282 = vsel %vm558, %v5271, 0
        %v5285 = vsel %vm558, %v5272, 0
        %v5288 = vsel %vm558, %v5273, 0
        %v5291 = vsel %vm558, %v5274, 0
        %v5294 = vsel %vm558, %v5275, 0
        %v5297 = vsel %vm558, %v5276, 0
        %v5300 = vsel %vm558, %v5277, 0
        %v5303 = vsel %vm558, %v5278, 0
        %v5306 = vsel %vm558, %v5279, 0
        %v5309 = vsel %vm558, %v5280, 0
        %v5312 = vsel %vm589, %v5250, 0
        %5314 = vmatprep.subr.bf16.mxu0 0
        %5315 = vmatpush1.bf16.msra.mxu0 %v5312
        %5316 = vmatprep.subr.bf16.mxu0 0
        %5317 = vmatpush1.bf16.msra.mxu0 0
        %5318 = vmatprep.subr.bf16.mxu0 0
        %5319 = vmatpush1.bf16.msra.mxu0 0
        %5320 = vmatprep.subr.bf16.mxu0 0
        %5321 = vmatpush1.bf16.msra.mxu0 0
        %5322 = vmatprep.subr.bf16.mxu0 0
        %5323 = vmatpush1.bf16.msra.mxu0 0
        %5324 = vmatprep.subr.bf16.mxu0 0
        %5325 = vmatpush1.bf16.msra.mxu0 0
        %5326 = vmatprep.subr.bf16.mxu0 0
        %5327 = vmatpush1.bf16.msra.mxu0 0
        %5328 = vmatprep.subr.bf16.mxu0 0
        %5329 = vmatpush1.bf16.msra.mxu0 0
        %5330 = vmatprep.subr.bf16.mxu0 0
        %5331 = vmatpush1.bf16.msra.mxu0 0
        %5332 = vmatprep.subr.bf16.mxu0 0
        %5333 = vmatpush1.bf16.msra.mxu0 0
        %5334 = vmatprep.subr.bf16.mxu0 0
        %5335 = vmatpush1.bf16.msra.mxu0 0
        %5336 = vmatprep.subr.bf16.mxu0 0
        %5337 = vmatpush1.bf16.msra.mxu0 0
        %5338 = vmatprep.subr.bf16.mxu0 0
        %5339 = vmatpush1.bf16.msra.mxu0 0
        %5340 = vmatprep.subr.bf16.mxu0 0
        %5341 = vmatpush1.bf16.msra.mxu0 0
        %5342 = vmatprep.subr.bf16.mxu0 0
        %5343 = vmatpush1.bf16.msra.mxu0 0
        %5344 = vmatprep.subr.bf16.mxu0 0
        %5345 = vmatpush1.bf16.msra.mxu0 0
        %5346 = vmatprep.mubr.bf16.mxu0 0
        %5347 = vmatmul.mubr.bf16.gmra.mrb[0].mxu0 %v5282
        %v5348 = vpop.f32.mrb[0].mxu0
        %v5349 = vadd.f32 0.0, %v5348
        %v5350 = vpop.f32.mrb[0].mxu0
        %v5351 = vpop.f32.mrb[0].mxu0
        %v5352 = vadd.f32 0.0, %v5351
        %v5353 = vpop.f32.mrb[0].mxu0
        %5354 = vmatprep.mubr.bf16.mxu0 0
        %5355 = vmatmul.mubr.bf16.gmra.mrb[0].mxu0 %v5285
        %v5356 = vpop.f32.mrb[0].mxu0
        %v5357 = vadd.f32 0.0, %v5356
        %v5358 = vpop.f32.mrb[0].mxu0
        %v5359 = vpop.f32.mrb[0].mxu0
        %v5360 = vadd.f32 0.0, %v5359
        %v5361 = vpop.f32.mrb[0].mxu0
        %5362 = vmatprep.mubr.bf16.mxu0 0
        %5363 = vmatmul.mubr.bf16.gmra.mrb[0].mxu0 %v5288
        %v5364 = vpop.f32.mrb[0].mxu0
        %v5365 = vadd.f32 0.0, %v5364
        %v5366 = vpop.f32.mrb[0].mxu0
        %v5367 = vpop.f32.mrb[0].mxu0
        %v5368 = vadd.f32 0.0, %v5367
        %v5369 = vpop.f32.mrb[0].mxu0
        %5370 = vmatprep.mubr.bf16.mxu0 0
        %5371 = vmatmul.mubr.bf16.gmra.mrb[0].mxu0 %v5291
        %v5372 = vpop.f32.mrb[0].mxu0
        %v5373 = vadd.f32 0.0, %v5372
        %v5374 = vpop.f32.mrb[0].mxu0
        %v5375 = vpop.f32.mrb[0].mxu0
        %v5376 = vadd.f32 0.0, %v5375
        %v5377 = vpop.f32.mrb[0].mxu0
        %5378 = vmatprep.mubr.bf16.mxu0 0
        %5379 = vmatmul.mubr.bf16.gmra.mrb[0].mxu0 %v5294
        %v5380 = vpop.f32.mrb[0].mxu0
        %v5381 = vadd.f32 0.0, %v5380
        %v5382 = vpop.f32.mrb[0].mxu0
        %v5383 = vpop.f32.mrb[0].mxu0
        %v5384 = vadd.f32 0.0, %v5383
        %v5385 = vpop.f32.mrb[0].mxu0
        %5386 = vmatprep.mubr.bf16.mxu0 0
        %5387 = vmatmul.mubr.bf16.gmra.mrb[0].mxu0 %v5297
        %v5388 = vpop.f32.mrb[0].mxu0
        %v5389 = vadd.f32 0.0, %v5388
        %v5390 = vpop.f32.mrb[0].mxu0
        %v5391 = vpop.f32.mrb[0].mxu0
        %v5392 = vadd.f32 0.0, %v5391
        %v5393 = vpop.f32.mrb[0].mxu0
        %5394 = vmatprep.mubr.bf16.mxu0 0
        %5395 = vmatmul.mubr.bf16.gmra.mrb[0].mxu0 %v5300
        %v5396 = vpop.f32.mrb[0].mxu0
        %v5397 = vadd.f32 0.0, %v5396
        %v5398 = vpop.f32.mrb[0].mxu0
        %v5399 = vpop.f32.mrb[0].mxu0
        %v5400 = vadd.f32 0.0, %v5399
        %v5401 = vpop.f32.mrb[0].mxu0
        %5402 = vmatprep.mubr.bf16.mxu0 0
        %5403 = vmatmul.mubr.bf16.gmra.mrb[0].mxu0 %v5303
        %v5404 = vpop.f32.mrb[0].mxu0
        %v5405 = vadd.f32 0.0, %v5404
        %v5406 = vpop.f32.mrb[0].mxu0
        %v5407 = vpop.f32.mrb[0].mxu0
        %v5408 = vadd.f32 0.0, %v5407
        %v5409 = vpop.f32.mrb[0].mxu0
        %5410 = vmatprep.mubr.bf16.mxu0 0
        %5411 = vmatmul.mubr.bf16.gmra.mrb[0].mxu0 %v5306
        %v5412 = vpop.f32.mrb[0].mxu0
        %v5413 = vadd.f32 0.0, %v5412
        %v5414 = vpop.f32.mrb[0].mxu0
        %v5415 = vpop.f32.mrb[0].mxu0
        %v5416 = vadd.f32 0.0, %v5415
        %v5417 = vpop.f32.mrb[0].mxu0
        %5418 = vmatprep.mubr.bf16.mxu0 0
        %5419 = vmatmul.mubr.bf16.gmra.mrb[0].mxu0 %v5309
        %v5420 = vpop.f32.mrb[0].mxu0
        %v5421 = vadd.f32 0.0, %v5420
        %v5422 = vpop.f32.mrb[0].mxu0
        %v5423 = vpop.f32.mrb[0].mxu0
        %v5424 = vadd.f32 0.0, %v5423
        %v5425 = vpop.f32.mrb[0].mxu0
        %5426 = vdwg.mxu0
        %v5427 = vadd.f32 %v5129, %v5349
        %v5428 = vadd.f32 %v5130, %v5352
        %v5429 = vadd.f32 %v5131, %v5357
        %v5430 = vadd.f32 %v5132, %v5360
        %v5431 = vadd.f32 %v5133, %v5365
        %v5432 = vadd.f32 %v5134, %v5368
        %v5433 = vadd.f32 %v5135, %v5373
        %v5434 = vadd.f32 %v5136, %v5376
        %v5435 = vadd.f32 %v5137, %v5381
        %v5436 = vadd.f32 %v5138, %v5384
        %v5437 = vadd.f32 %v5139, %v5389
        %v5438 = vadd.f32 %v5140, %v5392
        %v5439 = vadd.f32 %v5141, %v5397
        %v5440 = vadd.f32 %v5142, %v5400
        %v5441 = vadd.f32 %v5143, %v5405
        %v5442 = vadd.f32 %v5144, %v5408
        %v5443 = vadd.f32 %v5145, %v5413
        %v5444 = vadd.f32 %v5146, %v5416
        %v5445 = vadd.f32 %v5147, %v5421
        %v5446 = vadd.f32 %v5148, %v5424
        %s5447 = scalar_lea.vmem %s250, 36
        %v5448 = vld [vmem:[%s5447] sm:$0xf]
        %v5449 = vld [vmem:[%s5447 + $0x4] sm:$0xf]
        %v5450 = vld [vmem:[%s5447 + $0xc] sm:$0xf]
        %v5451 = vld [vmem:[%s5447 + $0x10] sm:$0xf]
        %v5452 = vld [vmem:[%s5447 + $0x18] sm:$0xf]
        %v5453 = vld [vmem:[%s5447 + $0x1c] sm:$0xf]
        %v5454 = vld [vmem:[%s5447 + $0x24] sm:$0xf]
        %v5455 = vld [vmem:[%s5447 + $0x28] sm:$0xf]
        %v5456 = vld [vmem:[%s5447 + $0x30] sm:$0xf]
        %v5457 = vld [vmem:[%s5447 + $0x34] sm:$0xf]
        %v5458 = vld [vmem:[%s5447 + $0x3c] sm:$0xf]
        %v5459 = vld [vmem:[%s5447 + $0x40] sm:$0xf]
        %v5460 = vld [vmem:[%s5447 + $0x48] sm:$0xf]
        %v5461 = vld [vmem:[%s5447 + $0x4c] sm:$0xf]
        %v5462 = vld [vmem:[%s5447 + $0x54] sm:$0xf]
        %v5463 = vld [vmem:[%s5447 + $0x58] sm:$0xf]
        %v5464 = vld [vmem:[%s5447 + $0x60] sm:$0xf]
        %v5465 = vld [vmem:[%s5447 + $0x64] sm:$0xf]
        %v5466 = vld [vmem:[%s5447 + $0x6c] sm:$0xf]
        %v5467 = vld [vmem:[%s5447 + $0x70] sm:$0xf]
        %s5468 = scalar_lea.vmem %s1, 30
        %v5469 = vld [vmem:[%s5468] sm:$0x3]
        %v5490 = vunpack.c.l.b16 %v5448
        %v5491 = vunpack.c.l.b16 %v5449
        %v5492 = vunpack.c.l.b16 %v5450
        %v5493 = vunpack.c.l.b16 %v5451
        %v5494 = vunpack.c.l.b16 %v5452
        %v5495 = vunpack.c.l.b16 %v5453
        %v5496 = vunpack.c.l.b16 %v5454
        %v5497 = vunpack.c.l.b16 %v5455
        %v5498 = vunpack.c.l.b16 %v5456
        %v5499 = vunpack.c.l.b16 %v5457
        %v5500 = vunpack.c.l.b16 %v5458
        %v5501 = vunpack.c.l.b16 %v5459
        %v5502 = vunpack.c.l.b16 %v5460
        %v5503 = vunpack.c.l.b16 %v5461
        %v5504 = vunpack.c.l.b16 %v5462
        %v5505 = vunpack.c.l.b16 %v5463
        %v5506 = vunpack.c.l.b16 %v5464
        %v5507 = vunpack.c.l.b16 %v5465
        %v5508 = vunpack.c.l.b16 %v5466
        %v5509 = vunpack.c.l.b16 %v5467
        %v5510 = vpack.c.b16 %v5491, %v5490
        %v5511 = vpack.c.b16 %v5493, %v5492
        %v5512 = vpack.c.b16 %v5495, %v5494
        %v5513 = vpack.c.b16 %v5497, %v5496
        %v5514 = vpack.c.b16 %v5499, %v5498
        %v5515 = vpack.c.b16 %v5501, %v5500
        %v5516 = vpack.c.b16 %v5503, %v5502
        %v5517 = vpack.c.b16 %v5505, %v5504
        %v5518 = vpack.c.b16 %v5507, %v5506
        %v5519 = vpack.c.b16 %v5509, %v5508
        %v5521 = vsel %vm558, %v5510, 0
        %v5524 = vsel %vm558, %v5511, 0
        %v5527 = vsel %vm558, %v5512, 0
        %v5530 = vsel %vm558, %v5513, 0
        %v5533 = vsel %vm558, %v5514, 0
        %v5536 = vsel %vm558, %v5515, 0
        %v5539 = vsel %vm558, %v5516, 0
        %v5542 = vsel %vm558, %v5517, 0
        %v5545 = vsel %vm558, %v5518, 0
        %v5548 = vsel %vm558, %v5519, 0
        %v5551 = vsel %vm589, %v5469, 0
        %5553 = vmatprep.subr.bf16.mxu0 0
        %5554 = vmatpush1.bf16.msra.mxu0 %v5551
        %5555 = vmatprep.subr.bf16.mxu0 0
        %5556 = vmatpush1.bf16.msra.mxu0 0
        %5557 = vmatprep.subr.bf16.mxu0 0
        %5558 = vmatpush1.bf16.msra.mxu0 0
        %5559 = vmatprep.subr.bf16.mxu0 0
        %5560 = vmatpush1.bf16.msra.mxu0 0
        %5561 = vmatprep.subr.bf16.mxu0 0
        %5562 = vmatpush1.bf16.msra.mxu0 0
        %5563 = vmatprep.subr.bf16.mxu0 0
        %5564 = vmatpush1.bf16.msra.mxu0 0
        %5565 = vmatprep.subr.bf16.mxu0 0
        %5566 = vmatpush1.bf16.msra.mxu0 0
        %5567 = vmatprep.subr.bf16.mxu0 0
        %5568 = vmatpush1.bf16.msra.mxu0 0
        %5569 = vmatprep.subr.bf16.mxu0 0
        %5570 = vmatpush1.bf16.msra.mxu0 0
        %5571 = vmatprep.subr.bf16.mxu0 0
        %5572 = vmatpush1.bf16.msra.mxu0 0
        %5573 = vmatprep.subr.bf16.mxu0 0
        %5574 = vmatpush1.bf16.msra.mxu0 0
        %5575 = vmatprep.subr.bf16.mxu0 0
        %5576 = vmatpush1.bf16.msra.mxu0 0
        %5577 = vmatprep.subr.bf16.mxu0 0
        %5578 = vmatpush1.bf16.msra.mxu0 0
        %5579 = vmatprep.subr.bf16.mxu0 0
        %5580 = vmatpush1.bf16.msra.mxu0 0
        %5581 = vmatprep.subr.bf16.mxu0 0
        %5582 = vmatpush1.bf16.msra.mxu0 0
        %5583 = vmatprep.subr.bf16.mxu0 0
        %5584 = vmatpush1.bf16.msra.mxu0 0
        %5585 = vmatprep.mubr.bf16.mxu0 0
        %5586 = vmatmul.mubr.bf16.gmra.mrb[0].mxu0 %v5521
        %v5587 = vpop.f32.mrb[0].mxu0
        %v5588 = vadd.f32 0.0, %v5587
        %v5589 = vpop.f32.mrb[0].mxu0
        %v5590 = vpop.f32.mrb[0].mxu0
        %v5591 = vadd.f32 0.0, %v5590
        %v5592 = vpop.f32.mrb[0].mxu0
        %5593 = vmatprep.mubr.bf16.mxu0 0
        %5594 = vmatmul.mubr.bf16.gmra.mrb[0].mxu0 %v5524
        %v5595 = vpop.f32.mrb[0].mxu0
        %v5596 = vadd.f32 0.0, %v5595
        %v5597 = vpop.f32.mrb[0].mxu0
        %v5598 = vpop.f32.mrb[0].mxu0
        %v5599 = vadd.f32 0.0, %v5598
        %v5600 = vpop.f32.mrb[0].mxu0
        %5601 = vmatprep.mubr.bf16.mxu0 0
        %5602 = vmatmul.mubr.bf16.gmra.mrb[0].mxu0 %v5527
        %v5603 = vpop.f32.mrb[0].mxu0
        %v5604 = vadd.f32 0.0, %v5603
        %v5605 = vpop.f32.mrb[0].mxu0
        %v5606 = vpop.f32.mrb[0].mxu0
        %v5607 = vadd.f32 0.0, %v5606
        %v5608 = vpop.f32.mrb[0].mxu0
        %5609 = vmatprep.mubr.bf16.mxu0 0
        %5610 = vmatmul.mubr.bf16.gmra.mrb[0].mxu0 %v5530
        %v5611 = vpop.f32.mrb[0].mxu0
        %v5612 = vadd.f32 0.0, %v5611
        %v5613 = vpop.f32.mrb[0].mxu0
        %v5614 = vpop.f32.mrb[0].mxu0
        %v5615 = vadd.f32 0.0, %v5614
        %v5616 = vpop.f32.mrb[0].mxu0
        %5617 = vmatprep.mubr.bf16.mxu0 0
        %5618 = vmatmul.mubr.bf16.gmra.mrb[0].mxu0 %v5533
        %v5619 = vpop.f32.mrb[0].mxu0
        %v5620 = vadd.f32 0.0, %v5619
        %v5621 = vpop.f32.mrb[0].mxu0
        %v5622 = vpop.f32.mrb[0].mxu0
        %v5623 = vadd.f32 0.0, %v5622
        %v5624 = vpop.f32.mrb[0].mxu0
        %5625 = vmatprep.mubr.bf16.mxu0 0
        %5626 = vmatmul.mubr.bf16.gmra.mrb[0].mxu0 %v5536
        %v5627 = vpop.f32.mrb[0].mxu0
        %v5628 = vadd.f32 0.0, %v5627
        %v5629 = vpop.f32.mrb[0].mxu0
        %v5630 = vpop.f32.mrb[0].mxu0
        %v5631 = vadd.f32 0.0, %v5630
        %v5632 = vpop.f32.mrb[0].mxu0
        %5633 = vmatprep.mubr.bf16.mxu0 0
        %5634 = vmatmul.mubr.bf16.gmra.mrb[0].mxu0 %v5539
        %v5635 = vpop.f32.mrb[0].mxu0
        %v5636 = vadd.f32 0.0, %v5635
        %v5637 = vpop.f32.mrb[0].mxu0
        %v5638 = vpop.f32.mrb[0].mxu0
        %v5639 = vadd.f32 0.0, %v5638
        %v5640 = vpop.f32.mrb[0].mxu0
        %5641 = vmatprep.mubr.bf16.mxu0 0
        %5642 = vmatmul.mubr.bf16.gmra.mrb[0].mxu0 %v5542
        %v5643 = vpop.f32.mrb[0].mxu0
        %v5644 = vadd.f32 0.0, %v5643
        %v5645 = vpop.f32.mrb[0].mxu0
        %v5646 = vpop.f32.mrb[0].mxu0
        %v5647 = vadd.f32 0.0, %v5646
        %v5648 = vpop.f32.mrb[0].mxu0
        %5649 = vmatprep.mubr.bf16.mxu0 0
        %5650 = vmatmul.mubr.bf16.gmra.mrb[0].mxu0 %v5545
        %v5651 = vpop.f32.mrb[0].mxu0
        %v5652 = vadd.f32 0.0, %v5651
        %v5653 = vpop.f32.mrb[0].mxu0
        %v5654 = vpop.f32.mrb[0].mxu0
        %v5655 = vadd.f32 0.0, %v5654
        %v5656 = vpop.f32.mrb[0].mxu0
        %5657 = vmatprep.mubr.bf16.mxu0 0
        %5658 = vmatmul.mubr.bf16.gmra.mrb[0].mxu0 %v5548
        %v5659 = vpop.f32.mrb[0].mxu0
        %v5660 = vadd.f32 0.0, %v5659
        %v5661 = vpop.f32.mrb[0].mxu0
        %v5662 = vpop.f32.mrb[0].mxu0
        %v5663 = vadd.f32 0.0, %v5662
        %v5664 = vpop.f32.mrb[0].mxu0
        %5665 = vdwg.mxu0
        %v5666 = vadd.f32 %v5427, %v5588
        %v5667 = vadd.f32 %v5428, %v5591
        %v5668 = vadd.f32 %v5429, %v5596
        %v5669 = vadd.f32 %v5430, %v5599
        %v5670 = vadd.f32 %v5431, %v5604
        %v5671 = vadd.f32 %v5432, %v5607
        %v5672 = vadd.f32 %v5433, %v5612
        %v5673 = vadd.f32 %v5434, %v5615
        %v5674 = vadd.f32 %v5435, %v5620
        %v5675 = vadd.f32 %v5436, %v5623
        %v5676 = vadd.f32 %v5437, %v5628
        %v5677 = vadd.f32 %v5438, %v5631
        %v5678 = vadd.f32 %v5439, %v5636
        %v5679 = vadd.f32 %v5440, %v5639
        %v5680 = vadd.f32 %v5441, %v5644
        %v5681 = vadd.f32 %v5442, %v5647
        %v5682 = vadd.f32 %v5443, %v5652
        %v5683 = vadd.f32 %v5444, %v5655
        %v5684 = vadd.f32 %v5445, %v5660
        %v5685 = vadd.f32 %v5446, %v5663
        %v5686 = vld [vmem:[%s5447] sm:$0xf]
        %v5687 = vld [vmem:[%s5447 + $0x4] sm:$0xf]
        %v5688 = vld [vmem:[%s5447 + $0x8] sm:$0x1]
        %v5689 = vld [vmem:[%s5447 + $0xc] sm:$0xf]
        %v5690 = vld [vmem:[%s5447 + $0x10] sm:$0xf]
        %v5691 = vld [vmem:[%s5447 + $0x14] sm:$0x1]
        %v5692 = vld [vmem:[%s5447 + $0x18] sm:$0xf]
        %v5693 = vld [vmem:[%s5447 + $0x1c] sm:$0xf]
        %v5694 = vld [vmem:[%s5447 + $0x20] sm:$0x1]
        %v5695 = vld [vmem:[%s5447 + $0x24] sm:$0xf]
        %v5696 = vld [vmem:[%s5447 + $0x28] sm:$0xf]
        %v5697 = vld [vmem:[%s5447 + $0x2c] sm:$0x1]
        %v5698 = vld [vmem:[%s5447 + $0x30] sm:$0xf]
        %v5699 = vld [vmem:[%s5447 + $0x34] sm:$0xf]
        %v5700 = vld [vmem:[%s5447 + $0x38] sm:$0x1]
        %v5701 = vld [vmem:[%s5447 + $0x3c] sm:$0xf]
        %v5702 = vld [vmem:[%s5447 + $0x40] sm:$0xf]
        %v5703 = vld [vmem:[%s5447 + $0x44] sm:$0x1]
        %v5704 = vld [vmem:[%s5447 + $0x48] sm:$0xf]
        %v5705 = vld [vmem:[%s5447 + $0x4c] sm:$0xf]
        %v5706 = vld [vmem:[%s5447 + $0x50] sm:$0x1]
        %v5707 = vld [vmem:[%s5447 + $0x54] sm:$0xf]
        %v5708 = vld [vmem:[%s5447 + $0x58] sm:$0xf]
        %v5709 = vld [vmem:[%s5447 + $0x5c] sm:$0x1]
        %v5710 = vld [vmem:[%s5447 + $0x60] sm:$0xf]
        %v5711 = vld [vmem:[%s5447 + $0x64] sm:$0xf]
        %v5712 = vld [vmem:[%s5447 + $0x68] sm:$0x1]
        %v5713 = vld [vmem:[%s5447 + $0x6c] sm:$0xf]
        %v5714 = vld [vmem:[%s5447 + $0x70] sm:$0xf]
        %v5715 = vld [vmem:[%s5447 + $0x74] sm:$0x1]
        %v5717 = vshrl.u32 %v5686, 16
        %v5719 = vrot.slane %v5717, 4
        %v5720 = vshll.u32 %v5686, 16
        %v5722 = vrot.slane %v5720, 5
        %v5723 = vor.u32 %v5719, %v5722
        %v5724 = vrot.slane %v5723, 4
        %v5726 = vshll.u32 %v5687, 16
        %v5728 = vrot.slane %v5726, 5
        %v5729 = vsel %vm285, %v5724, %v5728
        %v5730 = vshrl.u32 %v5687, 16
        %v5732 = vrot.slane %v5730, 4
        %v5733 = vor.u32 %v5732, %v5728
        %v5734 = vrot.slane %v5733, 4
        %v5736 = vshll.u32 %v5688, 16
        %v5738 = vrot.slane %v5736, 5
        %v5739 = vsel %vm285, %v5734, %v5738
        %v5741 = vshrl.u32 %v5689, 16
        %v5743 = vrot.slane %v5741, 4
        %v5744 = vshll.u32 %v5689, 16
        %v5746 = vrot.slane %v5744, 5
        %v5747 = vor.u32 %v5743, %v5746
        %v5748 = vrot.slane %v5747, 4
        %v5750 = vshll.u32 %v5690, 16
        %v5752 = vrot.slane %v5750, 5
        %v5753 = vsel %vm285, %v5748, %v5752
        %v5754 = vshrl.u32 %v5690, 16
        %v5756 = vrot.slane %v5754, 4
        %v5757 = vor.u32 %v5756, %v5752
        %v5758 = vrot.slane %v5757, 4
        %v5760 = vshll.u32 %v5691, 16
        %v5762 = vrot.slane %v5760, 5
        %v5763 = vsel %vm285, %v5758, %v5762
        %v5765 = vshrl.u32 %v5692, 16
        %v5767 = vrot.slane %v5765, 4
        %v5768 = vshll.u32 %v5692, 16
        %v5770 = vrot.slane %v5768, 5
        %v5771 = vor.u32 %v5767, %v5770
        %v5772 = vrot.slane %v5771, 4
        %v5774 = vshll.u32 %v5693, 16
        %v5776 = vrot.slane %v5774, 5
        %v5777 = vsel %vm285, %v5772, %v5776
        %v5778 = vshrl.u32 %v5693, 16
        %v5780 = vrot.slane %v5778, 4
        %v5781 = vor.u32 %v5780, %v5776
        %v5782 = vrot.slane %v5781, 4
        %v5784 = vshll.u32 %v5694, 16
        %v5786 = vrot.slane %v5784, 5
        %v5787 = vsel %vm285, %v5782, %v5786
        %v5789 = vshrl.u32 %v5695, 16
        %v5791 = vrot.slane %v5789, 4
        %v5792 = vshll.u32 %v5695, 16
        %v5794 = vrot.slane %v5792, 5
        %v5795 = vor.u32 %v5791, %v5794
        %v5796 = vrot.slane %v5795, 4
        %v5798 = vshll.u32 %v5696, 16
        %v5800 = vrot.slane %v5798, 5
        %v5801 = vsel %vm285, %v5796, %v5800
        %v5802 = vshrl.u32 %v5696, 16
        %v5804 = vrot.slane %v5802, 4
        %v5805 = vor.u32 %v5804, %v5800
        %v5806 = vrot.slane %v5805, 4
        %v5808 = vshll.u32 %v5697, 16
        %v5810 = vrot.slane %v5808, 5
        %v5811 = vsel %vm285, %v5806, %v5810
        %v5813 = vshrl.u32 %v5698, 16
        %v5815 = vrot.slane %v5813, 4
        %v5816 = vshll.u32 %v5698, 16
        %v5818 = vrot.slane %v5816, 5
        %v5819 = vor.u32 %v5815, %v5818
        %v5820 = vrot.slane %v5819, 4
        %v5822 = vshll.u32 %v5699, 16
        %v5824 = vrot.slane %v5822, 5
        %v5825 = vsel %vm285, %v5820, %v5824
        %v5826 = vshrl.u32 %v5699, 16
        %v5828 = vrot.slane %v5826, 4
        %v5829 = vor.u32 %v5828, %v5824
        %v5830 = vrot.slane %v5829, 4
        %v5832 = vshll.u32 %v5700, 16
        %v5834 = vrot.slane %v5832, 5
        %v5835 = vsel %vm285, %v5830, %v5834
        %v5837 = vshrl.u32 %v5701, 16
        %v5839 = vrot.slane %v5837, 4
        %v5840 = vshll.u32 %v5701, 16
        %v5842 = vrot.slane %v5840, 5
        %v5843 = vor.u32 %v5839, %v5842
        %v5844 = vrot.slane %v5843, 4
        %v5846 = vshll.u32 %v5702, 16
        %v5848 = vrot.slane %v5846, 5
        %v5849 = vsel %vm285, %v5844, %v5848
        %v5850 = vshrl.u32 %v5702, 16
        %v5852 = vrot.slane %v5850, 4
        %v5853 = vor.u32 %v5852, %v5848
        %v5854 = vrot.slane %v5853, 4
        %v5856 = vshll.u32 %v5703, 16
        %v5858 = vrot.slane %v5856, 5
        %v5859 = vsel %vm285, %v5854, %v5858
        %v5861 = vshrl.u32 %v5704, 16
        %v5863 = vrot.slane %v5861, 4
        %v5864 = vshll.u32 %v5704, 16
        %v5866 = vrot.slane %v5864, 5
        %v5867 = vor.u32 %v5863, %v5866
        %v5868 = vrot.slane %v5867, 4
        %v5870 = vshll.u32 %v5705, 16
        %v5872 = vrot.slane %v5870, 5
        %v5873 = vsel %vm285, %v5868, %v5872
        %v5874 = vshrl.u32 %v5705, 16
        %v5876 = vrot.slane %v5874, 4
        %v5877 = vor.u32 %v5876, %v5872
        %v5878 = vrot.slane %v5877, 4
        %v5880 = vshll.u32 %v5706, 16
        %v5882 = vrot.slane %v5880, 5
        %v5883 = vsel %vm285, %v5878, %v5882
        %v5885 = vshrl.u32 %v5707, 16
        %v5887 = vrot.slane %v5885, 4
        %v5888 = vshll.u32 %v5707, 16
        %v5890 = vrot.slane %v5888, 5
        %v5891 = vor.u32 %v5887, %v5890
        %v5892 = vrot.slane %v5891, 4
        %v5894 = vshll.u32 %v5708, 16
        %v5896 = vrot.slane %v5894, 5
        %v5897 = vsel %vm285, %v5892, %v5896
        %v5898 = vshrl.u32 %v5708, 16
        %v5900 = vrot.slane %v5898, 4
        %v5901 = vor.u32 %v5900, %v5896
        %v5902 = vrot.slane %v5901, 4
        %v5904 = vshll.u32 %v5709, 16
        %v5906 = vrot.slane %v5904, 5
        %v5907 = vsel %vm285, %v5902, %v5906
        %v5909 = vshrl.u32 %v5710, 16
        %v5911 = vrot.slane %v5909, 4
        %v5912 = vshll.u32 %v5710, 16
        %v5914 = vrot.slane %v5912, 5
        %v5915 = vor.u32 %v5911, %v5914
        %v5916 = vrot.slane %v5915, 4
        %v5918 = vshll.u32 %v5711, 16
        %v5920 = vrot.slane %v5918, 5
        %v5921 = vsel %vm285, %v5916, %v5920
        %v5922 = vshrl.u32 %v5711, 16
        %v5924 = vrot.slane %v5922, 4
        %v5925 = vor.u32 %v5924, %v5920
        %v5926 = vrot.slane %v5925, 4
        %v5928 = vshll.u32 %v5712, 16
        %v5930 = vrot.slane %v5928, 5
        %v5931 = vsel %vm285, %v5926, %v5930
        %v5933 = vshrl.u32 %v5713, 16
        %v5935 = vrot.slane %v5933, 4
        %v5936 = vshll.u32 %v5713, 16
        %v5938 = vrot.slane %v5936, 5
        %v5939 = vor.u32 %v5935, %v5938
        %v5940 = vrot.slane %v5939, 4
        %v5942 = vshll.u32 %v5714, 16
        %v5944 = vrot.slane %v5942, 5
        %v5945 = vsel %vm285, %v5940, %v5944
        %v5946 = vshrl.u32 %v5714, 16
        %v5948 = vrot.slane %v5946, 4
        %v5949 = vor.u32 %v5948, %v5944
        %v5950 = vrot.slane %v5949, 4
        %v5952 = vshll.u32 %v5715, 16
        %v5954 = vrot.slane %v5952, 5
        %v5955 = vsel %vm285, %v5950, %v5954
        %s5956 = scalar_lea.vmem %s1, 32
        %v5957 = vld [vmem:[%s5956] sm:$0x3]
        %v5958 = vunpack.c.l.b16 %v5729
        %v5959 = vunpack.c.l.b16 %v5739
        %v5960 = vunpack.c.l.b16 %v5753
        %v5961 = vunpack.c.l.b16 %v5763
        %v5962 = vunpack.c.l.b16 %v5777
        %v5963 = vunpack.c.l.b16 %v5787
        %v5964 = vunpack.c.l.b16 %v5801
        %v5965 = vunpack.c.l.b16 %v5811
        %v5966 = vunpack.c.l.b16 %v5825
        %v5967 = vunpack.c.l.b16 %v5835
        %v5968 = vunpack.c.l.b16 %v5849
        %v5969 = vunpack.c.l.b16 %v5859
        %v5970 = vunpack.c.l.b16 %v5873
        %v5971 = vunpack.c.l.b16 %v5883
        %v5972 = vunpack.c.l.b16 %v5897
        %v5973 = vunpack.c.l.b16 %v5907
        %v5974 = vunpack.c.l.b16 %v5921
        %v5975 = vunpack.c.l.b16 %v5931
        %v5976 = vunpack.c.l.b16 %v5945
        %v5977 = vunpack.c.l.b16 %v5955
        %v5978 = vpack.c.b16 %v5959, %v5958
        %v5979 = vpack.c.b16 %v5961, %v5960
        %v5980 = vpack.c.b16 %v5963, %v5962
        %v5981 = vpack.c.b16 %v5965, %v5964
        %v5982 = vpack.c.b16 %v5967, %v5966
        %v5983 = vpack.c.b16 %v5969, %v5968
        %v5984 = vpack.c.b16 %v5971, %v5970
        %v5985 = vpack.c.b16 %v5973, %v5972
        %v5986 = vpack.c.b16 %v5975, %v5974
        %v5987 = vpack.c.b16 %v5977, %v5976
        %v5989 = vsel %vm558, %v5978, 0
        %v5992 = vsel %vm558, %v5979, 0
        %v5995 = vsel %vm558, %v5980, 0
        %v5998 = vsel %vm558, %v5981, 0
        %v6001 = vsel %vm558, %v5982, 0
        %v6004 = vsel %vm558, %v5983, 0
        %v6007 = vsel %vm558, %v5984, 0
        %v6010 = vsel %vm558, %v5985, 0
        %v6013 = vsel %vm558, %v5986, 0
        %v6016 = vsel %vm558, %v5987, 0
        %v6019 = vsel %vm589, %v5957, 0
        %6021 = vmatprep.subr.bf16.mxu0 0
        %6022 = vmatpush1.bf16.msra.mxu0 %v6019
        %6023 = vmatprep.subr.bf16.mxu0 0
        %6024 = vmatpush1.bf16.msra.mxu0 0
        %6025 = vmatprep.subr.bf16.mxu0 0
        %6026 = vmatpush1.bf16.msra.mxu0 0
        %6027 = vmatprep.subr.bf16.mxu0 0
        %6028 = vmatpush1.bf16.msra.mxu0 0
        %6029 = vmatprep.subr.bf16.mxu0 0
        %6030 = vmatpush1.bf16.msra.mxu0 0
        %6031 = vmatprep.subr.bf16.mxu0 0
        %6032 = vmatpush1.bf16.msra.mxu0 0
        %6033 = vmatprep.subr.bf16.mxu0 0
        %6034 = vmatpush1.bf16.msra.mxu0 0
        %6035 = vmatprep.subr.bf16.mxu0 0
        %6036 = vmatpush1.bf16.msra.mxu0 0
        %6037 = vmatprep.subr.bf16.mxu0 0
        %6038 = vmatpush1.bf16.msra.mxu0 0
        %6039 = vmatprep.subr.bf16.mxu0 0
        %6040 = vmatpush1.bf16.msra.mxu0 0
        %6041 = vmatprep.subr.bf16.mxu0 0
        %6042 = vmatpush1.bf16.msra.mxu0 0
        %6043 = vmatprep.subr.bf16.mxu0 0
        %6044 = vmatpush1.bf16.msra.mxu0 0
        %6045 = vmatprep.subr.bf16.mxu0 0
        %6046 = vmatpush1.bf16.msra.mxu0 0
        %6047 = vmatprep.subr.bf16.mxu0 0
        %6048 = vmatpush1.bf16.msra.mxu0 0
        %6049 = vmatprep.subr.bf16.mxu0 0
        %6050 = vmatpush1.bf16.msra.mxu0 0
        %6051 = vmatprep.subr.bf16.mxu0 0
        %6052 = vmatpush1.bf16.msra.mxu0 0
        %6053 = vmatprep.mubr.bf16.mxu0 0
        %6054 = vmatmul.mubr.bf16.gmra.mrb[0].mxu0 %v5989
        %v6055 = vpop.f32.mrb[0].mxu0
        %v6056 = vadd.f32 0.0, %v6055
        %v6057 = vpop.f32.mrb[0].mxu0
        %v6058 = vpop.f32.mrb[0].mxu0
        %v6059 = vadd.f32 0.0, %v6058
        %v6060 = vpop.f32.mrb[0].mxu0
        %6061 = vmatprep.mubr.bf16.mxu0 0
        %6062 = vmatmul.mubr.bf16.gmra.mrb[0].mxu0 %v5992
        %v6063 = vpop.f32.mrb[0].mxu0
        %v6064 = vadd.f32 0.0, %v6063
        %v6065 = vpop.f32.mrb[0].mxu0
        %v6066 = vpop.f32.mrb[0].mxu0
        %v6067 = vadd.f32 0.0, %v6066
        %v6068 = vpop.f32.mrb[0].mxu0
        %6069 = vmatprep.mubr.bf16.mxu0 0
        %6070 = vmatmul.mubr.bf16.gmra.mrb[0].mxu0 %v5995
        %v6071 = vpop.f32.mrb[0].mxu0
        %v6072 = vadd.f32 0.0, %v6071
        %v6073 = vpop.f32.mrb[0].mxu0
        %v6074 = vpop.f32.mrb[0].mxu0
        %v6075 = vadd.f32 0.0, %v6074
        %v6076 = vpop.f32.mrb[0].mxu0
        %6077 = vmatprep.mubr.bf16.mxu0 0
        %6078 = vmatmul.mubr.bf16.gmra.mrb[0].mxu0 %v5998
        %v6079 = vpop.f32.mrb[0].mxu0
        %v6080 = vadd.f32 0.0, %v6079
        %v6081 = vpop.f32.mrb[0].mxu0
        %v6082 = vpop.f32.mrb[0].mxu0
        %v6083 = vadd.f32 0.0, %v6082
        %v6084 = vpop.f32.mrb[0].mxu0
        %6085 = vmatprep.mubr.bf16.mxu0 0
        %6086 = vmatmul.mubr.bf16.gmra.mrb[0].mxu0 %v6001
        %v6087 = vpop.f32.mrb[0].mxu0
        %v6088 = vadd.f32 0.0, %v6087
        %v6089 = vpop.f32.mrb[0].mxu0
        %v6090 = vpop.f32.mrb[0].mxu0
        %v6091 = vadd.f32 0.0, %v6090
        %v6092 = vpop.f32.mrb[0].mxu0
        %6093 = vmatprep.mubr.bf16.mxu0 0
        %6094 = vmatmul.mubr.bf16.gmra.mrb[0].mxu0 %v6004
        %v6095 = vpop.f32.mrb[0].mxu0
        %v6096 = vadd.f32 0.0, %v6095
        %v6097 = vpop.f32.mrb[0].mxu0
        %v6098 = vpop.f32.mrb[0].mxu0
        %v6099 = vadd.f32 0.0, %v6098
        %v6100 = vpop.f32.mrb[0].mxu0
        %6101 = vmatprep.mubr.bf16.mxu0 0
        %6102 = vmatmul.mubr.bf16.gmra.mrb[0].mxu0 %v6007
        %v6103 = vpop.f32.mrb[0].mxu0
        %v6104 = vadd.f32 0.0, %v6103
        %v6105 = vpop.f32.mrb[0].mxu0
        %v6106 = vpop.f32.mrb[0].mxu0
        %v6107 = vadd.f32 0.0, %v6106
        %v6108 = vpop.f32.mrb[0].mxu0
        %6109 = vmatprep.mubr.bf16.mxu0 0
        %6110 = vmatmul.mubr.bf16.gmra.mrb[0].mxu0 %v6010
        %v6111 = vpop.f32.mrb[0].mxu0
        %v6112 = vadd.f32 0.0, %v6111
        %v6113 = vpop.f32.mrb[0].mxu0
        %v6114 = vpop.f32.mrb[0].mxu0
        %v6115 = vadd.f32 0.0, %v6114
        %v6116 = vpop.f32.mrb[0].mxu0
        %6117 = vmatprep.mubr.bf16.mxu0 0
        %6118 = vmatmul.mubr.bf16.gmra.mrb[0].mxu0 %v6013
        %v6119 = vpop.f32.mrb[0].mxu0
        %v6120 = vadd.f32 0.0, %v6119
        %v6121 = vpop.f32.mrb[0].mxu0
        %v6122 = vpop.f32.mrb[0].mxu0
        %v6123 = vadd.f32 0.0, %v6122
        %v6124 = vpop.f32.mrb[0].mxu0
        %6125 = vmatprep.mubr.bf16.mxu0 0
        %6126 = vmatmul.mubr.bf16.gmra.mrb[0].mxu0 %v6016
        %v6127 = vpop.f32.mrb[0].mxu0
        %v6128 = vadd.f32 0.0, %v6127
        %v6129 = vpop.f32.mrb[0].mxu0
        %v6130 = vpop.f32.mrb[0].mxu0
        %v6131 = vadd.f32 0.0, %v6130
        %v6132 = vpop.f32.mrb[0].mxu0
        %6133 = vdwg.mxu0
        %v6134 = vadd.f32 %v5666, %v6056
        %v6135 = vadd.f32 %v5667, %v6059
        %v6136 = vadd.f32 %v5668, %v6064
        %v6137 = vadd.f32 %v5669, %v6067
        %v6138 = vadd.f32 %v5670, %v6072
        %v6139 = vadd.f32 %v5671, %v6075
        %v6140 = vadd.f32 %v5672, %v6080
        %v6141 = vadd.f32 %v5673, %v6083
        %v6142 = vadd.f32 %v5674, %v6088
        %v6143 = vadd.f32 %v5675, %v6091
        %v6144 = vadd.f32 %v5676, %v6096
        %v6145 = vadd.f32 %v5677, %v6099
        %v6146 = vadd.f32 %v5678, %v6104
        %v6147 = vadd.f32 %v5679, %v6107
        %v6148 = vadd.f32 %v5680, %v6112
        %v6149 = vadd.f32 %v5681, %v6115
        %v6150 = vadd.f32 %v5682, %v6120
        %v6151 = vadd.f32 %v5683, %v6123
        %v6152 = vadd.f32 %v5684, %v6128
        %v6153 = vadd.f32 %v5685, %v6131
        %v6154 = vld [vmem:[%s5447] sm:$0xe]
        %v6155 = vld [vmem:[%s5447 + $0xc] sm:$0xe]
        %v6156 = vld [vmem:[%s5447 + $0x18] sm:$0xe]
        %v6157 = vld [vmem:[%s5447 + $0x24] sm:$0xe]
        %v6158 = vld [vmem:[%s5447 + $0x30] sm:$0xe]
        %v6159 = vld [vmem:[%s5447 + $0x3c] sm:$0xe]
        %v6160 = vld [vmem:[%s5447 + $0x48] sm:$0xe]
        %v6161 = vld [vmem:[%s5447 + $0x54] sm:$0xe]
        %v6162 = vld [vmem:[%s5447 + $0x60] sm:$0xe]
        %v6163 = vld [vmem:[%s5447 + $0x6c] sm:$0xe]
        %v6194 = vrot.slane %v6154, 5
        %v6195 = vrot.slane %v6194, 4
        %v6196 = vrot.slane %v5687, 5
        %v6197 = vsel %vm934, %v6195, %v6196
        %v6198 = vrot.slane %v6196, 4
        %v6199 = vrot.slane %v5688, 5
        %v6200 = vsel %vm934, %v6198, %v6199
        %v6201 = vrot.slane %v6155, 5
        %v6202 = vrot.slane %v6201, 4
        %v6203 = vrot.slane %v5690, 5
        %v6204 = vsel %vm934, %v6202, %v6203
        %v6205 = vrot.slane %v6203, 4
        %v6206 = vrot.slane %v5691, 5
        %v6207 = vsel %vm934, %v6205, %v6206
        %v6208 = vrot.slane %v6156, 5
        %v6209 = vrot.slane %v6208, 4
        %v6210 = vrot.slane %v5693, 5
        %v6211 = vsel %vm934, %v6209, %v6210
        %v6212 = vrot.slane %v6210, 4
        %v6213 = vrot.slane %v5694, 5
        %v6214 = vsel %vm934, %v6212, %v6213
        %v6215 = vrot.slane %v6157, 5
        %v6216 = vrot.slane %v6215, 4
        %v6217 = vrot.slane %v5696, 5
        %v6218 = vsel %vm934, %v6216, %v6217
        %v6219 = vrot.slane %v6217, 4
        %v6220 = vrot.slane %v5697, 5
        %v6221 = vsel %vm934, %v6219, %v6220
        %v6222 = vrot.slane %v6158, 5
        %v6223 = vrot.slane %v6222, 4
        %v6224 = vrot.slane %v5699, 5
        %v6225 = vsel %vm934, %v6223, %v6224
        %v6226 = vrot.slane %v6224, 4
        %v6227 = vrot.slane %v5700, 5
        %v6228 = vsel %vm934, %v6226, %v6227
        %v6229 = vrot.slane %v6159, 5
        %v6230 = vrot.slane %v6229, 4
        %v6231 = vrot.slane %v5702, 5
        %v6232 = vsel %vm934, %v6230, %v6231
        %v6233 = vrot.slane %v6231, 4
        %v6234 = vrot.slane %v5703, 5
        %v6235 = vsel %vm934, %v6233, %v6234
        %v6236 = vrot.slane %v6160, 5
        %v6237 = vrot.slane %v6236, 4
        %v6238 = vrot.slane %v5705, 5
        %v6239 = vsel %vm934, %v6237, %v6238
        %v6240 = vrot.slane %v6238, 4
        %v6241 = vrot.slane %v5706, 5
        %v6242 = vsel %vm934, %v6240, %v6241
        %v6243 = vrot.slane %v6161, 5
        %v6244 = vrot.slane %v6243, 4
        %v6245 = vrot.slane %v5708, 5
        %v6246 = vsel %vm934, %v6244, %v6245
        %v6247 = vrot.slane %v6245, 4
        %v6248 = vrot.slane %v5709, 5
        %v6249 = vsel %vm934, %v6247, %v6248
        %v6250 = vrot.slane %v6162, 5
        %v6251 = vrot.slane %v6250, 4
        %v6252 = vrot.slane %v5711, 5
        %v6253 = vsel %vm934, %v6251, %v6252
        %v6254 = vrot.slane %v6252, 4
        %v6255 = vrot.slane %v5712, 5
        %v6256 = vsel %vm934, %v6254, %v6255
        %v6257 = vrot.slane %v6163, 5
        %v6258 = vrot.slane %v6257, 4
        %v6259 = vrot.slane %v5714, 5
        %v6260 = vsel %vm934, %v6258, %v6259
        %v6261 = vrot.slane %v6259, 4
        %v6262 = vrot.slane %v5715, 5
        %v6263 = vsel %vm934, %v6261, %v6262
        %s6264 = scalar_lea.vmem %s1, 34
        %v6265 = vld [vmem:[%s6264] sm:$0x3]
        %v6266 = vunpack.c.l.b16 %v6197
        %v6267 = vunpack.c.l.b16 %v6200
        %v6268 = vunpack.c.l.b16 %v6204
        %v6269 = vunpack.c.l.b16 %v6207
        %v6270 = vunpack.c.l.b16 %v6211
        %v6271 = vunpack.c.l.b16 %v6214
        %v6272 = vunpack.c.l.b16 %v6218
        %v6273 = vunpack.c.l.b16 %v6221
        %v6274 = vunpack.c.l.b16 %v6225
        %v6275 = vunpack.c.l.b16 %v6228
        %v6276 = vunpack.c.l.b16 %v6232
        %v6277 = vunpack.c.l.b16 %v6235
        %v6278 = vunpack.c.l.b16 %v6239
        %v6279 = vunpack.c.l.b16 %v6242
        %v6280 = vunpack.c.l.b16 %v6246
        %v6281 = vunpack.c.l.b16 %v6249
        %v6282 = vunpack.c.l.b16 %v6253
        %v6283 = vunpack.c.l.b16 %v6256
        %v6284 = vunpack.c.l.b16 %v6260
        %v6285 = vunpack.c.l.b16 %v6263
        %v6286 = vpack.c.b16 %v6267, %v6266
        %v6287 = vpack.c.b16 %v6269, %v6268
        %v6288 = vpack.c.b16 %v6271, %v6270
        %v6289 = vpack.c.b16 %v6273, %v6272
        %v6290 = vpack.c.b16 %v6275, %v6274
        %v6291 = vpack.c.b16 %v6277, %v6276
        %v6292 = vpack.c.b16 %v6279, %v6278
        %v6293 = vpack.c.b16 %v6281, %v6280
        %v6294 = vpack.c.b16 %v6283, %v6282
        %v6295 = vpack.c.b16 %v6285, %v6284
        %v6297 = vsel %vm558, %v6286, 0
        %v6300 = vsel %vm558, %v6287, 0
        %v6303 = vsel %vm558, %v6288, 0
        %v6306 = vsel %vm558, %v6289, 0
        %v6309 = vsel %vm558, %v6290, 0
        %v6312 = vsel %vm558, %v6291, 0
        %v6315 = vsel %vm558, %v6292, 0
        %v6318 = vsel %vm558, %v6293, 0
        %v6321 = vsel %vm558, %v6294, 0
        %v6324 = vsel %vm558, %v6295, 0
        %v6327 = vsel %vm589, %v6265, 0
        %6329 = vmatprep.subr.bf16.mxu0 0
        %6330 = vmatpush1.bf16.msra.mxu0 %v6327
        %6331 = vmatprep.subr.bf16.mxu0 0
        %6332 = vmatpush1.bf16.msra.mxu0 0
        %6333 = vmatprep.subr.bf16.mxu0 0
        %6334 = vmatpush1.bf16.msra.mxu0 0
        %6335 = vmatprep.subr.bf16.mxu0 0
        %6336 = vmatpush1.bf16.msra.mxu0 0
        %6337 = vmatprep.subr.bf16.mxu0 0
        %6338 = vmatpush1.bf16.msra.mxu0 0
        %6339 = vmatprep.subr.bf16.mxu0 0
        %6340 = vmatpush1.bf16.msra.mxu0 0
        %6341 = vmatprep.subr.bf16.mxu0 0
        %6342 = vmatpush1.bf16.msra.mxu0 0
        %6343 = vmatprep.subr.bf16.mxu0 0
        %6344 = vmatpush1.bf16.msra.mxu0 0
        %6345 = vmatprep.subr.bf16.mxu0 0
        %6346 = vmatpush1.bf16.msra.mxu0 0
        %6347 = vmatprep.subr.bf16.mxu0 0
        %6348 = vmatpush1.bf16.msra.mxu0 0
        %6349 = vmatprep.subr.bf16.mxu0 0
        %6350 = vmatpush1.bf16.msra.mxu0 0
        %6351 = vmatprep.subr.bf16.mxu0 0
        %6352 = vmatpush1.bf16.msra.mxu0 0
        %6353 = vmatprep.subr.bf16.mxu0 0
        %6354 = vmatpush1.bf16.msra.mxu0 0
        %6355 = vmatprep.subr.bf16.mxu0 0
        %6356 = vmatpush1.bf16.msra.mxu0 0
        %6357 = vmatprep.subr.bf16.mxu0 0
        %6358 = vmatpush1.bf16.msra.mxu0 0
        %6359 = vmatprep.subr.bf16.mxu0 0
        %6360 = vmatpush1.bf16.msra.mxu0 0
        %6361 = vmatprep.mubr.bf16.mxu0 0
        %6362 = vmatmul.mubr.bf16.gmra.mrb[0].mxu0 %v6297
        %v6363 = vpop.f32.mrb[0].mxu0
        %v6364 = vadd.f32 0.0, %v6363
        %v6365 = vpop.f32.mrb[0].mxu0
        %v6366 = vpop.f32.mrb[0].mxu0
        %v6367 = vadd.f32 0.0, %v6366
        %v6368 = vpop.f32.mrb[0].mxu0
        %6369 = vmatprep.mubr.bf16.mxu0 0
        %6370 = vmatmul.mubr.bf16.gmra.mrb[0].mxu0 %v6300
        %v6371 = vpop.f32.mrb[0].mxu0
        %v6372 = vadd.f32 0.0, %v6371
        %v6373 = vpop.f32.mrb[0].mxu0
        %v6374 = vpop.f32.mrb[0].mxu0
        %v6375 = vadd.f32 0.0, %v6374
        %v6376 = vpop.f32.mrb[0].mxu0
        %6377 = vmatprep.mubr.bf16.mxu0 0
        %6378 = vmatmul.mubr.bf16.gmra.mrb[0].mxu0 %v6303
        %v6379 = vpop.f32.mrb[0].mxu0
        %v6380 = vadd.f32 0.0, %v6379
        %v6381 = vpop.f32.mrb[0].mxu0
        %v6382 = vpop.f32.mrb[0].mxu0
        %v6383 = vadd.f32 0.0, %v6382
        %v6384 = vpop.f32.mrb[0].mxu0
        %6385 = vmatprep.mubr.bf16.mxu0 0
        %6386 = vmatmul.mubr.bf16.gmra.mrb[0].mxu0 %v6306
        %v6387 = vpop.f32.mrb[0].mxu0
        %v6388 = vadd.f32 0.0, %v6387
        %v6389 = vpop.f32.mrb[0].mxu0
        %v6390 = vpop.f32.mrb[0].mxu0
        %v6391 = vadd.f32 0.0, %v6390
        %v6392 = vpop.f32.mrb[0].mxu0
        %6393 = vmatprep.mubr.bf16.mxu0 0
        %6394 = vmatmul.mubr.bf16.gmra.mrb[0].mxu0 %v6309
        %v6395 = vpop.f32.mrb[0].mxu0
        %v6396 = vadd.f32 0.0, %v6395
        %v6397 = vpop.f32.mrb[0].mxu0
        %v6398 = vpop.f32.mrb[0].mxu0
        %v6399 = vadd.f32 0.0, %v6398
        %v6400 = vpop.f32.mrb[0].mxu0
        %6401 = vmatprep.mubr.bf16.mxu0 0
        %6402 = vmatmul.mubr.bf16.gmra.mrb[0].mxu0 %v6312
        %v6403 = vpop.f32.mrb[0].mxu0
        %v6404 = vadd.f32 0.0, %v6403
        %v6405 = vpop.f32.mrb[0].mxu0
        %v6406 = vpop.f32.mrb[0].mxu0
        %v6407 = vadd.f32 0.0, %v6406
        %v6408 = vpop.f32.mrb[0].mxu0
        %6409 = vmatprep.mubr.bf16.mxu0 0
        %6410 = vmatmul.mubr.bf16.gmra.mrb[0].mxu0 %v6315
        %v6411 = vpop.f32.mrb[0].mxu0
        %v6412 = vadd.f32 0.0, %v6411
        %v6413 = vpop.f32.mrb[0].mxu0
        %v6414 = vpop.f32.mrb[0].mxu0
        %v6415 = vadd.f32 0.0, %v6414
        %v6416 = vpop.f32.mrb[0].mxu0
        %6417 = vmatprep.mubr.bf16.mxu0 0
        %6418 = vmatmul.mubr.bf16.gmra.mrb[0].mxu0 %v6318
        %v6419 = vpop.f32.mrb[0].mxu0
        %v6420 = vadd.f32 0.0, %v6419
        %v6421 = vpop.f32.mrb[0].mxu0
        %v6422 = vpop.f32.mrb[0].mxu0
        %v6423 = vadd.f32 0.0, %v6422
        %v6424 = vpop.f32.mrb[0].mxu0
        %6425 = vmatprep.mubr.bf16.mxu0 0
        %6426 = vmatmul.mubr.bf16.gmra.mrb[0].mxu0 %v6321
        %v6427 = vpop.f32.mrb[0].mxu0
        %v6428 = vadd.f32 0.0, %v6427
        %v6429 = vpop.f32.mrb[0].mxu0
        %v6430 = vpop.f32.mrb[0].mxu0
        %v6431 = vadd.f32 0.0, %v6430
        %v6432 = vpop.f32.mrb[0].mxu0
        %6433 = vmatprep.mubr.bf16.mxu0 0
        %6434 = vmatmul.mubr.bf16.gmra.mrb[0].mxu0 %v6324
        %v6435 = vpop.f32.mrb[0].mxu0
        %v6436 = vadd.f32 0.0, %v6435
        %v6437 = vpop.f32.mrb[0].mxu0
        %v6438 = vpop.f32.mrb[0].mxu0
        %v6439 = vadd.f32 0.0, %v6438
        %v6440 = vpop.f32.mrb[0].mxu0
        %6441 = vdwg.mxu0
        %v6442 = vadd.f32 %v6134, %v6364
        %v6443 = vadd.f32 %v6135, %v6367
        %v6444 = vadd.f32 %v6136, %v6372
        %v6445 = vadd.f32 %v6137, %v6375
        %v6446 = vadd.f32 %v6138, %v6380
        %v6447 = vadd.f32 %v6139, %v6383
        %v6448 = vadd.f32 %v6140, %v6388
        %v6449 = vadd.f32 %v6141, %v6391
        %v6450 = vadd.f32 %v6142, %v6396
        %v6451 = vadd.f32 %v6143, %v6399
        %v6452 = vadd.f32 %v6144, %v6404
        %v6453 = vadd.f32 %v6145, %v6407
        %v6454 = vadd.f32 %v6146, %v6412
        %v6455 = vadd.f32 %v6147, %v6415
        %v6456 = vadd.f32 %v6148, %v6420
        %v6457 = vadd.f32 %v6149, %v6423
        %v6458 = vadd.f32 %v6150, %v6428
        %v6459 = vadd.f32 %v6151, %v6431
        %v6460 = vadd.f32 %v6152, %v6436
        %v6461 = vadd.f32 %v6153, %v6439
        %v6462 = vld [vmem:[%s5447 + $0x8] sm:$0x3]
        %v6463 = vld [vmem:[%s5447 + $0x14] sm:$0x3]
        %v6464 = vld [vmem:[%s5447 + $0x20] sm:$0x3]
        %v6465 = vld [vmem:[%s5447 + $0x2c] sm:$0x3]
        %v6466 = vld [vmem:[%s5447 + $0x38] sm:$0x3]
        %v6467 = vld [vmem:[%s5447 + $0x44] sm:$0x3]
        %v6468 = vld [vmem:[%s5447 + $0x50] sm:$0x3]
        %v6469 = vld [vmem:[%s5447 + $0x5c] sm:$0x3]
        %v6470 = vld [vmem:[%s5447 + $0x68] sm:$0x3]
        %v6471 = vld [vmem:[%s5447 + $0x74] sm:$0x3]
        %v6473 = vshrl.u32 %v6154, 16
        %v6475 = vrot.slane %v6473, 5
        %v6476 = vshll.u32 %v6154, 16
        %v6478 = vrot.slane %v6476, 6
        %v6479 = vor.u32 %v6475, %v6478
        %v6480 = vrot.slane %v6479, 4
        %v6481 = vrot.slane %v5730, 5
        %v6482 = vrot.slane %v5726, 6
        %v6483 = vor.u32 %v6481, %v6482
        %v6484 = vsel %vm1215, %v6480, %v6483
        %v6485 = vrot.slane %v6483, 4
        %v6487 = vshrl.u32 %v6462, 16
        %v6489 = vrot.slane %v6487, 5
        %v6490 = vshll.u32 %v6462, 16
        %v6492 = vrot.slane %v6490, 6
        %v6493 = vor.u32 %v6489, %v6492
        %v6494 = vsel %vm1215, %v6485, %v6493
        %v6496 = vshrl.u32 %v6155, 16
        %v6498 = vrot.slane %v6496, 5
        %v6499 = vshll.u32 %v6155, 16
        %v6501 = vrot.slane %v6499, 6
        %v6502 = vor.u32 %v6498, %v6501
        %v6503 = vrot.slane %v6502, 4
        %v6504 = vrot.slane %v5754, 5
        %v6505 = vrot.slane %v5750, 6
        %v6506 = vor.u32 %v6504, %v6505
        %v6507 = vsel %vm1215, %v6503, %v6506
        %v6508 = vrot.slane %v6506, 4
        %v6510 = vshrl.u32 %v6463, 16
        %v6512 = vrot.slane %v6510, 5
        %v6513 = vshll.u32 %v6463, 16
        %v6515 = vrot.slane %v6513, 6
        %v6516 = vor.u32 %v6512, %v6515
        %v6517 = vsel %vm1215, %v6508, %v6516
        %v6519 = vshrl.u32 %v6156, 16
        %v6521 = vrot.slane %v6519, 5
        %v6522 = vshll.u32 %v6156, 16
        %v6524 = vrot.slane %v6522, 6
        %v6525 = vor.u32 %v6521, %v6524
        %v6526 = vrot.slane %v6525, 4
        %v6527 = vrot.slane %v5778, 5
        %v6528 = vrot.slane %v5774, 6
        %v6529 = vor.u32 %v6527, %v6528
        %v6530 = vsel %vm1215, %v6526, %v6529
        %v6531 = vrot.slane %v6529, 4
        %v6533 = vshrl.u32 %v6464, 16
        %v6535 = vrot.slane %v6533, 5
        %v6536 = vshll.u32 %v6464, 16
        %v6538 = vrot.slane %v6536, 6
        %v6539 = vor.u32 %v6535, %v6538
        %v6540 = vsel %vm1215, %v6531, %v6539
        %v6542 = vshrl.u32 %v6157, 16
        %v6544 = vrot.slane %v6542, 5
        %v6545 = vshll.u32 %v6157, 16
        %v6547 = vrot.slane %v6545, 6
        %v6548 = vor.u32 %v6544, %v6547
        %v6549 = vrot.slane %v6548, 4
        %v6550 = vrot.slane %v5802, 5
        %v6551 = vrot.slane %v5798, 6
        %v6552 = vor.u32 %v6550, %v6551
        %v6553 = vsel %vm1215, %v6549, %v6552
        %v6554 = vrot.slane %v6552, 4
        %v6556 = vshrl.u32 %v6465, 16
        %v6558 = vrot.slane %v6556, 5
        %v6559 = vshll.u32 %v6465, 16
        %v6561 = vrot.slane %v6559, 6
        %v6562 = vor.u32 %v6558, %v6561
        %v6563 = vsel %vm1215, %v6554, %v6562
        %v6565 = vshrl.u32 %v6158, 16
        %v6567 = vrot.slane %v6565, 5
        %v6568 = vshll.u32 %v6158, 16
        %v6570 = vrot.slane %v6568, 6
        %v6571 = vor.u32 %v6567, %v6570
        %v6572 = vrot.slane %v6571, 4
        %v6573 = vrot.slane %v5826, 5
        %v6574 = vrot.slane %v5822, 6
        %v6575 = vor.u32 %v6573, %v6574
        %v6576 = vsel %vm1215, %v6572, %v6575
        %v6577 = vrot.slane %v6575, 4
        %v6579 = vshrl.u32 %v6466, 16
        %v6581 = vrot.slane %v6579, 5
        %v6582 = vshll.u32 %v6466, 16
        %v6584 = vrot.slane %v6582, 6
        %v6585 = vor.u32 %v6581, %v6584
        %v6586 = vsel %vm1215, %v6577, %v6585
        %v6588 = vshrl.u32 %v6159, 16
        %v6590 = vrot.slane %v6588, 5
        %v6591 = vshll.u32 %v6159, 16
        %v6593 = vrot.slane %v6591, 6
        %v6594 = vor.u32 %v6590, %v6593
        %v6595 = vrot.slane %v6594, 4
        %v6596 = vrot.slane %v5850, 5
        %v6597 = vrot.slane %v5846, 6
        %v6598 = vor.u32 %v6596, %v6597
        %v6599 = vsel %vm1215, %v6595, %v6598
        %v6600 = vrot.slane %v6598, 4
        %v6602 = vshrl.u32 %v6467, 16
        %v6604 = vrot.slane %v6602, 5
        %v6605 = vshll.u32 %v6467, 16
        %v6607 = vrot.slane %v6605, 6
        %v6608 = vor.u32 %v6604, %v6607
        %v6609 = vsel %vm1215, %v6600, %v6608
        %v6611 = vshrl.u32 %v6160, 16
        %v6613 = vrot.slane %v6611, 5
        %v6614 = vshll.u32 %v6160, 16
        %v6616 = vrot.slane %v6614, 6
        %v6617 = vor.u32 %v6613, %v6616
        %v6618 = vrot.slane %v6617, 4
        %v6619 = vrot.slane %v5874, 5
        %v6620 = vrot.slane %v5870, 6
        %v6621 = vor.u32 %v6619, %v6620
        %v6622 = vsel %vm1215, %v6618, %v6621
        %v6623 = vrot.slane %v6621, 4
        %v6625 = vshrl.u32 %v6468, 16
        %v6627 = vrot.slane %v6625, 5
        %v6628 = vshll.u32 %v6468, 16
        %v6630 = vrot.slane %v6628, 6
        %v6631 = vor.u32 %v6627, %v6630
        %v6632 = vsel %vm1215, %v6623, %v6631
        %v6634 = vshrl.u32 %v6161, 16
        %v6636 = vrot.slane %v6634, 5
        %v6637 = vshll.u32 %v6161, 16
        %v6639 = vrot.slane %v6637, 6
        %v6640 = vor.u32 %v6636, %v6639
        %v6641 = vrot.slane %v6640, 4
        %v6642 = vrot.slane %v5898, 5
        %v6643 = vrot.slane %v5894, 6
        %v6644 = vor.u32 %v6642, %v6643
        %v6645 = vsel %vm1215, %v6641, %v6644
        %v6646 = vrot.slane %v6644, 4
        %v6648 = vshrl.u32 %v6469, 16
        %v6650 = vrot.slane %v6648, 5
        %v6651 = vshll.u32 %v6469, 16
        %v6653 = vrot.slane %v6651, 6
        %v6654 = vor.u32 %v6650, %v6653
        %v6655 = vsel %vm1215, %v6646, %v6654
        %v6657 = vshrl.u32 %v6162, 16
        %v6659 = vrot.slane %v6657, 5
        %v6660 = vshll.u32 %v6162, 16
        %v6662 = vrot.slane %v6660, 6
        %v6663 = vor.u32 %v6659, %v6662
        %v6664 = vrot.slane %v6663, 4
        %v6665 = vrot.slane %v5922, 5
        %v6666 = vrot.slane %v5918, 6
        %v6667 = vor.u32 %v6665, %v6666
        %v6668 = vsel %vm1215, %v6664, %v6667
        %v6669 = vrot.slane %v6667, 4
        %v6671 = vshrl.u32 %v6470, 16
        %v6673 = vrot.slane %v6671, 5
        %v6674 = vshll.u32 %v6470, 16
        %v6676 = vrot.slane %v6674, 6
        %v6677 = vor.u32 %v6673, %v6676
        %v6678 = vsel %vm1215, %v6669, %v6677
        %v6680 = vshrl.u32 %v6163, 16
        %v6682 = vrot.slane %v6680, 5
        %v6683 = vshll.u32 %v6163, 16
        %v6685 = vrot.slane %v6683, 6
        %v6686 = vor.u32 %v6682, %v6685
        %v6687 = vrot.slane %v6686, 4
        %v6688 = vrot.slane %v5946, 5
        %v6689 = vrot.slane %v5942, 6
        %v6690 = vor.u32 %v6688, %v6689
        %v6691 = vsel %vm1215, %v6687, %v6690
        %v6692 = vrot.slane %v6690, 4
        %v6694 = vshrl.u32 %v6471, 16
        %v6696 = vrot.slane %v6694, 5
        %v6697 = vshll.u32 %v6471, 16
        %v6699 = vrot.slane %v6697, 6
        %v6700 = vor.u32 %v6696, %v6699
        %v6701 = vsel %vm1215, %v6692, %v6700
        %s6702 = scalar_lea.vmem %s1, 36
        %v6703 = vld [vmem:[%s6702] sm:$0x3]
        %v6704 = vunpack.c.l.b16 %v6484
        %v6705 = vunpack.c.l.b16 %v6494
        %v6706 = vunpack.c.l.b16 %v6507
        %v6707 = vunpack.c.l.b16 %v6517
        %v6708 = vunpack.c.l.b16 %v6530
        %v6709 = vunpack.c.l.b16 %v6540
        %v6710 = vunpack.c.l.b16 %v6553
        %v6711 = vunpack.c.l.b16 %v6563
        %v6712 = vunpack.c.l.b16 %v6576
        %v6713 = vunpack.c.l.b16 %v6586
        %v6714 = vunpack.c.l.b16 %v6599
        %v6715 = vunpack.c.l.b16 %v6609
        %v6716 = vunpack.c.l.b16 %v6622
        %v6717 = vunpack.c.l.b16 %v6632
        %v6718 = vunpack.c.l.b16 %v6645
        %v6719 = vunpack.c.l.b16 %v6655
        %v6720 = vunpack.c.l.b16 %v6668
        %v6721 = vunpack.c.l.b16 %v6678
        %v6722 = vunpack.c.l.b16 %v6691
        %v6723 = vunpack.c.l.b16 %v6701
        %v6724 = vpack.c.b16 %v6705, %v6704
        %v6725 = vpack.c.b16 %v6707, %v6706
        %v6726 = vpack.c.b16 %v6709, %v6708
        %v6727 = vpack.c.b16 %v6711, %v6710
        %v6728 = vpack.c.b16 %v6713, %v6712
        %v6729 = vpack.c.b16 %v6715, %v6714
        %v6730 = vpack.c.b16 %v6717, %v6716
        %v6731 = vpack.c.b16 %v6719, %v6718
        %v6732 = vpack.c.b16 %v6721, %v6720
        %v6733 = vpack.c.b16 %v6723, %v6722
        %v6735 = vsel %vm558, %v6724, 0
        %v6738 = vsel %vm558, %v6725, 0
        %v6741 = vsel %vm558, %v6726, 0
        %v6744 = vsel %vm558, %v6727, 0
        %v6747 = vsel %vm558, %v6728, 0
        %v6750 = vsel %vm558, %v6729, 0
        %v6753 = vsel %vm558, %v6730, 0
        %v6756 = vsel %vm558, %v6731, 0
        %v6759 = vsel %vm558, %v6732, 0
        %v6762 = vsel %vm558, %v6733, 0
        %v6765 = vsel %vm589, %v6703, 0
        %6767 = vmatprep.subr.bf16.mxu0 0
        %6768 = vmatpush1.bf16.msra.mxu0 %v6765
        %6769 = vmatprep.subr.bf16.mxu0 0
        %6770 = vmatpush1.bf16.msra.mxu0 0
        %6771 = vmatprep.subr.bf16.mxu0 0
        %6772 = vmatpush1.bf16.msra.mxu0 0
        %6773 = vmatprep.subr.bf16.mxu0 0
        %6774 = vmatpush1.bf16.msra.mxu0 0
        %6775 = vmatprep.subr.bf16.mxu0 0
        %6776 = vmatpush1.bf16.msra.mxu0 0
        %6777 = vmatprep.subr.bf16.mxu0 0
        %6778 = vmatpush1.bf16.msra.mxu0 0
        %6779 = vmatprep.subr.bf16.mxu0 0
        %6780 = vmatpush1.bf16.msra.mxu0 0
        %6781 = vmatprep.subr.bf16.mxu0 0
        %6782 = vmatpush1.bf16.msra.mxu0 0
        %6783 = vmatprep.subr.bf16.mxu0 0
        %6784 = vmatpush1.bf16.msra.mxu0 0
        %6785 = vmatprep.subr.bf16.mxu0 0
        %6786 = vmatpush1.bf16.msra.mxu0 0
        %6787 = vmatprep.subr.bf16.mxu0 0
        %6788 = vmatpush1.bf16.msra.mxu0 0
        %6789 = vmatprep.subr.bf16.mxu0 0
        %6790 = vmatpush1.bf16.msra.mxu0 0
        %6791 = vmatprep.subr.bf16.mxu0 0
        %6792 = vmatpush1.bf16.msra.mxu0 0
        %6793 = vmatprep.subr.bf16.mxu0 0
        %6794 = vmatpush1.bf16.msra.mxu0 0
        %6795 = vmatprep.subr.bf16.mxu0 0
        %6796 = vmatpush1.bf16.msra.mxu0 0
        %6797 = vmatprep.subr.bf16.mxu0 0
        %6798 = vmatpush1.bf16.msra.mxu0 0
        %6799 = vmatprep.mubr.bf16.mxu0 0
        %6800 = vmatmul.mubr.bf16.gmra.mrb[0].mxu0 %v6735
        %v6801 = vpop.f32.mrb[0].mxu0
        %v6802 = vadd.f32 0.0, %v6801
        %v6803 = vpop.f32.mrb[0].mxu0
        %v6804 = vpop.f32.mrb[0].mxu0
        %v6805 = vadd.f32 0.0, %v6804
        %v6806 = vpop.f32.mrb[0].mxu0
        %6807 = vmatprep.mubr.bf16.mxu0 0
        %6808 = vmatmul.mubr.bf16.gmra.mrb[0].mxu0 %v6738
        %v6809 = vpop.f32.mrb[0].mxu0
        %v6810 = vadd.f32 0.0, %v6809
        %v6811 = vpop.f32.mrb[0].mxu0
        %v6812 = vpop.f32.mrb[0].mxu0
        %v6813 = vadd.f32 0.0, %v6812
        %v6814 = vpop.f32.mrb[0].mxu0
        %6815 = vmatprep.mubr.bf16.mxu0 0
        %6816 = vmatmul.mubr.bf16.gmra.mrb[0].mxu0 %v6741
        %v6817 = vpop.f32.mrb[0].mxu0
        %v6818 = vadd.f32 0.0, %v6817
        %v6819 = vpop.f32.mrb[0].mxu0
        %v6820 = vpop.f32.mrb[0].mxu0
        %v6821 = vadd.f32 0.0, %v6820
        %v6822 = vpop.f32.mrb[0].mxu0
        %6823 = vmatprep.mubr.bf16.mxu0 0
        %6824 = vmatmul.mubr.bf16.gmra.mrb[0].mxu0 %v6744
        %v6825 = vpop.f32.mrb[0].mxu0
        %v6826 = vadd.f32 0.0, %v6825
        %v6827 = vpop.f32.mrb[0].mxu0
        %v6828 = vpop.f32.mrb[0].mxu0
        %v6829 = vadd.f32 0.0, %v6828
        %v6830 = vpop.f32.mrb[0].mxu0
        %6831 = vmatprep.mubr.bf16.mxu0 0
        %6832 = vmatmul.mubr.bf16.gmra.mrb[0].mxu0 %v6747
        %v6833 = vpop.f32.mrb[0].mxu0
        %v6834 = vadd.f32 0.0, %v6833
        %v6835 = vpop.f32.mrb[0].mxu0
        %v6836 = vpop.f32.mrb[0].mxu0
        %v6837 = vadd.f32 0.0, %v6836
        %v6838 = vpop.f32.mrb[0].mxu0
        %6839 = vmatprep.mubr.bf16.mxu0 0
        %6840 = vmatmul.mubr.bf16.gmra.mrb[0].mxu0 %v6750
        %v6841 = vpop.f32.mrb[0].mxu0
        %v6842 = vadd.f32 0.0, %v6841
        %v6843 = vpop.f32.mrb[0].mxu0
        %v6844 = vpop.f32.mrb[0].mxu0
        %v6845 = vadd.f32 0.0, %v6844
        %v6846 = vpop.f32.mrb[0].mxu0
        %6847 = vmatprep.mubr.bf16.mxu0 0
        %6848 = vmatmul.mubr.bf16.gmra.mrb[0].mxu0 %v6753
        %v6849 = vpop.f32.mrb[0].mxu0
        %v6850 = vadd.f32 0.0, %v6849
        %v6851 = vpop.f32.mrb[0].mxu0
        %v6852 = vpop.f32.mrb[0].mxu0
        %v6853 = vadd.f32 0.0, %v6852
        %v6854 = vpop.f32.mrb[0].mxu0
        %6855 = vmatprep.mubr.bf16.mxu0 0
        %6856 = vmatmul.mubr.bf16.gmra.mrb[0].mxu0 %v6756
        %v6857 = vpop.f32.mrb[0].mxu0
        %v6858 = vadd.f32 0.0, %v6857
        %v6859 = vpop.f32.mrb[0].mxu0
        %v6860 = vpop.f32.mrb[0].mxu0
        %v6861 = vadd.f32 0.0, %v6860
        %v6862 = vpop.f32.mrb[0].mxu0
        %6863 = vmatprep.mubr.bf16.mxu0 0
        %6864 = vmatmul.mubr.bf16.gmra.mrb[0].mxu0 %v6759
        %v6865 = vpop.f32.mrb[0].mxu0
        %v6866 = vadd.f32 0.0, %v6865
        %v6867 = vpop.f32.mrb[0].mxu0
        %v6868 = vpop.f32.mrb[0].mxu0
        %v6869 = vadd.f32 0.0, %v6868
        %v6870 = vpop.f32.mrb[0].mxu0
        %6871 = vmatprep.mubr.bf16.mxu0 0
        %6872 = vmatmul.mubr.bf16.gmra.mrb[0].mxu0 %v6762
        %v6873 = vpop.f32.mrb[0].mxu0
        %v6874 = vadd.f32 0.0, %v6873
        %v6875 = vpop.f32.mrb[0].mxu0
        %v6876 = vpop.f32.mrb[0].mxu0
        %v6877 = vadd.f32 0.0, %v6876
        %v6878 = vpop.f32.mrb[0].mxu0
        %6879 = vdwg.mxu0
        %v6880 = vadd.f32 %v6442, %v6802
        %v6881 = vadd.f32 %v6443, %v6805
        %v6882 = vadd.f32 %v6444, %v6810
        %v6883 = vadd.f32 %v6445, %v6813
        %v6884 = vadd.f32 %v6446, %v6818
        %v6885 = vadd.f32 %v6447, %v6821
        %v6886 = vadd.f32 %v6448, %v6826
        %v6887 = vadd.f32 %v6449, %v6829
        %v6888 = vadd.f32 %v6450, %v6834
        %v6889 = vadd.f32 %v6451, %v6837
        %v6890 = vadd.f32 %v6452, %v6842
        %v6891 = vadd.f32 %v6453, %v6845
        %v6892 = vadd.f32 %v6454, %v6850
        %v6893 = vadd.f32 %v6455, %v6853
        %v6894 = vadd.f32 %v6456, %v6858
        %v6895 = vadd.f32 %v6457, %v6861
        %v6896 = vadd.f32 %v6458, %v6866
        %v6897 = vadd.f32 %v6459, %v6869
        %v6898 = vadd.f32 %v6460, %v6874
        %v6899 = vadd.f32 %v6461, %v6877
        %v6900 = vld [vmem:[%s5447] sm:$0xc]
        %v6901 = vld [vmem:[%s5447 + $0xc] sm:$0xc]
        %v6902 = vld [vmem:[%s5447 + $0x18] sm:$0xc]
        %v6903 = vld [vmem:[%s5447 + $0x24] sm:$0xc]
        %v6904 = vld [vmem:[%s5447 + $0x30] sm:$0xc]
        %v6905 = vld [vmem:[%s5447 + $0x3c] sm:$0xc]
        %v6906 = vld [vmem:[%s5447 + $0x48] sm:$0xc]
        %v6907 = vld [vmem:[%s5447 + $0x54] sm:$0xc]
        %v6908 = vld [vmem:[%s5447 + $0x60] sm:$0xc]
        %v6909 = vld [vmem:[%s5447 + $0x6c] sm:$0xc]
        %v6930 = vrot.slane %v6900, 6
        %v6931 = vrot.slane %v6930, 4
        %v6932 = vrot.slane %v5687, 6
        %v6933 = vsel %vm1676, %v6931, %v6932
        %v6934 = vrot.slane %v6932, 4
        %v6935 = vrot.slane %v6462, 6
        %v6936 = vsel %vm1676, %v6934, %v6935
        %v6937 = vrot.slane %v6901, 6
        %v6938 = vrot.slane %v6937, 4
        %v6939 = vrot.slane %v5690, 6
        %v6940 = vsel %vm1676, %v6938, %v6939
        %v6941 = vrot.slane %v6939, 4
        %v6942 = vrot.slane %v6463, 6
        %v6943 = vsel %vm1676, %v6941, %v6942
        %v6944 = vrot.slane %v6902, 6
        %v6945 = vrot.slane %v6944, 4
        %v6946 = vrot.slane %v5693, 6
        %v6947 = vsel %vm1676, %v6945, %v6946
        %v6948 = vrot.slane %v6946, 4
        %v6949 = vrot.slane %v6464, 6
        %v6950 = vsel %vm1676, %v6948, %v6949
        %v6951 = vrot.slane %v6903, 6
        %v6952 = vrot.slane %v6951, 4
        %v6953 = vrot.slane %v5696, 6
        %v6954 = vsel %vm1676, %v6952, %v6953
        %v6955 = vrot.slane %v6953, 4
        %v6956 = vrot.slane %v6465, 6
        %v6957 = vsel %vm1676, %v6955, %v6956
        %v6958 = vrot.slane %v6904, 6
        %v6959 = vrot.slane %v6958, 4
        %v6960 = vrot.slane %v5699, 6
        %v6961 = vsel %vm1676, %v6959, %v6960
        %v6962 = vrot.slane %v6960, 4
        %v6963 = vrot.slane %v6466, 6
        %v6964 = vsel %vm1676, %v6962, %v6963
        %v6965 = vrot.slane %v6905, 6
        %v6966 = vrot.slane %v6965, 4
        %v6967 = vrot.slane %v5702, 6
        %v6968 = vsel %vm1676, %v6966, %v6967
        %v6969 = vrot.slane %v6967, 4
        %v6970 = vrot.slane %v6467, 6
        %v6971 = vsel %vm1676, %v6969, %v6970
        %v6972 = vrot.slane %v6906, 6
        %v6973 = vrot.slane %v6972, 4
        %v6974 = vrot.slane %v5705, 6
        %v6975 = vsel %vm1676, %v6973, %v6974
        %v6976 = vrot.slane %v6974, 4
        %v6977 = vrot.slane %v6468, 6
        %v6978 = vsel %vm1676, %v6976, %v6977
        %v6979 = vrot.slane %v6907, 6
        %v6980 = vrot.slane %v6979, 4
        %v6981 = vrot.slane %v5708, 6
        %v6982 = vsel %vm1676, %v6980, %v6981
        %v6983 = vrot.slane %v6981, 4
        %v6984 = vrot.slane %v6469, 6
        %v6985 = vsel %vm1676, %v6983, %v6984
        %v6986 = vrot.slane %v6908, 6
        %v6987 = vrot.slane %v6986, 4
        %v6988 = vrot.slane %v5711, 6
        %v6989 = vsel %vm1676, %v6987, %v6988
        %v6990 = vrot.slane %v6988, 4
        %v6991 = vrot.slane %v6470, 6
        %v6992 = vsel %vm1676, %v6990, %v6991
        %v6993 = vrot.slane %v6909, 6
        %v6994 = vrot.slane %v6993, 4
        %v6995 = vrot.slane %v5714, 6
        %v6996 = vsel %vm1676, %v6994, %v6995
        %v6997 = vrot.slane %v6995, 4
        %v6998 = vrot.slane %v6471, 6
        %v6999 = vsel %vm1676, %v6997, %v6998
        %s7000 = scalar_lea.vmem %s1, 38
        %v7001 = vld [vmem:[%s7000] sm:$0x3]
        %v7002 = vunpack.c.l.b16 %v6933
        %v7003 = vunpack.c.l.b16 %v6936
        %v7004 = vunpack.c.l.b16 %v6940
        %v7005 = vunpack.c.l.b16 %v6943
        %v7006 = vunpack.c.l.b16 %v6947
        %v7007 = vunpack.c.l.b16 %v6950
        %v7008 = vunpack.c.l.b16 %v6954
        %v7009 = vunpack.c.l.b16 %v6957
        %v7010 = vunpack.c.l.b16 %v6961
        %v7011 = vunpack.c.l.b16 %v6964
        %v7012 = vunpack.c.l.b16 %v6968
        %v7013 = vunpack.c.l.b16 %v6971
        %v7014 = vunpack.c.l.b16 %v6975
        %v7015 = vunpack.c.l.b16 %v6978
        %v7016 = vunpack.c.l.b16 %v6982
        %v7017 = vunpack.c.l.b16 %v6985
        %v7018 = vunpack.c.l.b16 %v6989
        %v7019 = vunpack.c.l.b16 %v6992
        %v7020 = vunpack.c.l.b16 %v6996
        %v7021 = vunpack.c.l.b16 %v6999
        %v7022 = vpack.c.b16 %v7003, %v7002
        %v7023 = vpack.c.b16 %v7005, %v7004
        %v7024 = vpack.c.b16 %v7007, %v7006
        %v7025 = vpack.c.b16 %v7009, %v7008
        %v7026 = vpack.c.b16 %v7011, %v7010
        %v7027 = vpack.c.b16 %v7013, %v7012
        %v7028 = vpack.c.b16 %v7015, %v7014
        %v7029 = vpack.c.b16 %v7017, %v7016
        %v7030 = vpack.c.b16 %v7019, %v7018
        %v7031 = vpack.c.b16 %v7021, %v7020
        %v7033 = vsel %vm558, %v7022, 0
        %v7036 = vsel %vm558, %v7023, 0
        %v7039 = vsel %vm558, %v7024, 0
        %v7042 = vsel %vm558, %v7025, 0
        %v7045 = vsel %vm558, %v7026, 0
        %v7048 = vsel %vm558, %v7027, 0
        %v7051 = vsel %vm558, %v7028, 0
        %v7054 = vsel %vm558, %v7029, 0
        %v7057 = vsel %vm558, %v7030, 0
        %v7060 = vsel %vm558, %v7031, 0
        %v7063 = vsel %vm589, %v7001, 0
        %7065 = vmatprep.subr.bf16.mxu0 0
        %7066 = vmatpush1.bf16.msra.mxu0 %v7063
        %7067 = vmatprep.subr.bf16.mxu0 0
        %7068 = vmatpush1.bf16.msra.mxu0 0
        %7069 = vmatprep.subr.bf16.mxu0 0
        %7070 = vmatpush1.bf16.msra.mxu0 0
        %7071 = vmatprep.subr.bf16.mxu0 0
        %7072 = vmatpush1.bf16.msra.mxu0 0
        %7073 = vmatprep.subr.bf16.mxu0 0
        %7074 = vmatpush1.bf16.msra.mxu0 0
        %7075 = vmatprep.subr.bf16.mxu0 0
        %7076 = vmatpush1.bf16.msra.mxu0 0
        %7077 = vmatprep.subr.bf16.mxu0 0
        %7078 = vmatpush1.bf16.msra.mxu0 0
        %7079 = vmatprep.subr.bf16.mxu0 0
        %7080 = vmatpush1.bf16.msra.mxu0 0
        %7081 = vmatprep.subr.bf16.mxu0 0
        %7082 = vmatpush1.bf16.msra.mxu0 0
        %7083 = vmatprep.subr.bf16.mxu0 0
        %7084 = vmatpush1.bf16.msra.mxu0 0
        %7085 = vmatprep.subr.bf16.mxu0 0
        %7086 = vmatpush1.bf16.msra.mxu0 0
        %7087 = vmatprep.subr.bf16.mxu0 0
        %7088 = vmatpush1.bf16.msra.mxu0 0
        %7089 = vmatprep.subr.bf16.mxu0 0
        %7090 = vmatpush1.bf16.msra.mxu0 0
        %7091 = vmatprep.subr.bf16.mxu0 0
        %7092 = vmatpush1.bf16.msra.mxu0 0
        %7093 = vmatprep.subr.bf16.mxu0 0
        %7094 = vmatpush1.bf16.msra.mxu0 0
        %7095 = vmatprep.subr.bf16.mxu0 0
        %7096 = vmatpush1.bf16.msra.mxu0 0
        %7097 = vmatprep.mubr.bf16.mxu0 0
        %7098 = vmatmul.mubr.bf16.gmra.mrb[0].mxu0 %v7033
        %v7099 = vpop.f32.mrb[0].mxu0
        %v7100 = vadd.f32 0.0, %v7099
        %v7101 = vpop.f32.mrb[0].mxu0
        %v7102 = vpop.f32.mrb[0].mxu0
        %v7103 = vadd.f32 0.0, %v7102
        %v7104 = vpop.f32.mrb[0].mxu0
        %7105 = vmatprep.mubr.bf16.mxu0 0
        %7106 = vmatmul.mubr.bf16.gmra.mrb[0].mxu0 %v7036
        %v7107 = vpop.f32.mrb[0].mxu0
        %v7108 = vadd.f32 0.0, %v7107
        %v7109 = vpop.f32.mrb[0].mxu0
        %v7110 = vpop.f32.mrb[0].mxu0
        %v7111 = vadd.f32 0.0, %v7110
        %v7112 = vpop.f32.mrb[0].mxu0
        %7113 = vmatprep.mubr.bf16.mxu0 0
        %7114 = vmatmul.mubr.bf16.gmra.mrb[0].mxu0 %v7039
        %v7115 = vpop.f32.mrb[0].mxu0
        %v7116 = vadd.f32 0.0, %v7115
        %v7117 = vpop.f32.mrb[0].mxu0
        %v7118 = vpop.f32.mrb[0].mxu0
        %v7119 = vadd.f32 0.0, %v7118
        %v7120 = vpop.f32.mrb[0].mxu0
        %7121 = vmatprep.mubr.bf16.mxu0 0
        %7122 = vmatmul.mubr.bf16.gmra.mrb[0].mxu0 %v7042
        %v7123 = vpop.f32.mrb[0].mxu0
        %v7124 = vadd.f32 0.0, %v7123
        %v7125 = vpop.f32.mrb[0].mxu0
        %v7126 = vpop.f32.mrb[0].mxu0
        %v7127 = vadd.f32 0.0, %v7126
        %v7128 = vpop.f32.mrb[0].mxu0
        %7129 = vmatprep.mubr.bf16.mxu0 0
        %7130 = vmatmul.mubr.bf16.gmra.mrb[0].mxu0 %v7045
        %v7131 = vpop.f32.mrb[0].mxu0
        %v7132 = vadd.f32 0.0, %v7131
        %v7133 = vpop.f32.mrb[0].mxu0
        %v7134 = vpop.f32.mrb[0].mxu0
        %v7135 = vadd.f32 0.0, %v7134
        %v7136 = vpop.f32.mrb[0].mxu0
        %7137 = vmatprep.mubr.bf16.mxu0 0
        %7138 = vmatmul.mubr.bf16.gmra.mrb[0].mxu0 %v7048
        %v7139 = vpop.f32.mrb[0].mxu0
        %v7140 = vadd.f32 0.0, %v7139
        %v7141 = vpop.f32.mrb[0].mxu0
        %v7142 = vpop.f32.mrb[0].mxu0
        %v7143 = vadd.f32 0.0, %v7142
        %v7144 = vpop.f32.mrb[0].mxu0
        %7145 = vmatprep.mubr.bf16.mxu0 0
        %7146 = vmatmul.mubr.bf16.gmra.mrb[0].mxu0 %v7051
        %v7147 = vpop.f32.mrb[0].mxu0
        %v7148 = vadd.f32 0.0, %v7147
        %v7149 = vpop.f32.mrb[0].mxu0
        %v7150 = vpop.f32.mrb[0].mxu0
        %v7151 = vadd.f32 0.0, %v7150
        %v7152 = vpop.f32.mrb[0].mxu0
        %7153 = vmatprep.mubr.bf16.mxu0 0
        %7154 = vmatmul.mubr.bf16.gmra.mrb[0].mxu0 %v7054
        %v7155 = vpop.f32.mrb[0].mxu0
        %v7156 = vadd.f32 0.0, %v7155
        %v7157 = vpop.f32.mrb[0].mxu0
        %v7158 = vpop.f32.mrb[0].mxu0
        %v7159 = vadd.f32 0.0, %v7158
        %v7160 = vpop.f32.mrb[0].mxu0
        %7161 = vmatprep.mubr.bf16.mxu0 0
        %7162 = vmatmul.mubr.bf16.gmra.mrb[0].mxu0 %v7057
        %v7163 = vpop.f32.mrb[0].mxu0
        %v7164 = vadd.f32 0.0, %v7163
        %v7165 = vpop.f32.mrb[0].mxu0
        %v7166 = vpop.f32.mrb[0].mxu0
        %v7167 = vadd.f32 0.0, %v7166
        %v7168 = vpop.f32.mrb[0].mxu0
        %7169 = vmatprep.mubr.bf16.mxu0 0
        %7170 = vmatmul.mubr.bf16.gmra.mrb[0].mxu0 %v7060
        %v7171 = vpop.f32.mrb[0].mxu0
        %v7172 = vadd.f32 0.0, %v7171
        %v7173 = vpop.f32.mrb[0].mxu0
        %v7174 = vpop.f32.mrb[0].mxu0
        %v7175 = vadd.f32 0.0, %v7174
        %v7176 = vpop.f32.mrb[0].mxu0
        %7177 = vdwg.mxu0
        %v7178 = vadd.f32 %v6880, %v7100
        %v7179 = vadd.f32 %v6881, %v7103
        %v7180 = vadd.f32 %v6882, %v7108
        %v7181 = vadd.f32 %v6883, %v7111
        %v7182 = vadd.f32 %v6884, %v7116
        %v7183 = vadd.f32 %v6885, %v7119
        %v7184 = vadd.f32 %v6886, %v7124
        %v7185 = vadd.f32 %v6887, %v7127
        %v7186 = vadd.f32 %v6888, %v7132
        %v7187 = vadd.f32 %v6889, %v7135
        %v7188 = vadd.f32 %v6890, %v7140
        %v7189 = vadd.f32 %v6891, %v7143
        %v7190 = vadd.f32 %v6892, %v7148
        %v7191 = vadd.f32 %v6893, %v7151
        %v7192 = vadd.f32 %v6894, %v7156
        %v7193 = vadd.f32 %v6895, %v7159
        %v7194 = vadd.f32 %v6896, %v7164
        %v7195 = vadd.f32 %v6897, %v7167
        %v7196 = vadd.f32 %v6898, %v7172
        %v7197 = vadd.f32 %v6899, %v7175
        %s7198 = scalar_lea.vmem %s250, 48
        %v7199 = vld [vmem:[%s7198] sm:$0xf]
        %v7200 = vld [vmem:[%s7198 + $0x4] sm:$0xf]
        %v7201 = vld [vmem:[%s7198 + $0xc] sm:$0xf]
        %v7202 = vld [vmem:[%s7198 + $0x10] sm:$0xf]
        %v7203 = vld [vmem:[%s7198 + $0x18] sm:$0xf]
        %v7204 = vld [vmem:[%s7198 + $0x1c] sm:$0xf]
        %v7205 = vld [vmem:[%s7198 + $0x24] sm:$0xf]
        %v7206 = vld [vmem:[%s7198 + $0x28] sm:$0xf]
        %v7207 = vld [vmem:[%s7198 + $0x30] sm:$0xf]
        %v7208 = vld [vmem:[%s7198 + $0x34] sm:$0xf]
        %v7209 = vld [vmem:[%s7198 + $0x3c] sm:$0xf]
        %v7210 = vld [vmem:[%s7198 + $0x40] sm:$0xf]
        %v7211 = vld [vmem:[%s7198 + $0x48] sm:$0xf]
        %v7212 = vld [vmem:[%s7198 + $0x4c] sm:$0xf]
        %v7213 = vld [vmem:[%s7198 + $0x54] sm:$0xf]
        %v7214 = vld [vmem:[%s7198 + $0x58] sm:$0xf]
        %v7215 = vld [vmem:[%s7198 + $0x60] sm:$0xf]
        %v7216 = vld [vmem:[%s7198 + $0x64] sm:$0xf]
        %v7217 = vld [vmem:[%s7198 + $0x6c] sm:$0xf]
        %v7218 = vld [vmem:[%s7198 + $0x70] sm:$0xf]
        %s7219 = scalar_lea.vmem %s1, 40
        %v7220 = vld [vmem:[%s7219] sm:$0x3]
        %v7241 = vunpack.c.l.b16 %v7199
        %v7242 = vunpack.c.l.b16 %v7200
        %v7243 = vunpack.c.l.b16 %v7201
        %v7244 = vunpack.c.l.b16 %v7202
        %v7245 = vunpack.c.l.b16 %v7203
        %v7246 = vunpack.c.l.b16 %v7204
        %v7247 = vunpack.c.l.b16 %v7205
        %v7248 = vunpack.c.l.b16 %v7206
        %v7249 = vunpack.c.l.b16 %v7207
        %v7250 = vunpack.c.l.b16 %v7208
        %v7251 = vunpack.c.l.b16 %v7209
        %v7252 = vunpack.c.l.b16 %v7210
        %v7253 = vunpack.c.l.b16 %v7211
        %v7254 = vunpack.c.l.b16 %v7212
        %v7255 = vunpack.c.l.b16 %v7213
        %v7256 = vunpack.c.l.b16 %v7214
        %v7257 = vunpack.c.l.b16 %v7215
        %v7258 = vunpack.c.l.b16 %v7216
        %v7259 = vunpack.c.l.b16 %v7217
        %v7260 = vunpack.c.l.b16 %v7218
        %v7261 = vpack.c.b16 %v7242, %v7241
        %v7262 = vpack.c.b16 %v7244, %v7243
        %v7263 = vpack.c.b16 %v7246, %v7245
        %v7264 = vpack.c.b16 %v7248, %v7247
        %v7265 = vpack.c.b16 %v7250, %v7249
        %v7266 = vpack.c.b16 %v7252, %v7251
        %v7267 = vpack.c.b16 %v7254, %v7253
        %v7268 = vpack.c.b16 %v7256, %v7255
        %v7269 = vpack.c.b16 %v7258, %v7257
        %v7270 = vpack.c.b16 %v7260, %v7259
        %v7272 = vsel %vm558, %v7261, 0
        %v7275 = vsel %vm558, %v7262, 0
        %v7278 = vsel %vm558, %v7263, 0
        %v7281 = vsel %vm558, %v7264, 0
        %v7284 = vsel %vm558, %v7265, 0
        %v7287 = vsel %vm558, %v7266, 0
        %v7290 = vsel %vm558, %v7267, 0
        %v7293 = vsel %vm558, %v7268, 0
        %v7296 = vsel %vm558, %v7269, 0
        %v7299 = vsel %vm558, %v7270, 0
        %v7302 = vsel %vm589, %v7220, 0
        %7304 = vmatprep.subr.bf16.mxu0 0
        %7305 = vmatpush1.bf16.msra.mxu0 %v7302
        %7306 = vmatprep.subr.bf16.mxu0 0
        %7307 = vmatpush1.bf16.msra.mxu0 0
        %7308 = vmatprep.subr.bf16.mxu0 0
        %7309 = vmatpush1.bf16.msra.mxu0 0
        %7310 = vmatprep.subr.bf16.mxu0 0
        %7311 = vmatpush1.bf16.msra.mxu0 0
        %7312 = vmatprep.subr.bf16.mxu0 0
        %7313 = vmatpush1.bf16.msra.mxu0 0
        %7314 = vmatprep.subr.bf16.mxu0 0
        %7315 = vmatpush1.bf16.msra.mxu0 0
        %7316 = vmatprep.subr.bf16.mxu0 0
        %7317 = vmatpush1.bf16.msra.mxu0 0
        %7318 = vmatprep.subr.bf16.mxu0 0
        %7319 = vmatpush1.bf16.msra.mxu0 0
        %7320 = vmatprep.subr.bf16.mxu0 0
        %7321 = vmatpush1.bf16.msra.mxu0 0
        %7322 = vmatprep.subr.bf16.mxu0 0
        %7323 = vmatpush1.bf16.msra.mxu0 0
        %7324 = vmatprep.subr.bf16.mxu0 0
        %7325 = vmatpush1.bf16.msra.mxu0 0
        %7326 = vmatprep.subr.bf16.mxu0 0
        %7327 = vmatpush1.bf16.msra.mxu0 0
        %7328 = vmatprep.subr.bf16.mxu0 0
        %7329 = vmatpush1.bf16.msra.mxu0 0
        %7330 = vmatprep.subr.bf16.mxu0 0
        %7331 = vmatpush1.bf16.msra.mxu0 0
        %7332 = vmatprep.subr.bf16.mxu0 0
        %7333 = vmatpush1.bf16.msra.mxu0 0
        %7334 = vmatprep.subr.bf16.mxu0 0
        %7335 = vmatpush1.bf16.msra.mxu0 0
        %7336 = vmatprep.mubr.bf16.mxu0 0
        %7337 = vmatmul.mubr.bf16.gmra.mrb[0].mxu0 %v7272
        %v7338 = vpop.f32.mrb[0].mxu0
        %v7339 = vadd.f32 0.0, %v7338
        %v7340 = vpop.f32.mrb[0].mxu0
        %v7341 = vpop.f32.mrb[0].mxu0
        %v7342 = vadd.f32 0.0, %v7341
        %v7343 = vpop.f32.mrb[0].mxu0
        %7344 = vmatprep.mubr.bf16.mxu0 0
        %7345 = vmatmul.mubr.bf16.gmra.mrb[0].mxu0 %v7275
        %v7346 = vpop.f32.mrb[0].mxu0
        %v7347 = vadd.f32 0.0, %v7346
        %v7348 = vpop.f32.mrb[0].mxu0
        %v7349 = vpop.f32.mrb[0].mxu0
        %v7350 = vadd.f32 0.0, %v7349
        %v7351 = vpop.f32.mrb[0].mxu0
        %7352 = vmatprep.mubr.bf16.mxu0 0
        %7353 = vmatmul.mubr.bf16.gmra.mrb[0].mxu0 %v7278
        %v7354 = vpop.f32.mrb[0].mxu0
        %v7355 = vadd.f32 0.0, %v7354
        %v7356 = vpop.f32.mrb[0].mxu0
        %v7357 = vpop.f32.mrb[0].mxu0
        %v7358 = vadd.f32 0.0, %v7357
        %v7359 = vpop.f32.mrb[0].mxu0
        %7360 = vmatprep.mubr.bf16.mxu0 0
        %7361 = vmatmul.mubr.bf16.gmra.mrb[0].mxu0 %v7281
        %v7362 = vpop.f32.mrb[0].mxu0
        %v7363 = vadd.f32 0.0, %v7362
        %v7364 = vpop.f32.mrb[0].mxu0
        %v7365 = vpop.f32.mrb[0].mxu0
        %v7366 = vadd.f32 0.0, %v7365
        %v7367 = vpop.f32.mrb[0].mxu0
        %7368 = vmatprep.mubr.bf16.mxu0 0
        %7369 = vmatmul.mubr.bf16.gmra.mrb[0].mxu0 %v7284
        %v7370 = vpop.f32.mrb[0].mxu0
        %v7371 = vadd.f32 0.0, %v7370
        %v7372 = vpop.f32.mrb[0].mxu0
        %v7373 = vpop.f32.mrb[0].mxu0
        %v7374 = vadd.f32 0.0, %v7373
        %v7375 = vpop.f32.mrb[0].mxu0
        %7376 = vmatprep.mubr.bf16.mxu0 0
        %7377 = vmatmul.mubr.bf16.gmra.mrb[0].mxu0 %v7287
        %v7378 = vpop.f32.mrb[0].mxu0
        %v7379 = vadd.f32 0.0, %v7378
        %v7380 = vpop.f32.mrb[0].mxu0
        %v7381 = vpop.f32.mrb[0].mxu0
        %v7382 = vadd.f32 0.0, %v7381
        %v7383 = vpop.f32.mrb[0].mxu0
        %7384 = vmatprep.mubr.bf16.mxu0 0
        %7385 = vmatmul.mubr.bf16.gmra.mrb[0].mxu0 %v7290
        %v7386 = vpop.f32.mrb[0].mxu0
        %v7387 = vadd.f32 0.0, %v7386
        %v7388 = vpop.f32.mrb[0].mxu0
        %v7389 = vpop.f32.mrb[0].mxu0
        %v7390 = vadd.f32 0.0, %v7389
        %v7391 = vpop.f32.mrb[0].mxu0
        %7392 = vmatprep.mubr.bf16.mxu0 0
        %7393 = vmatmul.mubr.bf16.gmra.mrb[0].mxu0 %v7293
        %v7394 = vpop.f32.mrb[0].mxu0
        %v7395 = vadd.f32 0.0, %v7394
        %v7396 = vpop.f32.mrb[0].mxu0
        %v7397 = vpop.f32.mrb[0].mxu0
        %v7398 = vadd.f32 0.0, %v7397
        %v7399 = vpop.f32.mrb[0].mxu0
        %7400 = vmatprep.mubr.bf16.mxu0 0
        %7401 = vmatmul.mubr.bf16.gmra.mrb[0].mxu0 %v7296
        %v7402 = vpop.f32.mrb[0].mxu0
        %v7403 = vadd.f32 0.0, %v7402
        %v7404 = vpop.f32.mrb[0].mxu0
        %v7405 = vpop.f32.mrb[0].mxu0
        %v7406 = vadd.f32 0.0, %v7405
        %v7407 = vpop.f32.mrb[0].mxu0
        %7408 = vmatprep.mubr.bf16.mxu0 0
        %7409 = vmatmul.mubr.bf16.gmra.mrb[0].mxu0 %v7299
        %v7410 = vpop.f32.mrb[0].mxu0
        %v7411 = vadd.f32 0.0, %v7410
        %v7412 = vpop.f32.mrb[0].mxu0
        %v7413 = vpop.f32.mrb[0].mxu0
        %v7414 = vadd.f32 0.0, %v7413
        %v7415 = vpop.f32.mrb[0].mxu0
        %7416 = vdwg.mxu0
        %v7417 = vadd.f32 %v7178, %v7339
        %v7418 = vadd.f32 %v7179, %v7342
        %v7419 = vadd.f32 %v7180, %v7347
        %v7420 = vadd.f32 %v7181, %v7350
        %v7421 = vadd.f32 %v7182, %v7355
        %v7422 = vadd.f32 %v7183, %v7358
        %v7423 = vadd.f32 %v7184, %v7363
        %v7424 = vadd.f32 %v7185, %v7366
        %v7425 = vadd.f32 %v7186, %v7371
        %v7426 = vadd.f32 %v7187, %v7374
        %v7427 = vadd.f32 %v7188, %v7379
        %v7428 = vadd.f32 %v7189, %v7382
        %v7429 = vadd.f32 %v7190, %v7387
        %v7430 = vadd.f32 %v7191, %v7390
        %v7431 = vadd.f32 %v7192, %v7395
        %v7432 = vadd.f32 %v7193, %v7398
        %v7433 = vadd.f32 %v7194, %v7403
        %v7434 = vadd.f32 %v7195, %v7406
        %v7435 = vadd.f32 %v7196, %v7411
        %v7436 = vadd.f32 %v7197, %v7414
        %v7437 = vld [vmem:[%s7198] sm:$0xf]
        %v7438 = vld [vmem:[%s7198 + $0x4] sm:$0xf]
        %v7439 = vld [vmem:[%s7198 + $0x8] sm:$0x1]
        %v7440 = vld [vmem:[%s7198 + $0xc] sm:$0xf]
        %v7441 = vld [vmem:[%s7198 + $0x10] sm:$0xf]
        %v7442 = vld [vmem:[%s7198 + $0x14] sm:$0x1]
        %v7443 = vld [vmem:[%s7198 + $0x18] sm:$0xf]
        %v7444 = vld [vmem:[%s7198 + $0x1c] sm:$0xf]
        %v7445 = vld [vmem:[%s7198 + $0x20] sm:$0x1]
        %v7446 = vld [vmem:[%s7198 + $0x24] sm:$0xf]
        %v7447 = vld [vmem:[%s7198 + $0x28] sm:$0xf]
        %v7448 = vld [vmem:[%s7198 + $0x2c] sm:$0x1]
        %v7449 = vld [vmem:[%s7198 + $0x30] sm:$0xf]
        %v7450 = vld [vmem:[%s7198 + $0x34] sm:$0xf]
        %v7451 = vld [vmem:[%s7198 + $0x38] sm:$0x1]
        %v7452 = vld [vmem:[%s7198 + $0x3c] sm:$0xf]
        %v7453 = vld [vmem:[%s7198 + $0x40] sm:$0xf]
        %v7454 = vld [vmem:[%s7198 + $0x44] sm:$0x1]
        %v7455 = vld [vmem:[%s7198 + $0x48] sm:$0xf]
        %v7456 = vld [vmem:[%s7198 + $0x4c] sm:$0xf]
        %v7457 = vld [vmem:[%s7198 + $0x50] sm:$0x1]
        %v7458 = vld [vmem:[%s7198 + $0x54] sm:$0xf]
        %v7459 = vld [vmem:[%s7198 + $0x58] sm:$0xf]
        %v7460 = vld [vmem:[%s7198 + $0x5c] sm:$0x1]
        %v7461 = vld [vmem:[%s7198 + $0x60] sm:$0xf]
        %v7462 = vld [vmem:[%s7198 + $0x64] sm:$0xf]
        %v7463 = vld [vmem:[%s7198 + $0x68] sm:$0x1]
        %v7464 = vld [vmem:[%s7198 + $0x6c] sm:$0xf]
        %v7465 = vld [vmem:[%s7198 + $0x70] sm:$0xf]
        %v7466 = vld [vmem:[%s7198 + $0x74] sm:$0x1]
        %v7468 = vshrl.u32 %v7437, 16
        %v7470 = vrot.slane %v7468, 4
        %v7471 = vshll.u32 %v7437, 16
        %v7473 = vrot.slane %v7471, 5
        %v7474 = vor.u32 %v7470, %v7473
        %v7475 = vrot.slane %v7474, 4
        %v7477 = vshll.u32 %v7438, 16
        %v7479 = vrot.slane %v7477, 5
        %v7480 = vsel %vm285, %v7475, %v7479
        %v7481 = vshrl.u32 %v7438, 16
        %v7483 = vrot.slane %v7481, 4
        %v7484 = vor.u32 %v7483, %v7479
        %v7485 = vrot.slane %v7484, 4
        %v7487 = vshll.u32 %v7439, 16
        %v7489 = vrot.slane %v7487, 5
        %v7490 = vsel %vm285, %v7485, %v7489
        %v7492 = vshrl.u32 %v7440, 16
        %v7494 = vrot.slane %v7492, 4
        %v7495 = vshll.u32 %v7440, 16
        %v7497 = vrot.slane %v7495, 5
        %v7498 = vor.u32 %v7494, %v7497
        %v7499 = vrot.slane %v7498, 4
        %v7501 = vshll.u32 %v7441, 16
        %v7503 = vrot.slane %v7501, 5
        %v7504 = vsel %vm285, %v7499, %v7503
        %v7505 = vshrl.u32 %v7441, 16
        %v7507 = vrot.slane %v7505, 4
        %v7508 = vor.u32 %v7507, %v7503
        %v7509 = vrot.slane %v7508, 4
        %v7511 = vshll.u32 %v7442, 16
        %v7513 = vrot.slane %v7511, 5
        %v7514 = vsel %vm285, %v7509, %v7513
        %v7516 = vshrl.u32 %v7443, 16
        %v7518 = vrot.slane %v7516, 4
        %v7519 = vshll.u32 %v7443, 16
        %v7521 = vrot.slane %v7519, 5
        %v7522 = vor.u32 %v7518, %v7521
        %v7523 = vrot.slane %v7522, 4
        %v7525 = vshll.u32 %v7444, 16
        %v7527 = vrot.slane %v7525, 5
        %v7528 = vsel %vm285, %v7523, %v7527
        %v7529 = vshrl.u32 %v7444, 16
        %v7531 = vrot.slane %v7529, 4
        %v7532 = vor.u32 %v7531, %v7527
        %v7533 = vrot.slane %v7532, 4
        %v7535 = vshll.u32 %v7445, 16
        %v7537 = vrot.slane %v7535, 5
        %v7538 = vsel %vm285, %v7533, %v7537
        %v7540 = vshrl.u32 %v7446, 16
        %v7542 = vrot.slane %v7540, 4
        %v7543 = vshll.u32 %v7446, 16
        %v7545 = vrot.slane %v7543, 5
        %v7546 = vor.u32 %v7542, %v7545
        %v7547 = vrot.slane %v7546, 4
        %v7549 = vshll.u32 %v7447, 16
        %v7551 = vrot.slane %v7549, 5
        %v7552 = vsel %vm285, %v7547, %v7551
        %v7553 = vshrl.u32 %v7447, 16
        %v7555 = vrot.slane %v7553, 4
        %v7556 = vor.u32 %v7555, %v7551
        %v7557 = vrot.slane %v7556, 4
        %v7559 = vshll.u32 %v7448, 16
        %v7561 = vrot.slane %v7559, 5
        %v7562 = vsel %vm285, %v7557, %v7561
        %v7564 = vshrl.u32 %v7449, 16
        %v7566 = vrot.slane %v7564, 4
        %v7567 = vshll.u32 %v7449, 16
        %v7569 = vrot.slane %v7567, 5
        %v7570 = vor.u32 %v7566, %v7569
        %v7571 = vrot.slane %v7570, 4
        %v7573 = vshll.u32 %v7450, 16
        %v7575 = vrot.slane %v7573, 5
        %v7576 = vsel %vm285, %v7571, %v7575
        %v7577 = vshrl.u32 %v7450, 16
        %v7579 = vrot.slane %v7577, 4
        %v7580 = vor.u32 %v7579, %v7575
        %v7581 = vrot.slane %v7580, 4
        %v7583 = vshll.u32 %v7451, 16
        %v7585 = vrot.slane %v7583, 5
        %v7586 = vsel %vm285, %v7581, %v7585
        %v7588 = vshrl.u32 %v7452, 16
        %v7590 = vrot.slane %v7588, 4
        %v7591 = vshll.u32 %v7452, 16
        %v7593 = vrot.slane %v7591, 5
        %v7594 = vor.u32 %v7590, %v7593
        %v7595 = vrot.slane %v7594, 4
        %v7597 = vshll.u32 %v7453, 16
        %v7599 = vrot.slane %v7597, 5
        %v7600 = vsel %vm285, %v7595, %v7599
        %v7601 = vshrl.u32 %v7453, 16
        %v7603 = vrot.slane %v7601, 4
        %v7604 = vor.u32 %v7603, %v7599
        %v7605 = vrot.slane %v7604, 4
        %v7607 = vshll.u32 %v7454, 16
        %v7609 = vrot.slane %v7607, 5
        %v7610 = vsel %vm285, %v7605, %v7609
        %v7612 = vshrl.u32 %v7455, 16
        %v7614 = vrot.slane %v7612, 4
        %v7615 = vshll.u32 %v7455, 16
        %v7617 = vrot.slane %v7615, 5
        %v7618 = vor.u32 %v7614, %v7617
        %v7619 = vrot.slane %v7618, 4
        %v7621 = vshll.u32 %v7456, 16
        %v7623 = vrot.slane %v7621, 5
        %v7624 = vsel %vm285, %v7619, %v7623
        %v7625 = vshrl.u32 %v7456, 16
        %v7627 = vrot.slane %v7625, 4
        %v7628 = vor.u32 %v7627, %v7623
        %v7629 = vrot.slane %v7628, 4
        %v7631 = vshll.u32 %v7457, 16
        %v7633 = vrot.slane %v7631, 5
        %v7634 = vsel %vm285, %v7629, %v7633
        %v7636 = vshrl.u32 %v7458, 16
        %v7638 = vrot.slane %v7636, 4
        %v7639 = vshll.u32 %v7458, 16
        %v7641 = vrot.slane %v7639, 5
        %v7642 = vor.u32 %v7638, %v7641
        %v7643 = vrot.slane %v7642, 4
        %v7645 = vshll.u32 %v7459, 16
        %v7647 = vrot.slane %v7645, 5
        %v7648 = vsel %vm285, %v7643, %v7647
        %v7649 = vshrl.u32 %v7459, 16
        %v7651 = vrot.slane %v7649, 4
        %v7652 = vor.u32 %v7651, %v7647
        %v7653 = vrot.slane %v7652, 4
        %v7655 = vshll.u32 %v7460, 16
        %v7657 = vrot.slane %v7655, 5
        %v7658 = vsel %vm285, %v7653, %v7657
        %v7660 = vshrl.u32 %v7461, 16
        %v7662 = vrot.slane %v7660, 4
        %v7663 = vshll.u32 %v7461, 16
        %v7665 = vrot.slane %v7663, 5
        %v7666 = vor.u32 %v7662, %v7665
        %v7667 = vrot.slane %v7666, 4
        %v7669 = vshll.u32 %v7462, 16
        %v7671 = vrot.slane %v7669, 5
        %v7672 = vsel %vm285, %v7667, %v7671
        %v7673 = vshrl.u32 %v7462, 16
        %v7675 = vrot.slane %v7673, 4
        %v7676 = vor.u32 %v7675, %v7671
        %v7677 = vrot.slane %v7676, 4
        %v7679 = vshll.u32 %v7463, 16
        %v7681 = vrot.slane %v7679, 5
        %v7682 = vsel %vm285, %v7677, %v7681
        %v7684 = vshrl.u32 %v7464, 16
        %v7686 = vrot.slane %v7684, 4
        %v7687 = vshll.u32 %v7464, 16
        %v7689 = vrot.slane %v7687, 5
        %v7690 = vor.u32 %v7686, %v7689
        %v7691 = vrot.slane %v7690, 4
        %v7693 = vshll.u32 %v7465, 16
        %v7695 = vrot.slane %v7693, 5
        %v7696 = vsel %vm285, %v7691, %v7695
        %v7697 = vshrl.u32 %v7465, 16
        %v7699 = vrot.slane %v7697, 4
        %v7700 = vor.u32 %v7699, %v7695
        %v7701 = vrot.slane %v7700, 4
        %v7703 = vshll.u32 %v7466, 16
        %v7705 = vrot.slane %v7703, 5
        %v7706 = vsel %vm285, %v7701, %v7705
        %s7707 = scalar_lea.vmem %s1, 42
        %v7708 = vld [vmem:[%s7707] sm:$0x3]
        %v7709 = vunpack.c.l.b16 %v7480
        %v7710 = vunpack.c.l.b16 %v7490
        %v7711 = vunpack.c.l.b16 %v7504
        %v7712 = vunpack.c.l.b16 %v7514
        %v7713 = vunpack.c.l.b16 %v7528
        %v7714 = vunpack.c.l.b16 %v7538
        %v7715 = vunpack.c.l.b16 %v7552
        %v7716 = vunpack.c.l.b16 %v7562
        %v7717 = vunpack.c.l.b16 %v7576
        %v7718 = vunpack.c.l.b16 %v7586
        %v7719 = vunpack.c.l.b16 %v7600
        %v7720 = vunpack.c.l.b16 %v7610
        %v7721 = vunpack.c.l.b16 %v7624
        %v7722 = vunpack.c.l.b16 %v7634
        %v7723 = vunpack.c.l.b16 %v7648
        %v7724 = vunpack.c.l.b16 %v7658
        %v7725 = vunpack.c.l.b16 %v7672
        %v7726 = vunpack.c.l.b16 %v7682
        %v7727 = vunpack.c.l.b16 %v7696
        %v7728 = vunpack.c.l.b16 %v7706
        %v7729 = vpack.c.b16 %v7710, %v7709
        %v7730 = vpack.c.b16 %v7712, %v7711
        %v7731 = vpack.c.b16 %v7714, %v7713
        %v7732 = vpack.c.b16 %v7716, %v7715
        %v7733 = vpack.c.b16 %v7718, %v7717
        %v7734 = vpack.c.b16 %v7720, %v7719
        %v7735 = vpack.c.b16 %v7722, %v7721
        %v7736 = vpack.c.b16 %v7724, %v7723
        %v7737 = vpack.c.b16 %v7726, %v7725
        %v7738 = vpack.c.b16 %v7728, %v7727
        %v7740 = vsel %vm558, %v7729, 0
        %v7743 = vsel %vm558, %v7730, 0
        %v7746 = vsel %vm558, %v7731, 0
        %v7749 = vsel %vm558, %v7732, 0
        %v7752 = vsel %vm558, %v7733, 0
        %v7755 = vsel %vm558, %v7734, 0
        %v7758 = vsel %vm558, %v7735, 0
        %v7761 = vsel %vm558, %v7736, 0
        %v7764 = vsel %vm558, %v7737, 0
        %v7767 = vsel %vm558, %v7738, 0
        %v7770 = vsel %vm589, %v7708, 0
        %7772 = vmatprep.subr.bf16.mxu0 0
        %7773 = vmatpush1.bf16.msra.mxu0 %v7770
        %7774 = vmatprep.subr.bf16.mxu0 0
        %7775 = vmatpush1.bf16.msra.mxu0 0
        %7776 = vmatprep.subr.bf16.mxu0 0
        %7777 = vmatpush1.bf16.msra.mxu0 0
        %7778 = vmatprep.subr.bf16.mxu0 0
        %7779 = vmatpush1.bf16.msra.mxu0 0
        %7780 = vmatprep.subr.bf16.mxu0 0
        %7781 = vmatpush1.bf16.msra.mxu0 0
        %7782 = vmatprep.subr.bf16.mxu0 0
        %7783 = vmatpush1.bf16.msra.mxu0 0
        %7784 = vmatprep.subr.bf16.mxu0 0
        %7785 = vmatpush1.bf16.msra.mxu0 0
        %7786 = vmatprep.subr.bf16.mxu0 0
        %7787 = vmatpush1.bf16.msra.mxu0 0
        %7788 = vmatprep.subr.bf16.mxu0 0
        %7789 = vmatpush1.bf16.msra.mxu0 0
        %7790 = vmatprep.subr.bf16.mxu0 0
        %7791 = vmatpush1.bf16.msra.mxu0 0
        %7792 = vmatprep.subr.bf16.mxu0 0
        %7793 = vmatpush1.bf16.msra.mxu0 0
        %7794 = vmatprep.subr.bf16.mxu0 0
        %7795 = vmatpush1.bf16.msra.mxu0 0
        %7796 = vmatprep.subr.bf16.mxu0 0
        %7797 = vmatpush1.bf16.msra.mxu0 0
        %7798 = vmatprep.subr.bf16.mxu0 0
        %7799 = vmatpush1.bf16.msra.mxu0 0
        %7800 = vmatprep.subr.bf16.mxu0 0
        %7801 = vmatpush1.bf16.msra.mxu0 0
        %7802 = vmatprep.subr.bf16.mxu0 0
        %7803 = vmatpush1.bf16.msra.mxu0 0
        %7804 = vmatprep.mubr.bf16.mxu0 0
        %7805 = vmatmul.mubr.bf16.gmra.mrb[0].mxu0 %v7740
        %v7806 = vpop.f32.mrb[0].mxu0
        %v7807 = vadd.f32 0.0, %v7806
        %v7808 = vpop.f32.mrb[0].mxu0
        %v7809 = vpop.f32.mrb[0].mxu0
        %v7810 = vadd.f32 0.0, %v7809
        %v7811 = vpop.f32.mrb[0].mxu0
        %7812 = vmatprep.mubr.bf16.mxu0 0
        %7813 = vmatmul.mubr.bf16.gmra.mrb[0].mxu0 %v7743
        %v7814 = vpop.f32.mrb[0].mxu0
        %v7815 = vadd.f32 0.0, %v7814
        %v7816 = vpop.f32.mrb[0].mxu0
        %v7817 = vpop.f32.mrb[0].mxu0
        %v7818 = vadd.f32 0.0, %v7817
        %v7819 = vpop.f32.mrb[0].mxu0
        %7820 = vmatprep.mubr.bf16.mxu0 0
        %7821 = vmatmul.mubr.bf16.gmra.mrb[0].mxu0 %v7746
        %v7822 = vpop.f32.mrb[0].mxu0
        %v7823 = vadd.f32 0.0, %v7822
        %v7824 = vpop.f32.mrb[0].mxu0
        %v7825 = vpop.f32.mrb[0].mxu0
        %v7826 = vadd.f32 0.0, %v7825
        %v7827 = vpop.f32.mrb[0].mxu0
        %7828 = vmatprep.mubr.bf16.mxu0 0
        %7829 = vmatmul.mubr.bf16.gmra.mrb[0].mxu0 %v7749
        %v7830 = vpop.f32.mrb[0].mxu0
        %v7831 = vadd.f32 0.0, %v7830
        %v7832 = vpop.f32.mrb[0].mxu0
        %v7833 = vpop.f32.mrb[0].mxu0
        %v7834 = vadd.f32 0.0, %v7833
        %v7835 = vpop.f32.mrb[0].mxu0
        %7836 = vmatprep.mubr.bf16.mxu0 0
        %7837 = vmatmul.mubr.bf16.gmra.mrb[0].mxu0 %v7752
        %v7838 = vpop.f32.mrb[0].mxu0
        %v7839 = vadd.f32 0.0, %v7838
        %v7840 = vpop.f32.mrb[0].mxu0
        %v7841 = vpop.f32.mrb[0].mxu0
        %v7842 = vadd.f32 0.0, %v7841
        %v7843 = vpop.f32.mrb[0].mxu0
        %7844 = vmatprep.mubr.bf16.mxu0 0
        %7845 = vmatmul.mubr.bf16.gmra.mrb[0].mxu0 %v7755
        %v7846 = vpop.f32.mrb[0].mxu0
        %v7847 = vadd.f32 0.0, %v7846
        %v7848 = vpop.f32.mrb[0].mxu0
        %v7849 = vpop.f32.mrb[0].mxu0
        %v7850 = vadd.f32 0.0, %v7849
        %v7851 = vpop.f32.mrb[0].mxu0
        %7852 = vmatprep.mubr.bf16.mxu0 0
        %7853 = vmatmul.mubr.bf16.gmra.mrb[0].mxu0 %v7758
        %v7854 = vpop.f32.mrb[0].mxu0
        %v7855 = vadd.f32 0.0, %v7854
        %v7856 = vpop.f32.mrb[0].mxu0
        %v7857 = vpop.f32.mrb[0].mxu0
        %v7858 = vadd.f32 0.0, %v7857
        %v7859 = vpop.f32.mrb[0].mxu0
        %7860 = vmatprep.mubr.bf16.mxu0 0
        %7861 = vmatmul.mubr.bf16.gmra.mrb[0].mxu0 %v7761
        %v7862 = vpop.f32.mrb[0].mxu0
        %v7863 = vadd.f32 0.0, %v7862
        %v7864 = vpop.f32.mrb[0].mxu0
        %v7865 = vpop.f32.mrb[0].mxu0
        %v7866 = vadd.f32 0.0, %v7865
        %v7867 = vpop.f32.mrb[0].mxu0
        %7868 = vmatprep.mubr.bf16.mxu0 0
        %7869 = vmatmul.mubr.bf16.gmra.mrb[0].mxu0 %v7764
        %v7870 = vpop.f32.mrb[0].mxu0
        %v7871 = vadd.f32 0.0, %v7870
        %v7872 = vpop.f32.mrb[0].mxu0
        %v7873 = vpop.f32.mrb[0].mxu0
        %v7874 = vadd.f32 0.0, %v7873
        %v7875 = vpop.f32.mrb[0].mxu0
        %7876 = vmatprep.mubr.bf16.mxu0 0
        %7877 = vmatmul.mubr.bf16.gmra.mrb[0].mxu0 %v7767
        %v7878 = vpop.f32.mrb[0].mxu0
        %v7879 = vadd.f32 0.0, %v7878
        %v7880 = vpop.f32.mrb[0].mxu0
        %v7881 = vpop.f32.mrb[0].mxu0
        %v7882 = vadd.f32 0.0, %v7881
        %v7883 = vpop.f32.mrb[0].mxu0
        %7884 = vdwg.mxu0
        %v7885 = vadd.f32 %v7417, %v7807
        %v7886 = vadd.f32 %v7418, %v7810
        %v7887 = vadd.f32 %v7419, %v7815
        %v7888 = vadd.f32 %v7420, %v7818
        %v7889 = vadd.f32 %v7421, %v7823
        %v7890 = vadd.f32 %v7422, %v7826
        %v7891 = vadd.f32 %v7423, %v7831
        %v7892 = vadd.f32 %v7424, %v7834
        %v7893 = vadd.f32 %v7425, %v7839
        %v7894 = vadd.f32 %v7426, %v7842
        %v7895 = vadd.f32 %v7427, %v7847
        %v7896 = vadd.f32 %v7428, %v7850
        %v7897 = vadd.f32 %v7429, %v7855
        %v7898 = vadd.f32 %v7430, %v7858
        %v7899 = vadd.f32 %v7431, %v7863
        %v7900 = vadd.f32 %v7432, %v7866
        %v7901 = vadd.f32 %v7433, %v7871
        %v7902 = vadd.f32 %v7434, %v7874
        %v7903 = vadd.f32 %v7435, %v7879
        %v7904 = vadd.f32 %v7436, %v7882
        %v7905 = vld [vmem:[%s7198] sm:$0xe]
        %v7906 = vld [vmem:[%s7198 + $0xc] sm:$0xe]
        %v7907 = vld [vmem:[%s7198 + $0x18] sm:$0xe]
        %v7908 = vld [vmem:[%s7198 + $0x24] sm:$0xe]
        %v7909 = vld [vmem:[%s7198 + $0x30] sm:$0xe]
        %v7910 = vld [vmem:[%s7198 + $0x3c] sm:$0xe]
        %v7911 = vld [vmem:[%s7198 + $0x48] sm:$0xe]
        %v7912 = vld [vmem:[%s7198 + $0x54] sm:$0xe]
        %v7913 = vld [vmem:[%s7198 + $0x60] sm:$0xe]
        %v7914 = vld [vmem:[%s7198 + $0x6c] sm:$0xe]
        %v7945 = vrot.slane %v7905, 5
        %v7946 = vrot.slane %v7945, 4
        %v7947 = vrot.slane %v7438, 5
        %v7948 = vsel %vm934, %v7946, %v7947
        %v7949 = vrot.slane %v7947, 4
        %v7950 = vrot.slane %v7439, 5
        %v7951 = vsel %vm934, %v7949, %v7950
        %v7952 = vrot.slane %v7906, 5
        %v7953 = vrot.slane %v7952, 4
        %v7954 = vrot.slane %v7441, 5
        %v7955 = vsel %vm934, %v7953, %v7954
        %v7956 = vrot.slane %v7954, 4
        %v7957 = vrot.slane %v7442, 5
        %v7958 = vsel %vm934, %v7956, %v7957
        %v7959 = vrot.slane %v7907, 5
        %v7960 = vrot.slane %v7959, 4
        %v7961 = vrot.slane %v7444, 5
        %v7962 = vsel %vm934, %v7960, %v7961
        %v7963 = vrot.slane %v7961, 4
        %v7964 = vrot.slane %v7445, 5
        %v7965 = vsel %vm934, %v7963, %v7964
        %v7966 = vrot.slane %v7908, 5
        %v7967 = vrot.slane %v7966, 4
        %v7968 = vrot.slane %v7447, 5
        %v7969 = vsel %vm934, %v7967, %v7968
        %v7970 = vrot.slane %v7968, 4
        %v7971 = vrot.slane %v7448, 5
        %v7972 = vsel %vm934, %v7970, %v7971
        %v7973 = vrot.slane %v7909, 5
        %v7974 = vrot.slane %v7973, 4
        %v7975 = vrot.slane %v7450, 5
        %v7976 = vsel %vm934, %v7974, %v7975
        %v7977 = vrot.slane %v7975, 4
        %v7978 = vrot.slane %v7451, 5
        %v7979 = vsel %vm934, %v7977, %v7978
        %v7980 = vrot.slane %v7910, 5
        %v7981 = vrot.slane %v7980, 4
        %v7982 = vrot.slane %v7453, 5
        %v7983 = vsel %vm934, %v7981, %v7982
        %v7984 = vrot.slane %v7982, 4
        %v7985 = vrot.slane %v7454, 5
        %v7986 = vsel %vm934, %v7984, %v7985
        %v7987 = vrot.slane %v7911, 5
        %v7988 = vrot.slane %v7987, 4
        %v7989 = vrot.slane %v7456, 5
        %v7990 = vsel %vm934, %v7988, %v7989
        %v7991 = vrot.slane %v7989, 4
        %v7992 = vrot.slane %v7457, 5
        %v7993 = vsel %vm934, %v7991, %v7992
        %v7994 = vrot.slane %v7912, 5
        %v7995 = vrot.slane %v7994, 4
        %v7996 = vrot.slane %v7459, 5
        %v7997 = vsel %vm934, %v7995, %v7996
        %v7998 = vrot.slane %v7996, 4
        %v7999 = vrot.slane %v7460, 5
        %v8000 = vsel %vm934, %v7998, %v7999
        %v8001 = vrot.slane %v7913, 5
        %v8002 = vrot.slane %v8001, 4
        %v8003 = vrot.slane %v7462, 5
        %v8004 = vsel %vm934, %v8002, %v8003
        %v8005 = vrot.slane %v8003, 4
        %v8006 = vrot.slane %v7463, 5
        %v8007 = vsel %vm934, %v8005, %v8006
        %v8008 = vrot.slane %v7914, 5
        %v8009 = vrot.slane %v8008, 4
        %v8010 = vrot.slane %v7465, 5
        %v8011 = vsel %vm934, %v8009, %v8010
        %v8012 = vrot.slane %v8010, 4
        %v8013 = vrot.slane %v7466, 5
        %v8014 = vsel %vm934, %v8012, %v8013
        %s8015 = scalar_lea.vmem %s1, 44
        %v8016 = vld [vmem:[%s8015] sm:$0x3]
        %v8017 = vunpack.c.l.b16 %v7948
        %v8018 = vunpack.c.l.b16 %v7951
        %v8019 = vunpack.c.l.b16 %v7955
        %v8020 = vunpack.c.l.b16 %v7958
        %v8021 = vunpack.c.l.b16 %v7962
        %v8022 = vunpack.c.l.b16 %v7965
        %v8023 = vunpack.c.l.b16 %v7969
        %v8024 = vunpack.c.l.b16 %v7972
        %v8025 = vunpack.c.l.b16 %v7976
        %v8026 = vunpack.c.l.b16 %v7979
        %v8027 = vunpack.c.l.b16 %v7983
        %v8028 = vunpack.c.l.b16 %v7986
        %v8029 = vunpack.c.l.b16 %v7990
        %v8030 = vunpack.c.l.b16 %v7993
        %v8031 = vunpack.c.l.b16 %v7997
        %v8032 = vunpack.c.l.b16 %v8000
        %v8033 = vunpack.c.l.b16 %v8004
        %v8034 = vunpack.c.l.b16 %v8007
        %v8035 = vunpack.c.l.b16 %v8011
        %v8036 = vunpack.c.l.b16 %v8014
        %v8037 = vpack.c.b16 %v8018, %v8017
        %v8038 = vpack.c.b16 %v8020, %v8019
        %v8039 = vpack.c.b16 %v8022, %v8021
        %v8040 = vpack.c.b16 %v8024, %v8023
        %v8041 = vpack.c.b16 %v8026, %v8025
        %v8042 = vpack.c.b16 %v8028, %v8027
        %v8043 = vpack.c.b16 %v8030, %v8029
        %v8044 = vpack.c.b16 %v8032, %v8031
        %v8045 = vpack.c.b16 %v8034, %v8033
        %v8046 = vpack.c.b16 %v8036, %v8035
        %v8048 = vsel %vm558, %v8037, 0
        %v8051 = vsel %vm558, %v8038, 0
        %v8054 = vsel %vm558, %v8039, 0
        %v8057 = vsel %vm558, %v8040, 0
        %v8060 = vsel %vm558, %v8041, 0
        %v8063 = vsel %vm558, %v8042, 0
        %v8066 = vsel %vm558, %v8043, 0
        %v8069 = vsel %vm558, %v8044, 0
        %v8072 = vsel %vm558, %v8045, 0
        %v8075 = vsel %vm558, %v8046, 0
        %v8078 = vsel %vm589, %v8016, 0
        %8080 = vmatprep.subr.bf16.mxu0 0
        %8081 = vmatpush1.bf16.msra.mxu0 %v8078
        %8082 = vmatprep.subr.bf16.mxu0 0
        %8083 = vmatpush1.bf16.msra.mxu0 0
        %8084 = vmatprep.subr.bf16.mxu0 0
        %8085 = vmatpush1.bf16.msra.mxu0 0
        %8086 = vmatprep.subr.bf16.mxu0 0
        %8087 = vmatpush1.bf16.msra.mxu0 0
        %8088 = vmatprep.subr.bf16.mxu0 0
        %8089 = vmatpush1.bf16.msra.mxu0 0
        %8090 = vmatprep.subr.bf16.mxu0 0
        %8091 = vmatpush1.bf16.msra.mxu0 0
        %8092 = vmatprep.subr.bf16.mxu0 0
        %8093 = vmatpush1.bf16.msra.mxu0 0
        %8094 = vmatprep.subr.bf16.mxu0 0
        %8095 = vmatpush1.bf16.msra.mxu0 0
        %8096 = vmatprep.subr.bf16.mxu0 0
        %8097 = vmatpush1.bf16.msra.mxu0 0
        %8098 = vmatprep.subr.bf16.mxu0 0
        %8099 = vmatpush1.bf16.msra.mxu0 0
        %8100 = vmatprep.subr.bf16.mxu0 0
        %8101 = vmatpush1.bf16.msra.mxu0 0
        %8102 = vmatprep.subr.bf16.mxu0 0
        %8103 = vmatpush1.bf16.msra.mxu0 0
        %8104 = vmatprep.subr.bf16.mxu0 0
        %8105 = vmatpush1.bf16.msra.mxu0 0
        %8106 = vmatprep.subr.bf16.mxu0 0
        %8107 = vmatpush1.bf16.msra.mxu0 0
        %8108 = vmatprep.subr.bf16.mxu0 0
        %8109 = vmatpush1.bf16.msra.mxu0 0
        %8110 = vmatprep.subr.bf16.mxu0 0
        %8111 = vmatpush1.bf16.msra.mxu0 0
        %8112 = vmatprep.mubr.bf16.mxu0 0
        %8113 = vmatmul.mubr.bf16.gmra.mrb[0].mxu0 %v8048
        %v8114 = vpop.f32.mrb[0].mxu0
        %v8115 = vadd.f32 0.0, %v8114
        %v8116 = vpop.f32.mrb[0].mxu0
        %v8117 = vpop.f32.mrb[0].mxu0
        %v8118 = vadd.f32 0.0, %v8117
        %v8119 = vpop.f32.mrb[0].mxu0
        %8120 = vmatprep.mubr.bf16.mxu0 0
        %8121 = vmatmul.mubr.bf16.gmra.mrb[0].mxu0 %v8051
        %v8122 = vpop.f32.mrb[0].mxu0
        %v8123 = vadd.f32 0.0, %v8122
        %v8124 = vpop.f32.mrb[0].mxu0
        %v8125 = vpop.f32.mrb[0].mxu0
        %v8126 = vadd.f32 0.0, %v8125
        %v8127 = vpop.f32.mrb[0].mxu0
        %8128 = vmatprep.mubr.bf16.mxu0 0
        %8129 = vmatmul.mubr.bf16.gmra.mrb[0].mxu0 %v8054
        %v8130 = vpop.f32.mrb[0].mxu0
        %v8131 = vadd.f32 0.0, %v8130
        %v8132 = vpop.f32.mrb[0].mxu0
        %v8133 = vpop.f32.mrb[0].mxu0
        %v8134 = vadd.f32 0.0, %v8133
        %v8135 = vpop.f32.mrb[0].mxu0
        %8136 = vmatprep.mubr.bf16.mxu0 0
        %8137 = vmatmul.mubr.bf16.gmra.mrb[0].mxu0 %v8057
        %v8138 = vpop.f32.mrb[0].mxu0
        %v8139 = vadd.f32 0.0, %v8138
        %v8140 = vpop.f32.mrb[0].mxu0
        %v8141 = vpop.f32.mrb[0].mxu0
        %v8142 = vadd.f32 0.0, %v8141
        %v8143 = vpop.f32.mrb[0].mxu0
        %8144 = vmatprep.mubr.bf16.mxu0 0
        %8145 = vmatmul.mubr.bf16.gmra.mrb[0].mxu0 %v8060
        %v8146 = vpop.f32.mrb[0].mxu0
        %v8147 = vadd.f32 0.0, %v8146
        %v8148 = vpop.f32.mrb[0].mxu0
        %v8149 = vpop.f32.mrb[0].mxu0
        %v8150 = vadd.f32 0.0, %v8149
        %v8151 = vpop.f32.mrb[0].mxu0
        %8152 = vmatprep.mubr.bf16.mxu0 0
        %8153 = vmatmul.mubr.bf16.gmra.mrb[0].mxu0 %v8063
        %v8154 = vpop.f32.mrb[0].mxu0
        %v8155 = vadd.f32 0.0, %v8154
        %v8156 = vpop.f32.mrb[0].mxu0
        %v8157 = vpop.f32.mrb[0].mxu0
        %v8158 = vadd.f32 0.0, %v8157
        %v8159 = vpop.f32.mrb[0].mxu0
        %8160 = vmatprep.mubr.bf16.mxu0 0
        %8161 = vmatmul.mubr.bf16.gmra.mrb[0].mxu0 %v8066
        %v8162 = vpop.f32.mrb[0].mxu0
        %v8163 = vadd.f32 0.0, %v8162
        %v8164 = vpop.f32.mrb[0].mxu0
        %v8165 = vpop.f32.mrb[0].mxu0
        %v8166 = vadd.f32 0.0, %v8165
        %v8167 = vpop.f32.mrb[0].mxu0
        %8168 = vmatprep.mubr.bf16.mxu0 0
        %8169 = vmatmul.mubr.bf16.gmra.mrb[0].mxu0 %v8069
        %v8170 = vpop.f32.mrb[0].mxu0
        %v8171 = vadd.f32 0.0, %v8170
        %v8172 = vpop.f32.mrb[0].mxu0
        %v8173 = vpop.f32.mrb[0].mxu0
        %v8174 = vadd.f32 0.0, %v8173
        %v8175 = vpop.f32.mrb[0].mxu0
        %8176 = vmatprep.mubr.bf16.mxu0 0
        %8177 = vmatmul.mubr.bf16.gmra.mrb[0].mxu0 %v8072
        %v8178 = vpop.f32.mrb[0].mxu0
        %v8179 = vadd.f32 0.0, %v8178
        %v8180 = vpop.f32.mrb[0].mxu0
        %v8181 = vpop.f32.mrb[0].mxu0
        %v8182 = vadd.f32 0.0, %v8181
        %v8183 = vpop.f32.mrb[0].mxu0
        %8184 = vmatprep.mubr.bf16.mxu0 0
        %8185 = vmatmul.mubr.bf16.gmra.mrb[0].mxu0 %v8075
        %v8186 = vpop.f32.mrb[0].mxu0
        %v8187 = vadd.f32 0.0, %v8186
        %v8188 = vpop.f32.mrb[0].mxu0
        %v8189 = vpop.f32.mrb[0].mxu0
        %v8190 = vadd.f32 0.0, %v8189
        %v8191 = vpop.f32.mrb[0].mxu0
        %8192 = vdwg.mxu0
        %v8193 = vadd.f32 %v7885, %v8115
        %v8194 = vadd.f32 %v7886, %v8118
        %v8195 = vadd.f32 %v7887, %v8123
        %v8196 = vadd.f32 %v7888, %v8126
        %v8197 = vadd.f32 %v7889, %v8131
        %v8198 = vadd.f32 %v7890, %v8134
        %v8199 = vadd.f32 %v7891, %v8139
        %v8200 = vadd.f32 %v7892, %v8142
        %v8201 = vadd.f32 %v7893, %v8147
        %v8202 = vadd.f32 %v7894, %v8150
        %v8203 = vadd.f32 %v7895, %v8155
        %v8204 = vadd.f32 %v7896, %v8158
        %v8205 = vadd.f32 %v7897, %v8163
        %v8206 = vadd.f32 %v7898, %v8166
        %v8207 = vadd.f32 %v7899, %v8171
        %v8208 = vadd.f32 %v7900, %v8174
        %v8209 = vadd.f32 %v7901, %v8179
        %v8210 = vadd.f32 %v7902, %v8182
        %v8211 = vadd.f32 %v7903, %v8187
        %v8212 = vadd.f32 %v7904, %v8190
        %v8213 = vld [vmem:[%s7198 + $0x8] sm:$0x3]
        %v8214 = vld [vmem:[%s7198 + $0x14] sm:$0x3]
        %v8215 = vld [vmem:[%s7198 + $0x20] sm:$0x3]
        %v8216 = vld [vmem:[%s7198 + $0x2c] sm:$0x3]
        %v8217 = vld [vmem:[%s7198 + $0x38] sm:$0x3]
        %v8218 = vld [vmem:[%s7198 + $0x44] sm:$0x3]
        %v8219 = vld [vmem:[%s7198 + $0x50] sm:$0x3]
        %v8220 = vld [vmem:[%s7198 + $0x5c] sm:$0x3]
        %v8221 = vld [vmem:[%s7198 + $0x68] sm:$0x3]
        %v8222 = vld [vmem:[%s7198 + $0x74] sm:$0x3]
        %v8224 = vshrl.u32 %v7905, 16
        %v8226 = vrot.slane %v8224, 5
        %v8227 = vshll.u32 %v7905, 16
        %v8229 = vrot.slane %v8227, 6
        %v8230 = vor.u32 %v8226, %v8229
        %v8231 = vrot.slane %v8230, 4
        %v8232 = vrot.slane %v7481, 5
        %v8233 = vrot.slane %v7477, 6
        %v8234 = vor.u32 %v8232, %v8233
        %v8235 = vsel %vm1215, %v8231, %v8234
        %v8236 = vrot.slane %v8234, 4
        %v8238 = vshrl.u32 %v8213, 16
        %v8240 = vrot.slane %v8238, 5
        %v8241 = vshll.u32 %v8213, 16
        %v8243 = vrot.slane %v8241, 6
        %v8244 = vor.u32 %v8240, %v8243
        %v8245 = vsel %vm1215, %v8236, %v8244
        %v8247 = vshrl.u32 %v7906, 16
        %v8249 = vrot.slane %v8247, 5
        %v8250 = vshll.u32 %v7906, 16
        %v8252 = vrot.slane %v8250, 6
        %v8253 = vor.u32 %v8249, %v8252
        %v8254 = vrot.slane %v8253, 4
        %v8255 = vrot.slane %v7505, 5
        %v8256 = vrot.slane %v7501, 6
        %v8257 = vor.u32 %v8255, %v8256
        %v8258 = vsel %vm1215, %v8254, %v8257
        %v8259 = vrot.slane %v8257, 4
        %v8261 = vshrl.u32 %v8214, 16
        %v8263 = vrot.slane %v8261, 5
        %v8264 = vshll.u32 %v8214, 16
        %v8266 = vrot.slane %v8264, 6
        %v8267 = vor.u32 %v8263, %v8266
        %v8268 = vsel %vm1215, %v8259, %v8267
        %v8270 = vshrl.u32 %v7907, 16
        %v8272 = vrot.slane %v8270, 5
        %v8273 = vshll.u32 %v7907, 16
        %v8275 = vrot.slane %v8273, 6
        %v8276 = vor.u32 %v8272, %v8275
        %v8277 = vrot.slane %v8276, 4
        %v8278 = vrot.slane %v7529, 5
        %v8279 = vrot.slane %v7525, 6
        %v8280 = vor.u32 %v8278, %v8279
        %v8281 = vsel %vm1215, %v8277, %v8280
        %v8282 = vrot.slane %v8280, 4
        %v8284 = vshrl.u32 %v8215, 16
        %v8286 = vrot.slane %v8284, 5
        %v8287 = vshll.u32 %v8215, 16
        %v8289 = vrot.slane %v8287, 6
        %v8290 = vor.u32 %v8286, %v8289
        %v8291 = vsel %vm1215, %v8282, %v8290
        %v8293 = vshrl.u32 %v7908, 16
        %v8295 = vrot.slane %v8293, 5
        %v8296 = vshll.u32 %v7908, 16
        %v8298 = vrot.slane %v8296, 6
        %v8299 = vor.u32 %v8295, %v8298
        %v8300 = vrot.slane %v8299, 4
        %v8301 = vrot.slane %v7553, 5
        %v8302 = vrot.slane %v7549, 6
        %v8303 = vor.u32 %v8301, %v8302
        %v8304 = vsel %vm1215, %v8300, %v8303
        %v8305 = vrot.slane %v8303, 4
        %v8307 = vshrl.u32 %v8216, 16
        %v8309 = vrot.slane %v8307, 5
        %v8310 = vshll.u32 %v8216, 16
        %v8312 = vrot.slane %v8310, 6
        %v8313 = vor.u32 %v8309, %v8312
        %v8314 = vsel %vm1215, %v8305, %v8313
        %v8316 = vshrl.u32 %v7909, 16
        %v8318 = vrot.slane %v8316, 5
        %v8319 = vshll.u32 %v7909, 16
        %v8321 = vrot.slane %v8319, 6
        %v8322 = vor.u32 %v8318, %v8321
        %v8323 = vrot.slane %v8322, 4
        %v8324 = vrot.slane %v7577, 5
        %v8325 = vrot.slane %v7573, 6
        %v8326 = vor.u32 %v8324, %v8325
        %v8327 = vsel %vm1215, %v8323, %v8326
        %v8328 = vrot.slane %v8326, 4
        %v8330 = vshrl.u32 %v8217, 16
        %v8332 = vrot.slane %v8330, 5
        %v8333 = vshll.u32 %v8217, 16
        %v8335 = vrot.slane %v8333, 6
        %v8336 = vor.u32 %v8332, %v8335
        %v8337 = vsel %vm1215, %v8328, %v8336
        %v8339 = vshrl.u32 %v7910, 16
        %v8341 = vrot.slane %v8339, 5
        %v8342 = vshll.u32 %v7910, 16
        %v8344 = vrot.slane %v8342, 6
        %v8345 = vor.u32 %v8341, %v8344
        %v8346 = vrot.slane %v8345, 4
        %v8347 = vrot.slane %v7601, 5
        %v8348 = vrot.slane %v7597, 6
        %v8349 = vor.u32 %v8347, %v8348
        %v8350 = vsel %vm1215, %v8346, %v8349
        %v8351 = vrot.slane %v8349, 4
        %v8353 = vshrl.u32 %v8218, 16
        %v8355 = vrot.slane %v8353, 5
        %v8356 = vshll.u32 %v8218, 16
        %v8358 = vrot.slane %v8356, 6
        %v8359 = vor.u32 %v8355, %v8358
        %v8360 = vsel %vm1215, %v8351, %v8359
        %v8362 = vshrl.u32 %v7911, 16
        %v8364 = vrot.slane %v8362, 5
        %v8365 = vshll.u32 %v7911, 16
        %v8367 = vrot.slane %v8365, 6
        %v8368 = vor.u32 %v8364, %v8367
        %v8369 = vrot.slane %v8368, 4
        %v8370 = vrot.slane %v7625, 5
        %v8371 = vrot.slane %v7621, 6
        %v8372 = vor.u32 %v8370, %v8371
        %v8373 = vsel %vm1215, %v8369, %v8372
        %v8374 = vrot.slane %v8372, 4
        %v8376 = vshrl.u32 %v8219, 16
        %v8378 = vrot.slane %v8376, 5
        %v8379 = vshll.u32 %v8219, 16
        %v8381 = vrot.slane %v8379, 6
        %v8382 = vor.u32 %v8378, %v8381
        %v8383 = vsel %vm1215, %v8374, %v8382
        %v8385 = vshrl.u32 %v7912, 16
        %v8387 = vrot.slane %v8385, 5
        %v8388 = vshll.u32 %v7912, 16
        %v8390 = vrot.slane %v8388, 6
        %v8391 = vor.u32 %v8387, %v8390
        %v8392 = vrot.slane %v8391, 4
        %v8393 = vrot.slane %v7649, 5
        %v8394 = vrot.slane %v7645, 6
        %v8395 = vor.u32 %v8393, %v8394
        %v8396 = vsel %vm1215, %v8392, %v8395
        %v8397 = vrot.slane %v8395, 4
        %v8399 = vshrl.u32 %v8220, 16
        %v8401 = vrot.slane %v8399, 5
        %v8402 = vshll.u32 %v8220, 16
        %v8404 = vrot.slane %v8402, 6
        %v8405 = vor.u32 %v8401, %v8404
        %v8406 = vsel %vm1215, %v8397, %v8405
        %v8408 = vshrl.u32 %v7913, 16
        %v8410 = vrot.slane %v8408, 5
        %v8411 = vshll.u32 %v7913, 16
        %v8413 = vrot.slane %v8411, 6
        %v8414 = vor.u32 %v8410, %v8413
        %v8415 = vrot.slane %v8414, 4
        %v8416 = vrot.slane %v7673, 5
        %v8417 = vrot.slane %v7669, 6
        %v8418 = vor.u32 %v8416, %v8417
        %v8419 = vsel %vm1215, %v8415, %v8418
        %v8420 = vrot.slane %v8418, 4
        %v8422 = vshrl.u32 %v8221, 16
        %v8424 = vrot.slane %v8422, 5
        %v8425 = vshll.u32 %v8221, 16
        %v8427 = vrot.slane %v8425, 6
        %v8428 = vor.u32 %v8424, %v8427
        %v8429 = vsel %vm1215, %v8420, %v8428
        %v8431 = vshrl.u32 %v7914, 16
        %v8433 = vrot.slane %v8431, 5
        %v8434 = vshll.u32 %v7914, 16
        %v8436 = vrot.slane %v8434, 6
        %v8437 = vor.u32 %v8433, %v8436
        %v8438 = vrot.slane %v8437, 4
        %v8439 = vrot.slane %v7697, 5
        %v8440 = vrot.slane %v7693, 6
        %v8441 = vor.u32 %v8439, %v8440
        %v8442 = vsel %vm1215, %v8438, %v8441
        %v8443 = vrot.slane %v8441, 4
        %v8445 = vshrl.u32 %v8222, 16
        %v8447 = vrot.slane %v8445, 5
        %v8448 = vshll.u32 %v8222, 16
        %v8450 = vrot.slane %v8448, 6
        %v8451 = vor.u32 %v8447, %v8450
        %v8452 = vsel %vm1215, %v8443, %v8451
        %s8453 = scalar_lea.vmem %s1, 46
        %v8454 = vld [vmem:[%s8453] sm:$0x3]
        %v8455 = vunpack.c.l.b16 %v8235
        %v8456 = vunpack.c.l.b16 %v8245
        %v8457 = vunpack.c.l.b16 %v8258
        %v8458 = vunpack.c.l.b16 %v8268
        %v8459 = vunpack.c.l.b16 %v8281
        %v8460 = vunpack.c.l.b16 %v8291
        %v8461 = vunpack.c.l.b16 %v8304
        %v8462 = vunpack.c.l.b16 %v8314
        %v8463 = vunpack.c.l.b16 %v8327
        %v8464 = vunpack.c.l.b16 %v8337
        %v8465 = vunpack.c.l.b16 %v8350
        %v8466 = vunpack.c.l.b16 %v8360
        %v8467 = vunpack.c.l.b16 %v8373
        %v8468 = vunpack.c.l.b16 %v8383
        %v8469 = vunpack.c.l.b16 %v8396
        %v8470 = vunpack.c.l.b16 %v8406
        %v8471 = vunpack.c.l.b16 %v8419
        %v8472 = vunpack.c.l.b16 %v8429
        %v8473 = vunpack.c.l.b16 %v8442
        %v8474 = vunpack.c.l.b16 %v8452
        %v8475 = vpack.c.b16 %v8456, %v8455
        %v8476 = vpack.c.b16 %v8458, %v8457
        %v8477 = vpack.c.b16 %v8460, %v8459
        %v8478 = vpack.c.b16 %v8462, %v8461
        %v8479 = vpack.c.b16 %v8464, %v8463
        %v8480 = vpack.c.b16 %v8466, %v8465
        %v8481 = vpack.c.b16 %v8468, %v8467
        %v8482 = vpack.c.b16 %v8470, %v8469
        %v8483 = vpack.c.b16 %v8472, %v8471
        %v8484 = vpack.c.b16 %v8474, %v8473
        %v8486 = vsel %vm558, %v8475, 0
        %v8489 = vsel %vm558, %v8476, 0
        %v8492 = vsel %vm558, %v8477, 0
        %v8495 = vsel %vm558, %v8478, 0
        %v8498 = vsel %vm558, %v8479, 0
        %v8501 = vsel %vm558, %v8480, 0
        %v8504 = vsel %vm558, %v8481, 0
        %v8507 = vsel %vm558, %v8482, 0
        %v8510 = vsel %vm558, %v8483, 0
        %v8513 = vsel %vm558, %v8484, 0
        %v8516 = vsel %vm589, %v8454, 0
        %8518 = vmatprep.subr.bf16.mxu0 0
        %8519 = vmatpush1.bf16.msra.mxu0 %v8516
        %8520 = vmatprep.subr.bf16.mxu0 0
        %8521 = vmatpush1.bf16.msra.mxu0 0
        %8522 = vmatprep.subr.bf16.mxu0 0
        %8523 = vmatpush1.bf16.msra.mxu0 0
        %8524 = vmatprep.subr.bf16.mxu0 0
        %8525 = vmatpush1.bf16.msra.mxu0 0
        %8526 = vmatprep.subr.bf16.mxu0 0
        %8527 = vmatpush1.bf16.msra.mxu0 0
        %8528 = vmatprep.subr.bf16.mxu0 0
        %8529 = vmatpush1.bf16.msra.mxu0 0
        %8530 = vmatprep.subr.bf16.mxu0 0
        %8531 = vmatpush1.bf16.msra.mxu0 0
        %8532 = vmatprep.subr.bf16.mxu0 0
        %8533 = vmatpush1.bf16.msra.mxu0 0
        %8534 = vmatprep.subr.bf16.mxu0 0
        %8535 = vmatpush1.bf16.msra.mxu0 0
        %8536 = vmatprep.subr.bf16.mxu0 0
        %8537 = vmatpush1.bf16.msra.mxu0 0
        %8538 = vmatprep.subr.bf16.mxu0 0
        %8539 = vmatpush1.bf16.msra.mxu0 0
        %8540 = vmatprep.subr.bf16.mxu0 0
        %8541 = vmatpush1.bf16.msra.mxu0 0
        %8542 = vmatprep.subr.bf16.mxu0 0
        %8543 = vmatpush1.bf16.msra.mxu0 0
        %8544 = vmatprep.subr.bf16.mxu0 0
        %8545 = vmatpush1.bf16.msra.mxu0 0
        %8546 = vmatprep.subr.bf16.mxu0 0
        %8547 = vmatpush1.bf16.msra.mxu0 0
        %8548 = vmatprep.subr.bf16.mxu0 0
        %8549 = vmatpush1.bf16.msra.mxu0 0
        %8550 = vmatprep.mubr.bf16.mxu0 0
        %8551 = vmatmul.mubr.bf16.gmra.mrb[0].mxu0 %v8486
        %v8552 = vpop.f32.mrb[0].mxu0
        %v8553 = vadd.f32 0.0, %v8552
        %v8554 = vpop.f32.mrb[0].mxu0
        %v8555 = vpop.f32.mrb[0].mxu0
        %v8556 = vadd.f32 0.0, %v8555
        %v8557 = vpop.f32.mrb[0].mxu0
        %8558 = vmatprep.mubr.bf16.mxu0 0
        %8559 = vmatmul.mubr.bf16.gmra.mrb[0].mxu0 %v8489
        %v8560 = vpop.f32.mrb[0].mxu0
        %v8561 = vadd.f32 0.0, %v8560
        %v8562 = vpop.f32.mrb[0].mxu0
        %v8563 = vpop.f32.mrb[0].mxu0
        %v8564 = vadd.f32 0.0, %v8563
        %v8565 = vpop.f32.mrb[0].mxu0
        %8566 = vmatprep.mubr.bf16.mxu0 0
        %8567 = vmatmul.mubr.bf16.gmra.mrb[0].mxu0 %v8492
        %v8568 = vpop.f32.mrb[0].mxu0
        %v8569 = vadd.f32 0.0, %v8568
        %v8570 = vpop.f32.mrb[0].mxu0
        %v8571 = vpop.f32.mrb[0].mxu0
        %v8572 = vadd.f32 0.0, %v8571
        %v8573 = vpop.f32.mrb[0].mxu0
        %8574 = vmatprep.mubr.bf16.mxu0 0
        %8575 = vmatmul.mubr.bf16.gmra.mrb[0].mxu0 %v8495
        %v8576 = vpop.f32.mrb[0].mxu0
        %v8577 = vadd.f32 0.0, %v8576
        %v8578 = vpop.f32.mrb[0].mxu0
        %v8579 = vpop.f32.mrb[0].mxu0
        %v8580 = vadd.f32 0.0, %v8579
        %v8581 = vpop.f32.mrb[0].mxu0
        %8582 = vmatprep.mubr.bf16.mxu0 0
        %8583 = vmatmul.mubr.bf16.gmra.mrb[0].mxu0 %v8498
        %v8584 = vpop.f32.mrb[0].mxu0
        %v8585 = vadd.f32 0.0, %v8584
        %v8586 = vpop.f32.mrb[0].mxu0
        %v8587 = vpop.f32.mrb[0].mxu0
        %v8588 = vadd.f32 0.0, %v8587
        %v8589 = vpop.f32.mrb[0].mxu0
        %8590 = vmatprep.mubr.bf16.mxu0 0
        %8591 = vmatmul.mubr.bf16.gmra.mrb[0].mxu0 %v8501
        %v8592 = vpop.f32.mrb[0].mxu0
        %v8593 = vadd.f32 0.0, %v8592
        %v8594 = vpop.f32.mrb[0].mxu0
        %v8595 = vpop.f32.mrb[0].mxu0
        %v8596 = vadd.f32 0.0, %v8595
        %v8597 = vpop.f32.mrb[0].mxu0
        %8598 = vmatprep.mubr.bf16.mxu0 0
        %8599 = vmatmul.mubr.bf16.gmra.mrb[0].mxu0 %v8504
        %v8600 = vpop.f32.mrb[0].mxu0
        %v8601 = vadd.f32 0.0, %v8600
        %v8602 = vpop.f32.mrb[0].mxu0
        %v8603 = vpop.f32.mrb[0].mxu0
        %v8604 = vadd.f32 0.0, %v8603
        %v8605 = vpop.f32.mrb[0].mxu0
        %8606 = vmatprep.mubr.bf16.mxu0 0
        %8607 = vmatmul.mubr.bf16.gmra.mrb[0].mxu0 %v8507
        %v8608 = vpop.f32.mrb[0].mxu0
        %v8609 = vadd.f32 0.0, %v8608
        %v8610 = vpop.f32.mrb[0].mxu0
        %v8611 = vpop.f32.mrb[0].mxu0
        %v8612 = vadd.f32 0.0, %v8611
        %v8613 = vpop.f32.mrb[0].mxu0
        %8614 = vmatprep.mubr.bf16.mxu0 0
        %8615 = vmatmul.mubr.bf16.gmra.mrb[0].mxu0 %v8510
        %v8616 = vpop.f32.mrb[0].mxu0
        %v8617 = vadd.f32 0.0, %v8616
        %v8618 = vpop.f32.mrb[0].mxu0
        %v8619 = vpop.f32.mrb[0].mxu0
        %v8620 = vadd.f32 0.0, %v8619
        %v8621 = vpop.f32.mrb[0].mxu0
        %8622 = vmatprep.mubr.bf16.mxu0 0
        %8623 = vmatmul.mubr.bf16.gmra.mrb[0].mxu0 %v8513
        %v8624 = vpop.f32.mrb[0].mxu0
        %v8625 = vadd.f32 0.0, %v8624
        %v8626 = vpop.f32.mrb[0].mxu0
        %v8627 = vpop.f32.mrb[0].mxu0
        %v8628 = vadd.f32 0.0, %v8627
        %v8629 = vpop.f32.mrb[0].mxu0
        %8630 = vdwg.mxu0
        %v8631 = vadd.f32 %v8193, %v8553
        %v8632 = vadd.f32 %v8194, %v8556
        %v8633 = vadd.f32 %v8195, %v8561
        %v8634 = vadd.f32 %v8196, %v8564
        %v8635 = vadd.f32 %v8197, %v8569
        %v8636 = vadd.f32 %v8198, %v8572
        %v8637 = vadd.f32 %v8199, %v8577
        %v8638 = vadd.f32 %v8200, %v8580
        %v8639 = vadd.f32 %v8201, %v8585
        %v8640 = vadd.f32 %v8202, %v8588
        %v8641 = vadd.f32 %v8203, %v8593
        %v8642 = vadd.f32 %v8204, %v8596
        %v8643 = vadd.f32 %v8205, %v8601
        %v8644 = vadd.f32 %v8206, %v8604
        %v8645 = vadd.f32 %v8207, %v8609
        %v8646 = vadd.f32 %v8208, %v8612
        %v8647 = vadd.f32 %v8209, %v8617
        %v8648 = vadd.f32 %v8210, %v8620
        %v8649 = vadd.f32 %v8211, %v8625
        %v8650 = vadd.f32 %v8212, %v8628
        %v8651 = vld [vmem:[%s7198] sm:$0xc]
        %v8652 = vld [vmem:[%s7198 + $0xc] sm:$0xc]
        %v8653 = vld [vmem:[%s7198 + $0x18] sm:$0xc]
        %v8654 = vld [vmem:[%s7198 + $0x24] sm:$0xc]
        %v8655 = vld [vmem:[%s7198 + $0x30] sm:$0xc]
        %v8656 = vld [vmem:[%s7198 + $0x3c] sm:$0xc]
        %v8657 = vld [vmem:[%s7198 + $0x48] sm:$0xc]
        %v8658 = vld [vmem:[%s7198 + $0x54] sm:$0xc]
        %v8659 = vld [vmem:[%s7198 + $0x60] sm:$0xc]
        %v8660 = vld [vmem:[%s7198 + $0x6c] sm:$0xc]
        %v8681 = vrot.slane %v8651, 6
        %v8682 = vrot.slane %v8681, 4
        %v8683 = vrot.slane %v7438, 6
        %v8684 = vsel %vm1676, %v8682, %v8683
        %v8685 = vrot.slane %v8683, 4
        %v8686 = vrot.slane %v8213, 6
        %v8687 = vsel %vm1676, %v8685, %v8686
        %v8688 = vrot.slane %v8652, 6
        %v8689 = vrot.slane %v8688, 4
        %v8690 = vrot.slane %v7441, 6
        %v8691 = vsel %vm1676, %v8689, %v8690
        %v8692 = vrot.slane %v8690, 4
        %v8693 = vrot.slane %v8214, 6
        %v8694 = vsel %vm1676, %v8692, %v8693
        %v8695 = vrot.slane %v8653, 6
        %v8696 = vrot.slane %v8695, 4
        %v8697 = vrot.slane %v7444, 6
        %v8698 = vsel %vm1676, %v8696, %v8697
        %v8699 = vrot.slane %v8697, 4
        %v8700 = vrot.slane %v8215, 6
        %v8701 = vsel %vm1676, %v8699, %v8700
        %v8702 = vrot.slane %v8654, 6
        %v8703 = vrot.slane %v8702, 4
        %v8704 = vrot.slane %v7447, 6
        %v8705 = vsel %vm1676, %v8703, %v8704
        %v8706 = vrot.slane %v8704, 4
        %v8707 = vrot.slane %v8216, 6
        %v8708 = vsel %vm1676, %v8706, %v8707
        %v8709 = vrot.slane %v8655, 6
        %v8710 = vrot.slane %v8709, 4
        %v8711 = vrot.slane %v7450, 6
        %v8712 = vsel %vm1676, %v8710, %v8711
        %v8713 = vrot.slane %v8711, 4
        %v8714 = vrot.slane %v8217, 6
        %v8715 = vsel %vm1676, %v8713, %v8714
        %v8716 = vrot.slane %v8656, 6
        %v8717 = vrot.slane %v8716, 4
        %v8718 = vrot.slane %v7453, 6
        %v8719 = vsel %vm1676, %v8717, %v8718
        %v8720 = vrot.slane %v8718, 4
        %v8721 = vrot.slane %v8218, 6
        %v8722 = vsel %vm1676, %v8720, %v8721
        %v8723 = vrot.slane %v8657, 6
        %v8724 = vrot.slane %v8723, 4
        %v8725 = vrot.slane %v7456, 6
        %v8726 = vsel %vm1676, %v8724, %v8725
        %v8727 = vrot.slane %v8725, 4
        %v8728 = vrot.slane %v8219, 6
        %v8729 = vsel %vm1676, %v8727, %v8728
        %v8730 = vrot.slane %v8658, 6
        %v8731 = vrot.slane %v8730, 4
        %v8732 = vrot.slane %v7459, 6
        %v8733 = vsel %vm1676, %v8731, %v8732
        %v8734 = vrot.slane %v8732, 4
        %v8735 = vrot.slane %v8220, 6
        %v8736 = vsel %vm1676, %v8734, %v8735
        %v8737 = vrot.slane %v8659, 6
        %v8738 = vrot.slane %v8737, 4
        %v8739 = vrot.slane %v7462, 6
        %v8740 = vsel %vm1676, %v8738, %v8739
        %v8741 = vrot.slane %v8739, 4
        %v8742 = vrot.slane %v8221, 6
        %v8743 = vsel %vm1676, %v8741, %v8742
        %v8744 = vrot.slane %v8660, 6
        %v8745 = vrot.slane %v8744, 4
        %v8746 = vrot.slane %v7465, 6
        %v8747 = vsel %vm1676, %v8745, %v8746
        %v8748 = vrot.slane %v8746, 4
        %v8749 = vrot.slane %v8222, 6
        %v8750 = vsel %vm1676, %v8748, %v8749
        %s8751 = scalar_lea.vmem %s1, 48
        %v8752 = vld [vmem:[%s8751] sm:$0x3]
        %v8753 = vunpack.c.l.b16 %v8684
        %v8754 = vunpack.c.l.b16 %v8687
        %v8755 = vunpack.c.l.b16 %v8691
        %v8756 = vunpack.c.l.b16 %v8694
        %v8757 = vunpack.c.l.b16 %v8698
        %v8758 = vunpack.c.l.b16 %v8701
        %v8759 = vunpack.c.l.b16 %v8705
        %v8760 = vunpack.c.l.b16 %v8708
        %v8761 = vunpack.c.l.b16 %v8712
        %v8762 = vunpack.c.l.b16 %v8715
        %v8763 = vunpack.c.l.b16 %v8719
        %v8764 = vunpack.c.l.b16 %v8722
        %v8765 = vunpack.c.l.b16 %v8726
        %v8766 = vunpack.c.l.b16 %v8729
        %v8767 = vunpack.c.l.b16 %v8733
        %v8768 = vunpack.c.l.b16 %v8736
        %v8769 = vunpack.c.l.b16 %v8740
        %v8770 = vunpack.c.l.b16 %v8743
        %v8771 = vunpack.c.l.b16 %v8747
        %v8772 = vunpack.c.l.b16 %v8750
        %v8773 = vpack.c.b16 %v8754, %v8753
        %v8774 = vpack.c.b16 %v8756, %v8755
        %v8775 = vpack.c.b16 %v8758, %v8757
        %v8776 = vpack.c.b16 %v8760, %v8759
        %v8777 = vpack.c.b16 %v8762, %v8761
        %v8778 = vpack.c.b16 %v8764, %v8763
        %v8779 = vpack.c.b16 %v8766, %v8765
        %v8780 = vpack.c.b16 %v8768, %v8767
        %v8781 = vpack.c.b16 %v8770, %v8769
        %v8782 = vpack.c.b16 %v8772, %v8771
        %v8784 = vsel %vm558, %v8773, 0
        %v8787 = vsel %vm558, %v8774, 0
        %v8790 = vsel %vm558, %v8775, 0
        %v8793 = vsel %vm558, %v8776, 0
        %v8796 = vsel %vm558, %v8777, 0
        %v8799 = vsel %vm558, %v8778, 0
        %v8802 = vsel %vm558, %v8779, 0
        %v8805 = vsel %vm558, %v8780, 0
        %v8808 = vsel %vm558, %v8781, 0
        %v8811 = vsel %vm558, %v8782, 0
        %v8814 = vsel %vm589, %v8752, 0
        %8816 = vmatprep.subr.bf16.mxu0 0
        %8817 = vmatpush1.bf16.msra.mxu0 %v8814
        %8818 = vmatprep.subr.bf16.mxu0 0
        %8819 = vmatpush1.bf16.msra.mxu0 0
        %8820 = vmatprep.subr.bf16.mxu0 0
        %8821 = vmatpush1.bf16.msra.mxu0 0
        %8822 = vmatprep.subr.bf16.mxu0 0
        %8823 = vmatpush1.bf16.msra.mxu0 0
        %8824 = vmatprep.subr.bf16.mxu0 0
        %8825 = vmatpush1.bf16.msra.mxu0 0
        %8826 = vmatprep.subr.bf16.mxu0 0
        %8827 = vmatpush1.bf16.msra.mxu0 0
        %8828 = vmatprep.subr.bf16.mxu0 0
        %8829 = vmatpush1.bf16.msra.mxu0 0
        %8830 = vmatprep.subr.bf16.mxu0 0
        %8831 = vmatpush1.bf16.msra.mxu0 0
        %8832 = vmatprep.subr.bf16.mxu0 0
        %8833 = vmatpush1.bf16.msra.mxu0 0
        %8834 = vmatprep.subr.bf16.mxu0 0
        %8835 = vmatpush1.bf16.msra.mxu0 0
        %8836 = vmatprep.subr.bf16.mxu0 0
        %8837 = vmatpush1.bf16.msra.mxu0 0
        %8838 = vmatprep.subr.bf16.mxu0 0
        %8839 = vmatpush1.bf16.msra.mxu0 0
        %8840 = vmatprep.subr.bf16.mxu0 0
        %8841 = vmatpush1.bf16.msra.mxu0 0
        %8842 = vmatprep.subr.bf16.mxu0 0
        %8843 = vmatpush1.bf16.msra.mxu0 0
        %8844 = vmatprep.subr.bf16.mxu0 0
        %8845 = vmatpush1.bf16.msra.mxu0 0
        %8846 = vmatprep.subr.bf16.mxu0 0
        %8847 = vmatpush1.bf16.msra.mxu0 0
        %8848 = vmatprep.mubr.bf16.mxu0 0
        %8849 = vmatmul.mubr.bf16.gmra.mrb[0].mxu0 %v8784
        %v8850 = vpop.f32.mrb[0].mxu0
        %v8851 = vadd.f32 0.0, %v8850
        %v8852 = vpop.f32.mrb[0].mxu0
        %v8853 = vpop.f32.mrb[0].mxu0
        %v8854 = vadd.f32 0.0, %v8853
        %v8855 = vpop.f32.mrb[0].mxu0
        %8856 = vmatprep.mubr.bf16.mxu0 0
        %8857 = vmatmul.mubr.bf16.gmra.mrb[0].mxu0 %v8787
        %v8858 = vpop.f32.mrb[0].mxu0
        %v8859 = vadd.f32 0.0, %v8858
        %v8860 = vpop.f32.mrb[0].mxu0
        %v8861 = vpop.f32.mrb[0].mxu0
        %v8862 = vadd.f32 0.0, %v8861
        %v8863 = vpop.f32.mrb[0].mxu0
        %8864 = vmatprep.mubr.bf16.mxu0 0
        %8865 = vmatmul.mubr.bf16.gmra.mrb[0].mxu0 %v8790
        %v8866 = vpop.f32.mrb[0].mxu0
        %v8867 = vadd.f32 0.0, %v8866
        %v8868 = vpop.f32.mrb[0].mxu0
        %v8869 = vpop.f32.mrb[0].mxu0
        %v8870 = vadd.f32 0.0, %v8869
        %v8871 = vpop.f32.mrb[0].mxu0
        %8872 = vmatprep.mubr.bf16.mxu0 0
        %8873 = vmatmul.mubr.bf16.gmra.mrb[0].mxu0 %v8793
        %v8874 = vpop.f32.mrb[0].mxu0
        %v8875 = vadd.f32 0.0, %v8874
        %v8876 = vpop.f32.mrb[0].mxu0
        %v8877 = vpop.f32.mrb[0].mxu0
        %v8878 = vadd.f32 0.0, %v8877
        %v8879 = vpop.f32.mrb[0].mxu0
        %8880 = vmatprep.mubr.bf16.mxu0 0
        %8881 = vmatmul.mubr.bf16.gmra.mrb[0].mxu0 %v8796
        %v8882 = vpop.f32.mrb[0].mxu0
        %v8883 = vadd.f32 0.0, %v8882
        %v8884 = vpop.f32.mrb[0].mxu0
        %v8885 = vpop.f32.mrb[0].mxu0
        %v8886 = vadd.f32 0.0, %v8885
        %v8887 = vpop.f32.mrb[0].mxu0
        %8888 = vmatprep.mubr.bf16.mxu0 0
        %8889 = vmatmul.mubr.bf16.gmra.mrb[0].mxu0 %v8799
        %v8890 = vpop.f32.mrb[0].mxu0
        %v8891 = vadd.f32 0.0, %v8890
        %v8892 = vpop.f32.mrb[0].mxu0
        %v8893 = vpop.f32.mrb[0].mxu0
        %v8894 = vadd.f32 0.0, %v8893
        %v8895 = vpop.f32.mrb[0].mxu0
        %8896 = vmatprep.mubr.bf16.mxu0 0
        %8897 = vmatmul.mubr.bf16.gmra.mrb[0].mxu0 %v8802
        %v8898 = vpop.f32.mrb[0].mxu0
        %v8899 = vadd.f32 0.0, %v8898
        %v8900 = vpop.f32.mrb[0].mxu0
        %v8901 = vpop.f32.mrb[0].mxu0
        %v8902 = vadd.f32 0.0, %v8901
        %v8903 = vpop.f32.mrb[0].mxu0
        %8904 = vmatprep.mubr.bf16.mxu0 0
        %8905 = vmatmul.mubr.bf16.gmra.mrb[0].mxu0 %v8805
        %v8906 = vpop.f32.mrb[0].mxu0
        %v8907 = vadd.f32 0.0, %v8906
        %v8908 = vpop.f32.mrb[0].mxu0
        %v8909 = vpop.f32.mrb[0].mxu0
        %v8910 = vadd.f32 0.0, %v8909
        %v8911 = vpop.f32.mrb[0].mxu0
        %8912 = vmatprep.mubr.bf16.mxu0 0
        %8913 = vmatmul.mubr.bf16.gmra.mrb[0].mxu0 %v8808
        %v8914 = vpop.f32.mrb[0].mxu0
        %v8915 = vadd.f32 0.0, %v8914
        %v8916 = vpop.f32.mrb[0].mxu0
        %v8917 = vpop.f32.mrb[0].mxu0
        %v8918 = vadd.f32 0.0, %v8917
        %v8919 = vpop.f32.mrb[0].mxu0
        %8920 = vmatprep.mubr.bf16.mxu0 0
        %8921 = vmatmul.mubr.bf16.gmra.mrb[0].mxu0 %v8811
        %v8922 = vpop.f32.mrb[0].mxu0
        %v8923 = vadd.f32 0.0, %v8922
        %v8924 = vpop.f32.mrb[0].mxu0
        %v8925 = vpop.f32.mrb[0].mxu0
        %v8926 = vadd.f32 0.0, %v8925
        %v8927 = vpop.f32.mrb[0].mxu0
        %8928 = vdwg.mxu0
        %v8929 = vadd.f32 %v8631, %v8851
        %v8930 = vadd.f32 %v8632, %v8854
        %v8931 = vadd.f32 %v8633, %v8859
        %v8932 = vadd.f32 %v8634, %v8862
        %v8933 = vadd.f32 %v8635, %v8867
        %v8934 = vadd.f32 %v8636, %v8870
        %v8935 = vadd.f32 %v8637, %v8875
        %v8936 = vadd.f32 %v8638, %v8878
        %v8937 = vadd.f32 %v8639, %v8883
        %v8938 = vadd.f32 %v8640, %v8886
        %v8939 = vadd.f32 %v8641, %v8891
        %v8940 = vadd.f32 %v8642, %v8894
        %v8941 = vadd.f32 %v8643, %v8899
        %v8942 = vadd.f32 %v8644, %v8902
        %v8943 = vadd.f32 %v8645, %v8907
        %v8944 = vadd.f32 %v8646, %v8910
        %v8945 = vadd.f32 %v8647, %v8915
        %v8946 = vadd.f32 %v8648, %v8918
        %v8947 = vadd.f32 %v8649, %v8923
        %v8948 = vadd.f32 %v8650, %v8926
        %v8949 = vld [vmem:[%s2] sm:$0x1]
        %v8951 = vlaneseq
        %v8952 = vshrl.u32 %v8951, 7
        %v8953 = vsub.s32 0, %v8952
        %v8954 = vrot.slane %v8949, %v8953
        %v8956 = vadd.f32 %v8929, %v8954
        %v8957 = vadd.f32 %v8930, %v8954
        %v8958 = vadd.f32 %v8931, %v8954
        %v8959 = vadd.f32 %v8932, %v8954
        %v8960 = vadd.f32 %v8933, %v8954
        %v8961 = vadd.f32 %v8934, %v8954
        %v8962 = vadd.f32 %v8935, %v8954
        %v8963 = vadd.f32 %v8936, %v8954
        %v8964 = vadd.f32 %v8937, %v8954
        %v8965 = vadd.f32 %v8938, %v8954
        %v8966 = vadd.f32 %v8939, %v8954
        %v8967 = vadd.f32 %v8940, %v8954
        %v8968 = vadd.f32 %v8941, %v8954
        %v8969 = vadd.f32 %v8942, %v8954
        %v8970 = vadd.f32 %v8943, %v8954
        %v8971 = vadd.f32 %v8944, %v8954
        %v8972 = vadd.f32 %v8945, %v8954
        %v8973 = vadd.f32 %v8946, %v8954
        %v8974 = vadd.f32 %v8947, %v8954
        %v8975 = vadd.f32 %v8948, %v8954
        %v8976 = vpack.c.bf16 %v8957, %v8956
        %v8977 = vpack.c.bf16 %v8959, %v8958
        %v8978 = vpack.c.bf16 %v8961, %v8960
        %v8979 = vpack.c.bf16 %v8963, %v8962
        %v8980 = vpack.c.bf16 %v8965, %v8964
        %v8981 = vpack.c.bf16 %v8967, %v8966
        %v8982 = vpack.c.bf16 %v8969, %v8968
        %v8983 = vpack.c.bf16 %v8971, %v8970
        %v8984 = vpack.c.bf16 %v8973, %v8972
        %v8985 = vpack.c.bf16 %v8975, %v8974
        %v8996 = vunpack.c.l.b16 %v8976
        %v8997 = vunpack.c.h.b16 %v8976
        %v8998 = vunpack.c.l.b16 %v8977
        %v8999 = vunpack.c.h.b16 %v8977
        %v9000 = vunpack.c.l.b16 %v8978
        %v9001 = vunpack.c.h.b16 %v8978
        %v9002 = vunpack.c.l.b16 %v8979
        %v9003 = vunpack.c.h.b16 %v8979
        %v9004 = vunpack.c.l.b16 %v8980
        %v9005 = vunpack.c.h.b16 %v8980
        %v9006 = vunpack.c.l.b16 %v8981
        %v9007 = vunpack.c.h.b16 %v8981
        %v9008 = vunpack.c.l.b16 %v8982
        %v9009 = vunpack.c.h.b16 %v8982
        %v9010 = vunpack.c.l.b16 %v8983
        %v9011 = vunpack.c.h.b16 %v8983
        %v9012 = vunpack.c.l.b16 %v8984
        %v9013 = vunpack.c.h.b16 %v8984
        %v9014 = vunpack.c.l.b16 %v8985
        %v9015 = vunpack.c.h.b16 %v8985
        %v9016 = vpack.c.b16 %v8996, %v8996
        %v9017 = vpack.c.b16 %v8997, %v8997
        %v9018 = vpack.c.b16 %v8998, %v8998
        %v9019 = vpack.c.b16 %v8999, %v8999
        %v9020 = vpack.c.b16 %v9000, %v9000
        %v9021 = vpack.c.b16 %v9001, %v9001
        %v9022 = vpack.c.b16 %v9002, %v9002
        %v9023 = vpack.c.b16 %v9003, %v9003
        %v9024 = vpack.c.b16 %v9004, %v9004
        %v9025 = vpack.c.b16 %v9005, %v9005
        %v9026 = vpack.c.b16 %v9006, %v9006
        %v9027 = vpack.c.b16 %v9007, %v9007
        %v9028 = vpack.c.b16 %v9008, %v9008
        %v9029 = vpack.c.b16 %v9009, %v9009
        %v9030 = vpack.c.b16 %v9010, %v9010
        %v9031 = vpack.c.b16 %v9011, %v9011
        %v9032 = vpack.c.b16 %v9012, %v9012
        %v9033 = vpack.c.b16 %v9013, %v9013
        %v9034 = vpack.c.b16 %v9014, %v9014
        %v9035 = vpack.c.b16 %v9015, %v9015
        %vm9036 = vsmask.f32 256
        %vm9037 = vsmask.f32 4368
        %vm9038 = vmor %vm9036, %vm9037
        %v9040 = vshrl.u32 %v9016, 16
        %v9042 = vrot.slane %v9040, 7
        %v9043 = vshll.u32 %v9016, 16
        %v9045 = vor.u32 %v9042, %v9043
        %v9046 = vrot.slane %v9042, 4
        %v9048 = vshrl.u32 %v9017, 16
        %v9050 = vrot.slane %v9048, 7
        %v9051 = vshll.u32 %v9017, 16
        %v9053 = vor.u32 %v9050, %v9051
        %v9054 = vsel %vm9038, %v9046, %v9053
        %v9055 = vrot.slane %v9050, 4
        %v9057 = vshrl.u32 %v9018, 16
        %v9059 = vrot.slane %v9057, 7
        %v9060 = vshll.u32 %v9018, 16
        %v9062 = vor.u32 %v9059, %v9060
        %v9063 = vrot.slane %v9059, 4
        %v9065 = vshrl.u32 %v9019, 16
        %v9067 = vrot.slane %v9065, 7
        %v9068 = vshll.u32 %v9019, 16
        %v9070 = vor.u32 %v9067, %v9068
        %v9071 = vsel %vm9038, %v9063, %v9070
        %v9072 = vrot.slane %v9067, 4
        %v9074 = vshrl.u32 %v9020, 16
        %v9076 = vrot.slane %v9074, 7
        %v9077 = vshll.u32 %v9020, 16
        %v9079 = vor.u32 %v9076, %v9077
        %v9080 = vrot.slane %v9076, 4
        %v9082 = vshrl.u32 %v9021, 16
        %v9084 = vrot.slane %v9082, 7
        %v9085 = vshll.u32 %v9021, 16
        %v9087 = vor.u32 %v9084, %v9085
        %v9088 = vsel %vm9038, %v9080, %v9087
        %v9089 = vrot.slane %v9084, 4
        %v9091 = vshrl.u32 %v9022, 16
        %v9093 = vrot.slane %v9091, 7
        %v9094 = vshll.u32 %v9022, 16
        %v9096 = vor.u32 %v9093, %v9094
        %v9097 = vrot.slane %v9093, 4
        %v9099 = vshrl.u32 %v9023, 16
        %v9101 = vrot.slane %v9099, 7
        %v9102 = vshll.u32 %v9023, 16
        %v9104 = vor.u32 %v9101, %v9102
        %v9105 = vsel %vm9038, %v9097, %v9104
        %v9106 = vrot.slane %v9101, 4
        %v9108 = vshrl.u32 %v9024, 16
        %v9110 = vrot.slane %v9108, 7
        %v9111 = vshll.u32 %v9024, 16
        %v9113 = vor.u32 %v9110, %v9111
        %v9114 = vrot.slane %v9110, 4
        %v9116 = vshrl.u32 %v9025, 16
        %v9118 = vrot.slane %v9116, 7
        %v9119 = vshll.u32 %v9025, 16
        %v9121 = vor.u32 %v9118, %v9119
        %v9122 = vsel %vm9038, %v9114, %v9121
        %v9123 = vrot.slane %v9118, 4
        %v9125 = vshrl.u32 %v9026, 16
        %v9127 = vrot.slane %v9125, 7
        %v9128 = vshll.u32 %v9026, 16
        %v9130 = vor.u32 %v9127, %v9128
        %v9131 = vrot.slane %v9127, 4
        %v9133 = vshrl.u32 %v9027, 16
        %v9135 = vrot.slane %v9133, 7
        %v9136 = vshll.u32 %v9027, 16
        %v9138 = vor.u32 %v9135, %v9136
        %v9139 = vsel %vm9038, %v9131, %v9138
        %v9140 = vrot.slane %v9135, 4
        %v9142 = vshrl.u32 %v9028, 16
        %v9144 = vrot.slane %v9142, 7
        %v9145 = vshll.u32 %v9028, 16
        %v9147 = vor.u32 %v9144, %v9145
        %v9148 = vrot.slane %v9144, 4
        %v9150 = vshrl.u32 %v9029, 16
        %v9152 = vrot.slane %v9150, 7
        %v9153 = vshll.u32 %v9029, 16
        %v9155 = vor.u32 %v9152, %v9153
        %v9156 = vsel %vm9038, %v9148, %v9155
        %v9157 = vrot.slane %v9152, 4
        %v9159 = vshrl.u32 %v9030, 16
        %v9161 = vrot.slane %v9159, 7
        %v9162 = vshll.u32 %v9030, 16
        %v9164 = vor.u32 %v9161, %v9162
        %v9165 = vrot.slane %v9161, 4
        %v9167 = vshrl.u32 %v9031, 16
        %v9169 = vrot.slane %v9167, 7
        %v9170 = vshll.u32 %v9031, 16
        %v9172 = vor.u32 %v9169, %v9170
        %v9173 = vsel %vm9038, %v9165, %v9172
        %v9174 = vrot.slane %v9169, 4
        %v9176 = vshrl.u32 %v9032, 16
        %v9178 = vrot.slane %v9176, 7
        %v9179 = vshll.u32 %v9032, 16
        %v9181 = vor.u32 %v9178, %v9179
        %v9182 = vrot.slane %v9178, 4
        %v9184 = vshrl.u32 %v9033, 16
        %v9186 = vrot.slane %v9184, 7
        %v9187 = vshll.u32 %v9033, 16
        %v9189 = vor.u32 %v9186, %v9187
        %v9190 = vsel %vm9038, %v9182, %v9189
        %v9191 = vrot.slane %v9186, 4
        %v9193 = vshrl.u32 %v9034, 16
        %v9195 = vrot.slane %v9193, 7
        %v9196 = vshll.u32 %v9034, 16
        %v9198 = vor.u32 %v9195, %v9196
        %v9199 = vrot.slane %v9195, 4
        %v9201 = vshrl.u32 %v9035, 16
        %v9203 = vrot.slane %v9201, 7
        %v9204 = vshll.u32 %v9035, 16
        %v9206 = vor.u32 %v9203, %v9204
        %v9207 = vsel %vm9038, %v9199, %v9206
        %v9208 = vrot.slane %v9203, 4
        %vm9239 = vcmask 257024
        %vm9240 = vsmask.f32 7938
        %vm9241 = vmand %vm9239, %vm9240
        %v9242 = vld [vmem:[#allocation2] sm:$0xf]
        %v9243 = vsel %vm9241, %v9045, %v9242
        %9244 = vst [vmem:[#allocation2] sm:$0xf] %v9243
        %vm9245 = vcmask 257024
        %9246 = vst.msk [vmem:[#allocation2 + $0x4] sm:$0xf] %vm9245, %v9054
        %vm9247 = vcmask 253952
        %vm9248 = vmand %vm9247, %vm9036
        %v9249 = vld [vmem:[#allocation2 + $0x8] sm:$0x1]
        %v9250 = vsel %vm9248, %v9055, %v9249
        %9251 = vst [vmem:[#allocation2 + $0x8] sm:$0x1] %v9250
        %v9252 = vld [vmem:[#allocation2 + $0xc] sm:$0xf]
        %v9253 = vsel %vm9241, %v9062, %v9252
        %9254 = vst [vmem:[#allocation2 + $0xc] sm:$0xf] %v9253
        %9255 = vst.msk [vmem:[#allocation2 + $0x10] sm:$0xf] %vm9245, %v9071
        %v9256 = vld [vmem:[#allocation2 + $0x14] sm:$0x1]
        %v9257 = vsel %vm9248, %v9072, %v9256
        %9258 = vst [vmem:[#allocation2 + $0x14] sm:$0x1] %v9257
        %v9259 = vld [vmem:[#allocation2 + $0x18] sm:$0xf]
        %v9260 = vsel %vm9241, %v9079, %v9259
        %9261 = vst [vmem:[#allocation2 + $0x18] sm:$0xf] %v9260
        %9262 = vst.msk [vmem:[#allocation2 + $0x1c] sm:$0xf] %vm9245, %v9088
        %v9263 = vld [vmem:[#allocation2 + $0x20] sm:$0x1]
        %v9264 = vsel %vm9248, %v9089, %v9263
        %9265 = vst [vmem:[#allocation2 + $0x20] sm:$0x1] %v9264
        %v9266 = vld [vmem:[#allocation2 + $0x24] sm:$0xf]
        %v9267 = vsel %vm9241, %v9096, %v9266
        %9268 = vst [vmem:[#allocation2 + $0x24] sm:$0xf] %v9267
        %9269 = vst.msk [vmem:[#allocation2 + $0x28] sm:$0xf] %vm9245, %v9105
        %v9270 = vld [vmem:[#allocation2 + $0x2c] sm:$0x1]
        %v9271 = vsel %vm9248, %v9106, %v9270
        %9272 = vst [vmem:[#allocation2 + $0x2c] sm:$0x1] %v9271
        %v9273 = vld [vmem:[#allocation2 + $0x30] sm:$0xf]
        %v9274 = vsel %vm9241, %v9113, %v9273
        %9275 = vst [vmem:[#allocation2 + $0x30] sm:$0xf] %v9274
        %9276 = vst.msk [vmem:[#allocation2 + $0x34] sm:$0xf] %vm9245, %v9122
        %v9277 = vld [vmem:[#allocation2 + $0x38] sm:$0x1]
        %v9278 = vsel %vm9248, %v9123, %v9277
        %9279 = vst [vmem:[#allocation2 + $0x38] sm:$0x1] %v9278
        %v9280 = vld [vmem:[#allocation2 + $0x3c] sm:$0xf]
        %v9281 = vsel %vm9241, %v9130, %v9280
        %9282 = vst [vmem:[#allocation2 + $0x3c] sm:$0xf] %v9281
        %9283 = vst.msk [vmem:[#allocation2 + $0x40] sm:$0xf] %vm9245, %v9139
        %v9284 = vld [vmem:[#allocation2 + $0x44] sm:$0x1]
        %v9285 = vsel %vm9248, %v9140, %v9284
        %9286 = vst [vmem:[#allocation2 + $0x44] sm:$0x1] %v9285
        %v9287 = vld [vmem:[#allocation2 + $0x48] sm:$0xf]
        %v9288 = vsel %vm9241, %v9147, %v9287
        %9289 = vst [vmem:[#allocation2 + $0x48] sm:$0xf] %v9288
        %9290 = vst.msk [vmem:[#allocation2 + $0x4c] sm:$0xf] %vm9245, %v9156
        %v9291 = vld [vmem:[#allocation2 + $0x50] sm:$0x1]
        %v9292 = vsel %vm9248, %v9157, %v9291
        %9293 = vst [vmem:[#allocation2 + $0x50] sm:$0x1] %v9292
        %v9294 = vld [vmem:[#allocation2 + $0x54] sm:$0xf]
        %v9295 = vsel %vm9241, %v9164, %v9294
        %9296 = vst [vmem:[#allocation2 + $0x54] sm:$0xf] %v9295
        %9297 = vst.msk [vmem:[#allocation2 + $0x58] sm:$0xf] %vm9245, %v9173
        %v9298 = vld [vmem:[#allocation2 + $0x5c] sm:$0x1]
        %v9299 = vsel %vm9248, %v9174, %v9298
        %9300 = vst [vmem:[#allocation2 + $0x5c] sm:$0x1] %v9299
        %v9301 = vld [vmem:[#allocation2 + $0x60] sm:$0xf]
        %v9302 = vsel %vm9241, %v9181, %v9301
        %9303 = vst [vmem:[#allocation2 + $0x60] sm:$0xf] %v9302
        %9304 = vst.msk [vmem:[#allocation2 + $0x64] sm:$0xf] %vm9245, %v9190
        %v9305 = vld [vmem:[#allocation2 + $0x68] sm:$0x1]
        %v9306 = vsel %vm9248, %v9191, %v9305
        %9307 = vst [vmem:[#allocation2 + $0x68] sm:$0x1] %v9306
        %v9308 = vld [vmem:[#allocation2 + $0x6c] sm:$0xf]
        %v9309 = vsel %vm9241, %v9198, %v9308
        %9310 = vst [vmem:[#allocation2 + $0x6c] sm:$0xf] %v9309
        %9311 = vst.msk [vmem:[#allocation2 + $0x70] sm:$0xf] %vm9245, %v9207
        %v9312 = vld [vmem:[#allocation2 + $0x74] sm:$0x1]
        %v9313 = vsel %vm9248, %v9208, %v9312
        %9314 = vst [vmem:[#allocation2 + $0x74] sm:$0x1] %v9313
        %v9315 = vld [vmem:[#allocation2] sm:$0x1]
        %v9316 = vsel %vm9248, 0, %v9315
        %9317 = vst [vmem:[#allocation2] sm:$0x1] %v9316
        %v9318 = vld [vmem:[#allocation2 + $0xc] sm:$0x1]
        %v9319 = vsel %vm9248, 0, %v9318
        %9320 = vst [vmem:[#allocation2 + $0xc] sm:$0x1] %v9319
        %v9321 = vld [vmem:[#allocation2 + $0x18] sm:$0x1]
        %v9322 = vsel %vm9248, 0, %v9321
        %9323 = vst [vmem:[#allocation2 + $0x18] sm:$0x1] %v9322
        %v9324 = vld [vmem:[#allocation2 + $0x24] sm:$0x1]
        %v9325 = vsel %vm9248, 0, %v9324
        %9326 = vst [vmem:[#allocation2 + $0x24] sm:$0x1] %v9325
        %v9327 = vld [vmem:[#allocation2 + $0x30] sm:$0x1]
        %v9328 = vsel %vm9248, 0, %v9327
        %9329 = vst [vmem:[#allocation2 + $0x30] sm:$0x1] %v9328
        %v9330 = vld [vmem:[#allocation2 + $0x3c] sm:$0x1]
        %v9331 = vsel %vm9248, 0, %v9330
        %9332 = vst [vmem:[#allocation2 + $0x3c] sm:$0x1] %v9331
        %v9333 = vld [vmem:[#allocation2 + $0x48] sm:$0x1]
        %v9334 = vsel %vm9248, 0, %v9333
        %9335 = vst [vmem:[#allocation2 + $0x48] sm:$0x1] %v9334
        %v9336 = vld [vmem:[#allocation2 + $0x54] sm:$0x1]
        %v9337 = vsel %vm9248, 0, %v9336
        %9338 = vst [vmem:[#allocation2 + $0x54] sm:$0x1] %v9337
        %v9339 = vld [vmem:[#allocation2 + $0x60] sm:$0x1]
        %v9340 = vsel %vm9248, 0, %v9339
        %9341 = vst [vmem:[#allocation2 + $0x60] sm:$0x1] %v9340
        %v9342 = vld [vmem:[#allocation2 + $0x6c] sm:$0x1]
        %v9343 = vsel %vm9248, 0, %v9342
        %9344 = vst [vmem:[#allocation2 + $0x6c] sm:$0x1] %v9343
        %vm9345 = vmand %vm9247, %vm9240
        %v9346 = vld [vmem:[#allocation2 + $0x8] sm:$0x1]
        %v9347 = vsel %vm9345, 0, %v9346
        %9348 = vst [vmem:[#allocation2 + $0x8] sm:$0x1] %v9347
        %v9349 = vld [vmem:[#allocation2 + $0x14] sm:$0x1]
        %v9350 = vsel %vm9345, 0, %v9349
        %9351 = vst [vmem:[#allocation2 + $0x14] sm:$0x1] %v9350
        %v9352 = vld [vmem:[#allocation2 + $0x20] sm:$0x1]
        %v9353 = vsel %vm9345, 0, %v9352
        %9354 = vst [vmem:[#allocation2 + $0x20] sm:$0x1] %v9353
        %v9355 = vld [vmem:[#allocation2 + $0x2c] sm:$0x1]
        %v9356 = vsel %vm9345, 0, %v9355
        %9357 = vst [vmem:[#allocation2 + $0x2c] sm:$0x1] %v9356
        %v9358 = vld [vmem:[#allocation2 + $0x38] sm:$0x1]
        %v9359 = vsel %vm9345, 0, %v9358
        %9360 = vst [vmem:[#allocation2 + $0x38] sm:$0x1] %v9359
        %v9361 = vld [vmem:[#allocation2 + $0x44] sm:$0x1]
        %v9362 = vsel %vm9345, 0, %v9361
        %9363 = vst [vmem:[#allocation2 + $0x44] sm:$0x1] %v9362
        %v9364 = vld [vmem:[#allocation2 + $0x50] sm:$0x1]
        %v9365 = vsel %vm9345, 0, %v9364
        %9366 = vst [vmem:[#allocation2 + $0x50] sm:$0x1] %v9365
        %v9367 = vld [vmem:[#allocation2 + $0x5c] sm:$0x1]
        %v9368 = vsel %vm9345, 0, %v9367
        %9369 = vst [vmem:[#allocation2 + $0x5c] sm:$0x1] %v9368
        %v9370 = vld [vmem:[#allocation2 + $0x68] sm:$0x1]
        %v9371 = vsel %vm9345, 0, %v9370
        %9372 = vst [vmem:[#allocation2 + $0x68] sm:$0x1] %v9371
        %v9373 = vld [vmem:[#allocation2 + $0x74] sm:$0x1]
        %v9374 = vsel %vm9345, 0, %v9373
        %9375 = vst [vmem:[#allocation2 + $0x74] sm:$0x1] %v9374
        %p9376 = scmp.eq.s32.totalorder %s24, 0
        // Predicated region
        $region41: #{backbone_forward.1} parent=39 // pred_check
          %p9377 = pneg %p9376
        $region42: #{backbone_forward.1} parent=39 // pred_check_branch
          %9379 = sbr.rel (%p9377) target = $region44
        $region43: #{backbone_forward.1} parent=39 // pred_region
          %9380 = vst.msk [vmem:[#allocation2] sm:$0xf] %vm9245, 0
          %9381 = vst.msk [vmem:[#allocation2 + $0x4] sm:$0xf] %vm9245, 0
          %vm9382 = vcmask 253952
          %9383 = vst.msk [vmem:[#allocation2 + $0x8] sm:$0x1] %vm9382, 0
        $region44: #{backbone_forward.1} parent=39 // pred_fallthru
          _
        %p9384 = scmp.eq.s32.totalorder %s24, 1
        // Predicated region
        $region45: #{backbone_forward.1} parent=39 // pred_check
          %p9385 = pneg %p9384
        $region46: #{backbone_forward.1} parent=39 // pred_check_branch
          %9387 = sbr.rel (%p9385) target = $region48
        $region47: #{backbone_forward.1} parent=39 // pred_region
          %s9388 = scalar_lea.vmem [#allocation2], 108
          %9389 = vst.msk [vmem:[%s9388] sm:$0xf] %vm9245, 0
          %9390 = vst.msk [vmem:[%s9388 + $0x4] sm:$0xf] %vm9245, 0
          %vm9391 = vcmask 253952
          %9392 = vst.msk [vmem:[%s9388 + $0x8] sm:$0x1] %vm9391, 0
        $region48: #{backbone_forward.1} parent=39 // pred_fallthru
          _
        %v9393 = vld [vmem:[#allocation2] sm:$0xf]
        %v9394 = vld [vmem:[#allocation2 + $0x4] sm:$0xf]
        %v9395 = vld [vmem:[#allocation2 + $0xc] sm:$0xf]
        %v9396 = vld [vmem:[#allocation2 + $0x10] sm:$0xf]
        %v9397 = vld [vmem:[#allocation2 + $0x18] sm:$0xf]
        %v9398 = vld [vmem:[#allocation2 + $0x1c] sm:$0xf]
        %v9399 = vld [vmem:[#allocation2 + $0x24] sm:$0xf]
        %v9400 = vld [vmem:[#allocation2 + $0x28] sm:$0xf]
        %v9401 = vld [vmem:[#allocation2 + $0x30] sm:$0xf]
        %v9402 = vld [vmem:[#allocation2 + $0x34] sm:$0xf]
        %v9403 = vld [vmem:[#allocation2 + $0x3c] sm:$0xf]
        %v9404 = vld [vmem:[#allocation2 + $0x40] sm:$0xf]
        %v9405 = vld [vmem:[#allocation2 + $0x48] sm:$0xf]
        %v9406 = vld [vmem:[#allocation2 + $0x4c] sm:$0xf]
        %v9407 = vld [vmem:[#allocation2 + $0x54] sm:$0xf]
        %v9408 = vld [vmem:[#allocation2 + $0x58] sm:$0xf]
        %v9409 = vld [vmem:[%s3] sm:$0xf]
        %v9410 = vld [vmem:[%s3 + $0x4] sm:$0xf]
        %v9411 = vld [vmem:[%s3 + $0x8] sm:$0xf]
        %v9412 = vld [vmem:[%s3 + $0xc] sm:$0xf]
        %v9413 = vld [vmem:[#allocation2 + $0x8] sm:$0x1]
        %v9414 = vld [vmem:[#allocation2 + $0x14] sm:$0x1]
        %v9415 = vld [vmem:[#allocation2 + $0x20] sm:$0x1]
        %v9416 = vld [vmem:[#allocation2 + $0x2c] sm:$0x1]
        %v9417 = vld [vmem:[#allocation2 + $0x38] sm:$0x1]
        %v9418 = vld [vmem:[#allocation2 + $0x44] sm:$0x1]
        %v9419 = vld [vmem:[#allocation2 + $0x50] sm:$0x1]
        %v9420 = vld [vmem:[#allocation2 + $0x5c] sm:$0x1]
        %v9422 = vshrl.u32 %v9393, 16
        %v9424 = vrot.slane %v9422, 4
        %v9425 = vshll.u32 %v9393, 16
        %v9427 = vrot.slane %v9425, 5
        %v9428 = vor.u32 %v9424, %v9427
        %v9429 = vrot.slane %v9428, 4
        %v9431 = vshll.u32 %v9394, 16
        %v9433 = vrot.slane %v9431, 5
        %v9434 = vsel %vm285, %v9429, %v9433
        %v9435 = vshrl.u32 %v9394, 16
        %v9437 = vrot.slane %v9435, 4
        %v9438 = vor.u32 %v9437, %v9433
        %v9439 = vrot.slane %v9438, 4
        %v9441 = vshll.u32 %v9413, 16
        %v9443 = vrot.slane %v9441, 5
        %v9444 = vsel %vm285, %v9439, %v9443
        %v9446 = vshrl.u32 %v9395, 16
        %v9448 = vrot.slane %v9446, 4
        %v9449 = vshll.u32 %v9395, 16
        %v9451 = vrot.slane %v9449, 5
        %v9452 = vor.u32 %v9448, %v9451
        %v9453 = vrot.slane %v9452, 4
        %v9455 = vshll.u32 %v9396, 16
        %v9457 = vrot.slane %v9455, 5
        %v9458 = vsel %vm285, %v9453, %v9457
        %v9459 = vshrl.u32 %v9396, 16
        %v9461 = vrot.slane %v9459, 4
        %v9462 = vor.u32 %v9461, %v9457
        %v9463 = vrot.slane %v9462, 4
        %v9465 = vshll.u32 %v9414, 16
        %v9467 = vrot.slane %v9465, 5
        %v9468 = vsel %vm285, %v9463, %v9467
        %v9470 = vshrl.u32 %v9397, 16
        %v9472 = vrot.slane %v9470, 4
        %v9473 = vshll.u32 %v9397, 16
        %v9475 = vrot.slane %v9473, 5
        %v9476 = vor.u32 %v9472, %v9475
        %v9477 = vrot.slane %v9476, 4
        %v9479 = vshll.u32 %v9398, 16
        %v9481 = vrot.slane %v9479, 5
        %v9482 = vsel %vm285, %v9477, %v9481
        %v9483 = vshrl.u32 %v9398, 16
        %v9485 = vrot.slane %v9483, 4
        %v9486 = vor.u32 %v9485, %v9481
        %v9487 = vrot.slane %v9486, 4
        %v9489 = vshll.u32 %v9415, 16
        %v9491 = vrot.slane %v9489, 5
        %v9492 = vsel %vm285, %v9487, %v9491
        %v9494 = vshrl.u32 %v9399, 16
        %v9496 = vrot.slane %v9494, 4
        %v9497 = vshll.u32 %v9399, 16
        %v9499 = vrot.slane %v9497, 5
        %v9500 = vor.u32 %v9496, %v9499
        %v9501 = vrot.slane %v9500, 4
        %v9503 = vshll.u32 %v9400, 16
        %v9505 = vrot.slane %v9503, 5
        %v9506 = vsel %vm285, %v9501, %v9505
        %v9507 = vshrl.u32 %v9400, 16
        %v9509 = vrot.slane %v9507, 4
        %v9510 = vor.u32 %v9509, %v9505
        %v9511 = vrot.slane %v9510, 4
        %v9513 = vshll.u32 %v9416, 16
        %v9515 = vrot.slane %v9513, 5
        %v9516 = vsel %vm285, %v9511, %v9515
        %v9518 = vshrl.u32 %v9401, 16
        %v9520 = vrot.slane %v9518, 4
        %v9521 = vshll.u32 %v9401, 16
        %v9523 = vrot.slane %v9521, 5
        %v9524 = vor.u32 %v9520, %v9523
        %v9525 = vrot.slane %v9524, 4
        %v9527 = vshll.u32 %v9402, 16
        %v9529 = vrot.slane %v9527, 5
        %v9530 = vsel %vm285, %v9525, %v9529
        %v9531 = vshrl.u32 %v9402, 16
        %v9533 = vrot.slane %v9531, 4
        %v9534 = vor.u32 %v9533, %v9529
        %v9535 = vrot.slane %v9534, 4
        %v9537 = vshll.u32 %v9417, 16
        %v9539 = vrot.slane %v9537, 5
        %v9540 = vsel %vm285, %v9535, %v9539
        %v9542 = vshrl.u32 %v9403, 16
        %v9544 = vrot.slane %v9542, 4
        %v9545 = vshll.u32 %v9403, 16
        %v9547 = vrot.slane %v9545, 5
        %v9548 = vor.u32 %v9544, %v9547
        %v9549 = vrot.slane %v9548, 4
        %v9551 = vshll.u32 %v9404, 16
        %v9553 = vrot.slane %v9551, 5
        %v9554 = vsel %vm285, %v9549, %v9553
        %v9555 = vshrl.u32 %v9404, 16
        %v9557 = vrot.slane %v9555, 4
        %v9558 = vor.u32 %v9557, %v9553
        %v9559 = vrot.slane %v9558, 4
        %v9561 = vshll.u32 %v9418, 16
        %v9563 = vrot.slane %v9561, 5
        %v9564 = vsel %vm285, %v9559, %v9563
        %v9566 = vshrl.u32 %v9405, 16
        %v9568 = vrot.slane %v9566, 4
        %v9569 = vshll.u32 %v9405, 16
        %v9571 = vrot.slane %v9569, 5
        %v9572 = vor.u32 %v9568, %v9571
        %v9573 = vrot.slane %v9572, 4
        %v9575 = vshll.u32 %v9406, 16
        %v9577 = vrot.slane %v9575, 5
        %v9578 = vsel %vm285, %v9573, %v9577
        %v9579 = vshrl.u32 %v9406, 16
        %v9581 = vrot.slane %v9579, 4
        %v9582 = vor.u32 %v9581, %v9577
        %v9583 = vrot.slane %v9582, 4
        %v9585 = vshll.u32 %v9419, 16
        %v9587 = vrot.slane %v9585, 5
        %v9588 = vsel %vm285, %v9583, %v9587
        %v9590 = vshrl.u32 %v9407, 16
        %v9592 = vrot.slane %v9590, 4
        %v9593 = vshll.u32 %v9407, 16
        %v9595 = vrot.slane %v9593, 5
        %v9596 = vor.u32 %v9592, %v9595
        %v9597 = vrot.slane %v9596, 4
        %v9599 = vshll.u32 %v9408, 16
        %v9601 = vrot.slane %v9599, 5
        %v9602 = vsel %vm285, %v9597, %v9601
        %v9603 = vshrl.u32 %v9408, 16
        %v9605 = vrot.slane %v9603, 4
        %v9606 = vor.u32 %v9605, %v9601
        %v9607 = vrot.slane %v9606, 4
        %v9609 = vshll.u32 %v9420, 16
        %v9611 = vrot.slane %v9609, 5
        %v9612 = vsel %vm285, %v9607, %v9611
        %s9613 = scalar_lea.vmem %s3, 16
        %v9614 = vld [vmem:[%s9613] sm:$0xf]
        %v9615 = vld [vmem:[%s9613 + $0x4] sm:$0xf]
        %v9616 = vld [vmem:[%s9613 + $0x8] sm:$0xf]
        %v9617 = vld [vmem:[%s9613 + $0xc] sm:$0xf]
        %v9618 = vunpack.c.l.b16 %v9434
        %v9619 = vunpack.c.l.b16 %v9444
        %v9620 = vunpack.c.l.b16 %v9458
        %v9621 = vunpack.c.l.b16 %v9468
        %v9622 = vunpack.c.l.b16 %v9482
        %v9623 = vunpack.c.l.b16 %v9492
        %v9624 = vunpack.c.l.b16 %v9506
        %v9625 = vunpack.c.l.b16 %v9516
        %v9626 = vunpack.c.l.b16 %v9530
        %v9627 = vunpack.c.l.b16 %v9540
        %v9628 = vunpack.c.l.b16 %v9554
        %v9629 = vunpack.c.l.b16 %v9564
        %v9630 = vunpack.c.l.b16 %v9578
        %v9631 = vunpack.c.l.b16 %v9588
        %v9632 = vunpack.c.l.b16 %v9602
        %v9633 = vunpack.c.l.b16 %v9612
        %v9634 = vpack.c.b16 %v9619, %v9618
        %v9635 = vpack.c.b16 %v9621, %v9620
        %v9636 = vpack.c.b16 %v9623, %v9622
        %v9637 = vpack.c.b16 %v9625, %v9624
        %v9638 = vpack.c.b16 %v9627, %v9626
        %v9639 = vpack.c.b16 %v9629, %v9628
        %v9640 = vpack.c.b16 %v9631, %v9630
        %v9641 = vpack.c.b16 %v9633, %v9632
        %v9646 = vunpack.c.l.b16 %v9614
        %v9647 = vunpack.c.l.b16 %v9615
        %v9648 = vunpack.c.l.b16 %v9616
        %v9649 = vunpack.c.l.b16 %v9617
        %v9650 = vpack.c.b16 %v9647, %v9646
        %v9651 = vpack.c.b16 %v9649, %v9648
        %vm9654 = vcmask 261120
        %v9656 = vsel %vm9654, %v9634, 0
        %v9659 = vsel %vm9654, %v9635, 0
        %v9662 = vsel %vm9654, %v9636, 0
        %v9665 = vsel %vm9654, %v9637, 0
        %v9668 = vsel %vm9654, %v9638, 0
        %v9671 = vsel %vm9654, %v9639, 0
        %v9674 = vsel %vm9654, %v9640, 0
        %v9677 = vsel %vm9654, %v9641, 0
        %9679 = vmatprep.subr.bf16.mxu0 0
        %9680 = vmatpush1.bf16.msra.mxu0 %v9650
        %9681 = vmatprep.subr.bf16.mxu0 0
        %9682 = vmatpush1.bf16.msra.mxu0 %v9651
        %9683 = vmatprep.subr.bf16.mxu0 0
        %9684 = vmatpush1.bf16.msra.mxu0 0
        %9685 = vmatprep.subr.bf16.mxu0 0
        %9686 = vmatpush1.bf16.msra.mxu0 0
        %9687 = vmatprep.subr.bf16.mxu0 0
        %9688 = vmatpush1.bf16.msra.mxu0 0
        %9689 = vmatprep.subr.bf16.mxu0 0
        %9690 = vmatpush1.bf16.msra.mxu0 0
        %9691 = vmatprep.subr.bf16.mxu0 0
        %9692 = vmatpush1.bf16.msra.mxu0 0
        %9693 = vmatprep.subr.bf16.mxu0 0
        %9694 = vmatpush1.bf16.msra.mxu0 0
        %9695 = vmatprep.subr.bf16.mxu0 0
        %9696 = vmatpush1.bf16.msra.mxu0 0
        %9697 = vmatprep.subr.bf16.mxu0 0
        %9698 = vmatpush1.bf16.msra.mxu0 0
        %9699 = vmatprep.subr.bf16.mxu0 0
        %9700 = vmatpush1.bf16.msra.mxu0 0
        %9701 = vmatprep.subr.bf16.mxu0 0
        %9702 = vmatpush1.bf16.msra.mxu0 0
        %9703 = vmatprep.subr.bf16.mxu0 0
        %9704 = vmatpush1.bf16.msra.mxu0 0
        %9705 = vmatprep.subr.bf16.mxu0 0
        %9706 = vmatpush1.bf16.msra.mxu0 0
        %9707 = vmatprep.subr.bf16.mxu0 0
        %9708 = vmatpush1.bf16.msra.mxu0 0
        %9709 = vmatprep.subr.bf16.mxu0 0
        %9710 = vmatpush1.bf16.msra.mxu0 0
        %9711 = vmatprep.mubr.bf16.mxu0 0
        %9712 = vmatmul.mubr.bf16.gmra.mrb[0].mxu0 %v9656
        %v9713 = vpop.f32.mrb[0].mxu0
        %v9714 = vadd.f32 0.0, %v9713
        %v9715 = vpop.f32.mrb[0].mxu0
        %v9716 = vpop.f32.mrb[0].mxu0
        %v9717 = vadd.f32 0.0, %v9716
        %v9718 = vpop.f32.mrb[0].mxu0
        %9719 = vmatprep.mubr.bf16.mxu0 0
        %9720 = vmatmul.mubr.bf16.gmra.mrb[0].mxu0 %v9659
        %v9721 = vpop.f32.mrb[0].mxu0
        %v9722 = vadd.f32 0.0, %v9721
        %v9723 = vpop.f32.mrb[0].mxu0
        %v9724 = vpop.f32.mrb[0].mxu0
        %v9725 = vadd.f32 0.0, %v9724
        %v9726 = vpop.f32.mrb[0].mxu0
        %9727 = vmatprep.mubr.bf16.mxu0 0
        %9728 = vmatmul.mubr.bf16.gmra.mrb[0].mxu0 %v9662
        %v9729 = vpop.f32.mrb[0].mxu0
        %v9730 = vadd.f32 0.0, %v9729
        %v9731 = vpop.f32.mrb[0].mxu0
        %v9732 = vpop.f32.mrb[0].mxu0
        %v9733 = vadd.f32 0.0, %v9732
        %v9734 = vpop.f32.mrb[0].mxu0
        %9735 = vmatprep.mubr.bf16.mxu0 0
        %9736 = vmatmul.mubr.bf16.gmra.mrb[0].mxu0 %v9665
        %v9737 = vpop.f32.mrb[0].mxu0
        %v9738 = vadd.f32 0.0, %v9737
        %v9739 = vpop.f32.mrb[0].mxu0
        %v9740 = vpop.f32.mrb[0].mxu0
        %v9741 = vadd.f32 0.0, %v9740
        %v9742 = vpop.f32.mrb[0].mxu0
        %9743 = vmatprep.mubr.bf16.mxu0 0
        %9744 = vmatmul.mubr.bf16.gmra.mrb[0].mxu0 %v9668
        %v9745 = vpop.f32.mrb[0].mxu0
        %v9746 = vadd.f32 0.0, %v9745
        %v9747 = vpop.f32.mrb[0].mxu0
        %v9748 = vpop.f32.mrb[0].mxu0
        %v9749 = vadd.f32 0.0, %v9748
        %v9750 = vpop.f32.mrb[0].mxu0
        %9751 = vmatprep.mubr.bf16.mxu0 0
        %9752 = vmatmul.mubr.bf16.gmra.mrb[0].mxu0 %v9671
        %v9753 = vpop.f32.mrb[0].mxu0
        %v9754 = vadd.f32 0.0, %v9753
        %v9755 = vpop.f32.mrb[0].mxu0
        %v9756 = vpop.f32.mrb[0].mxu0
        %v9757 = vadd.f32 0.0, %v9756
        %v9758 = vpop.f32.mrb[0].mxu0
        %9759 = vmatprep.mubr.bf16.mxu0 0
        %9760 = vmatmul.mubr.bf16.gmra.mrb[0].mxu0 %v9674
        %v9761 = vpop.f32.mrb[0].mxu0
        %v9762 = vadd.f32 0.0, %v9761
        %v9763 = vpop.f32.mrb[0].mxu0
        %v9764 = vpop.f32.mrb[0].mxu0
        %v9765 = vadd.f32 0.0, %v9764
        %v9766 = vpop.f32.mrb[0].mxu0
        %9767 = vmatprep.mubr.bf16.mxu0 0
        %9768 = vmatmul.mubr.bf16.gmra.mrb[0].mxu0 %v9677
        %v9769 = vpop.f32.mrb[0].mxu0
        %v9770 = vadd.f32 0.0, %v9769
        %v9771 = vpop.f32.mrb[0].mxu0
        %v9772 = vpop.f32.mrb[0].mxu0
        %v9773 = vadd.f32 0.0, %v9772
        %v9774 = vpop.f32.mrb[0].mxu0
        %9775 = vdwg.mxu0
        %v9792 = vunpack.c.l.b16 %v9393
        %v9793 = vunpack.c.l.b16 %v9394
        %v9794 = vunpack.c.l.b16 %v9395
        %v9795 = vunpack.c.l.b16 %v9396
        %v9796 = vunpack.c.l.b16 %v9397
        %v9797 = vunpack.c.l.b16 %v9398
        %v9798 = vunpack.c.l.b16 %v9399
        %v9799 = vunpack.c.l.b16 %v9400
        %v9800 = vunpack.c.l.b16 %v9401
        %v9801 = vunpack.c.l.b16 %v9402
        %v9802 = vunpack.c.l.b16 %v9403
        %v9803 = vunpack.c.l.b16 %v9404
        %v9804 = vunpack.c.l.b16 %v9405
        %v9805 = vunpack.c.l.b16 %v9406
        %v9806 = vunpack.c.l.b16 %v9407
        %v9807 = vunpack.c.l.b16 %v9408
        %v9808 = vpack.c.b16 %v9793, %v9792
        %v9809 = vpack.c.b16 %v9795, %v9794
        %v9810 = vpack.c.b16 %v9797, %v9796
        %v9811 = vpack.c.b16 %v9799, %v9798
        %v9812 = vpack.c.b16 %v9801, %v9800
        %v9813 = vpack.c.b16 %v9803, %v9802
        %v9814 = vpack.c.b16 %v9805, %v9804
        %v9815 = vpack.c.b16 %v9807, %v9806
        %v9820 = vunpack.c.l.b16 %v9409
        %v9821 = vunpack.c.l.b16 %v9410
        %v9822 = vunpack.c.l.b16 %v9411
        %v9823 = vunpack.c.l.b16 %v9412
        %v9824 = vpack.c.b16 %v9821, %v9820
        %v9825 = vpack.c.b16 %v9823, %v9822
        %v9829 = vsel %vm9654, %v9808, 0
        %v9832 = vsel %vm9654, %v9809, 0
        %v9835 = vsel %vm9654, %v9810, 0
        %v9838 = vsel %vm9654, %v9811, 0
        %v9841 = vsel %vm9654, %v9812, 0
        %v9844 = vsel %vm9654, %v9813, 0
        %v9847 = vsel %vm9654, %v9814, 0
        %v9850 = vsel %vm9654, %v9815, 0
        %9852 = vmatprep.subr.bf16.mxu0 0
        %9853 = vmatpush1.bf16.msra.mxu0 %v9824
        %9854 = vmatprep.subr.bf16.mxu0 0
        %9855 = vmatpush1.bf16.msra.mxu0 %v9825
        %9856 = vmatprep.subr.bf16.mxu0 0
        %9857 = vmatpush1.bf16.msra.mxu0 0
        %9858 = vmatprep.subr.bf16.mxu0 0
        %9859 = vmatpush1.bf16.msra.mxu0 0
        %9860 = vmatprep.subr.bf16.mxu0 0
        %9861 = vmatpush1.bf16.msra.mxu0 0
        %9862 = vmatprep.subr.bf16.mxu0 0
        %9863 = vmatpush1.bf16.msra.mxu0 0
        %9864 = vmatprep.subr.bf16.mxu0 0
        %9865 = vmatpush1.bf16.msra.mxu0 0
        %9866 = vmatprep.subr.bf16.mxu0 0
        %9867 = vmatpush1.bf16.msra.mxu0 0
        %9868 = vmatprep.subr.bf16.mxu0 0
        %9869 = vmatpush1.bf16.msra.mxu0 0
        %9870 = vmatprep.subr.bf16.mxu0 0
        %9871 = vmatpush1.bf16.msra.mxu0 0
        %9872 = vmatprep.subr.bf16.mxu0 0
        %9873 = vmatpush1.bf16.msra.mxu0 0
        %9874 = vmatprep.subr.bf16.mxu0 0
        %9875 = vmatpush1.bf16.msra.mxu0 0
        %9876 = vmatprep.subr.bf16.mxu0 0
        %9877 = vmatpush1.bf16.msra.mxu0 0
        %9878 = vmatprep.subr.bf16.mxu0 0
        %9879 = vmatpush1.bf16.msra.mxu0 0
        %9880 = vmatprep.subr.bf16.mxu0 0
        %9881 = vmatpush1.bf16.msra.mxu0 0
        %9882 = vmatprep.subr.bf16.mxu0 0
        %9883 = vmatpush1.bf16.msra.mxu0 0
        %9884 = vmatprep.mubr.bf16.mxu0 0
        %9885 = vmatmul.mubr.bf16.gmra.mrb[0].mxu0 %v9829
        %v9886 = vpop.f32.mrb[0].mxu0
        %v9887 = vadd.f32 %v9714, %v9886
        %v9888 = vpop.f32.mrb[0].mxu0
        %v9889 = vpop.f32.mrb[0].mxu0
        %v9890 = vadd.f32 %v9717, %v9889
        %v9891 = vpop.f32.mrb[0].mxu0
        %9892 = vmatprep.mubr.bf16.mxu0 0
        %9893 = vmatmul.mubr.bf16.gmra.mrb[0].mxu0 %v9832
        %v9894 = vpop.f32.mrb[0].mxu0
        %v9895 = vadd.f32 %v9722, %v9894
        %v9896 = vpop.f32.mrb[0].mxu0
        %v9897 = vpop.f32.mrb[0].mxu0
        %v9898 = vadd.f32 %v9725, %v9897
        %v9899 = vpop.f32.mrb[0].mxu0
        %9900 = vmatprep.mubr.bf16.mxu0 0
        %9901 = vmatmul.mubr.bf16.gmra.mrb[0].mxu0 %v9835
        %v9902 = vpop.f32.mrb[0].mxu0
        %v9903 = vadd.f32 %v9730, %v9902
        %v9904 = vpop.f32.mrb[0].mxu0
        %v9905 = vpop.f32.mrb[0].mxu0
        %v9906 = vadd.f32 %v9733, %v9905
        %v9907 = vpop.f32.mrb[0].mxu0
        %9908 = vmatprep.mubr.bf16.mxu0 0
        %9909 = vmatmul.mubr.bf16.gmra.mrb[0].mxu0 %v9838
        %v9910 = vpop.f32.mrb[0].mxu0
        %v9911 = vadd.f32 %v9738, %v9910
        %v9912 = vpop.f32.mrb[0].mxu0
        %v9913 = vpop.f32.mrb[0].mxu0
        %v9914 = vadd.f32 %v9741, %v9913
        %v9915 = vpop.f32.mrb[0].mxu0
        %9916 = vmatprep.mubr.bf16.mxu0 0
        %9917 = vmatmul.mubr.bf16.gmra.mrb[0].mxu0 %v9841
        %v9918 = vpop.f32.mrb[0].mxu0
        %v9919 = vadd.f32 %v9746, %v9918
        %v9920 = vpop.f32.mrb[0].mxu0
        %v9921 = vpop.f32.mrb[0].mxu0
        %v9922 = vadd.f32 %v9749, %v9921
        %v9923 = vpop.f32.mrb[0].mxu0
        %9924 = vmatprep.mubr.bf16.mxu0 0
        %9925 = vmatmul.mubr.bf16.gmra.mrb[0].mxu0 %v9844
        %v9926 = vpop.f32.mrb[0].mxu0
        %v9927 = vadd.f32 %v9754, %v9926
        %v9928 = vpop.f32.mrb[0].mxu0
        %v9929 = vpop.f32.mrb[0].mxu0
        %v9930 = vadd.f32 %v9757, %v9929
        %v9931 = vpop.f32.mrb[0].mxu0
        %9932 = vmatprep.mubr.bf16.mxu0 0
        %9933 = vmatmul.mubr.bf16.gmra.mrb[0].mxu0 %v9847
        %v9934 = vpop.f32.mrb[0].mxu0
        %v9935 = vadd.f32 %v9762, %v9934
        %v9936 = vpop.f32.mrb[0].mxu0
        %v9937 = vpop.f32.mrb[0].mxu0
        %v9938 = vadd.f32 %v9765, %v9937
        %v9939 = vpop.f32.mrb[0].mxu0
        %9940 = vmatprep.mubr.bf16.mxu0 0
        %9941 = vmatmul.mubr.bf16.gmra.mrb[0].mxu0 %v9850
        %v9942 = vpop.f32.mrb[0].mxu0
        %v9943 = vadd.f32 %v9770, %v9942
        %v9944 = vpop.f32.mrb[0].mxu0
        %v9945 = vpop.f32.mrb[0].mxu0
        %v9946 = vadd.f32 %v9773, %v9945
        %v9947 = vpop.f32.mrb[0].mxu0
        %9948 = vdwg.mxu0
        %v9949 = vld [vmem:[#allocation2] sm:$0xe]
        %v9950 = vld [vmem:[#allocation2 + $0xc] sm:$0xe]
        %v9951 = vld [vmem:[#allocation2 + $0x18] sm:$0xe]
        %v9952 = vld [vmem:[#allocation2 + $0x24] sm:$0xe]
        %v9953 = vld [vmem:[#allocation2 + $0x30] sm:$0xe]
        %v9954 = vld [vmem:[#allocation2 + $0x3c] sm:$0xe]
        %v9955 = vld [vmem:[#allocation2 + $0x48] sm:$0xe]
        %v9956 = vld [vmem:[#allocation2 + $0x54] sm:$0xe]
        %v9973 = vrot.slane %v9949, 5
        %v9974 = vrot.slane %v9973, 4
        %v9975 = vrot.slane %v9394, 5
        %v9976 = vsel %vm934, %v9974, %v9975
        %v9977 = vrot.slane %v9975, 4
        %v9978 = vrot.slane %v9413, 5
        %v9979 = vsel %vm934, %v9977, %v9978
        %v9980 = vrot.slane %v9950, 5
        %v9981 = vrot.slane %v9980, 4
        %v9982 = vrot.slane %v9396, 5
        %v9983 = vsel %vm934, %v9981, %v9982
        %v9984 = vrot.slane %v9982, 4
        %v9985 = vrot.slane %v9414, 5
        %v9986 = vsel %vm934, %v9984, %v9985
        %v9987 = vrot.slane %v9951, 5
        %v9988 = vrot.slane %v9987, 4
        %v9989 = vrot.slane %v9398, 5
        %v9990 = vsel %vm934, %v9988, %v9989
        %v9991 = vrot.slane %v9989, 4
        %v9992 = vrot.slane %v9415, 5
        %v9993 = vsel %vm934, %v9991, %v9992
        %v9994 = vrot.slane %v9952, 5
        %v9995 = vrot.slane %v9994, 4
        %v9996 = vrot.slane %v9400, 5
        %v9997 = vsel %vm934, %v9995, %v9996
        %v9998 = vrot.slane %v9996, 4
        %v9999 = vrot.slane %v9416, 5
        %v10000 = vsel %vm934, %v9998, %v9999
        %v10001 = vrot.slane %v9953, 5
        %v10002 = vrot.slane %v10001, 4
        %v10003 = vrot.slane %v9402, 5
        %v10004 = vsel %vm934, %v10002, %v10003
        %v10005 = vrot.slane %v10003, 4
        %v10006 = vrot.slane %v9417, 5
        %v10007 = vsel %vm934, %v10005, %v10006
        %v10008 = vrot.slane %v9954, 5
        %v10009 = vrot.slane %v10008, 4
        %v10010 = vrot.slane %v9404, 5
        %v10011 = vsel %vm934, %v10009, %v10010
        %v10012 = vrot.slane %v10010, 4
        %v10013 = vrot.slane %v9418, 5
        %v10014 = vsel %vm934, %v10012, %v10013
        %v10015 = vrot.slane %v9955, 5
        %v10016 = vrot.slane %v10015, 4
        %v10017 = vrot.slane %v9406, 5
        %v10018 = vsel %vm934, %v10016, %v10017
        %v10019 = vrot.slane %v10017, 4
        %v10020 = vrot.slane %v9419, 5
        %v10021 = vsel %vm934, %v10019, %v10020
        %v10022 = vrot.slane %v9956, 5
        %v10023 = vrot.slane %v10022, 4
        %v10024 = vrot.slane %v9408, 5
        %v10025 = vsel %vm934, %v10023, %v10024
        %v10026 = vrot.slane %v10024, 4
        %v10027 = vrot.slane %v9420, 5
        %v10028 = vsel %vm934, %v10026, %v10027
        %s10029 = scalar_lea.vmem %s3, 32
        %v10030 = vld [vmem:[%s10029] sm:$0xf]
        %v10031 = vld [vmem:[%s10029 + $0x4] sm:$0xf]
        %v10032 = vld [vmem:[%s10029 + $0x8] sm:$0xf]
        %v10033 = vld [vmem:[%s10029 + $0xc] sm:$0xf]
        %v10034 = vunpack.c.l.b16 %v9976
        %v10035 = vunpack.c.l.b16 %v9979
        %v10036 = vunpack.c.l.b16 %v9983
        %v10037 = vunpack.c.l.b16 %v9986
        %v10038 = vunpack.c.l.b16 %v9990
        %v10039 = vunpack.c.l.b16 %v9993
        %v10040 = vunpack.c.l.b16 %v9997
        %v10041 = vunpack.c.l.b16 %v10000
        %v10042 = vunpack.c.l.b16 %v10004
        %v10043 = vunpack.c.l.b16 %v10007
        %v10044 = vunpack.c.l.b16 %v10011
        %v10045 = vunpack.c.l.b16 %v10014
        %v10046 = vunpack.c.l.b16 %v10018
        %v10047 = vunpack.c.l.b16 %v10021
        %v10048 = vunpack.c.l.b16 %v10025
        %v10049 = vunpack.c.l.b16 %v10028
        %v10050 = vpack.c.b16 %v10035, %v10034
        %v10051 = vpack.c.b16 %v10037, %v10036
        %v10052 = vpack.c.b16 %v10039, %v10038
        %v10053 = vpack.c.b16 %v10041, %v10040
        %v10054 = vpack.c.b16 %v10043, %v10042
        %v10055 = vpack.c.b16 %v10045, %v10044
        %v10056 = vpack.c.b16 %v10047, %v10046
        %v10057 = vpack.c.b16 %v10049, %v10048
        %v10062 = vunpack.c.l.b16 %v10030
        %v10063 = vunpack.c.l.b16 %v10031
        %v10064 = vunpack.c.l.b16 %v10032
        %v10065 = vunpack.c.l.b16 %v10033
        %v10066 = vpack.c.b16 %v10063, %v10062
        %v10067 = vpack.c.b16 %v10065, %v10064
        %v10071 = vsel %vm9654, %v10050, 0
        %v10074 = vsel %vm9654, %v10051, 0
        %v10077 = vsel %vm9654, %v10052, 0
        %v10080 = vsel %vm9654, %v10053, 0
        %v10083 = vsel %vm9654, %v10054, 0
        %v10086 = vsel %vm9654, %v10055, 0
        %v10089 = vsel %vm9654, %v10056, 0
        %v10092 = vsel %vm9654, %v10057, 0
        %10094 = vmatprep.subr.bf16.mxu0 0
        %10095 = vmatpush1.bf16.msra.mxu0 %v10066
        %10096 = vmatprep.subr.bf16.mxu0 0
        %10097 = vmatpush1.bf16.msra.mxu0 %v10067
        %10098 = vmatprep.subr.bf16.mxu0 0
        %10099 = vmatpush1.bf16.msra.mxu0 0
        %10100 = vmatprep.subr.bf16.mxu0 0
        %10101 = vmatpush1.bf16.msra.mxu0 0
        %10102 = vmatprep.subr.bf16.mxu0 0
        %10103 = vmatpush1.bf16.msra.mxu0 0
        %10104 = vmatprep.subr.bf16.mxu0 0
        %10105 = vmatpush1.bf16.msra.mxu0 0
        %10106 = vmatprep.subr.bf16.mxu0 0
        %10107 = vmatpush1.bf16.msra.mxu0 0
        %10108 = vmatprep.subr.bf16.mxu0 0
        %10109 = vmatpush1.bf16.msra.mxu0 0
        %10110 = vmatprep.subr.bf16.mxu0 0
        %10111 = vmatpush1.bf16.msra.mxu0 0
        %10112 = vmatprep.subr.bf16.mxu0 0
        %10113 = vmatpush1.bf16.msra.mxu0 0
        %10114 = vmatprep.subr.bf16.mxu0 0
        %10115 = vmatpush1.bf16.msra.mxu0 0
        %10116 = vmatprep.subr.bf16.mxu0 0
        %10117 = vmatpush1.bf16.msra.mxu0 0
        %10118 = vmatprep.subr.bf16.mxu0 0
        %10119 = vmatpush1.bf16.msra.mxu0 0
        %10120 = vmatprep.subr.bf16.mxu0 0
        %10121 = vmatpush1.bf16.msra.mxu0 0
        %10122 = vmatprep.subr.bf16.mxu0 0
        %10123 = vmatpush1.bf16.msra.mxu0 0
        %10124 = vmatprep.subr.bf16.mxu0 0
        %10125 = vmatpush1.bf16.msra.mxu0 0
        %10126 = vmatprep.mubr.bf16.mxu0 0
        %10127 = vmatmul.mubr.bf16.gmra.mrb[0].mxu0 %v10071
        %v10128 = vpop.f32.mrb[0].mxu0
        %v10129 = vadd.f32 0.0, %v10128
        %v10130 = vpop.f32.mrb[0].mxu0
        %v10131 = vpop.f32.mrb[0].mxu0
        %v10132 = vadd.f32 0.0, %v10131
        %v10133 = vpop.f32.mrb[0].mxu0
        %10134 = vmatprep.mubr.bf16.mxu0 0
        %10135 = vmatmul.mubr.bf16.gmra.mrb[0].mxu0 %v10074
        %v10136 = vpop.f32.mrb[0].mxu0
        %v10137 = vadd.f32 0.0, %v10136
        %v10138 = vpop.f32.mrb[0].mxu0
        %v10139 = vpop.f32.mrb[0].mxu0
        %v10140 = vadd.f32 0.0, %v10139
        %v10141 = vpop.f32.mrb[0].mxu0
        %10142 = vmatprep.mubr.bf16.mxu0 0
        %10143 = vmatmul.mubr.bf16.gmra.mrb[0].mxu0 %v10077
        %v10144 = vpop.f32.mrb[0].mxu0
        %v10145 = vadd.f32 0.0, %v10144
        %v10146 = vpop.f32.mrb[0].mxu0
        %v10147 = vpop.f32.mrb[0].mxu0
        %v10148 = vadd.f32 0.0, %v10147
        %v10149 = vpop.f32.mrb[0].mxu0
        %10150 = vmatprep.mubr.bf16.mxu0 0
        %10151 = vmatmul.mubr.bf16.gmra.mrb[0].mxu0 %v10080
        %v10152 = vpop.f32.mrb[0].mxu0
        %v10153 = vadd.f32 0.0, %v10152
        %v10154 = vpop.f32.mrb[0].mxu0
        %v10155 = vpop.f32.mrb[0].mxu0
        %v10156 = vadd.f32 0.0, %v10155
        %v10157 = vpop.f32.mrb[0].mxu0
        %10158 = vmatprep.mubr.bf16.mxu0 0
        %10159 = vmatmul.mubr.bf16.gmra.mrb[0].mxu0 %v10083
        %v10160 = vpop.f32.mrb[0].mxu0
        %v10161 = vadd.f32 0.0, %v10160
        %v10162 = vpop.f32.mrb[0].mxu0
        %v10163 = vpop.f32.mrb[0].mxu0
        %v10164 = vadd.f32 0.0, %v10163
        %v10165 = vpop.f32.mrb[0].mxu0
        %10166 = vmatprep.mubr.bf16.mxu0 0
        %10167 = vmatmul.mubr.bf16.gmra.mrb[0].mxu0 %v10086
        %v10168 = vpop.f32.mrb[0].mxu0
        %v10169 = vadd.f32 0.0, %v10168
        %v10170 = vpop.f32.mrb[0].mxu0
        %v10171 = vpop.f32.mrb[0].mxu0
        %v10172 = vadd.f32 0.0, %v10171
        %v10173 = vpop.f32.mrb[0].mxu0
        %10174 = vmatprep.mubr.bf16.mxu0 0
        %10175 = vmatmul.mubr.bf16.gmra.mrb[0].mxu0 %v10089
        %v10176 = vpop.f32.mrb[0].mxu0
        %v10177 = vadd.f32 0.0, %v10176
        %v10178 = vpop.f32.mrb[0].mxu0
        %v10179 = vpop.f32.mrb[0].mxu0
        %v10180 = vadd.f32 0.0, %v10179
        %v10181 = vpop.f32.mrb[0].mxu0
        %10182 = vmatprep.mubr.bf16.mxu0 0
        %10183 = vmatmul.mubr.bf16.gmra.mrb[0].mxu0 %v10092
        %v10184 = vpop.f32.mrb[0].mxu0
        %v10185 = vadd.f32 0.0, %v10184
        %v10186 = vpop.f32.mrb[0].mxu0
        %v10187 = vpop.f32.mrb[0].mxu0
        %v10188 = vadd.f32 0.0, %v10187
        %v10189 = vpop.f32.mrb[0].mxu0
        %10190 = vdwg.mxu0
        %v10191 = vadd.f32 %v9887, %v10129
        %v10192 = vadd.f32 %v9890, %v10132
        %v10193 = vadd.f32 %v9895, %v10137
        %v10194 = vadd.f32 %v9898, %v10140
        %v10195 = vadd.f32 %v9903, %v10145
        %v10196 = vadd.f32 %v9906, %v10148
        %v10197 = vadd.f32 %v9911, %v10153
        %v10198 = vadd.f32 %v9914, %v10156
        %v10199 = vadd.f32 %v9919, %v10161
        %v10200 = vadd.f32 %v9922, %v10164
        %v10201 = vadd.f32 %v9927, %v10169
        %v10202 = vadd.f32 %v9930, %v10172
        %v10203 = vadd.f32 %v9935, %v10177
        %v10204 = vadd.f32 %v9938, %v10180
        %v10205 = vadd.f32 %v9943, %v10185
        %v10206 = vadd.f32 %v9946, %v10188
        %s10207 = scalar_lea.vmem [#allocation2], 12
        %v10208 = vld [vmem:[%s10207] sm:$0xf]
        %v10209 = vld [vmem:[%s10207 + $0x4] sm:$0xf]
        %v10210 = vld [vmem:[%s10207 + $0xc] sm:$0xf]
        %v10211 = vld [vmem:[%s10207 + $0x10] sm:$0xf]
        %v10212 = vld [vmem:[%s10207 + $0x18] sm:$0xf]
        %v10213 = vld [vmem:[%s10207 + $0x1c] sm:$0xf]
        %v10214 = vld [vmem:[%s10207 + $0x24] sm:$0xf]
        %v10215 = vld [vmem:[%s10207 + $0x28] sm:$0xf]
        %v10216 = vld [vmem:[%s10207 + $0x30] sm:$0xf]
        %v10217 = vld [vmem:[%s10207 + $0x34] sm:$0xf]
        %v10218 = vld [vmem:[%s10207 + $0x3c] sm:$0xf]
        %v10219 = vld [vmem:[%s10207 + $0x40] sm:$0xf]
        %v10220 = vld [vmem:[%s10207 + $0x48] sm:$0xf]
        %v10221 = vld [vmem:[%s10207 + $0x4c] sm:$0xf]
        %v10222 = vld [vmem:[%s10207 + $0x54] sm:$0xf]
        %v10223 = vld [vmem:[%s10207 + $0x58] sm:$0xf]
        %s10224 = scalar_lea.vmem %s3, 48
        %v10225 = vld [vmem:[%s10224] sm:$0xf]
        %v10226 = vld [vmem:[%s10224 + $0x4] sm:$0xf]
        %v10227 = vld [vmem:[%s10224 + $0x8] sm:$0xf]
        %v10228 = vld [vmem:[%s10224 + $0xc] sm:$0xf]
        %v10245 = vunpack.c.l.b16 %v10208
        %v10246 = vunpack.c.l.b16 %v10209
        %v10247 = vunpack.c.l.b16 %v10210
        %v10248 = vunpack.c.l.b16 %v10211
        %v10249 = vunpack.c.l.b16 %v10212
        %v10250 = vunpack.c.l.b16 %v10213
        %v10251 = vunpack.c.l.b16 %v10214
        %v10252 = vunpack.c.l.b16 %v10215
        %v10253 = vunpack.c.l.b16 %v10216
        %v10254 = vunpack.c.l.b16 %v10217
        %v10255 = vunpack.c.l.b16 %v10218
        %v10256 = vunpack.c.l.b16 %v10219
        %v10257 = vunpack.c.l.b16 %v10220
        %v10258 = vunpack.c.l.b16 %v10221
        %v10259 = vunpack.c.l.b16 %v10222
        %v10260 = vunpack.c.l.b16 %v10223
        %v10261 = vpack.c.b16 %v10246, %v10245
        %v10262 = vpack.c.b16 %v10248, %v10247
        %v10263 = vpack.c.b16 %v10250, %v10249
        %v10264 = vpack.c.b16 %v10252, %v10251
        %v10265 = vpack.c.b16 %v10254, %v10253
        %v10266 = vpack.c.b16 %v10256, %v10255
        %v10267 = vpack.c.b16 %v10258, %v10257
        %v10268 = vpack.c.b16 %v10260, %v10259
        %v10273 = vunpack.c.l.b16 %v10225
        %v10274 = vunpack.c.l.b16 %v10226
        %v10275 = vunpack.c.l.b16 %v10227
        %v10276 = vunpack.c.l.b16 %v10228
        %v10277 = vpack.c.b16 %v10274, %v10273
        %v10278 = vpack.c.b16 %v10276, %v10275
        %v10282 = vsel %vm9654, %v10261, 0
        %v10285 = vsel %vm9654, %v10262, 0
        %v10288 = vsel %vm9654, %v10263, 0
        %v10291 = vsel %vm9654, %v10264, 0
        %v10294 = vsel %vm9654, %v10265, 0
        %v10297 = vsel %vm9654, %v10266, 0
        %v10300 = vsel %vm9654, %v10267, 0
        %v10303 = vsel %vm9654, %v10268, 0
        %10305 = vmatprep.subr.bf16.mxu0 0
        %10306 = vmatpush1.bf16.msra.mxu0 %v10277
        %10307 = vmatprep.subr.bf16.mxu0 0
        %10308 = vmatpush1.bf16.msra.mxu0 %v10278
        %10309 = vmatprep.subr.bf16.mxu0 0
        %10310 = vmatpush1.bf16.msra.mxu0 0
        %10311 = vmatprep.subr.bf16.mxu0 0
        %10312 = vmatpush1.bf16.msra.mxu0 0
        %10313 = vmatprep.subr.bf16.mxu0 0
        %10314 = vmatpush1.bf16.msra.mxu0 0
        %10315 = vmatprep.subr.bf16.mxu0 0
        %10316 = vmatpush1.bf16.msra.mxu0 0
        %10317 = vmatprep.subr.bf16.mxu0 0
        %10318 = vmatpush1.bf16.msra.mxu0 0
        %10319 = vmatprep.subr.bf16.mxu0 0
        %10320 = vmatpush1.bf16.msra.mxu0 0
        %10321 = vmatprep.subr.bf16.mxu0 0
        %10322 = vmatpush1.bf16.msra.mxu0 0
        %10323 = vmatprep.subr.bf16.mxu0 0
        %10324 = vmatpush1.bf16.msra.mxu0 0
        %10325 = vmatprep.subr.bf16.mxu0 0
        %10326 = vmatpush1.bf16.msra.mxu0 0
        %10327 = vmatprep.subr.bf16.mxu0 0
        %10328 = vmatpush1.bf16.msra.mxu0 0
        %10329 = vmatprep.subr.bf16.mxu0 0
        %10330 = vmatpush1.bf16.msra.mxu0 0
        %10331 = vmatprep.subr.bf16.mxu0 0
        %10332 = vmatpush1.bf16.msra.mxu0 0
        %10333 = vmatprep.subr.bf16.mxu0 0
        %10334 = vmatpush1.bf16.msra.mxu0 0
        %10335 = vmatprep.subr.bf16.mxu0 0
        %10336 = vmatpush1.bf16.msra.mxu0 0
        %10337 = vmatprep.mubr.bf16.mxu0 0
        %10338 = vmatmul.mubr.bf16.gmra.mrb[0].mxu0 %v10282
        %v10339 = vpop.f32.mrb[0].mxu0
        %v10340 = vadd.f32 0.0, %v10339
        %v10341 = vpop.f32.mrb[0].mxu0
        %v10342 = vpop.f32.mrb[0].mxu0
        %v10343 = vadd.f32 0.0, %v10342
        %v10344 = vpop.f32.mrb[0].mxu0
        %10345 = vmatprep.mubr.bf16.mxu0 0
        %10346 = vmatmul.mubr.bf16.gmra.mrb[0].mxu0 %v10285
        %v10347 = vpop.f32.mrb[0].mxu0
        %v10348 = vadd.f32 0.0, %v10347
        %v10349 = vpop.f32.mrb[0].mxu0
        %v10350 = vpop.f32.mrb[0].mxu0
        %v10351 = vadd.f32 0.0, %v10350
        %v10352 = vpop.f32.mrb[0].mxu0
        %10353 = vmatprep.mubr.bf16.mxu0 0
        %10354 = vmatmul.mubr.bf16.gmra.mrb[0].mxu0 %v10288
        %v10355 = vpop.f32.mrb[0].mxu0
        %v10356 = vadd.f32 0.0, %v10355
        %v10357 = vpop.f32.mrb[0].mxu0
        %v10358 = vpop.f32.mrb[0].mxu0
        %v10359 = vadd.f32 0.0, %v10358
        %v10360 = vpop.f32.mrb[0].mxu0
        %10361 = vmatprep.mubr.bf16.mxu0 0
        %10362 = vmatmul.mubr.bf16.gmra.mrb[0].mxu0 %v10291
        %v10363 = vpop.f32.mrb[0].mxu0
        %v10364 = vadd.f32 0.0, %v10363
        %v10365 = vpop.f32.mrb[0].mxu0
        %v10366 = vpop.f32.mrb[0].mxu0
        %v10367 = vadd.f32 0.0, %v10366
        %v10368 = vpop.f32.mrb[0].mxu0
        %10369 = vmatprep.mubr.bf16.mxu0 0
        %10370 = vmatmul.mubr.bf16.gmra.mrb[0].mxu0 %v10294
        %v10371 = vpop.f32.mrb[0].mxu0
        %v10372 = vadd.f32 0.0, %v10371
        %v10373 = vpop.f32.mrb[0].mxu0
        %v10374 = vpop.f32.mrb[0].mxu0
        %v10375 = vadd.f32 0.0, %v10374
        %v10376 = vpop.f32.mrb[0].mxu0
        %10377 = vmatprep.mubr.bf16.mxu0 0
        %10378 = vmatmul.mubr.bf16.gmra.mrb[0].mxu0 %v10297
        %v10379 = vpop.f32.mrb[0].mxu0
        %v10380 = vadd.f32 0.0, %v10379
        %v10381 = vpop.f32.mrb[0].mxu0
        %v10382 = vpop.f32.mrb[0].mxu0
        %v10383 = vadd.f32 0.0, %v10382
        %v10384 = vpop.f32.mrb[0].mxu0
        %10385 = vmatprep.mubr.bf16.mxu0 0
        %10386 = vmatmul.mubr.bf16.gmra.mrb[0].mxu0 %v10300
        %v10387 = vpop.f32.mrb[0].mxu0
        %v10388 = vadd.f32 0.0, %v10387
        %v10389 = vpop.f32.mrb[0].mxu0
        %v10390 = vpop.f32.mrb[0].mxu0
        %v10391 = vadd.f32 0.0, %v10390
        %v10392 = vpop.f32.mrb[0].mxu0
        %10393 = vmatprep.mubr.bf16.mxu0 0
        %10394 = vmatmul.mubr.bf16.gmra.mrb[0].mxu0 %v10303
        %v10395 = vpop.f32.mrb[0].mxu0
        %v10396 = vadd.f32 0.0, %v10395
        %v10397 = vpop.f32.mrb[0].mxu0
        %v10398 = vpop.f32.mrb[0].mxu0
        %v10399 = vadd.f32 0.0, %v10398
        %v10400 = vpop.f32.mrb[0].mxu0
        %10401 = vdwg.mxu0
        %v10402 = vadd.f32 %v10191, %v10340
        %v10403 = vadd.f32 %v10192, %v10343
        %v10404 = vadd.f32 %v10193, %v10348
        %v10405 = vadd.f32 %v10194, %v10351
        %v10406 = vadd.f32 %v10195, %v10356
        %v10407 = vadd.f32 %v10196, %v10359
        %v10408 = vadd.f32 %v10197, %v10364
        %v10409 = vadd.f32 %v10198, %v10367
        %v10410 = vadd.f32 %v10199, %v10372
        %v10411 = vadd.f32 %v10200, %v10375
        %v10412 = vadd.f32 %v10201, %v10380
        %v10413 = vadd.f32 %v10202, %v10383
        %v10414 = vadd.f32 %v10203, %v10388
        %v10415 = vadd.f32 %v10204, %v10391
        %v10416 = vadd.f32 %v10205, %v10396
        %v10417 = vadd.f32 %v10206, %v10399
        %v10418 = vld [vmem:[%s10207] sm:$0xf]
        %v10419 = vld [vmem:[%s10207 + $0x4] sm:$0xf]
        %v10420 = vld [vmem:[%s10207 + $0x8] sm:$0x1]
        %v10421 = vld [vmem:[%s10207 + $0xc] sm:$0xf]
        %v10422 = vld [vmem:[%s10207 + $0x10] sm:$0xf]
        %v10423 = vld [vmem:[%s10207 + $0x14] sm:$0x1]
        %v10424 = vld [vmem:[%s10207 + $0x18] sm:$0xf]
        %v10425 = vld [vmem:[%s10207 + $0x1c] sm:$0xf]
        %v10426 = vld [vmem:[%s10207 + $0x20] sm:$0x1]
        %v10427 = vld [vmem:[%s10207 + $0x24] sm:$0xf]
        %v10428 = vld [vmem:[%s10207 + $0x28] sm:$0xf]
        %v10429 = vld [vmem:[%s10207 + $0x2c] sm:$0x1]
        %v10430 = vld [vmem:[%s10207 + $0x30] sm:$0xf]
        %v10431 = vld [vmem:[%s10207 + $0x34] sm:$0xf]
        %v10432 = vld [vmem:[%s10207 + $0x38] sm:$0x1]
        %v10433 = vld [vmem:[%s10207 + $0x3c] sm:$0xf]
        %v10434 = vld [vmem:[%s10207 + $0x40] sm:$0xf]
        %v10435 = vld [vmem:[%s10207 + $0x44] sm:$0x1]
        %v10436 = vld [vmem:[%s10207 + $0x48] sm:$0xf]
        %v10437 = vld [vmem:[%s10207 + $0x4c] sm:$0xf]
        %v10438 = vld [vmem:[%s10207 + $0x50] sm:$0x1]
        %v10439 = vld [vmem:[%s10207 + $0x54] sm:$0xf]
        %v10440 = vld [vmem:[%s10207 + $0x58] sm:$0xf]
        %v10441 = vld [vmem:[%s10207 + $0x5c] sm:$0x1]
        %v10443 = vshrl.u32 %v10418, 16
        %v10445 = vrot.slane %v10443, 4
        %v10446 = vshll.u32 %v10418, 16
        %v10448 = vrot.slane %v10446, 5
        %v10449 = vor.u32 %v10445, %v10448
        %v10450 = vrot.slane %v10449, 4
        %v10452 = vshll.u32 %v10419, 16
        %v10454 = vrot.slane %v10452, 5
        %v10455 = vsel %vm285, %v10450, %v10454
        %v10456 = vshrl.u32 %v10419, 16
        %v10458 = vrot.slane %v10456, 4
        %v10459 = vor.u32 %v10458, %v10454
        %v10460 = vrot.slane %v10459, 4
        %v10462 = vshll.u32 %v10420, 16
        %v10464 = vrot.slane %v10462, 5
        %v10465 = vsel %vm285, %v10460, %v10464
        %v10467 = vshrl.u32 %v10421, 16
        %v10469 = vrot.slane %v10467, 4
        %v10470 = vshll.u32 %v10421, 16
        %v10472 = vrot.slane %v10470, 5
        %v10473 = vor.u32 %v10469, %v10472
        %v10474 = vrot.slane %v10473, 4
        %v10476 = vshll.u32 %v10422, 16
        %v10478 = vrot.slane %v10476, 5
        %v10479 = vsel %vm285, %v10474, %v10478
        %v10480 = vshrl.u32 %v10422, 16
        %v10482 = vrot.slane %v10480, 4
        %v10483 = vor.u32 %v10482, %v10478
        %v10484 = vrot.slane %v10483, 4
        %v10486 = vshll.u32 %v10423, 16
        %v10488 = vrot.slane %v10486, 5
        %v10489 = vsel %vm285, %v10484, %v10488
        %v10491 = vshrl.u32 %v10424, 16
        %v10493 = vrot.slane %v10491, 4
        %v10494 = vshll.u32 %v10424, 16
        %v10496 = vrot.slane %v10494, 5
        %v10497 = vor.u32 %v10493, %v10496
        %v10498 = vrot.slane %v10497, 4
        %v10500 = vshll.u32 %v10425, 16
        %v10502 = vrot.slane %v10500, 5
        %v10503 = vsel %vm285, %v10498, %v10502
        %v10504 = vshrl.u32 %v10425, 16
        %v10506 = vrot.slane %v10504, 4
        %v10507 = vor.u32 %v10506, %v10502
        %v10508 = vrot.slane %v10507, 4
        %v10510 = vshll.u32 %v10426, 16
        %v10512 = vrot.slane %v10510, 5
        %v10513 = vsel %vm285, %v10508, %v10512
        %v10515 = vshrl.u32 %v10427, 16
        %v10517 = vrot.slane %v10515, 4
        %v10518 = vshll.u32 %v10427, 16
        %v10520 = vrot.slane %v10518, 5
        %v10521 = vor.u32 %v10517, %v10520
        %v10522 = vrot.slane %v10521, 4
        %v10524 = vshll.u32 %v10428, 16
        %v10526 = vrot.slane %v10524, 5
        %v10527 = vsel %vm285, %v10522, %v10526
        %v10528 = vshrl.u32 %v10428, 16
        %v10530 = vrot.slane %v10528, 4
        %v10531 = vor.u32 %v10530, %v10526
        %v10532 = vrot.slane %v10531, 4
        %v10534 = vshll.u32 %v10429, 16
        %v10536 = vrot.slane %v10534, 5
        %v10537 = vsel %vm285, %v10532, %v10536
        %v10539 = vshrl.u32 %v10430, 16
        %v10541 = vrot.slane %v10539, 4
        %v10542 = vshll.u32 %v10430, 16
        %v10544 = vrot.slane %v10542, 5
        %v10545 = vor.u32 %v10541, %v10544
        %v10546 = vrot.slane %v10545, 4
        %v10548 = vshll.u32 %v10431, 16
        %v10550 = vrot.slane %v10548, 5
        %v10551 = vsel %vm285, %v10546, %v10550
        %v10552 = vshrl.u32 %v10431, 16
        %v10554 = vrot.slane %v10552, 4
        %v10555 = vor.u32 %v10554, %v10550
        %v10556 = vrot.slane %v10555, 4
        %v10558 = vshll.u32 %v10432, 16
        %v10560 = vrot.slane %v10558, 5
        %v10561 = vsel %vm285, %v10556, %v10560
        %v10563 = vshrl.u32 %v10433, 16
        %v10565 = vrot.slane %v10563, 4
        %v10566 = vshll.u32 %v10433, 16
        %v10568 = vrot.slane %v10566, 5
        %v10569 = vor.u32 %v10565, %v10568
        %v10570 = vrot.slane %v10569, 4
        %v10572 = vshll.u32 %v10434, 16
        %v10574 = vrot.slane %v10572, 5
        %v10575 = vsel %vm285, %v10570, %v10574
        %v10576 = vshrl.u32 %v10434, 16
        %v10578 = vrot.slane %v10576, 4
        %v10579 = vor.u32 %v10578, %v10574
        %v10580 = vrot.slane %v10579, 4
        %v10582 = vshll.u32 %v10435, 16
        %v10584 = vrot.slane %v10582, 5
        %v10585 = vsel %vm285, %v10580, %v10584
        %v10587 = vshrl.u32 %v10436, 16
        %v10589 = vrot.slane %v10587, 4
        %v10590 = vshll.u32 %v10436, 16
        %v10592 = vrot.slane %v10590, 5
        %v10593 = vor.u32 %v10589, %v10592
        %v10594 = vrot.slane %v10593, 4
        %v10596 = vshll.u32 %v10437, 16
        %v10598 = vrot.slane %v10596, 5
        %v10599 = vsel %vm285, %v10594, %v10598
        %v10600 = vshrl.u32 %v10437, 16
        %v10602 = vrot.slane %v10600, 4
        %v10603 = vor.u32 %v10602, %v10598
        %v10604 = vrot.slane %v10603, 4
        %v10606 = vshll.u32 %v10438, 16
        %v10608 = vrot.slane %v10606, 5
        %v10609 = vsel %vm285, %v10604, %v10608
        %v10611 = vshrl.u32 %v10439, 16
        %v10613 = vrot.slane %v10611, 4
        %v10614 = vshll.u32 %v10439, 16
        %v10616 = vrot.slane %v10614, 5
        %v10617 = vor.u32 %v10613, %v10616
        %v10618 = vrot.slane %v10617, 4
        %v10620 = vshll.u32 %v10440, 16
        %v10622 = vrot.slane %v10620, 5
        %v10623 = vsel %vm285, %v10618, %v10622
        %v10624 = vshrl.u32 %v10440, 16
        %v10626 = vrot.slane %v10624, 4
        %v10627 = vor.u32 %v10626, %v10622
        %v10628 = vrot.slane %v10627, 4
        %v10630 = vshll.u32 %v10441, 16
        %v10632 = vrot.slane %v10630, 5
        %v10633 = vsel %vm285, %v10628, %v10632
        %s10634 = scalar_lea.vmem %s3, 64
        %v10635 = vld [vmem:[%s10634] sm:$0xf]
        %v10636 = vld [vmem:[%s10634 + $0x4] sm:$0xf]
        %v10637 = vld [vmem:[%s10634 + $0x8] sm:$0xf]
        %v10638 = vld [vmem:[%s10634 + $0xc] sm:$0xf]
        %v10639 = vunpack.c.l.b16 %v10455
        %v10640 = vunpack.c.l.b16 %v10465
        %v10641 = vunpack.c.l.b16 %v10479
        %v10642 = vunpack.c.l.b16 %v10489
        %v10643 = vunpack.c.l.b16 %v10503
        %v10644 = vunpack.c.l.b16 %v10513
        %v10645 = vunpack.c.l.b16 %v10527
        %v10646 = vunpack.c.l.b16 %v10537
        %v10647 = vunpack.c.l.b16 %v10551
        %v10648 = vunpack.c.l.b16 %v10561
        %v10649 = vunpack.c.l.b16 %v10575
        %v10650 = vunpack.c.l.b16 %v10585
        %v10651 = vunpack.c.l.b16 %v10599
        %v10652 = vunpack.c.l.b16 %v10609
        %v10653 = vunpack.c.l.b16 %v10623
        %v10654 = vunpack.c.l.b16 %v10633
        %v10655 = vpack.c.b16 %v10640, %v10639
        %v10656 = vpack.c.b16 %v10642, %v10641
        %v10657 = vpack.c.b16 %v10644, %v10643
        %v10658 = vpack.c.b16 %v10646, %v10645
        %v10659 = vpack.c.b16 %v10648, %v10647
        %v10660 = vpack.c.b16 %v10650, %v10649
        %v10661 = vpack.c.b16 %v10652, %v10651
        %v10662 = vpack.c.b16 %v10654, %v10653
        %v10667 = vunpack.c.l.b16 %v10635
        %v10668 = vunpack.c.l.b16 %v10636
        %v10669 = vunpack.c.l.b16 %v10637
        %v10670 = vunpack.c.l.b16 %v10638
        %v10671 = vpack.c.b16 %v10668, %v10667
        %v10672 = vpack.c.b16 %v10670, %v10669
        %v10676 = vsel %vm9654, %v10655, 0
        %v10679 = vsel %vm9654, %v10656, 0
        %v10682 = vsel %vm9654, %v10657, 0
        %v10685 = vsel %vm9654, %v10658, 0
        %v10688 = vsel %vm9654, %v10659, 0
        %v10691 = vsel %vm9654, %v10660, 0
        %v10694 = vsel %vm9654, %v10661, 0
        %v10697 = vsel %vm9654, %v10662, 0
        %10699 = vmatprep.subr.bf16.mxu0 0
        %10700 = vmatpush1.bf16.msra.mxu0 %v10671
        %10701 = vmatprep.subr.bf16.mxu0 0
        %10702 = vmatpush1.bf16.msra.mxu0 %v10672
        %10703 = vmatprep.subr.bf16.mxu0 0
        %10704 = vmatpush1.bf16.msra.mxu0 0
        %10705 = vmatprep.subr.bf16.mxu0 0
        %10706 = vmatpush1.bf16.msra.mxu0 0
        %10707 = vmatprep.subr.bf16.mxu0 0
        %10708 = vmatpush1.bf16.msra.mxu0 0
        %10709 = vmatprep.subr.bf16.mxu0 0
        %10710 = vmatpush1.bf16.msra.mxu0 0
        %10711 = vmatprep.subr.bf16.mxu0 0
        %10712 = vmatpush1.bf16.msra.mxu0 0
        %10713 = vmatprep.subr.bf16.mxu0 0
        %10714 = vmatpush1.bf16.msra.mxu0 0
        %10715 = vmatprep.subr.bf16.mxu0 0
        %10716 = vmatpush1.bf16.msra.mxu0 0
        %10717 = vmatprep.subr.bf16.mxu0 0
        %10718 = vmatpush1.bf16.msra.mxu0 0
        %10719 = vmatprep.subr.bf16.mxu0 0
        %10720 = vmatpush1.bf16.msra.mxu0 0
        %10721 = vmatprep.subr.bf16.mxu0 0
        %10722 = vmatpush1.bf16.msra.mxu0 0
        %10723 = vmatprep.subr.bf16.mxu0 0
        %10724 = vmatpush1.bf16.msra.mxu0 0
        %10725 = vmatprep.subr.bf16.mxu0 0
        %10726 = vmatpush1.bf16.msra.mxu0 0
        %10727 = vmatprep.subr.bf16.mxu0 0
        %10728 = vmatpush1.bf16.msra.mxu0 0
        %10729 = vmatprep.subr.bf16.mxu0 0
        %10730 = vmatpush1.bf16.msra.mxu0 0
        %10731 = vmatprep.mubr.bf16.mxu0 0
        %10732 = vmatmul.mubr.bf16.gmra.mrb[0].mxu0 %v10676
        %v10733 = vpop.f32.mrb[0].mxu0
        %v10734 = vadd.f32 0.0, %v10733
        %v10735 = vpop.f32.mrb[0].mxu0
        %v10736 = vpop.f32.mrb[0].mxu0
        %v10737 = vadd.f32 0.0, %v10736
        %v10738 = vpop.f32.mrb[0].mxu0
        %10739 = vmatprep.mubr.bf16.mxu0 0
        %10740 = vmatmul.mubr.bf16.gmra.mrb[0].mxu0 %v10679
        %v10741 = vpop.f32.mrb[0].mxu0
        %v10742 = vadd.f32 0.0, %v10741
        %v10743 = vpop.f32.mrb[0].mxu0
        %v10744 = vpop.f32.mrb[0].mxu0
        %v10745 = vadd.f32 0.0, %v10744
        %v10746 = vpop.f32.mrb[0].mxu0
        %10747 = vmatprep.mubr.bf16.mxu0 0
        %10748 = vmatmul.mubr.bf16.gmra.mrb[0].mxu0 %v10682
        %v10749 = vpop.f32.mrb[0].mxu0
        %v10750 = vadd.f32 0.0, %v10749
        %v10751 = vpop.f32.mrb[0].mxu0
        %v10752 = vpop.f32.mrb[0].mxu0
        %v10753 = vadd.f32 0.0, %v10752
        %v10754 = vpop.f32.mrb[0].mxu0
        %10755 = vmatprep.mubr.bf16.mxu0 0
        %10756 = vmatmul.mubr.bf16.gmra.mrb[0].mxu0 %v10685
        %v10757 = vpop.f32.mrb[0].mxu0
        %v10758 = vadd.f32 0.0, %v10757
        %v10759 = vpop.f32.mrb[0].mxu0
        %v10760 = vpop.f32.mrb[0].mxu0
        %v10761 = vadd.f32 0.0, %v10760
        %v10762 = vpop.f32.mrb[0].mxu0
        %10763 = vmatprep.mubr.bf16.mxu0 0
        %10764 = vmatmul.mubr.bf16.gmra.mrb[0].mxu0 %v10688
        %v10765 = vpop.f32.mrb[0].mxu0
        %v10766 = vadd.f32 0.0, %v10765
        %v10767 = vpop.f32.mrb[0].mxu0
        %v10768 = vpop.f32.mrb[0].mxu0
        %v10769 = vadd.f32 0.0, %v10768
        %v10770 = vpop.f32.mrb[0].mxu0
        %10771 = vmatprep.mubr.bf16.mxu0 0
        %10772 = vmatmul.mubr.bf16.gmra.mrb[0].mxu0 %v10691
        %v10773 = vpop.f32.mrb[0].mxu0
        %v10774 = vadd.f32 0.0, %v10773
        %v10775 = vpop.f32.mrb[0].mxu0
        %v10776 = vpop.f32.mrb[0].mxu0
        %v10777 = vadd.f32 0.0, %v10776
        %v10778 = vpop.f32.mrb[0].mxu0
        %10779 = vmatprep.mubr.bf16.mxu0 0
        %10780 = vmatmul.mubr.bf16.gmra.mrb[0].mxu0 %v10694
        %v10781 = vpop.f32.mrb[0].mxu0
        %v10782 = vadd.f32 0.0, %v10781
        %v10783 = vpop.f32.mrb[0].mxu0
        %v10784 = vpop.f32.mrb[0].mxu0
        %v10785 = vadd.f32 0.0, %v10784
        %v10786 = vpop.f32.mrb[0].mxu0
        %10787 = vmatprep.mubr.bf16.mxu0 0
        %10788 = vmatmul.mubr.bf16.gmra.mrb[0].mxu0 %v10697
        %v10789 = vpop.f32.mrb[0].mxu0
        %v10790 = vadd.f32 0.0, %v10789
        %v10791 = vpop.f32.mrb[0].mxu0
        %v10792 = vpop.f32.mrb[0].mxu0
        %v10793 = vadd.f32 0.0, %v10792
        %v10794 = vpop.f32.mrb[0].mxu0
        %10795 = vdwg.mxu0
        %v10796 = vadd.f32 %v10402, %v10734
        %v10797 = vadd.f32 %v10403, %v10737
        %v10798 = vadd.f32 %v10404, %v10742
        %v10799 = vadd.f32 %v10405, %v10745
        %v10800 = vadd.f32 %v10406, %v10750
        %v10801 = vadd.f32 %v10407, %v10753
        %v10802 = vadd.f32 %v10408, %v10758
        %v10803 = vadd.f32 %v10409, %v10761
        %v10804 = vadd.f32 %v10410, %v10766
        %v10805 = vadd.f32 %v10411, %v10769
        %v10806 = vadd.f32 %v10412, %v10774
        %v10807 = vadd.f32 %v10413, %v10777
        %v10808 = vadd.f32 %v10414, %v10782
        %v10809 = vadd.f32 %v10415, %v10785
        %v10810 = vadd.f32 %v10416, %v10790
        %v10811 = vadd.f32 %v10417, %v10793
        %v10812 = vld [vmem:[%s10207] sm:$0xe]
        %v10813 = vld [vmem:[%s10207 + $0xc] sm:$0xe]
        %v10814 = vld [vmem:[%s10207 + $0x18] sm:$0xe]
        %v10815 = vld [vmem:[%s10207 + $0x24] sm:$0xe]
        %v10816 = vld [vmem:[%s10207 + $0x30] sm:$0xe]
        %v10817 = vld [vmem:[%s10207 + $0x3c] sm:$0xe]
        %v10818 = vld [vmem:[%s10207 + $0x48] sm:$0xe]
        %v10819 = vld [vmem:[%s10207 + $0x54] sm:$0xe]
        %v10844 = vrot.slane %v10812, 5
        %v10845 = vrot.slane %v10844, 4
        %v10846 = vrot.slane %v10419, 5
        %v10847 = vsel %vm934, %v10845, %v10846
        %v10848 = vrot.slane %v10846, 4
        %v10849 = vrot.slane %v10420, 5
        %v10850 = vsel %vm934, %v10848, %v10849
        %v10851 = vrot.slane %v10813, 5
        %v10852 = vrot.slane %v10851, 4
        %v10853 = vrot.slane %v10422, 5
        %v10854 = vsel %vm934, %v10852, %v10853
        %v10855 = vrot.slane %v10853, 4
        %v10856 = vrot.slane %v10423, 5
        %v10857 = vsel %vm934, %v10855, %v10856
        %v10858 = vrot.slane %v10814, 5
        %v10859 = vrot.slane %v10858, 4
        %v10860 = vrot.slane %v10425, 5
        %v10861 = vsel %vm934, %v10859, %v10860
        %v10862 = vrot.slane %v10860, 4
        %v10863 = vrot.slane %v10426, 5
        %v10864 = vsel %vm934, %v10862, %v10863
        %v10865 = vrot.slane %v10815, 5
        %v10866 = vrot.slane %v10865, 4
        %v10867 = vrot.slane %v10428, 5
        %v10868 = vsel %vm934, %v10866, %v10867
        %v10869 = vrot.slane %v10867, 4
        %v10870 = vrot.slane %v10429, 5
        %v10871 = vsel %vm934, %v10869, %v10870
        %v10872 = vrot.slane %v10816, 5
        %v10873 = vrot.slane %v10872, 4
        %v10874 = vrot.slane %v10431, 5
        %v10875 = vsel %vm934, %v10873, %v10874
        %v10876 = vrot.slane %v10874, 4
        %v10877 = vrot.slane %v10432, 5
        %v10878 = vsel %vm934, %v10876, %v10877
        %v10879 = vrot.slane %v10817, 5
        %v10880 = vrot.slane %v10879, 4
        %v10881 = vrot.slane %v10434, 5
        %v10882 = vsel %vm934, %v10880, %v10881
        %v10883 = vrot.slane %v10881, 4
        %v10884 = vrot.slane %v10435, 5
        %v10885 = vsel %vm934, %v10883, %v10884
        %v10886 = vrot.slane %v10818, 5
        %v10887 = vrot.slane %v10886, 4
        %v10888 = vrot.slane %v10437, 5
        %v10889 = vsel %vm934, %v10887, %v10888
        %v10890 = vrot.slane %v10888, 4
        %v10891 = vrot.slane %v10438, 5
        %v10892 = vsel %vm934, %v10890, %v10891
        %v10893 = vrot.slane %v10819, 5
        %v10894 = vrot.slane %v10893, 4
        %v10895 = vrot.slane %v10440, 5
        %v10896 = vsel %vm934, %v10894, %v10895
        %v10897 = vrot.slane %v10895, 4
        %v10898 = vrot.slane %v10441, 5
        %v10899 = vsel %vm934, %v10897, %v10898
        %s10900 = scalar_lea.vmem %s3, 80
        %v10901 = vld [vmem:[%s10900] sm:$0xf]
        %v10902 = vld [vmem:[%s10900 + $0x4] sm:$0xf]
        %v10903 = vld [vmem:[%s10900 + $0x8] sm:$0xf]
        %v10904 = vld [vmem:[%s10900 + $0xc] sm:$0xf]
        %v10905 = vunpack.c.l.b16 %v10847
        %v10906 = vunpack.c.l.b16 %v10850
        %v10907 = vunpack.c.l.b16 %v10854
        %v10908 = vunpack.c.l.b16 %v10857
        %v10909 = vunpack.c.l.b16 %v10861
        %v10910 = vunpack.c.l.b16 %v10864
        %v10911 = vunpack.c.l.b16 %v10868
        %v10912 = vunpack.c.l.b16 %v10871
        %v10913 = vunpack.c.l.b16 %v10875
        %v10914 = vunpack.c.l.b16 %v10878
        %v10915 = vunpack.c.l.b16 %v10882
        %v10916 = vunpack.c.l.b16 %v10885
        %v10917 = vunpack.c.l.b16 %v10889
        %v10918 = vunpack.c.l.b16 %v10892
        %v10919 = vunpack.c.l.b16 %v10896
        %v10920 = vunpack.c.l.b16 %v10899
        %v10921 = vpack.c.b16 %v10906, %v10905
        %v10922 = vpack.c.b16 %v10908, %v10907
        %v10923 = vpack.c.b16 %v10910, %v10909
        %v10924 = vpack.c.b16 %v10912, %v10911
        %v10925 = vpack.c.b16 %v10914, %v10913
        %v10926 = vpack.c.b16 %v10916, %v10915
        %v10927 = vpack.c.b16 %v10918, %v10917
        %v10928 = vpack.c.b16 %v10920, %v10919
        %v10933 = vunpack.c.l.b16 %v10901
        %v10934 = vunpack.c.l.b16 %v10902
        %v10935 = vunpack.c.l.b16 %v10903
        %v10936 = vunpack.c.l.b16 %v10904
        %v10937 = vpack.c.b16 %v10934, %v10933
        %v10938 = vpack.c.b16 %v10936, %v10935
        %v10942 = vsel %vm9654, %v10921, 0
        %v10945 = vsel %vm9654, %v10922, 0
        %v10948 = vsel %vm9654, %v10923, 0
        %v10951 = vsel %vm9654, %v10924, 0
        %v10954 = vsel %vm9654, %v10925, 0
        %v10957 = vsel %vm9654, %v10926, 0
        %v10960 = vsel %vm9654, %v10927, 0
        %v10963 = vsel %vm9654, %v10928, 0
        %10965 = vmatprep.subr.bf16.mxu0 0
        %10966 = vmatpush1.bf16.msra.mxu0 %v10937
        %10967 = vmatprep.subr.bf16.mxu0 0
        %10968 = vmatpush1.bf16.msra.mxu0 %v10938
        %10969 = vmatprep.subr.bf16.mxu0 0
        %10970 = vmatpush1.bf16.msra.mxu0 0
        %10971 = vmatprep.subr.bf16.mxu0 0
        %10972 = vmatpush1.bf16.msra.mxu0 0
        %10973 = vmatprep.subr.bf16.mxu0 0
        %10974 = vmatpush1.bf16.msra.mxu0 0
        %10975 = vmatprep.subr.bf16.mxu0 0
        %10976 = vmatpush1.bf16.msra.mxu0 0
        %10977 = vmatprep.subr.bf16.mxu0 0
        %10978 = vmatpush1.bf16.msra.mxu0 0
        %10979 = vmatprep.subr.bf16.mxu0 0
        %10980 = vmatpush1.bf16.msra.mxu0 0
        %10981 = vmatprep.subr.bf16.mxu0 0
        %10982 = vmatpush1.bf16.msra.mxu0 0
        %10983 = vmatprep.subr.bf16.mxu0 0
        %10984 = vmatpush1.bf16.msra.mxu0 0
        %10985 = vmatprep.subr.bf16.mxu0 0
        %10986 = vmatpush1.bf16.msra.mxu0 0
        %10987 = vmatprep.subr.bf16.mxu0 0
        %10988 = vmatpush1.bf16.msra.mxu0 0
        %10989 = vmatprep.subr.bf16.mxu0 0
        %10990 = vmatpush1.bf16.msra.mxu0 0
        %10991 = vmatprep.subr.bf16.mxu0 0
        %10992 = vmatpush1.bf16.msra.mxu0 0
        %10993 = vmatprep.subr.bf16.mxu0 0
        %10994 = vmatpush1.bf16.msra.mxu0 0
        %10995 = vmatprep.subr.bf16.mxu0 0
        %10996 = vmatpush1.bf16.msra.mxu0 0
        %10997 = vmatprep.mubr.bf16.mxu0 0
        %10998 = vmatmul.mubr.bf16.gmra.mrb[0].mxu0 %v10942
        %v10999 = vpop.f32.mrb[0].mxu0
        %v11000 = vadd.f32 0.0, %v10999
        %v11001 = vpop.f32.mrb[0].mxu0
        %v11002 = vpop.f32.mrb[0].mxu0
        %v11003 = vadd.f32 0.0, %v11002
        %v11004 = vpop.f32.mrb[0].mxu0
        %11005 = vmatprep.mubr.bf16.mxu0 0
        %11006 = vmatmul.mubr.bf16.gmra.mrb[0].mxu0 %v10945
        %v11007 = vpop.f32.mrb[0].mxu0
        %v11008 = vadd.f32 0.0, %v11007
        %v11009 = vpop.f32.mrb[0].mxu0
        %v11010 = vpop.f32.mrb[0].mxu0
        %v11011 = vadd.f32 0.0, %v11010
        %v11012 = vpop.f32.mrb[0].mxu0
        %11013 = vmatprep.mubr.bf16.mxu0 0
        %11014 = vmatmul.mubr.bf16.gmra.mrb[0].mxu0 %v10948
        %v11015 = vpop.f32.mrb[0].mxu0
        %v11016 = vadd.f32 0.0, %v11015
        %v11017 = vpop.f32.mrb[0].mxu0
        %v11018 = vpop.f32.mrb[0].mxu0
        %v11019 = vadd.f32 0.0, %v11018
        %v11020 = vpop.f32.mrb[0].mxu0
        %11021 = vmatprep.mubr.bf16.mxu0 0
        %11022 = vmatmul.mubr.bf16.gmra.mrb[0].mxu0 %v10951
        %v11023 = vpop.f32.mrb[0].mxu0
        %v11024 = vadd.f32 0.0, %v11023
        %v11025 = vpop.f32.mrb[0].mxu0
        %v11026 = vpop.f32.mrb[0].mxu0
        %v11027 = vadd.f32 0.0, %v11026
        %v11028 = vpop.f32.mrb[0].mxu0
        %11029 = vmatprep.mubr.bf16.mxu0 0
        %11030 = vmatmul.mubr.bf16.gmra.mrb[0].mxu0 %v10954
        %v11031 = vpop.f32.mrb[0].mxu0
        %v11032 = vadd.f32 0.0, %v11031
        %v11033 = vpop.f32.mrb[0].mxu0
        %v11034 = vpop.f32.mrb[0].mxu0
        %v11035 = vadd.f32 0.0, %v11034
        %v11036 = vpop.f32.mrb[0].mxu0
        %11037 = vmatprep.mubr.bf16.mxu0 0
        %11038 = vmatmul.mubr.bf16.gmra.mrb[0].mxu0 %v10957
        %v11039 = vpop.f32.mrb[0].mxu0
        %v11040 = vadd.f32 0.0, %v11039
        %v11041 = vpop.f32.mrb[0].mxu0
        %v11042 = vpop.f32.mrb[0].mxu0
        %v11043 = vadd.f32 0.0, %v11042
        %v11044 = vpop.f32.mrb[0].mxu0
        %11045 = vmatprep.mubr.bf16.mxu0 0
        %11046 = vmatmul.mubr.bf16.gmra.mrb[0].mxu0 %v10960
        %v11047 = vpop.f32.mrb[0].mxu0
        %v11048 = vadd.f32 0.0, %v11047
        %v11049 = vpop.f32.mrb[0].mxu0
        %v11050 = vpop.f32.mrb[0].mxu0
        %v11051 = vadd.f32 0.0, %v11050
        %v11052 = vpop.f32.mrb[0].mxu0
        %11053 = vmatprep.mubr.bf16.mxu0 0
        %11054 = vmatmul.mubr.bf16.gmra.mrb[0].mxu0 %v10963
        %v11055 = vpop.f32.mrb[0].mxu0
        %v11056 = vadd.f32 0.0, %v11055
        %v11057 = vpop.f32.mrb[0].mxu0
        %v11058 = vpop.f32.mrb[0].mxu0
        %v11059 = vadd.f32 0.0, %v11058
        %v11060 = vpop.f32.mrb[0].mxu0
        %11061 = vdwg.mxu0
        %v11062 = vadd.f32 %v10796, %v11000
        %v11063 = vadd.f32 %v10797, %v11003
        %v11064 = vadd.f32 %v10798, %v11008
        %v11065 = vadd.f32 %v10799, %v11011
        %v11066 = vadd.f32 %v10800, %v11016
        %v11067 = vadd.f32 %v10801, %v11019
        %v11068 = vadd.f32 %v10802, %v11024
        %v11069 = vadd.f32 %v10803, %v11027
        %v11070 = vadd.f32 %v10804, %v11032
        %v11071 = vadd.f32 %v10805, %v11035
        %v11072 = vadd.f32 %v10806, %v11040
        %v11073 = vadd.f32 %v10807, %v11043
        %v11074 = vadd.f32 %v10808, %v11048
        %v11075 = vadd.f32 %v10809, %v11051
        %v11076 = vadd.f32 %v10810, %v11056
        %v11077 = vadd.f32 %v10811, %v11059
        %s11078 = scalar_lea.vmem [#allocation2], 24
        %v11079 = vld [vmem:[%s11078] sm:$0xf]
        %v11080 = vld [vmem:[%s11078 + $0x4] sm:$0xf]
        %v11081 = vld [vmem:[%s11078 + $0xc] sm:$0xf]
        %v11082 = vld [vmem:[%s11078 + $0x10] sm:$0xf]
        %v11083 = vld [vmem:[%s11078 + $0x18] sm:$0xf]
        %v11084 = vld [vmem:[%s11078 + $0x1c] sm:$0xf]
        %v11085 = vld [vmem:[%s11078 + $0x24] sm:$0xf]
        %v11086 = vld [vmem:[%s11078 + $0x28] sm:$0xf]
        %v11087 = vld [vmem:[%s11078 + $0x30] sm:$0xf]
        %v11088 = vld [vmem:[%s11078 + $0x34] sm:$0xf]
        %v11089 = vld [vmem:[%s11078 + $0x3c] sm:$0xf]
        %v11090 = vld [vmem:[%s11078 + $0x40] sm:$0xf]
        %v11091 = vld [vmem:[%s11078 + $0x48] sm:$0xf]
        %v11092 = vld [vmem:[%s11078 + $0x4c] sm:$0xf]
        %v11093 = vld [vmem:[%s11078 + $0x54] sm:$0xf]
        %v11094 = vld [vmem:[%s11078 + $0x58] sm:$0xf]
        %s11095 = scalar_lea.vmem %s3, 96
        %v11096 = vld [vmem:[%s11095] sm:$0xf]
        %v11097 = vld [vmem:[%s11095 + $0x4] sm:$0xf]
        %v11098 = vld [vmem:[%s11095 + $0x8] sm:$0xf]
        %v11099 = vld [vmem:[%s11095 + $0xc] sm:$0xf]
        %v11116 = vunpack.c.l.b16 %v11079
        %v11117 = vunpack.c.l.b16 %v11080
        %v11118 = vunpack.c.l.b16 %v11081
        %v11119 = vunpack.c.l.b16 %v11082
        %v11120 = vunpack.c.l.b16 %v11083
        %v11121 = vunpack.c.l.b16 %v11084
        %v11122 = vunpack.c.l.b16 %v11085
        %v11123 = vunpack.c.l.b16 %v11086
        %v11124 = vunpack.c.l.b16 %v11087
        %v11125 = vunpack.c.l.b16 %v11088
        %v11126 = vunpack.c.l.b16 %v11089
        %v11127 = vunpack.c.l.b16 %v11090
        %v11128 = vunpack.c.l.b16 %v11091
        %v11129 = vunpack.c.l.b16 %v11092
        %v11130 = vunpack.c.l.b16 %v11093
        %v11131 = vunpack.c.l.b16 %v11094
        %v11132 = vpack.c.b16 %v11117, %v11116
        %v11133 = vpack.c.b16 %v11119, %v11118
        %v11134 = vpack.c.b16 %v11121, %v11120
        %v11135 = vpack.c.b16 %v11123, %v11122
        %v11136 = vpack.c.b16 %v11125, %v11124
        %v11137 = vpack.c.b16 %v11127, %v11126
        %v11138 = vpack.c.b16 %v11129, %v11128
        %v11139 = vpack.c.b16 %v11131, %v11130
        %v11144 = vunpack.c.l.b16 %v11096
        %v11145 = vunpack.c.l.b16 %v11097
        %v11146 = vunpack.c.l.b16 %v11098
        %v11147 = vunpack.c.l.b16 %v11099
        %v11148 = vpack.c.b16 %v11145, %v11144
        %v11149 = vpack.c.b16 %v11147, %v11146
        %v11153 = vsel %vm9654, %v11132, 0
        %v11156 = vsel %vm9654, %v11133, 0
        %v11159 = vsel %vm9654, %v11134, 0
        %v11162 = vsel %vm9654, %v11135, 0
        %v11165 = vsel %vm9654, %v11136, 0
        %v11168 = vsel %vm9654, %v11137, 0
        %v11171 = vsel %vm9654, %v11138, 0
        %v11174 = vsel %vm9654, %v11139, 0
        %11176 = vmatprep.subr.bf16.mxu0 0
        %11177 = vmatpush1.bf16.msra.mxu0 %v11148
        %11178 = vmatprep.subr.bf16.mxu0 0
        %11179 = vmatpush1.bf16.msra.mxu0 %v11149
        %11180 = vmatprep.subr.bf16.mxu0 0
        %11181 = vmatpush1.bf16.msra.mxu0 0
        %11182 = vmatprep.subr.bf16.mxu0 0
        %11183 = vmatpush1.bf16.msra.mxu0 0
        %11184 = vmatprep.subr.bf16.mxu0 0
        %11185 = vmatpush1.bf16.msra.mxu0 0
        %11186 = vmatprep.subr.bf16.mxu0 0
        %11187 = vmatpush1.bf16.msra.mxu0 0
        %11188 = vmatprep.subr.bf16.mxu0 0
        %11189 = vmatpush1.bf16.msra.mxu0 0
        %11190 = vmatprep.subr.bf16.mxu0 0
        %11191 = vmatpush1.bf16.msra.mxu0 0
        %11192 = vmatprep.subr.bf16.mxu0 0
        %11193 = vmatpush1.bf16.msra.mxu0 0
        %11194 = vmatprep.subr.bf16.mxu0 0
        %11195 = vmatpush1.bf16.msra.mxu0 0
        %11196 = vmatprep.subr.bf16.mxu0 0
        %11197 = vmatpush1.bf16.msra.mxu0 0
        %11198 = vmatprep.subr.bf16.mxu0 0
        %11199 = vmatpush1.bf16.msra.mxu0 0
        %11200 = vmatprep.subr.bf16.mxu0 0
        %11201 = vmatpush1.bf16.msra.mxu0 0
        %11202 = vmatprep.subr.bf16.mxu0 0
        %11203 = vmatpush1.bf16.msra.mxu0 0
        %11204 = vmatprep.subr.bf16.mxu0 0
        %11205 = vmatpush1.bf16.msra.mxu0 0
        %11206 = vmatprep.subr.bf16.mxu0 0
        %11207 = vmatpush1.bf16.msra.mxu0 0
        %11208 = vmatprep.mubr.bf16.mxu0 0
        %11209 = vmatmul.mubr.bf16.gmra.mrb[0].mxu0 %v11153
        %v11210 = vpop.f32.mrb[0].mxu0
        %v11211 = vadd.f32 0.0, %v11210
        %v11212 = vpop.f32.mrb[0].mxu0
        %v11213 = vpop.f32.mrb[0].mxu0
        %v11214 = vadd.f32 0.0, %v11213
        %v11215 = vpop.f32.mrb[0].mxu0
        %11216 = vmatprep.mubr.bf16.mxu0 0
        %11217 = vmatmul.mubr.bf16.gmra.mrb[0].mxu0 %v11156
        %v11218 = vpop.f32.mrb[0].mxu0
        %v11219 = vadd.f32 0.0, %v11218
        %v11220 = vpop.f32.mrb[0].mxu0
        %v11221 = vpop.f32.mrb[0].mxu0
        %v11222 = vadd.f32 0.0, %v11221
        %v11223 = vpop.f32.mrb[0].mxu0
        %11224 = vmatprep.mubr.bf16.mxu0 0
        %11225 = vmatmul.mubr.bf16.gmra.mrb[0].mxu0 %v11159
        %v11226 = vpop.f32.mrb[0].mxu0
        %v11227 = vadd.f32 0.0, %v11226
        %v11228 = vpop.f32.mrb[0].mxu0
        %v11229 = vpop.f32.mrb[0].mxu0
        %v11230 = vadd.f32 0.0, %v11229
        %v11231 = vpop.f32.mrb[0].mxu0
        %11232 = vmatprep.mubr.bf16.mxu0 0
        %11233 = vmatmul.mubr.bf16.gmra.mrb[0].mxu0 %v11162
        %v11234 = vpop.f32.mrb[0].mxu0
        %v11235 = vadd.f32 0.0, %v11234
        %v11236 = vpop.f32.mrb[0].mxu0
        %v11237 = vpop.f32.mrb[0].mxu0
        %v11238 = vadd.f32 0.0, %v11237
        %v11239 = vpop.f32.mrb[0].mxu0
        %11240 = vmatprep.mubr.bf16.mxu0 0
        %11241 = vmatmul.mubr.bf16.gmra.mrb[0].mxu0 %v11165
        %v11242 = vpop.f32.mrb[0].mxu0
        %v11243 = vadd.f32 0.0, %v11242
        %v11244 = vpop.f32.mrb[0].mxu0
        %v11245 = vpop.f32.mrb[0].mxu0
        %v11246 = vadd.f32 0.0, %v11245
        %v11247 = vpop.f32.mrb[0].mxu0
        %11248 = vmatprep.mubr.bf16.mxu0 0
        %11249 = vmatmul.mubr.bf16.gmra.mrb[0].mxu0 %v11168
        %v11250 = vpop.f32.mrb[0].mxu0
        %v11251 = vadd.f32 0.0, %v11250
        %v11252 = vpop.f32.mrb[0].mxu0
        %v11253 = vpop.f32.mrb[0].mxu0
        %v11254 = vadd.f32 0.0, %v11253
        %v11255 = vpop.f32.mrb[0].mxu0
        %11256 = vmatprep.mubr.bf16.mxu0 0
        %11257 = vmatmul.mubr.bf16.gmra.mrb[0].mxu0 %v11171
        %v11258 = vpop.f32.mrb[0].mxu0
        %v11259 = vadd.f32 0.0, %v11258
        %v11260 = vpop.f32.mrb[0].mxu0
        %v11261 = vpop.f32.mrb[0].mxu0
        %v11262 = vadd.f32 0.0, %v11261
        %v11263 = vpop.f32.mrb[0].mxu0
        %11264 = vmatprep.mubr.bf16.mxu0 0
        %11265 = vmatmul.mubr.bf16.gmra.mrb[0].mxu0 %v11174
        %v11266 = vpop.f32.mrb[0].mxu0
        %v11267 = vadd.f32 0.0, %v11266
        %v11268 = vpop.f32.mrb[0].mxu0
        %v11269 = vpop.f32.mrb[0].mxu0
        %v11270 = vadd.f32 0.0, %v11269
        %v11271 = vpop.f32.mrb[0].mxu0
        %11272 = vdwg.mxu0
        %v11273 = vadd.f32 %v11062, %v11211
        %v11274 = vadd.f32 %v11063, %v11214
        %v11275 = vadd.f32 %v11064, %v11219
        %v11276 = vadd.f32 %v11065, %v11222
        %v11277 = vadd.f32 %v11066, %v11227
        %v11278 = vadd.f32 %v11067, %v11230
        %v11279 = vadd.f32 %v11068, %v11235
        %v11280 = vadd.f32 %v11069, %v11238
        %v11281 = vadd.f32 %v11070, %v11243
        %v11282 = vadd.f32 %v11071, %v11246
        %v11283 = vadd.f32 %v11072, %v11251
        %v11284 = vadd.f32 %v11073, %v11254
        %v11285 = vadd.f32 %v11074, %v11259
        %v11286 = vadd.f32 %v11075, %v11262
        %v11287 = vadd.f32 %v11076, %v11267
        %v11288 = vadd.f32 %v11077, %v11270
        %v11289 = vld [vmem:[%s11078] sm:$0xf]
        %v11290 = vld [vmem:[%s11078 + $0x4] sm:$0xf]
        %v11291 = vld [vmem:[%s11078 + $0x8] sm:$0x1]
        %v11292 = vld [vmem:[%s11078 + $0xc] sm:$0xf]
        %v11293 = vld [vmem:[%s11078 + $0x10] sm:$0xf]
        %v11294 = vld [vmem:[%s11078 + $0x14] sm:$0x1]
        %v11295 = vld [vmem:[%s11078 + $0x18] sm:$0xf]
        %v11296 = vld [vmem:[%s11078 + $0x1c] sm:$0xf]
        %v11297 = vld [vmem:[%s11078 + $0x20] sm:$0x1]
        %v11298 = vld [vmem:[%s11078 + $0x24] sm:$0xf]
        %v11299 = vld [vmem:[%s11078 + $0x28] sm:$0xf]
        %v11300 = vld [vmem:[%s11078 + $0x2c] sm:$0x1]
        %v11301 = vld [vmem:[%s11078 + $0x30] sm:$0xf]
        %v11302 = vld [vmem:[%s11078 + $0x34] sm:$0xf]
        %v11303 = vld [vmem:[%s11078 + $0x38] sm:$0x1]
        %v11304 = vld [vmem:[%s11078 + $0x3c] sm:$0xf]
        %v11305 = vld [vmem:[%s11078 + $0x40] sm:$0xf]
        %v11306 = vld [vmem:[%s11078 + $0x44] sm:$0x1]
        %v11307 = vld [vmem:[%s11078 + $0x48] sm:$0xf]
        %v11308 = vld [vmem:[%s11078 + $0x4c] sm:$0xf]
        %v11309 = vld [vmem:[%s11078 + $0x50] sm:$0x1]
        %v11310 = vld [vmem:[%s11078 + $0x54] sm:$0xf]
        %v11311 = vld [vmem:[%s11078 + $0x58] sm:$0xf]
        %v11312 = vld [vmem:[%s11078 + $0x5c] sm:$0x1]
        %v11314 = vshrl.u32 %v11289, 16
        %v11316 = vrot.slane %v11314, 4
        %v11317 = vshll.u32 %v11289, 16
        %v11319 = vrot.slane %v11317, 5
        %v11320 = vor.u32 %v11316, %v11319
        %v11321 = vrot.slane %v11320, 4
        %v11323 = vshll.u32 %v11290, 16
        %v11325 = vrot.slane %v11323, 5
        %v11326 = vsel %vm285, %v11321, %v11325
        %v11327 = vshrl.u32 %v11290, 16
        %v11329 = vrot.slane %v11327, 4
        %v11330 = vor.u32 %v11329, %v11325
        %v11331 = vrot.slane %v11330, 4
        %v11333 = vshll.u32 %v11291, 16
        %v11335 = vrot.slane %v11333, 5
        %v11336 = vsel %vm285, %v11331, %v11335
        %v11338 = vshrl.u32 %v11292, 16
        %v11340 = vrot.slane %v11338, 4
        %v11341 = vshll.u32 %v11292, 16
        %v11343 = vrot.slane %v11341, 5
        %v11344 = vor.u32 %v11340, %v11343
        %v11345 = vrot.slane %v11344, 4
        %v11347 = vshll.u32 %v11293, 16
        %v11349 = vrot.slane %v11347, 5
        %v11350 = vsel %vm285, %v11345, %v11349
        %v11351 = vshrl.u32 %v11293, 16
        %v11353 = vrot.slane %v11351, 4
        %v11354 = vor.u32 %v11353, %v11349
        %v11355 = vrot.slane %v11354, 4
        %v11357 = vshll.u32 %v11294, 16
        %v11359 = vrot.slane %v11357, 5
        %v11360 = vsel %vm285, %v11355, %v11359
        %v11362 = vshrl.u32 %v11295, 16
        %v11364 = vrot.slane %v11362, 4
        %v11365 = vshll.u32 %v11295, 16
        %v11367 = vrot.slane %v11365, 5
        %v11368 = vor.u32 %v11364, %v11367
        %v11369 = vrot.slane %v11368, 4
        %v11371 = vshll.u32 %v11296, 16
        %v11373 = vrot.slane %v11371, 5
        %v11374 = vsel %vm285, %v11369, %v11373
        %v11375 = vshrl.u32 %v11296, 16
        %v11377 = vrot.slane %v11375, 4
        %v11378 = vor.u32 %v11377, %v11373
        %v11379 = vrot.slane %v11378, 4
        %v11381 = vshll.u32 %v11297, 16
        %v11383 = vrot.slane %v11381, 5
        %v11384 = vsel %vm285, %v11379, %v11383
        %v11386 = vshrl.u32 %v11298, 16
        %v11388 = vrot.slane %v11386, 4
        %v11389 = vshll.u32 %v11298, 16
        %v11391 = vrot.slane %v11389, 5
        %v11392 = vor.u32 %v11388, %v11391
        %v11393 = vrot.slane %v11392, 4
        %v11395 = vshll.u32 %v11299, 16
        %v11397 = vrot.slane %v11395, 5
        %v11398 = vsel %vm285, %v11393, %v11397
        %v11399 = vshrl.u32 %v11299, 16
        %v11401 = vrot.slane %v11399, 4
        %v11402 = vor.u32 %v11401, %v11397
        %v11403 = vrot.slane %v11402, 4
        %v11405 = vshll.u32 %v11300, 16
        %v11407 = vrot.slane %v11405, 5
        %v11408 = vsel %vm285, %v11403, %v11407
        %v11410 = vshrl.u32 %v11301, 16
        %v11412 = vrot.slane %v11410, 4
        %v11413 = vshll.u32 %v11301, 16
        %v11415 = vrot.slane %v11413, 5
        %v11416 = vor.u32 %v11412, %v11415
        %v11417 = vrot.slane %v11416, 4
        %v11419 = vshll.u32 %v11302, 16
        %v11421 = vrot.slane %v11419, 5
        %v11422 = vsel %vm285, %v11417, %v11421
        %v11423 = vshrl.u32 %v11302, 16
        %v11425 = vrot.slane %v11423, 4
        %v11426 = vor.u32 %v11425, %v11421
        %v11427 = vrot.slane %v11426, 4
        %v11429 = vshll.u32 %v11303, 16
        %v11431 = vrot.slane %v11429, 5
        %v11432 = vsel %vm285, %v11427, %v11431
        %v11434 = vshrl.u32 %v11304, 16
        %v11436 = vrot.slane %v11434, 4
        %v11437 = vshll.u32 %v11304, 16
        %v11439 = vrot.slane %v11437, 5
        %v11440 = vor.u32 %v11436, %v11439
        %v11441 = vrot.slane %v11440, 4
        %v11443 = vshll.u32 %v11305, 16
        %v11445 = vrot.slane %v11443, 5
        %v11446 = vsel %vm285, %v11441, %v11445
        %v11447 = vshrl.u32 %v11305, 16
        %v11449 = vrot.slane %v11447, 4
        %v11450 = vor.u32 %v11449, %v11445
        %v11451 = vrot.slane %v11450, 4
        %v11453 = vshll.u32 %v11306, 16
        %v11455 = vrot.slane %v11453, 5
        %v11456 = vsel %vm285, %v11451, %v11455
        %v11458 = vshrl.u32 %v11307, 16
        %v11460 = vrot.slane %v11458, 4
        %v11461 = vshll.u32 %v11307, 16
        %v11463 = vrot.slane %v11461, 5
        %v11464 = vor.u32 %v11460, %v11463
        %v11465 = vrot.slane %v11464, 4
        %v11467 = vshll.u32 %v11308, 16
        %v11469 = vrot.slane %v11467, 5
        %v11470 = vsel %vm285, %v11465, %v11469
        %v11471 = vshrl.u32 %v11308, 16
        %v11473 = vrot.slane %v11471, 4
        %v11474 = vor.u32 %v11473, %v11469
        %v11475 = vrot.slane %v11474, 4
        %v11477 = vshll.u32 %v11309, 16
        %v11479 = vrot.slane %v11477, 5
        %v11480 = vsel %vm285, %v11475, %v11479
        %v11482 = vshrl.u32 %v11310, 16
        %v11484 = vrot.slane %v11482, 4
        %v11485 = vshll.u32 %v11310, 16
        %v11487 = vrot.slane %v11485, 5
        %v11488 = vor.u32 %v11484, %v11487
        %v11489 = vrot.slane %v11488, 4
        %v11491 = vshll.u32 %v11311, 16
        %v11493 = vrot.slane %v11491, 5
        %v11494 = vsel %vm285, %v11489, %v11493
        %v11495 = vshrl.u32 %v11311, 16
        %v11497 = vrot.slane %v11495, 4
        %v11498 = vor.u32 %v11497, %v11493
        %v11499 = vrot.slane %v11498, 4
        %v11501 = vshll.u32 %v11312, 16
        %v11503 = vrot.slane %v11501, 5
        %v11504 = vsel %vm285, %v11499, %v11503
        %s11505 = scalar_lea.vmem %s3, 112
        %v11506 = vld [vmem:[%s11505] sm:$0xf]
        %v11507 = vld [vmem:[%s11505 + $0x4] sm:$0xf]
        %v11508 = vld [vmem:[%s11505 + $0x8] sm:$0xf]
        %v11509 = vld [vmem:[%s11505 + $0xc] sm:$0xf]
        %v11510 = vunpack.c.l.b16 %v11326
        %v11511 = vunpack.c.l.b16 %v11336
        %v11512 = vunpack.c.l.b16 %v11350
        %v11513 = vunpack.c.l.b16 %v11360
        %v11514 = vunpack.c.l.b16 %v11374
        %v11515 = vunpack.c.l.b16 %v11384
        %v11516 = vunpack.c.l.b16 %v11398
        %v11517 = vunpack.c.l.b16 %v11408
        %v11518 = vunpack.c.l.b16 %v11422
        %v11519 = vunpack.c.l.b16 %v11432
        %v11520 = vunpack.c.l.b16 %v11446
        %v11521 = vunpack.c.l.b16 %v11456
        %v11522 = vunpack.c.l.b16 %v11470
        %v11523 = vunpack.c.l.b16 %v11480
        %v11524 = vunpack.c.l.b16 %v11494
        %v11525 = vunpack.c.l.b16 %v11504
        %v11526 = vpack.c.b16 %v11511, %v11510
        %v11527 = vpack.c.b16 %v11513, %v11512
        %v11528 = vpack.c.b16 %v11515, %v11514
        %v11529 = vpack.c.b16 %v11517, %v11516
        %v11530 = vpack.c.b16 %v11519, %v11518
        %v11531 = vpack.c.b16 %v11521, %v11520
        %v11532 = vpack.c.b16 %v11523, %v11522
        %v11533 = vpack.c.b16 %v11525, %v11524
        %v11538 = vunpack.c.l.b16 %v11506
        %v11539 = vunpack.c.l.b16 %v11507
        %v11540 = vunpack.c.l.b16 %v11508
        %v11541 = vunpack.c.l.b16 %v11509
        %v11542 = vpack.c.b16 %v11539, %v11538
        %v11543 = vpack.c.b16 %v11541, %v11540
        %v11547 = vsel %vm9654, %v11526, 0
        %v11550 = vsel %vm9654, %v11527, 0
        %v11553 = vsel %vm9654, %v11528, 0
        %v11556 = vsel %vm9654, %v11529, 0
        %v11559 = vsel %vm9654, %v11530, 0
        %v11562 = vsel %vm9654, %v11531, 0
        %v11565 = vsel %vm9654, %v11532, 0
        %v11568 = vsel %vm9654, %v11533, 0
        %11570 = vmatprep.subr.bf16.mxu0 0
        %11571 = vmatpush1.bf16.msra.mxu0 %v11542
        %11572 = vmatprep.subr.bf16.mxu0 0
        %11573 = vmatpush1.bf16.msra.mxu0 %v11543
        %11574 = vmatprep.subr.bf16.mxu0 0
        %11575 = vmatpush1.bf16.msra.mxu0 0
        %11576 = vmatprep.subr.bf16.mxu0 0
        %11577 = vmatpush1.bf16.msra.mxu0 0
        %11578 = vmatprep.subr.bf16.mxu0 0
        %11579 = vmatpush1.bf16.msra.mxu0 0
        %11580 = vmatprep.subr.bf16.mxu0 0
        %11581 = vmatpush1.bf16.msra.mxu0 0
        %11582 = vmatprep.subr.bf16.mxu0 0
        %11583 = vmatpush1.bf16.msra.mxu0 0
        %11584 = vmatprep.subr.bf16.mxu0 0
        %11585 = vmatpush1.bf16.msra.mxu0 0
        %11586 = vmatprep.subr.bf16.mxu0 0
        %11587 = vmatpush1.bf16.msra.mxu0 0
        %11588 = vmatprep.subr.bf16.mxu0 0
        %11589 = vmatpush1.bf16.msra.mxu0 0
        %11590 = vmatprep.subr.bf16.mxu0 0
        %11591 = vmatpush1.bf16.msra.mxu0 0
        %11592 = vmatprep.subr.bf16.mxu0 0
        %11593 = vmatpush1.bf16.msra.mxu0 0
        %11594 = vmatprep.subr.bf16.mxu0 0
        %11595 = vmatpush1.bf16.msra.mxu0 0
        %11596 = vmatprep.subr.bf16.mxu0 0
        %11597 = vmatpush1.bf16.msra.mxu0 0
        %11598 = vmatprep.subr.bf16.mxu0 0
        %11599 = vmatpush1.bf16.msra.mxu0 0
        %11600 = vmatprep.subr.bf16.mxu0 0
        %11601 = vmatpush1.bf16.msra.mxu0 0
        %11602 = vmatprep.mubr.bf16.mxu0 0
        %11603 = vmatmul.mubr.bf16.gmra.mrb[0].mxu0 %v11547
        %v11604 = vpop.f32.mrb[0].mxu0
        %v11605 = vadd.f32 0.0, %v11604
        %v11606 = vpop.f32.mrb[0].mxu0
        %v11607 = vpop.f32.mrb[0].mxu0
        %v11608 = vadd.f32 0.0, %v11607
        %v11609 = vpop.f32.mrb[0].mxu0
        %11610 = vmatprep.mubr.bf16.mxu0 0
        %11611 = vmatmul.mubr.bf16.gmra.mrb[0].mxu0 %v11550
        %v11612 = vpop.f32.mrb[0].mxu0
        %v11613 = vadd.f32 0.0, %v11612
        %v11614 = vpop.f32.mrb[0].mxu0
        %v11615 = vpop.f32.mrb[0].mxu0
        %v11616 = vadd.f32 0.0, %v11615
        %v11617 = vpop.f32.mrb[0].mxu0
        %11618 = vmatprep.mubr.bf16.mxu0 0
        %11619 = vmatmul.mubr.bf16.gmra.mrb[0].mxu0 %v11553
        %v11620 = vpop.f32.mrb[0].mxu0
        %v11621 = vadd.f32 0.0, %v11620
        %v11622 = vpop.f32.mrb[0].mxu0
        %v11623 = vpop.f32.mrb[0].mxu0
        %v11624 = vadd.f32 0.0, %v11623
        %v11625 = vpop.f32.mrb[0].mxu0
        %11626 = vmatprep.mubr.bf16.mxu0 0
        %11627 = vmatmul.mubr.bf16.gmra.mrb[0].mxu0 %v11556
        %v11628 = vpop.f32.mrb[0].mxu0
        %v11629 = vadd.f32 0.0, %v11628
        %v11630 = vpop.f32.mrb[0].mxu0
        %v11631 = vpop.f32.mrb[0].mxu0
        %v11632 = vadd.f32 0.0, %v11631
        %v11633 = vpop.f32.mrb[0].mxu0
        %11634 = vmatprep.mubr.bf16.mxu0 0
        %11635 = vmatmul.mubr.bf16.gmra.mrb[0].mxu0 %v11559
        %v11636 = vpop.f32.mrb[0].mxu0
        %v11637 = vadd.f32 0.0, %v11636
        %v11638 = vpop.f32.mrb[0].mxu0
        %v11639 = vpop.f32.mrb[0].mxu0
        %v11640 = vadd.f32 0.0, %v11639
        %v11641 = vpop.f32.mrb[0].mxu0
        %11642 = vmatprep.mubr.bf16.mxu0 0
        %11643 = vmatmul.mubr.bf16.gmra.mrb[0].mxu0 %v11562
        %v11644 = vpop.f32.mrb[0].mxu0
        %v11645 = vadd.f32 0.0, %v11644
        %v11646 = vpop.f32.mrb[0].mxu0
        %v11647 = vpop.f32.mrb[0].mxu0
        %v11648 = vadd.f32 0.0, %v11647
        %v11649 = vpop.f32.mrb[0].mxu0
        %11650 = vmatprep.mubr.bf16.mxu0 0
        %11651 = vmatmul.mubr.bf16.gmra.mrb[0].mxu0 %v11565
        %v11652 = vpop.f32.mrb[0].mxu0
        %v11653 = vadd.f32 0.0, %v11652
        %v11654 = vpop.f32.mrb[0].mxu0
        %v11655 = vpop.f32.mrb[0].mxu0
        %v11656 = vadd.f32 0.0, %v11655
        %v11657 = vpop.f32.mrb[0].mxu0
        %11658 = vmatprep.mubr.bf16.mxu0 0
        %11659 = vmatmul.mubr.bf16.gmra.mrb[0].mxu0 %v11568
        %v11660 = vpop.f32.mrb[0].mxu0
        %v11661 = vadd.f32 0.0, %v11660
        %v11662 = vpop.f32.mrb[0].mxu0
        %v11663 = vpop.f32.mrb[0].mxu0
        %v11664 = vadd.f32 0.0, %v11663
        %v11665 = vpop.f32.mrb[0].mxu0
        %11666 = vdwg.mxu0
        %v11667 = vadd.f32 %v11273, %v11605
        %v11668 = vadd.f32 %v11274, %v11608
        %v11669 = vadd.f32 %v11275, %v11613
        %v11670 = vadd.f32 %v11276, %v11616
        %v11671 = vadd.f32 %v11277, %v11621
        %v11672 = vadd.f32 %v11278, %v11624
        %v11673 = vadd.f32 %v11279, %v11629
        %v11674 = vadd.f32 %v11280, %v11632
        %v11675 = vadd.f32 %v11281, %v11637
        %v11676 = vadd.f32 %v11282, %v11640
        %v11677 = vadd.f32 %v11283, %v11645
        %v11678 = vadd.f32 %v11284, %v11648
        %v11679 = vadd.f32 %v11285, %v11653
        %v11680 = vadd.f32 %v11286, %v11656
        %v11681 = vadd.f32 %v11287, %v11661
        %v11682 = vadd.f32 %v11288, %v11664
        %v11683 = vld [vmem:[%s11078] sm:$0xe]
        %v11684 = vld [vmem:[%s11078 + $0xc] sm:$0xe]
        %v11685 = vld [vmem:[%s11078 + $0x18] sm:$0xe]
        %v11686 = vld [vmem:[%s11078 + $0x24] sm:$0xe]
        %v11687 = vld [vmem:[%s11078 + $0x30] sm:$0xe]
        %v11688 = vld [vmem:[%s11078 + $0x3c] sm:$0xe]
        %v11689 = vld [vmem:[%s11078 + $0x48] sm:$0xe]
        %v11690 = vld [vmem:[%s11078 + $0x54] sm:$0xe]
        %v11715 = vrot.slane %v11683, 5
        %v11716 = vrot.slane %v11715, 4
        %v11717 = vrot.slane %v11290, 5
        %v11718 = vsel %vm934, %v11716, %v11717
        %v11719 = vrot.slane %v11717, 4
        %v11720 = vrot.slane %v11291, 5
        %v11721 = vsel %vm934, %v11719, %v11720
        %v11722 = vrot.slane %v11684, 5
        %v11723 = vrot.slane %v11722, 4
        %v11724 = vrot.slane %v11293, 5
        %v11725 = vsel %vm934, %v11723, %v11724
        %v11726 = vrot.slane %v11724, 4
        %v11727 = vrot.slane %v11294, 5
        %v11728 = vsel %vm934, %v11726, %v11727
        %v11729 = vrot.slane %v11685, 5
        %v11730 = vrot.slane %v11729, 4
        %v11731 = vrot.slane %v11296, 5
        %v11732 = vsel %vm934, %v11730, %v11731
        %v11733 = vrot.slane %v11731, 4
        %v11734 = vrot.slane %v11297, 5
        %v11735 = vsel %vm934, %v11733, %v11734
        %v11736 = vrot.slane %v11686, 5
        %v11737 = vrot.slane %v11736, 4
        %v11738 = vrot.slane %v11299, 5
        %v11739 = vsel %vm934, %v11737, %v11738
        %v11740 = vrot.slane %v11738, 4
        %v11741 = vrot.slane %v11300, 5
        %v11742 = vsel %vm934, %v11740, %v11741
        %v11743 = vrot.slane %v11687, 5
        %v11744 = vrot.slane %v11743, 4
        %v11745 = vrot.slane %v11302, 5
        %v11746 = vsel %vm934, %v11744, %v11745
        %v11747 = vrot.slane %v11745, 4
        %v11748 = vrot.slane %v11303, 5
        %v11749 = vsel %vm934, %v11747, %v11748
        %v11750 = vrot.slane %v11688, 5
        %v11751 = vrot.slane %v11750, 4
        %v11752 = vrot.slane %v11305, 5
        %v11753 = vsel %vm934, %v11751, %v11752
        %v11754 = vrot.slane %v11752, 4
        %v11755 = vrot.slane %v11306, 5
        %v11756 = vsel %vm934, %v11754, %v11755
        %v11757 = vrot.slane %v11689, 5
        %v11758 = vrot.slane %v11757, 4
        %v11759 = vrot.slane %v11308, 5
        %v11760 = vsel %vm934, %v11758, %v11759
        %v11761 = vrot.slane %v11759, 4
        %v11762 = vrot.slane %v11309, 5
        %v11763 = vsel %vm934, %v11761, %v11762
        %v11764 = vrot.slane %v11690, 5
        %v11765 = vrot.slane %v11764, 4
        %v11766 = vrot.slane %v11311, 5
        %v11767 = vsel %vm934, %v11765, %v11766
        %v11768 = vrot.slane %v11766, 4
        %v11769 = vrot.slane %v11312, 5
        %v11770 = vsel %vm934, %v11768, %v11769
        %s11771 = scalar_lea.vmem %s3, 128
        %v11772 = vld [vmem:[%s11771] sm:$0xf]
        %v11773 = vld [vmem:[%s11771 + $0x4] sm:$0xf]
        %v11774 = vld [vmem:[%s11771 + $0x8] sm:$0xf]
        %v11775 = vld [vmem:[%s11771 + $0xc] sm:$0xf]
        %v11776 = vunpack.c.l.b16 %v11718
        %v11777 = vunpack.c.l.b16 %v11721
        %v11778 = vunpack.c.l.b16 %v11725
        %v11779 = vunpack.c.l.b16 %v11728
        %v11780 = vunpack.c.l.b16 %v11732
        %v11781 = vunpack.c.l.b16 %v11735
        %v11782 = vunpack.c.l.b16 %v11739
        %v11783 = vunpack.c.l.b16 %v11742
        %v11784 = vunpack.c.l.b16 %v11746
        %v11785 = vunpack.c.l.b16 %v11749
        %v11786 = vunpack.c.l.b16 %v11753
        %v11787 = vunpack.c.l.b16 %v11756
        %v11788 = vunpack.c.l.b16 %v11760
        %v11789 = vunpack.c.l.b16 %v11763
        %v11790 = vunpack.c.l.b16 %v11767
        %v11791 = vunpack.c.l.b16 %v11770
        %v11792 = vpack.c.b16 %v11777, %v11776
        %v11793 = vpack.c.b16 %v11779, %v11778
        %v11794 = vpack.c.b16 %v11781, %v11780
        %v11795 = vpack.c.b16 %v11783, %v11782
        %v11796 = vpack.c.b16 %v11785, %v11784
        %v11797 = vpack.c.b16 %v11787, %v11786
        %v11798 = vpack.c.b16 %v11789, %v11788
        %v11799 = vpack.c.b16 %v11791, %v11790
        %v11804 = vunpack.c.l.b16 %v11772
        %v11805 = vunpack.c.l.b16 %v11773
        %v11806 = vunpack.c.l.b16 %v11774
        %v11807 = vunpack.c.l.b16 %v11775
        %v11808 = vpack.c.b16 %v11805, %v11804
        %v11809 = vpack.c.b16 %v11807, %v11806
        %v11813 = vsel %vm9654, %v11792, 0
        %v11816 = vsel %vm9654, %v11793, 0
        %v11819 = vsel %vm9654, %v11794, 0
        %v11822 = vsel %vm9654, %v11795, 0
        %v11825 = vsel %vm9654, %v11796, 0
        %v11828 = vsel %vm9654, %v11797, 0
        %v11831 = vsel %vm9654, %v11798, 0
        %v11834 = vsel %vm9654, %v11799, 0
        %11836 = vmatprep.subr.bf16.mxu0 0
        %11837 = vmatpush1.bf16.msra.mxu0 %v11808
        %11838 = vmatprep.subr.bf16.mxu0 0
        %11839 = vmatpush1.bf16.msra.mxu0 %v11809
        %11840 = vmatprep.subr.bf16.mxu0 0
        %11841 = vmatpush1.bf16.msra.mxu0 0
        %11842 = vmatprep.subr.bf16.mxu0 0
        %11843 = vmatpush1.bf16.msra.mxu0 0
        %11844 = vmatprep.subr.bf16.mxu0 0
        %11845 = vmatpush1.bf16.msra.mxu0 0
        %11846 = vmatprep.subr.bf16.mxu0 0
        %11847 = vmatpush1.bf16.msra.mxu0 0
        %11848 = vmatprep.subr.bf16.mxu0 0
        %11849 = vmatpush1.bf16.msra.mxu0 0
        %11850 = vmatprep.subr.bf16.mxu0 0
        %11851 = vmatpush1.bf16.msra.mxu0 0
        %11852 = vmatprep.subr.bf16.mxu0 0
        %11853 = vmatpush1.bf16.msra.mxu0 0
        %11854 = vmatprep.subr.bf16.mxu0 0
        %11855 = vmatpush1.bf16.msra.mxu0 0
        %11856 = vmatprep.subr.bf16.mxu0 0
        %11857 = vmatpush1.bf16.msra.mxu0 0
        %11858 = vmatprep.subr.bf16.mxu0 0
        %11859 = vmatpush1.bf16.msra.mxu0 0
        %11860 = vmatprep.subr.bf16.mxu0 0
        %11861 = vmatpush1.bf16.msra.mxu0 0
        %11862 = vmatprep.subr.bf16.mxu0 0
        %11863 = vmatpush1.bf16.msra.mxu0 0
        %11864 = vmatprep.subr.bf16.mxu0 0
        %11865 = vmatpush1.bf16.msra.mxu0 0
        %11866 = vmatprep.subr.bf16.mxu0 0
        %11867 = vmatpush1.bf16.msra.mxu0 0
        %11868 = vmatprep.mubr.bf16.mxu0 0
        %11869 = vmatmul.mubr.bf16.gmra.mrb[0].mxu0 %v11813
        %v11870 = vpop.f32.mrb[0].mxu0
        %v11871 = vadd.f32 0.0, %v11870
        %v11872 = vpop.f32.mrb[0].mxu0
        %v11873 = vpop.f32.mrb[0].mxu0
        %v11874 = vadd.f32 0.0, %v11873
        %v11875 = vpop.f32.mrb[0].mxu0
        %11876 = vmatprep.mubr.bf16.mxu0 0
        %11877 = vmatmul.mubr.bf16.gmra.mrb[0].mxu0 %v11816
        %v11878 = vpop.f32.mrb[0].mxu0
        %v11879 = vadd.f32 0.0, %v11878
        %v11880 = vpop.f32.mrb[0].mxu0
        %v11881 = vpop.f32.mrb[0].mxu0
        %v11882 = vadd.f32 0.0, %v11881
        %v11883 = vpop.f32.mrb[0].mxu0
        %11884 = vmatprep.mubr.bf16.mxu0 0
        %11885 = vmatmul.mubr.bf16.gmra.mrb[0].mxu0 %v11819
        %v11886 = vpop.f32.mrb[0].mxu0
        %v11887 = vadd.f32 0.0, %v11886
        %v11888 = vpop.f32.mrb[0].mxu0
        %v11889 = vpop.f32.mrb[0].mxu0
        %v11890 = vadd.f32 0.0, %v11889
        %v11891 = vpop.f32.mrb[0].mxu0
        %11892 = vmatprep.mubr.bf16.mxu0 0
        %11893 = vmatmul.mubr.bf16.gmra.mrb[0].mxu0 %v11822
        %v11894 = vpop.f32.mrb[0].mxu0
        %v11895 = vadd.f32 0.0, %v11894
        %v11896 = vpop.f32.mrb[0].mxu0
        %v11897 = vpop.f32.mrb[0].mxu0
        %v11898 = vadd.f32 0.0, %v11897
        %v11899 = vpop.f32.mrb[0].mxu0
        %11900 = vmatprep.mubr.bf16.mxu0 0
        %11901 = vmatmul.mubr.bf16.gmra.mrb[0].mxu0 %v11825
        %v11902 = vpop.f32.mrb[0].mxu0
        %v11903 = vadd.f32 0.0, %v11902
        %v11904 = vpop.f32.mrb[0].mxu0
        %v11905 = vpop.f32.mrb[0].mxu0
        %v11906 = vadd.f32 0.0, %v11905
        %v11907 = vpop.f32.mrb[0].mxu0
        %11908 = vmatprep.mubr.bf16.mxu0 0
        %11909 = vmatmul.mubr.bf16.gmra.mrb[0].mxu0 %v11828
        %v11910 = vpop.f32.mrb[0].mxu0
        %v11911 = vadd.f32 0.0, %v11910
        %v11912 = vpop.f32.mrb[0].mxu0
        %v11913 = vpop.f32.mrb[0].mxu0
        %v11914 = vadd.f32 0.0, %v11913
        %v11915 = vpop.f32.mrb[0].mxu0
        %11916 = vmatprep.mubr.bf16.mxu0 0
        %11917 = vmatmul.mubr.bf16.gmra.mrb[0].mxu0 %v11831
        %v11918 = vpop.f32.mrb[0].mxu0
        %v11919 = vadd.f32 0.0, %v11918
        %v11920 = vpop.f32.mrb[0].mxu0
        %v11921 = vpop.f32.mrb[0].mxu0
        %v11922 = vadd.f32 0.0, %v11921
        %v11923 = vpop.f32.mrb[0].mxu0
        %11924 = vmatprep.mubr.bf16.mxu0 0
        %11925 = vmatmul.mubr.bf16.gmra.mrb[0].mxu0 %v11834
        %v11926 = vpop.f32.mrb[0].mxu0
        %v11927 = vadd.f32 0.0, %v11926
        %v11928 = vpop.f32.mrb[0].mxu0
        %v11929 = vpop.f32.mrb[0].mxu0
        %v11930 = vadd.f32 0.0, %v11929
        %v11931 = vpop.f32.mrb[0].mxu0
        %11932 = vdwg.mxu0
        %v11933 = vadd.f32 %v11667, %v11871
        %v11934 = vadd.f32 %v11668, %v11874
        %v11935 = vadd.f32 %v11669, %v11879
        %v11936 = vadd.f32 %v11670, %v11882
        %v11937 = vadd.f32 %v11671, %v11887
        %v11938 = vadd.f32 %v11672, %v11890
        %v11939 = vadd.f32 %v11673, %v11895
        %v11940 = vadd.f32 %v11674, %v11898
        %v11941 = vadd.f32 %v11675, %v11903
        %v11942 = vadd.f32 %v11676, %v11906
        %v11943 = vadd.f32 %v11677, %v11911
        %v11944 = vadd.f32 %v11678, %v11914
        %v11945 = vadd.f32 %v11679, %v11919
        %v11946 = vadd.f32 %v11680, %v11922
        %v11947 = vadd.f32 %v11681, %v11927
        %v11948 = vadd.f32 %v11682, %v11930
        %v11949 = vld [vmem:[%s4] sm:$0x1]
        %v11951 = vlaneseq
        %v11952 = vshrl.u32 %v11951, 7
        %v11953 = vsub.s32 0, %v11952
        %v11954 = vrot.slane %v11949, %v11953
        %v11956 = vadd.f32 %v11933, %v11954
        %v11957 = vadd.f32 %v11934, %v11954
        %v11958 = vadd.f32 %v11935, %v11954
        %v11959 = vadd.f32 %v11936, %v11954
        %v11960 = vadd.f32 %v11937, %v11954
        %v11961 = vadd.f32 %v11938, %v11954
        %v11962 = vadd.f32 %v11939, %v11954
        %v11963 = vadd.f32 %v11940, %v11954
        %v11964 = vadd.f32 %v11941, %v11954
        %v11965 = vadd.f32 %v11942, %v11954
        %v11966 = vadd.f32 %v11943, %v11954
        %v11967 = vadd.f32 %v11944, %v11954
        %v11968 = vadd.f32 %v11945, %v11954
        %v11969 = vadd.f32 %v11946, %v11954
        %v11970 = vadd.f32 %v11947, %v11954
        %v11971 = vadd.f32 %v11948, %v11954
        %11972 = vst.msk [vmem:[%s241] sm:$0xff] %vm9654, %v11956
        %11973 = vst.msk [vmem:[%s241 + $0x8] sm:$0xff] %vm9654, %v11957
        %11974 = vst.msk [vmem:[%s241 + $0x10] sm:$0xff] %vm9654, %v11958
        %11975 = vst.msk [vmem:[%s241 + $0x18] sm:$0xff] %vm9654, %v11959
        %11976 = vst.msk [vmem:[%s241 + $0x20] sm:$0xff] %vm9654, %v11960
        %11977 = vst.msk [vmem:[%s241 + $0x28] sm:$0xff] %vm9654, %v11961
        %11978 = vst.msk [vmem:[%s241 + $0x30] sm:$0xff] %vm9654, %v11962
        %11979 = vst.msk [vmem:[%s241 + $0x38] sm:$0xff] %vm9654, %v11963
        %11980 = vst.msk [vmem:[%s241 + $0x40] sm:$0xff] %vm9654, %v11964
        %11981 = vst.msk [vmem:[%s241 + $0x48] sm:$0xff] %vm9654, %v11965
        %11982 = vst.msk [vmem:[%s241 + $0x50] sm:$0xff] %vm9654, %v11966
        %11983 = vst.msk [vmem:[%s241 + $0x58] sm:$0xff] %vm9654, %v11967
        %11984 = vst.msk [vmem:[%s241 + $0x60] sm:$0xff] %vm9654, %v11968
        %11985 = vst.msk [vmem:[%s241 + $0x68] sm:$0xff] %vm9654, %v11969
        %11986 = vst.msk [vmem:[%s241 + $0x70] sm:$0xff] %vm9654, %v11970
        %11987 = vst.msk [vmem:[%s241 + $0x78] sm:$0xff] %vm9654, %v11971
        %s11988 = sand.u32 %s153, 1
        %s11989 = scalar_lea.sflag [#allocation4], %s11988
        %s11990 = sand.u32 %s153, 1
        %s11991 = smul.addr %s11990, 128
        %s11992 = scalar_lea.vmem [#allocation3], %s11991
        // Predicated region
        $region49: #{backbone_forward.1} parent=39 // pred_check
          %p11993 = pneg %p163
        $region50: #{backbone_forward.1} parent=39 // pred_check_branch
          %11995 = sbr.rel (%p11993) target = $region52
        $region51: #{backbone_forward.1} parent=39 // pred_region
          %s11997 = ssub.s32 2048, 2048
          %11998 = vsyncadd %s11989, %s11997
          %s11999 = smul.addr %s24, 16
          %s12000 = smul.addr %s23, 32
          %s12001 = sadd.s32 %s11999, %s12000
          %s12002 = smul.addr %s12001, 128
          %s12003 = scalar_lea.hbm %s5, %s12002
          %s12004 = sshll.u32 %s11992, 4
          %s12005 = int_to_ptr.vmem [resolvable:$true] %s12004
          %12010 = dma.vmem_to_hbm [thread:$0]  %s12005, 2048, %s12003, %s11989, 128, 128, 8
        $region52: #{backbone_forward.1} parent=39 // pred_fallthru
          _
      $region40: #{backbone_forward.1} parent=5 // pred_fallthru
        _
      %p12011 = scmp.le.s32.totalorder 2, %s14
      // Predicated region
      $region53: #{backbone_forward.1} parent=5 // pred_check
        %p12012 = pneg %p12011
      $region54: #{backbone_forward.1} parent=5 // pred_check_branch
        %12014 = sbr.rel (%p12012) target = $region56
      $region55: #{backbone_forward.1} parent=5 // pred_region
        %s12015 = ssub.s32 %s14, 2
        // Predicated region
        $region57: #{backbone_forward.1} parent=55 // pred_check
          %p12016 = pneg %p169
        $region58: #{backbone_forward.1} parent=55 // pred_check_branch
          %12018 = sbr.rel (%p12016) target = $region60
        $region59: #{backbone_forward.1} parent=55 // pred_region
          %s12019 = sand.u32 %s154, 1
          %s12020 = scalar_lea.sflag [#allocation4], %s12019
          %s12021 = sand.u32 %s154, 1
          %s12022 = smul.addr %s12021, 128
          %s12023 = scalar_lea.vmem [#allocation3], %s12022
          %12024 = dma.done %s12020, 2048
        $region60: #{backbone_forward.1} parent=55 // pred_fallthru
          _
      $region56: #{backbone_forward.1} parent=5 // pred_fallthru
        _
    $region6: #{backbone_forward.1} parent=1 // loop_footer
      %s18 = sadd.s32 1, %s14
    $region7: #{backbone_forward.1} parent=1 // loop_footer_branch
      %13 = sbr.rel target = $region3
    $region8: #{backbone_forward.1} parent=1 // loop_exit
      _
    %12025 = vsyncpa [#allocation4], 1
    %s12026 = scalar_lea.sflag [#allocation4], 1
    %12027 = vsyncpa %s12026, 1

</llo_original>
